<compile_context>
chip_gen: v7x
topology: tpu7x:2x2x1
jax: 0.10.0
libtpu: 0.0.40
codegen_flags: <defaults>
</compile_context>

<pallas_src>
import functools

import jax
import jax.numpy as jnp
from jax.experimental import pallas as pl
from jax.experimental.pallas import tpu as pltpu

_LANE = 128
_MASK_VAL = -1e30            # additive softmax mask for non-edges


def _device_kind():
    try:
        return jax.devices()[0].device_kind.lower()
    except Exception:
        return ""


_KIND = _device_kind()

# Generation-specific scoped-VMEM limit (v7x: 64 MiB physical; v5e/v6e: 128).
if "v7" in _KIND:
    _VMEM_LIMIT = 56 * 1024 * 1024
elif "v6" in _KIND or "v5" in _KIND:
    _VMEM_LIMIT = 100 * 1024 * 1024
else:
    _VMEM_LIMIT = 48 * 1024 * 1024

# bf16 elementwise softmax math only where the VPU/EUP support it natively.
_BF16_ELEMENTWISE = ("v6" in _KIND) or ("v7" in _KIND)

# Default tile sizes (clamped to the node count inside gat_layer).
_DEF_TQ = 256
_DEF_TR = 256
_DEF_TK = 512 if "v7" in _KIND else 1024


def _round_up(x, m):
    return ((x + m - 1) // m) * m


def _elu(x):
    return jnp.where(x > 0, x, jnp.exp(x) - 1.0)


def _log_softmax_rows(x):
    m = jnp.max(x, axis=1, keepdims=True)
    z = x - m
    return z - jnp.log(jnp.sum(jnp.exp(z), axis=1, keepdims=True))


# ---------------------------------------------------------------------------
# Kernel 1: per-node projection + attention-score pieces (all on the MXU).
# ---------------------------------------------------------------------------
def _proj_kernel(x_ref, w_ref, adst_ref, asrc_ref, h_ref, sdst_ref, ssrc_ref):
    h = jnp.dot(x_ref[...], w_ref[...], preferred_element_type=jnp.float32)
    # s_dst[n, hd] = <h[n, hd*F:(hd+1)*F], att_dst[hd]> via block-placed
    # [width, H] matrices -> one MXU matmul each (no VPU mul + XLU reduce).
    sdst_ref[...] = jnp.dot(h, adst_ref[...], preferred_element_type=jnp.float32)
    ssrc_ref[...] = jnp.dot(h, asrc_ref[...], preferred_element_type=jnp.float32)
    # Aggregation only needs h as the matmul RHS -> keep it bf16.
    h_ref[...] = h.astype(h_ref.dtype)


# ---------------------------------------------------------------------------
# Kernel 2: online-softmax attention + aggregation, tiled over (dst, src).
# ---------------------------------------------------------------------------
def _make_attn_kernel(heads, f_out, concat, act_kind, width, cdtype):
    """width = padded projected-feature width (== bias / output width)."""
    full_rhs = (not concat) and heads == 1   # heads=1: full 128-lane h RHS

    def kernel(h_ref, sdst_ref, ssrcT_ref, adj_ref, bias_ref, out_ref,
               m_ref, l_ref, acc_ref):
        kk = pl.program_id(1)
        tq = out_ref.shape[0]

        @pl.when(kk == 0)
        def _():
            m_ref[...] = jnp.full_like(m_ref, -jnp.inf)
            l_ref[...] = jnp.zeros_like(l_ref)
            acc_ref[...] = jnp.zeros_like(acc_ref)

        # Pre-baked additive mask tile: 0 for edges (incl. self-loops),
        # ~-1e30 for non-edges.  One cast per tile, no per-head select.
        neg = adj_ref[...].astype(cdtype)                         # [tq, tk]

        # Head loop unrolled at trace time (heads is small); each head's
        # [tq, tk] temporaries die once its accumulator slice is updated.
        for hd in range(heads):
            s_d = sdst_ref[:, hd:hd + 1].astype(cdtype)           # [tq, 1]
            s_s = ssrcT_ref[hd:hd + 1, :].astype(cdtype)          # [1, tk]
            e = s_d + s_s                                         # [tq, tk]
            e = jnp.where(e > 0, e, 0.2 * e)                      # LeakyReLU
            e = e + neg                                           # mask
            m_prev = m_ref[:, hd:hd + 1]                          # f32 [tq,1]
            m_new = jnp.maximum(
                m_prev, jnp.max(e, axis=1, keepdims=True).astype(jnp.float32))
            alpha = jnp.exp(m_prev - m_new)                       # f32 [tq,1]
            p = jnp.exp(e - m_new.astype(cdtype))                 # [tq, tk]
            l_ref[:, hd:hd + 1] = (
                alpha * l_ref[:, hd:hd + 1]
                + jnp.sum(p, axis=1, keepdims=True).astype(jnp.float32))
            if full_rhs:
                sl = slice(0, width)          # pad columns of h are zero
            else:
                sl = slice(hd * f_out, (hd + 1) * f_out)
            agg = jnp.dot(p.astype(jnp.bfloat16), h_ref[:, sl],
                          preferred_element_type=jnp.float32)
            acc_ref[:, sl] = alpha * acc_ref[:, sl] + agg
            m_ref[:, hd:hd + 1] = m_new

        @pl.when(kk == pl.num_programs(1) - 1)
        def _():
            # Clamp denominator so an all-masked (padded) row cannot produce
            # Inf/NaN; with self-loops every real row has l > 0.
            inv = pl.reciprocal(jnp.maximum(l_ref[...], 1e-20), approx=True)
            acc = acc_ref[...]
            if concat:
                pieces = [acc[:, hd * f_out:(hd + 1) * f_out] * inv[:, hd:hd + 1]
                          for hd in range(heads)]
                hf = heads * f_out
                if width > hf:
                    pieces.append(jnp.zeros((tq, width - hf), jnp.float32))
                y = jnp.concatenate(pieces, axis=1)               # [tq, width]
            elif full_rhs:
                y = acc * inv[:, 0:1]                             # [tq, width]
            else:
                y = sum(acc[:, hd * f_out:(hd + 1) * f_out] * inv[:, hd:hd + 1]
                        for hd in range(heads)) * (1.0 / heads)
                if width > f_out:
                    y = jnp.concatenate(
                        [y, jnp.zeros((tq, width - f_out), jnp.float32)], axis=1)
            y = y + bias_ref[...]                                 # pad bias = 0
            if act_kind == "elu":
                out_ref[...] = _elu(y)        # ELU(0)=0 keeps pad lanes zero
            else:
                # log_softmax over the valid columns only (mask the padding).
                col = jax.lax.broadcasted_iota(jnp.int32, (1, width), 1)
                y = jnp.where(col < f_out, y, _MASK_VAL)
                out_ref[...] = _log_softmax_rows(y)

    return kernel


# ---------------------------------------------------------------------------
# One GATConv layer = projection pallas_call + tiled online-softmax attention.
# ---------------------------------------------------------------------------
def gat_layer(x, w, a_dst, a_src, bias, adj_bias, *, heads, f_out, concat, act,
              tq=None, tk=None, tr=None):
    n, f_in = x.shape
    width = w.shape[1]                      # padded projected-feature width
    assert bias.shape[1] == width

    tq = min(tq or _DEF_TQ, n)
    tk = min(tk or _DEF_TK, n)
    tr = min(tr or _DEF_TR, n)
    assert n % tq == 0 and n % tk == 0 and n % tr == 0, (
        "node count must be divisible by the tile sizes (pad the graph)")
    assert tk % _LANE == 0 or tk == n, "tk must be a multiple of 128 (or == n)"

    proj_params = pltpu.CompilerParams(
        dimension_semantics=("parallel",), vmem_limit_bytes=_VMEM_LIMIT)
    attn_params = pltpu.CompilerParams(
        dimension_semantics=("parallel", "arbitrary"),
        vmem_limit_bytes=_VMEM_LIMIT)

    # --- projection + score pieces ----------------------------------------
    h, s_dst, s_src = pl.pallas_call(
        _proj_kernel,
        out_shape=(jax.ShapeDtypeStruct((n, width), jnp.bfloat16),
                   jax.ShapeDtypeStruct((n, heads), jnp.float32),
                   jax.ShapeDtypeStruct((n, heads), jnp.float32)),
        grid=(n // tr,),
        in_specs=[pl.BlockSpec((tr, f_in), lambda i: (i, 0)),
                  pl.BlockSpec((f_in, width), lambda i: (0, 0)),
                  pl.BlockSpec((width, heads), lambda i: (0, 0)),
                  pl.BlockSpec((width, heads), lambda i: (0, 0))],
        out_specs=(pl.BlockSpec((tr, width), lambda i: (i, 0)),
                   pl.BlockSpec((tr, heads), lambda i: (i, 0)),
                   pl.BlockSpec((tr, heads), lambda i: (i, 0))),
        compiler_params=proj_params,
    )(x, w, a_dst, a_src)

    # Tiny [n, heads] -> [heads, n] layout transform so s_src broadcasts along
    # lanes inside the attention kernel (see TODO at top about fusing it).
    s_srcT = s_src.T

    cdtype = jnp.bfloat16 if _BF16_ELEMENTWISE else jnp.float32
    kernel = _make_attn_kernel(heads, f_out, concat, act, width, cdtype)

    # --- online-softmax attention + aggregation ----------------------------
    # grid = (dst tiles [parallel -> megacore], src tiles [arbitrary, reduce]);
    # per-step VMEM working set is O(tq*tk), independent of n.
    return pl.pallas_call(
        kernel,
        out_shape=jax.ShapeDtypeStruct((n, width), jnp.float32),
        grid=(n // tq, n // tk),
        in_specs=[pl.BlockSpec((tk, width), lambda i, k: (k, 0)),   # h src tile
                  pl.BlockSpec((tq, heads), lambda i, k: (i, 0)),   # s_dst
                  pl.BlockSpec((heads, tk), lambda i, k: (0, k)),   # s_src^T
                  pl.BlockSpec((tq, tk), lambda i, k: (i, k)),      # adj bias
                  pl.BlockSpec((1, width), lambda i, k: (0, 0))],   # layer bias
        out_specs=pl.BlockSpec((tq, width), lambda i, k: (i, 0)),
        scratch_shapes=[pltpu.VMEM((tq, heads), jnp.float32),       # running max
                        pltpu.VMEM((tq, heads), jnp.float32),       # running sum
                        pltpu.VMEM((tq, width), jnp.float32)],      # accumulator
        compiler_params=attn_params,
    )(h, s_dst, s_srcT, adj_bias, bias)


# ---------------------------------------------------------------------------
# Parameters (PyG GATConv shapes, zero-padded to lane-dense layouts).
# ---------------------------------------------------------------------------
def _glorot(key, shape):
    fan_in, fan_out = shape[-2], shape[-1]
    limit = (6.0 / (fan_in + fan_out)) ** 0.5
    return jax.random.uniform(key, shape, jnp.float32, -limit, limit)


def _att_matrix(att, f_out, width):
    """[H, f_out] per-head attention vectors -> block-placed [width, H]."""
    heads = att.shape[0]
    a = jnp.zeros((width, heads), jnp.float32)
    for hd in range(heads):
        a = a.at[hd * f_out:(hd + 1) * f_out, hd].set(att[hd])
    return a


def init_gat_gcn_params(key, in_c, out_c, hid_c, K):
    ks = jax.random.split(key, 6)
    hf1 = K * hid_c
    hf1_pad = _round_up(hf1, _LANE)
    out_pad = _round_up(out_c, _LANE)

    w1 = _glorot(ks[0], (in_c, hf1))
    w2 = _glorot(ks[3], (hf1, out_c))
    return {
        # conv1: GATConv(in_c, hid_c, heads=K, concat=True)
        "w1": jnp.zeros((in_c, hf1_pad), jnp.float32).at[:, :hf1].set(w1),
        "Adst1": _att_matrix(_glorot(ks[2], (K, hid_c)), hid_c, hf1_pad),
        "Asrc1": _att_matrix(_glorot(ks[1], (K, hid_c)), hid_c, hf1_pad),
        "b1": jnp.zeros((1, hf1_pad), jnp.float32),
        # conv2: GATConv(hid_c*K, out_c, heads=1, concat=False)
        "w2": jnp.zeros((hf1_pad, out_pad), jnp.float32).at[:hf1, :out_c].set(w2),
        "Adst2": _att_matrix(_glorot(ks[5], (1, out_c)), out_c, out_pad),
        "Asrc2": _att_matrix(_glorot(ks[4], (1, out_c)), out_c, out_pad),
        "b2": jnp.zeros((1, out_pad), jnp.float32),
    }


def gat_gcn_forward(params, x, adj_bias, *, hid_c, K, out_c,
                    tq=None, tk=None, tr=None):
    # F.dropout(x) -> identity in eval mode.
    hid = gat_layer(x, params["w1"], params["Adst1"], params["Asrc1"],
                    params["b1"], adj_bias, heads=K, f_out=hid_c, concat=True,
                    act="elu", tq=tq, tk=tk, tr=tr)     # dropout(id) + ELU fused
    # hid stays lane-padded ([N, 128k], zeros in the pad) and feeds conv2.
    out = gat_layer(hid, params["w2"], params["Adst2"], params["Asrc2"],
                    params["b2"], adj_bias, heads=1, f_out=out_c, concat=False,
                    act="log_softmax", tq=tq, tk=tk, tr=tr)
    return out[:, :out_c]                   # drop lane padding at the very end


def build_adj(edge_index, n):
    """(bool neighbor mask incl. self-loops, bf16 additive softmax bias)."""
    src, dst = edge_index[0], edge_index[1]
    adj = jnp.zeros((n, n), jnp.float32).at[dst, src].set(1.0)
    adj = jnp.maximum(adj, jnp.eye(n, dtype=jnp.float32))
    mask = adj > 0
    bias = jnp.where(mask, 0.0, _MASK_VAL).astype(jnp.bfloat16)
    return mask, bias


# ---------------------------------------------------------------------------
# Pure-JAX f32 reference (same padded parameters -> padding is inert).
# ---------------------------------------------------------------------------
def gat_gcn_reference(params, x, adj_mask, *, hid_c, K, out_c):
    def layer(xin, w, adst, asrc, b, heads, f_out, concat):
        h = xin @ w
        sd = h @ adst
        ss = h @ asrc
        outs = []
        for hd in range(heads):
            e = sd[:, hd:hd + 1] + ss[:, hd][None, :]
            e = jnp.where(e > 0, e, 0.2 * e)
            e = jnp.where(adj_mask, e, -jnp.inf)
            p = jax.nn.softmax(e, axis=1)
            outs.append(p @ h[:, hd * f_out:(hd + 1) * f_out])
        y = jnp.concatenate(outs, axis=1) if concat else sum(outs) / heads
        return y + b[:, :y.shape[1]]

    hid = layer(x, params["w1"], params["Adst1"], params["Asrc1"],
                params["b1"], K, hid_c, True)
    hid = jnp.where(hid > 0, hid, jnp.exp(hid) - 1.0)            # ELU
    pad = params["w1"].shape[1] - hid.shape[1]
    if pad:
        hid = jnp.concatenate([hid, jnp.zeros((hid.shape[0], pad))], axis=1)
    out = layer(hid, params["w2"], params["Adst2"], params["Asrc2"],
                params["b2"], 1, out_c, False)
    return jax.nn.log_softmax(out, axis=1)


if __name__ == "__main__":
    # Small, deterministic problem: 256 nodes so both grid axes have 2 steps
    # at tq=tk=128 (exercises the online-softmax pipeline + finalize).
    N, in_c, hid_c, K, out_c = 256, 8, 16, 4, 6

    key = jax.random.PRNGKey(0)
    k_x, k_p = jax.random.split(key)
    x = jax.random.normal(k_x, (N, in_c), jnp.float32)

    # Deterministic edge_index [2, E]: a ring both ways + skip edges.
    idx = jnp.arange(N)
    src = jnp.concatenate([idx, idx, idx])
    dst = jnp.concatenate([(idx + 1) % N, (idx - 1) % N, (idx + 5) % N])
    edge_index = jnp.stack([src, dst], axis=0)
    adj_mask, adj_bias = build_adj(edge_index, N)

    params = init_gat_gcn_params(k_p, in_c, out_c, hid_c, K)

    fwd = jax.jit(functools.partial(gat_gcn_forward, hid_c=hid_c, K=K,
                                    out_c=out_c, tq=128, tk=128, tr=128))
    out = jax.block_until_ready(fwd(params, x, adj_bias))

    assert out.shape == (N, out_c)
    assert bool(jnp.all(jnp.isfinite(out)))
    # Rows of log_softmax should exponentiate to ~1.
    assert bool(jnp.allclose(jnp.sum(jnp.exp(out), axis=1), 1.0, atol=1e-3))

    # bf16 aggregation + approx reciprocal (+ bf16 softmax math on v6e/v7x)
    # give ~1e-2-level deviation vs the f32 reference.
    ref = gat_gcn_reference(params, x, adj_mask, hid_c=hid_c, K=K, out_c=out_c)
    max_err = float(jnp.max(jnp.abs(out - ref)))
    assert max_err < 0.2, f"kernel vs reference max abs diff too large: {max_err}"

    print("KERNEL_OK")
</pallas_src>

<mosaic_0001>
module attributes {stable_mosaic.version = 11 : i64} {
  func.func @_proj_kernel(%arg0: i32, %arg1: memref<128x8xf32, #tpu.memory_space<vmem>>, %arg2: memref<8x128xf32, #tpu.memory_space<vmem>>, %arg3: memref<128x4xf32, #tpu.memory_space<vmem>>, %arg4: memref<128x4xf32, #tpu.memory_space<vmem>>, %arg5: memref<128x128xbf16, #tpu.memory_space<vmem>>, %arg6: memref<128x4xf32, #tpu.memory_space<vmem>>, %arg7: memref<128x4xf32, #tpu.memory_space<vmem>>) attributes {dimension_semantics = [#tpu.dimension_semantics<parallel>], iteration_bounds = array<i64: 2>, scalar_prefetch = 0 : i64, scratch_operands = 0 : i64, tpu.core_type = #tpu.core_type<tc>, window_params = [{transform_indices = @transform_0, window_bounds = array<i64: 128, 8>}, {pipeline_mode = #tpu.pipeline_mode<synchronous>, transform_indices = @transform_1, window_bounds = array<i64: 8, 128>}, {pipeline_mode = #tpu.pipeline_mode<synchronous>, transform_indices = @transform_2, window_bounds = array<i64: 128, 4>}, {pipeline_mode = #tpu.pipeline_mode<synchronous>, transform_indices = @transform_3, window_bounds = array<i64: 128, 4>}, {transform_indices = @transform_4, window_bounds = array<i64: 128, 128>}, {transform_indices = @transform_5, window_bounds = array<i64: 128, 4>}, {transform_indices = @transform_6, window_bounds = array<i64: 128, 4>}]} {
    %c0 = arith.constant 0 : index
    %c0_0 = arith.constant 0 : index
    %0 = vector.load %arg1[%c0, %c0_0] : memref<128x8xf32, #tpu.memory_space<vmem>>, vector<128x8xf32>
    %c0_1 = arith.constant 0 : index
    %c0_2 = arith.constant 0 : index
    %1 = vector.load %arg2[%c0_1, %c0_2] : memref<8x128xf32, #tpu.memory_space<vmem>>, vector<8x128xf32>
    %cst = arith.constant dense<0.000000e+00> : vector<128x128xf32>
    %2 = tpu.matmul %0, %1, %cst {dimension_numbers = #tpu.dot_dimension_numbers<[1], [0], [0], [1], [0, 0, 1, 1], [], []>} : vector<128x8xf32>, vector<8x128xf32>, vector<128x128xf32> -> vector<128x128xf32>
    %c0_3 = arith.constant 0 : index
    %c0_4 = arith.constant 0 : index
    %3 = vector.load %arg3[%c0_3, %c0_4] : memref<128x4xf32, #tpu.memory_space<vmem>>, vector<128x4xf32>
    %cst_5 = arith.constant dense<0.000000e+00> : vector<128x4xf32>
    %4 = tpu.matmul %2, %3, %cst_5 {dimension_numbers = #tpu.dot_dimension_numbers<[1], [0], [0], [1], [0, 0, 1, 1], [], []>} : vector<128x128xf32>, vector<128x4xf32>, vector<128x4xf32> -> vector<128x4xf32>
    %c0_6 = arith.constant 0 : index
    %c0_7 = arith.constant 0 : index
    %5 = vector.load %arg6[%c0_6, %c0_7] : memref<128x4xf32, #tpu.memory_space<vmem>>, vector<128x4xf32>
    tpu.vector_store %arg6[%c0_6, %c0_7], %4 {strides = array<i32>} : memref<128x4xf32, #tpu.memory_space<vmem>>, vector<128x4xf32>,
    %c0_8 = arith.constant 0 : index
    %c0_9 = arith.constant 0 : index
    %6 = vector.load %arg4[%c0_8, %c0_9] : memref<128x4xf32, #tpu.memory_space<vmem>>, vector<128x4xf32>
    %cst_10 = arith.constant dense<0.000000e+00> : vector<128x4xf32>
    %7 = tpu.matmul %2, %6, %cst_10 {dimension_numbers = #tpu.dot_dimension_numbers<[1], [0], [0], [1], [0, 0, 1, 1], [], []>} : vector<128x128xf32>, vector<128x4xf32>, vector<128x4xf32> -> vector<128x4xf32>
    %c0_11 = arith.constant 0 : index
    %c0_12 = arith.constant 0 : index
    %8 = vector.load %arg7[%c0_11, %c0_12] : memref<128x4xf32, #tpu.memory_space<vmem>>, vector<128x4xf32>
    tpu.vector_store %arg7[%c0_11, %c0_12], %7 {strides = array<i32>} : memref<128x4xf32, #tpu.memory_space<vmem>>, vector<128x4xf32>,
    %9 = arith.truncf %2 : vector<128x128xf32> to vector<128x128xbf16>
    %c0_13 = arith.constant 0 : index
    %c0_14 = arith.constant 0 : index
    %10 = vector.load %arg5[%c0_13, %c0_14] : memref<128x128xbf16, #tpu.memory_space<vmem>>, vector<128x128xbf16>
    tpu.vector_store %arg5[%c0_13, %c0_14], %9 {strides = array<i32>} : memref<128x128xbf16, #tpu.memory_space<vmem>>, vector<128x128xbf16>,
    return
  }
  func.func @transform_0(%arg0: i32) -> (i32, i32) {
    %c0_i32 = arith.constant 0 : i32
    %c0_i32_0 = arith.constant 0 : i32
    return %arg0, %c0_i32 : i32, i32
  }
  func.func @transform_1(%arg0: i32) -> (i32, i32) {
    %c0_i32 = arith.constant 0 : i32
    %c0_i32_0 = arith.constant 0 : i32
    %c0_i32_1 = arith.constant 0 : i32
    return %c0_i32, %c0_i32_0 : i32, i32
  }
  func.func @transform_2(%arg0: i32) -> (i32, i32) {
    %c0_i32 = arith.constant 0 : i32
    %c0_i32_0 = arith.constant 0 : i32
    %c0_i32_1 = arith.constant 0 : i32
    return %c0_i32, %c0_i32_0 : i32, i32
  }
  func.func @transform_3(%arg0: i32) -> (i32, i32) {
    %c0_i32 = arith.constant 0 : i32
    %c0_i32_0 = arith.constant 0 : i32
    %c0_i32_1 = arith.constant 0 : i32
    return %c0_i32, %c0_i32_0 : i32, i32
  }
  func.func @transform_4(%arg0: i32) -> (i32, i32) {
    %c0_i32 = arith.constant 0 : i32
    %c0_i32_0 = arith.constant 0 : i32
    return %arg0, %c0_i32 : i32, i32
  }
  func.func @transform_5(%arg0: i32) -> (i32, i32) {
    %c0_i32 = arith.constant 0 : i32
    %c0_i32_0 = arith.constant 0 : i32
    return %arg0, %c0_i32 : i32, i32
  }
  func.func @transform_6(%arg0: i32) -> (i32, i32) {
    %c0_i32 = arith.constant 0 : i32
    %c0_i32_0 = arith.constant 0 : i32
    return %arg0, %c0_i32 : i32, i32
  }
}

module attributes {stable_mosaic.version = 11 : i64} {
  func.func @_proj_kernel(%arg0: i32, %arg1: memref<128x128xf32, #tpu.memory_space<vmem>>, %arg2: memref<128x128xf32, #tpu.memory_space<vmem>>, %arg3: memref<128x1xf32, #tpu.memory_space<vmem>>, %arg4: memref<128x1xf32, #tpu.memory_space<vmem>>, %arg5: memref<128x128xbf16, #tpu.memory_space<vmem>>, %arg6: memref<128x1xf32, #tpu.memory_space<vmem>>, %arg7: memref<128x1xf32, #tpu.memory_space<vmem>>) attributes {dimension_semantics = [#tpu.dimension_semantics<parallel>], iteration_bounds = array<i64: 2>, scalar_prefetch = 0 : i64, scratch_operands = 0 : i64, tpu.core_type = #tpu.core_type<tc>, window_params = [{transform_indices = @transform_0, window_bounds = array<i64: 128, 128>}, {pipeline_mode = #tpu.pipeline_mode<synchronous>, transform_indices = @transform_1, window_bounds = array<i64: 128, 128>}, {pipeline_mode = #tpu.pipeline_mode<synchronous>, transform_indices = @transform_2, window_bounds = array<i64: 128, 1>}, {pipeline_mode = #tpu.pipeline_mode<synchronous>, transform_indices = @transform_3, window_bounds = array<i64: 128, 1>}, {transform_indices = @transform_4, window_bounds = array<i64: 128, 128>}, {transform_indices = @transform_5, window_bounds = array<i64: 128, 1>}, {transform_indices = @transform_6, window_bounds = array<i64: 128, 1>}]} {
    %c0 = arith.constant 0 : index
    %c0_0 = arith.constant 0 : index
    %0 = vector.load %arg1[%c0, %c0_0] : memref<128x128xf32, #tpu.memory_space<vmem>>, vector<128x128xf32>
    %c0_1 = arith.constant 0 : index
    %c0_2 = arith.constant 0 : index
    %1 = vector.load %arg2[%c0_1, %c0_2] : memref<128x128xf32, #tpu.memory_space<vmem>>, vector<128x128xf32>
    %cst = arith.constant dense<0.000000e+00> : vector<128x128xf32>
    %2 = tpu.matmul %0, %1, %cst {dimension_numbers = #tpu.dot_dimension_numbers<[1], [0], [0], [1], [0, 0, 1, 1], [], []>} : vector<128x128xf32>, vector<128x128xf32>, vector<128x128xf32> -> vector<128x128xf32>
    %c0_3 = arith.constant 0 : index
    %c0_4 = arith.constant 0 : index
    %3 = vector.load %arg3[%c0_3, %c0_4] : memref<128x1xf32, #tpu.memory_space<vmem>>, vector<128x1xf32>
    %cst_5 = arith.constant dense<0.000000e+00> : vector<128x1xf32>
    %4 = tpu.matmul %2, %3, %cst_5 {dimension_numbers = #tpu.dot_dimension_numbers<[1], [0], [0], [1], [0, 0, 1, 1], [], []>} : vector<128x128xf32>, vector<128x1xf32>, vector<128x1xf32> -> vector<128x1xf32>
    %c0_6 = arith.constant 0 : index
    %c0_7 = arith.constant 0 : index
    %5 = vector.load %arg6[%c0_6, %c0_7] : memref<128x1xf32, #tpu.memory_space<vmem>>, vector<128x1xf32>
    tpu.vector_store %arg6[%c0_6, %c0_7], %4 {strides = array<i32>} : memref<128x1xf32, #tpu.memory_space<vmem>>, vector<128x1xf32>,
    %c0_8 = arith.constant 0 : index
    %c0_9 = arith.constant 0 : index
    %6 = vector.load %arg4[%c0_8, %c0_9] : memref<128x1xf32, #tpu.memory_space<vmem>>, vector<128x1xf32>
    %cst_10 = arith.constant dense<0.000000e+00> : vector<128x1xf32>
    %7 = tpu.matmul %2, %6, %cst_10 {dimension_numbers = #tpu.dot_dimension_numbers<[1], [0], [0], [1], [0, 0, 1, 1], [], []>} : vector<128x128xf32>, vector<128x1xf32>, vector<128x1xf32> -> vector<128x1xf32>
    %c0_11 = arith.constant 0 : index
    %c0_12 = arith.constant 0 : index
    %8 = vector.load %arg7[%c0_11, %c0_12] : memref<128x1xf32, #tpu.memory_space<vmem>>, vector<128x1xf32>
    tpu.vector_store %arg7[%c0_11, %c0_12], %7 {strides = array<i32>} : memref<128x1xf32, #tpu.memory_space<vmem>>, vector<128x1xf32>,
    %9 = arith.truncf %2 : vector<128x128xf32> to vector<128x128xbf16>
    %c0_13 = arith.constant 0 : index
    %c0_14 = arith.constant 0 : index
    %10 = vector.load %arg5[%c0_13, %c0_14] : memref<128x128xbf16, #tpu.memory_space<vmem>>, vector<128x128xbf16>
    tpu.vector_store %arg5[%c0_13, %c0_14], %9 {strides = array<i32>} : memref<128x128xbf16, #tpu.memory_space<vmem>>, vector<128x128xbf16>,
    return
  }
  func.func @transform_0(%arg0: i32) -> (i32, i32) {
    %c0_i32 = arith.constant 0 : i32
    %c0_i32_0 = arith.constant 0 : i32
    return %arg0, %c0_i32 : i32, i32
  }
  func.func @transform_1(%arg0: i32) -> (i32, i32) {
    %c0_i32 = arith.constant 0 : i32
    %c0_i32_0 = arith.constant 0 : i32
    %c0_i32_1 = arith.constant 0 : i32
    return %c0_i32, %c0_i32_0 : i32, i32
  }
  func.func @transform_2(%arg0: i32) -> (i32, i32) {
    %c0_i32 = arith.constant 0 : i32
    %c0_i32_0 = arith.constant 0 : i32
    %c0_i32_1 = arith.constant 0 : i32
    return %c0_i32, %c0_i32_0 : i32, i32
  }
  func.func @transform_3(%arg0: i32) -> (i32, i32) {
    %c0_i32 = arith.constant 0 : i32
    %c0_i32_0 = arith.constant 0 : i32
    %c0_i32_1 = arith.constant 0 : i32
    return %c0_i32, %c0_i32_0 : i32, i32
  }
  func.func @transform_4(%arg0: i32) -> (i32, i32) {
    %c0_i32 = arith.constant 0 : i32
    %c0_i32_0 = arith.constant 0 : i32
    return %arg0, %c0_i32 : i32, i32
  }
  func.func @transform_5(%arg0: i32) -> (i32, i32) {
    %c0_i32 = arith.constant 0 : i32
    %c0_i32_0 = arith.constant 0 : i32
    return %arg0, %c0_i32 : i32, i32
  }
  func.func @transform_6(%arg0: i32) -> (i32, i32) {
    %c0_i32 = arith.constant 0 : i32
    %c0_i32_0 = arith.constant 0 : i32
    return %arg0, %c0_i32 : i32, i32
  }
}

module attributes {stable_mosaic.version = 11 : i64} {
  func.func @kernel(%arg0: i32, %arg1: i32, %arg2: memref<128x128xbf16, #tpu.memory_space<vmem>>, %arg3: memref<128x4xf32, #tpu.memory_space<vmem>>, %arg4: memref<4x128xf32, #tpu.memory_space<vmem>>, %arg5: memref<128x128xbf16, #tpu.memory_space<vmem>>, %arg6: memref<1x128xf32, #tpu.memory_space<vmem>>, %arg7: memref<128x128xf32, #tpu.memory_space<vmem>>, %arg8: memref<128x4xf32, #tpu.memory_space<vmem>>, %arg9: memref<128x4xf32, #tpu.memory_space<vmem>>, %arg10: memref<128x128xf32, #tpu.memory_space<vmem>>) attributes {dimension_semantics = [#tpu.dimension_semantics<parallel>, #tpu.dimension_semantics<arbitrary>], iteration_bounds = array<i64: 2, 2>, scalar_prefetch = 0 : i64, scratch_operands = 3 : i64, tpu.core_type = #tpu.core_type<tc>, window_params = [{transform_indices = @transform_0, window_bounds = array<i64: 128, 128>}, {transform_indices = @transform_1, window_bounds = array<i64: 128, 4>}, {transform_indices = @transform_2, window_bounds = array<i64: 4, 128>}, {transform_indices = @transform_3, window_bounds = array<i64: 128, 128>}, {pipeline_mode = #tpu.pipeline_mode<synchronous>, transform_indices = @transform_4, window_bounds = array<i64: 1, 128>}, {transform_indices = @transform_5, window_bounds = array<i64: 128, 128>}]} {
    %c0_i32 = arith.constant 0 : i32
    %0 = arith.cmpi eq, %arg1, %c0_i32 : i32
    %1 = arith.extui %0 : i1 to i32
    %c0_i32_0 = arith.constant 0 : i32
    %2 = arith.cmpi ne, %1, %c0_i32_0 : i32
    scf.if %2 {
      %cst_88 = arith.constant 0xFF800000 : f32
      %148 = vector.broadcast %cst_88 : f32 to vector<128x4xf32>
      %c0_89 = arith.constant 0 : index
      %c0_90 = arith.constant 0 : index
      %149 = vector.load %arg8[%c0_89, %c0_90] : memref<128x4xf32, #tpu.memory_space<vmem>>, vector<128x4xf32>
      tpu.vector_store %arg8[%c0_89, %c0_90], %148 {strides = array<i32>} : memref<128x4xf32, #tpu.memory_space<vmem>>, vector<128x4xf32>,
      %cst_91 = arith.constant 0.000000e+00 : f32
      %150 = vector.broadcast %cst_91 : f32 to vector<128x4xf32>
      %c0_92 = arith.constant 0 : index
      %c0_93 = arith.constant 0 : index
      %151 = vector.load %arg9[%c0_92, %c0_93] : memref<128x4xf32, #tpu.memory_space<vmem>>, vector<128x4xf32>
      tpu.vector_store %arg9[%c0_92, %c0_93], %150 {strides = array<i32>} : memref<128x4xf32, #tpu.memory_space<vmem>>, vector<128x4xf32>,
      %cst_94 = arith.constant 0.000000e+00 : f32
      %152 = vector.broadcast %cst_94 : f32 to vector<128x128xf32>
      %c0_95 = arith.constant 0 : index
      %c0_96 = arith.constant 0 : index
      %153 = vector.load %arg10[%c0_95, %c0_96] : memref<128x128xf32, #tpu.memory_space<vmem>>, vector<128x128xf32>
      tpu.vector_store %arg10[%c0_95, %c0_96], %152 {strides = array<i32>} : memref<128x128xf32, #tpu.memory_space<vmem>>, vector<128x128xf32>,
    } else {
    }
    %c0 = arith.constant 0 : index
    %c0_1 = arith.constant 0 : index
    %3 = vector.load %arg5[%c0, %c0_1] : memref<128x128xbf16, #tpu.memory_space<vmem>>, vector<128x128xbf16>
    %4 = arith.extf %3 : vector<128x128xbf16> to vector<128x128xf32>
    %c0_2 = arith.constant 0 : index
    %c0_3 = arith.constant 0 : index
    %5 = vector.load %arg3[%c0_2, %c0_3] : memref<128x4xf32, #tpu.memory_space<vmem>>, vector<128x1xf32>
    %c0_4 = arith.constant 0 : index
    %c0_5 = arith.constant 0 : index
    %6 = vector.load %arg4[%c0_4, %c0_5] : memref<4x128xf32, #tpu.memory_space<vmem>>, vector<1x128xf32>
    %7 = vector.broadcast %5 : vector<128x1xf32> to vector<128x128xf32>
    %8 = vector.broadcast %6 : vector<1x128xf32> to vector<128x128xf32>
    %9 = arith.addf %7, %8 : vector<128x128xf32>
    %cst = arith.constant 0.000000e+00 : f32
    %10 = vector.broadcast %cst : f32 to vector<128x128xf32>
    %11 = arith.cmpf ogt, %9, %10 : vector<128x128xf32>
    %cst_6 = arith.constant 2.000000e-01 : f32
    %12 = vector.broadcast %cst_6 : f32 to vector<128x128xf32>
    %13 = arith.mulf %12, %9 : vector<128x128xf32>
    %14 = arith.select %11, %9, %13 : vector<128x128xi1>, vector<128x128xf32>
    %15 = arith.addf %14, %4 : vector<128x128xf32>
    %c0_7 = arith.constant 0 : index
    %c0_8 = arith.constant 0 : index
    %16 = vector.load %arg8[%c0_7, %c0_8] : memref<128x4xf32, #tpu.memory_space<vmem>>, vector<128x1xf32>
    %cst_9 = arith.constant dense<0xFF800000> : vector<128xf32>
    %17 = vector.multi_reduction <maximumf>, %15, %cst_9 [1] : vector<128x128xf32> to vector<128xf32>
    %18 = vector.shape_cast %17 : vector<128xf32> to vector<128x1xf32>
    %19 = arith.maximumf %16, %18 : vector<128x1xf32>
    %20 = arith.subf %16, %19 : vector<128x1xf32>
    %21 = math.exp %20 : vector<128x1xf32>
    %22 = vector.broadcast %19 : vector<128x1xf32> to vector<128x128xf32>
    %23 = arith.subf %15, %22 : vector<128x128xf32>
    %24 = math.exp %23 : vector<128x128xf32>
    %c0_10 = arith.constant 0 : index
    %c0_11 = arith.constant 0 : index
    %25 = vector.load %arg9[%c0_10, %c0_11] : memref<128x4xf32, #tpu.memory_space<vmem>>, vector<128x1xf32>
    %26 = arith.mulf %21, %25 : vector<128x1xf32>
    %cst_12 = arith.constant dense<0.000000e+00> : vector<128xf32>
    %27 = vector.multi_reduction <add>, %24, %cst_12 [1] : vector<128x128xf32> to vector<128xf32>
    %28 = vector.shape_cast %27 : vector<128xf32> to vector<128x1xf32>
    %29 = arith.addf %26, %28 : vector<128x1xf32>
    %c0_13 = arith.constant 0 : index
    %c0_14 = arith.constant 0 : index
    %30 = vector.load %arg9[%c0_13, %c0_14] : memref<128x4xf32, #tpu.memory_space<vmem>>, vector<128x1xf32>
    tpu.vector_store %arg9[%c0_13, %c0_14], %29 {strides = array<i32>} : memref<128x4xf32, #tpu.memory_space<vmem>>, vector<128x1xf32>,
    %31 = arith.truncf %24 : vector<128x128xf32> to vector<128x128xbf16>
    %c0_15 = arith.constant 0 : index
    %c0_16 = arith.constant 0 : index
    %32 = vector.load %arg2[%c0_15, %c0_16] : memref<128x128xbf16, #tpu.memory_space<vmem>>, vector<128x16xbf16>
    %cst_17 = arith.constant dense<0.000000e+00> : vector<128x16xf32>
    %33 = tpu.matmul %31, %32, %cst_17 {dimension_numbers = #tpu.dot_dimension_numbers<[1], [0], [0], [1], [0, 0, 1, 1], [], []>} : vector<128x128xbf16>, vector<128x16xbf16>, vector<128x16xf32> -> vector<128x16xf32>
    %c0_18 = arith.constant 0 : index
    %c0_19 = arith.constant 0 : index
    %34 = vector.load %arg10[%c0_18, %c0_19] : memref<128x128xf32, #tpu.memory_space<vmem>>, vector<128x16xf32>
    %35 = vector.broadcast %21 : vector<128x1xf32> to vector<128x16xf32>
    %36 = arith.mulf %35, %34 : vector<128x16xf32>
    %37 = arith.addf %36, %33 : vector<128x16xf32>
    %c0_20 = arith.constant 0 : index
    %c0_21 = arith.constant 0 : index
    %38 = vector.load %arg10[%c0_20, %c0_21] : memref<128x128xf32, #tpu.memory_space<vmem>>, vector<128x16xf32>
    tpu.vector_store %arg10[%c0_20, %c0_21], %37 {strides = array<i32>} : memref<128x128xf32, #tpu.memory_space<vmem>>, vector<128x16xf32>,
    %c0_22 = arith.constant 0 : index
    %c0_23 = arith.constant 0 : index
    %39 = vector.load %arg8[%c0_22, %c0_23] : memref<128x4xf32, #tpu.memory_space<vmem>>, vector<128x1xf32>
    tpu.vector_store %arg8[%c0_22, %c0_23], %19 {strides = array<i32>} : memref<128x4xf32, #tpu.memory_space<vmem>>, vector<128x1xf32>,
    %c0_24 = arith.constant 0 : index
    %c1 = arith.constant 1 : index
    %40 = vector.load %arg3[%c0_24, %c1] : memref<128x4xf32, #tpu.memory_space<vmem>>, vector<128x1xf32>
    %c1_25 = arith.constant 1 : index
    %c0_26 = arith.constant 0 : index
    %41 = vector.load %arg4[%c1_25, %c0_26] : memref<4x128xf32, #tpu.memory_space<vmem>>, vector<1x128xf32>
    %42 = vector.broadcast %40 : vector<128x1xf32> to vector<128x128xf32>
    %43 = vector.broadcast %41 : vector<1x128xf32> to vector<128x128xf32>
    %44 = arith.addf %42, %43 : vector<128x128xf32>
    %cst_27 = arith.constant 0.000000e+00 : f32
    %45 = vector.broadcast %cst_27 : f32 to vector<128x128xf32>
    %46 = arith.cmpf ogt, %44, %45 : vector<128x128xf32>
    %cst_28 = arith.constant 2.000000e-01 : f32
    %47 = vector.broadcast %cst_28 : f32 to vector<128x128xf32>
    %48 = arith.mulf %47, %44 : vector<128x128xf32>
    %49 = arith.select %46, %44, %48 : vector<128x128xi1>, vector<128x128xf32>
    %50 = arith.addf %49, %4 : vector<128x128xf32>
    %c0_29 = arith.constant 0 : index
    %c1_30 = arith.constant 1 : index
    %51 = vector.load %arg8[%c0_29, %c1_30] : memref<128x4xf32, #tpu.memory_space<vmem>>, vector<128x1xf32>
    %cst_31 = arith.constant dense<0xFF800000> : vector<128xf32>
    %52 = vector.multi_reduction <maximumf>, %50, %cst_31 [1] : vector<128x128xf32> to vector<128xf32>
    %53 = vector.shape_cast %52 : vector<128xf32> to vector<128x1xf32>
    %54 = arith.maximumf %51, %53 : vector<128x1xf32>
    %55 = arith.subf %51, %54 : vector<128x1xf32>
    %56 = math.exp %55 : vector<128x1xf32>
    %57 = vector.broadcast %54 : vector<128x1xf32> to vector<128x128xf32>
    %58 = arith.subf %50, %57 : vector<128x128xf32>
    %59 = math.exp %58 : vector<128x128xf32>
    %c0_32 = arith.constant 0 : index
    %c1_33 = arith.constant 1 : index
    %60 = vector.load %arg9[%c0_32, %c1_33] : memref<128x4xf32, #tpu.memory_space<vmem>>, vector<128x1xf32>
    %61 = arith.mulf %56, %60 : vector<128x1xf32>
    %cst_34 = arith.constant dense<0.000000e+00> : vector<128xf32>
    %62 = vector.multi_reduction <add>, %59, %cst_34 [1] : vector<128x128xf32> to vector<128xf32>
    %63 = vector.shape_cast %62 : vector<128xf32> to vector<128x1xf32>
    %64 = arith.addf %61, %63 : vector<128x1xf32>
    %c0_35 = arith.constant 0 : index
    %c1_36 = arith.constant 1 : index
    %65 = vector.load %arg9[%c0_35, %c1_36] : memref<128x4xf32, #tpu.memory_space<vmem>>, vector<128x1xf32>
    tpu.vector_store %arg9[%c0_35, %c1_36], %64 {strides = array<i32>} : memref<128x4xf32, #tpu.memory_space<vmem>>, vector<128x1xf32>,
    %66 = arith.truncf %59 : vector<128x128xf32> to vector<128x128xbf16>
    %c0_37 = arith.constant 0 : index
    %c16 = arith.constant 16 : index
    %67 = vector.load %arg2[%c0_37, %c16] : memref<128x128xbf16, #tpu.memory_space<vmem>>, vector<128x16xbf16>
    %cst_38 = arith.constant dense<0.000000e+00> : vector<128x16xf32>
    %68 = tpu.matmul %66, %67, %cst_38 {dimension_numbers = #tpu.dot_dimension_numbers<[1], [0], [0], [1], [0, 0, 1, 1], [], []>} : vector<128x128xbf16>, vector<128x16xbf16>, vector<128x16xf32> -> vector<128x16xf32>
    %c0_39 = arith.constant 0 : index
    %c16_40 = arith.constant 16 : index
    %69 = vector.load %arg10[%c0_39, %c16_40] : memref<128x128xf32, #tpu.memory_space<vmem>>, vector<128x16xf32>
    %70 = vector.broadcast %56 : vector<128x1xf32> to vector<128x16xf32>
    %71 = arith.mulf %70, %69 : vector<128x16xf32>
    %72 = arith.addf %71, %68 : vector<128x16xf32>
    %c0_41 = arith.constant 0 : index
    %c16_42 = arith.constant 16 : index
    %73 = vector.load %arg10[%c0_41, %c16_42] : memref<128x128xf32, #tpu.memory_space<vmem>>, vector<128x16xf32>
    tpu.vector_store %arg10[%c0_41, %c16_42], %72 {strides = array<i32>} : memref<128x128xf32, #tpu.memory_space<vmem>>, vector<128x16xf32>,
    %c0_43 = arith.constant 0 : index
    %c1_44 = arith.constant 1 : index
    %74 = vector.load %arg8[%c0_43, %c1_44] : memref<128x4xf32, #tpu.memory_space<vmem>>, vector<128x1xf32>
    tpu.vector_store %arg8[%c0_43, %c1_44], %54 {strides = array<i32>} : memref<128x4xf32, #tpu.memory_space<vmem>>, vector<128x1xf32>,
    %c0_45 = arith.constant 0 : index
    %c2 = arith.constant 2 : index
    %75 = vector.load %arg3[%c0_45, %c2] : memref<128x4xf32, #tpu.memory_space<vmem>>, vector<128x1xf32>
    %c2_46 = arith.constant 2 : index
    %c0_47 = arith.constant 0 : index
    %76 = vector.load %arg4[%c2_46, %c0_47] : memref<4x128xf32, #tpu.memory_space<vmem>>, vector<1x128xf32>
    %77 = vector.broadcast %75 : vector<128x1xf32> to vector<128x128xf32>
    %78 = vector.broadcast %76 : vector<1x128xf32> to vector<128x128xf32>
    %79 = arith.addf %77, %78 : vector<128x128xf32>
    %cst_48 = arith.constant 0.000000e+00 : f32
    %80 = vector.broadcast %cst_48 : f32 to vector<128x128xf32>
    %81 = arith.cmpf ogt, %79, %80 : vector<128x128xf32>
    %cst_49 = arith.constant 2.000000e-01 : f32
    %82 = vector.broadcast %cst_49 : f32 to vector<128x128xf32>
    %83 = arith.mulf %82, %79 : vector<128x128xf32>
    %84 = arith.select %81, %79, %83 : vector<128x128xi1>, vector<128x128xf32>
    %85 = arith.addf %84, %4 : vector<128x128xf32>
    %c0_50 = arith.constant 0 : index
    %c2_51 = arith.constant 2 : index
    %86 = vector.load %arg8[%c0_50, %c2_51] : memref<128x4xf32, #tpu.memory_space<vmem>>, vector<128x1xf32>
    %cst_52 = arith.constant dense<0xFF800000> : vector<128xf32>
    %87 = vector.multi_reduction <maximumf>, %85, %cst_52 [1] : vector<128x128xf32> to vector<128xf32>
    %88 = vector.shape_cast %87 : vector<128xf32> to vector<128x1xf32>
    %89 = arith.maximumf %86, %88 : vector<128x1xf32>
    %90 = arith.subf %86, %89 : vector<128x1xf32>
    %91 = math.exp %90 : vector<128x1xf32>
    %92 = vector.broadcast %89 : vector<128x1xf32> to vector<128x128xf32>
    %93 = arith.subf %85, %92 : vector<128x128xf32>
    %94 = math.exp %93 : vector<128x128xf32>
    %c0_53 = arith.constant 0 : index
    %c2_54 = arith.constant 2 : index
    %95 = vector.load %arg9[%c0_53, %c2_54] : memref<128x4xf32, #tpu.memory_space<vmem>>, vector<128x1xf32>
    %96 = arith.mulf %91, %95 : vector<128x1xf32>
    %cst_55 = arith.constant dense<0.000000e+00> : vector<128xf32>
    %97 = vector.multi_reduction <add>, %94, %cst_55 [1] : vector<128x128xf32> to vector<128xf32>
    %98 = vector.shape_cast %97 : vector<128xf32> to vector<128x1xf32>
    %99 = arith.addf %96, %98 : vector<128x1xf32>
    %c0_56 = arith.constant 0 : index
    %c2_57 = arith.constant 2 : index
    %100 = vector.load %arg9[%c0_56, %c2_57] : memref<128x4xf32, #tpu.memory_space<vmem>>, vector<128x1xf32>
    tpu.vector_store %arg9[%c0_56, %c2_57], %99 {strides = array<i32>} : memref<128x4xf32, #tpu.memory_space<vmem>>, vector<128x1xf32>,
    %101 = arith.truncf %94 : vector<128x128xf32> to vector<128x128xbf16>
    %c0_58 = arith.constant 0 : index
    %c32 = arith.constant 32 : index
    %102 = vector.load %arg2[%c0_58, %c32] : memref<128x128xbf16, #tpu.memory_space<vmem>>, vector<128x16xbf16>
    %cst_59 = arith.constant dense<0.000000e+00> : vector<128x16xf32>
    %103 = tpu.matmul %101, %102, %cst_59 {dimension_numbers = #tpu.dot_dimension_numbers<[1], [0], [0], [1], [0, 0, 1, 1], [], []>} : vector<128x128xbf16>, vector<128x16xbf16>, vector<128x16xf32> -> vector<128x16xf32>
    %c0_60 = arith.constant 0 : index
    %c32_61 = arith.constant 32 : index
    %104 = vector.load %arg10[%c0_60, %c32_61] : memref<128x128xf32, #tpu.memory_space<vmem>>, vector<128x16xf32>
    %105 = vector.broadcast %91 : vector<128x1xf32> to vector<128x16xf32>
    %106 = arith.mulf %105, %104 : vector<128x16xf32>
    %107 = arith.addf %106, %103 : vector<128x16xf32>
    %c0_62 = arith.constant 0 : index
    %c32_63 = arith.constant 32 : index
    %108 = vector.load %arg10[%c0_62, %c32_63] : memref<128x128xf32, #tpu.memory_space<vmem>>, vector<128x16xf32>
    tpu.vector_store %arg10[%c0_62, %c32_63], %107 {strides = array<i32>} : memref<128x128xf32, #tpu.memory_space<vmem>>, vector<128x16xf32>,
    %c0_64 = arith.constant 0 : index
    %c2_65 = arith.constant 2 : index
    %109 = vector.load %arg8[%c0_64, %c2_65] : memref<128x4xf32, #tpu.memory_space<vmem>>, vector<128x1xf32>
    tpu.vector_store %arg8[%c0_64, %c2_65], %89 {strides = array<i32>} : memref<128x4xf32, #tpu.memory_space<vmem>>, vector<128x1xf32>,
    %c0_66 = arith.constant 0 : index
    %c3 = arith.constant 3 : index
    %110 = vector.load %arg3[%c0_66, %c3] : memref<128x4xf32, #tpu.memory_space<vmem>>, vector<128x1xf32>
    %c3_67 = arith.constant 3 : index
    %c0_68 = arith.constant 0 : index
    %111 = vector.load %arg4[%c3_67, %c0_68] : memref<4x128xf32, #tpu.memory_space<vmem>>, vector<1x128xf32>
    %112 = vector.broadcast %110 : vector<128x1xf32> to vector<128x128xf32>
    %113 = vector.broadcast %111 : vector<1x128xf32> to vector<128x128xf32>
    %114 = arith.addf %112, %113 : vector<128x128xf32>
    %cst_69 = arith.constant 0.000000e+00 : f32
    %115 = vector.broadcast %cst_69 : f32 to vector<128x128xf32>
    %116 = arith.cmpf ogt, %114, %115 : vector<128x128xf32>
    %cst_70 = arith.constant 2.000000e-01 : f32
    %117 = vector.broadcast %cst_70 : f32 to vector<128x128xf32>
    %118 = arith.mulf %117, %114 : vector<128x128xf32>
    %119 = arith.select %116, %114, %118 : vector<128x128xi1>, vector<128x128xf32>
    %120 = arith.addf %119, %4 : vector<128x128xf32>
    %c0_71 = arith.constant 0 : index
    %c3_72 = arith.constant 3 : index
    %121 = vector.load %arg8[%c0_71, %c3_72] : memref<128x4xf32, #tpu.memory_space<vmem>>, vector<128x1xf32>
    %cst_73 = arith.constant dense<0xFF800000> : vector<128xf32>
    %122 = vector.multi_reduction <maximumf>, %120, %cst_73 [1] : vector<128x128xf32> to vector<128xf32>
    %123 = vector.shape_cast %122 : vector<128xf32> to vector<128x1xf32>
    %124 = arith.maximumf %121, %123 : vector<128x1xf32>
    %125 = arith.subf %121, %124 : vector<128x1xf32>
    %126 = math.exp %125 : vector<128x1xf32>
    %127 = vector.broadcast %124 : vector<128x1xf32> to vector<128x128xf32>
    %128 = arith.subf %120, %127 : vector<128x128xf32>
    %129 = math.exp %128 : vector<128x128xf32>
    %c0_74 = arith.constant 0 : index
    %c3_75 = arith.constant 3 : index
    %130 = vector.load %arg9[%c0_74, %c3_75] : memref<128x4xf32, #tpu.memory_space<vmem>>, vector<128x1xf32>
    %131 = arith.mulf %126, %130 : vector<128x1xf32>
    %cst_76 = arith.constant dense<0.000000e+00> : vector<128xf32>
    %132 = vector.multi_reduction <add>, %129, %cst_76 [1] : vector<128x128xf32> to vector<128xf32>
    %133 = vector.shape_cast %132 : vector<128xf32> to vector<128x1xf32>
    %134 = arith.addf %131, %133 : vector<128x1xf32>
    %c0_77 = arith.constant 0 : index
    %c3_78 = arith.constant 3 : index
    %135 = vector.load %arg9[%c0_77, %c3_78] : memref<128x4xf32, #tpu.memory_space<vmem>>, vector<128x1xf32>
    tpu.vector_store %arg9[%c0_77, %c3_78], %134 {strides = array<i32>} : memref<128x4xf32, #tpu.memory_space<vmem>>, vector<128x1xf32>,
    %136 = arith.truncf %129 : vector<128x128xf32> to vector<128x128xbf16>
    %c0_79 = arith.constant 0 : index
    %c48 = arith.constant 48 : index
    %137 = vector.load %arg2[%c0_79, %c48] : memref<128x128xbf16, #tpu.memory_space<vmem>>, vector<128x16xbf16>
    %cst_80 = arith.constant dense<0.000000e+00> : vector<128x16xf32>
    %138 = tpu.matmul %136, %137, %cst_80 {dimension_numbers = #tpu.dot_dimension_numbers<[1], [0], [0], [1], [0, 0, 1, 1], [], []>} : vector<128x128xbf16>, vector<128x16xbf16>, vector<128x16xf32> -> vector<128x16xf32>
    %c0_81 = arith.constant 0 : index
    %c48_82 = arith.constant 48 : index
    %139 = vector.load %arg10[%c0_81, %c48_82] : memref<128x128xf32, #tpu.memory_space<vmem>>, vector<128x16xf32>
    %140 = vector.broadcast %126 : vector<128x1xf32> to vector<128x16xf32>
    %141 = arith.mulf %140, %139 : vector<128x16xf32>
    %142 = arith.addf %141, %138 : vector<128x16xf32>
    %c0_83 = arith.constant 0 : index
    %c48_84 = arith.constant 48 : index
    %143 = vector.load %arg10[%c0_83, %c48_84] : memref<128x128xf32, #tpu.memory_space<vmem>>, vector<128x16xf32>
    tpu.vector_store %arg10[%c0_83, %c48_84], %142 {strides = array<i32>} : memref<128x128xf32, #tpu.memory_space<vmem>>, vector<128x16xf32>,
    %c0_85 = arith.constant 0 : index
    %c3_86 = arith.constant 3 : index
    %144 = vector.load %arg8[%c0_85, %c3_86] : memref<128x4xf32, #tpu.memory_space<vmem>>, vector<128x1xf32>
    tpu.vector_store %arg8[%c0_85, %c3_86], %124 {strides = array<i32>} : memref<128x4xf32, #tpu.memory_space<vmem>>, vector<128x1xf32>,
    %c1_i32 = arith.constant 1 : i32
    %145 = arith.cmpi eq, %arg1, %c1_i32 : i32
    %146 = arith.extui %145 : i1 to i32
    %c0_i32_87 = arith.constant 0 : i32
    %147 = arith.cmpi ne, %146, %c0_i32_87 : i32
    scf.if %147 {
      %c0_88 = arith.constant 0 : index
      %c0_89 = arith.constant 0 : index
      %148 = vector.load %arg9[%c0_88, %c0_89] : memref<128x4xf32, #tpu.memory_space<vmem>>, vector<128x4xf32>
      %cst_90 = arith.constant 9.99999968E-21 : f32
      %149 = vector.broadcast %cst_90 : f32 to vector<128x4xf32>
      %150 = arith.maximumf %148, %149 : vector<128x4xf32>
      %151 = tpu.reciprocal %150 {approx = true} : vector<128x4xf32> -> vector<128x4xf32>
      %c0_91 = arith.constant 0 : index
      %c0_92 = arith.constant 0 : index
      %152 = vector.load %arg10[%c0_91, %c0_92] : memref<128x128xf32, #tpu.memory_space<vmem>>, vector<128x128xf32>
      %153 = vector.extract_strided_slice %152 {offsets = [0, 0], sizes = [128, 16], strides = [1, 1]} : vector<128x128xf32> to vector<128x16xf32>
      %154 = vector.extract_strided_slice %151 {offsets = [0, 0], sizes = [128, 1], strides = [1, 1]} : vector<128x4xf32> to vector<128x1xf32>
      %155 = vector.broadcast %154 : vector<128x1xf32> to vector<128x16xf32>
      %156 = arith.mulf %153, %155 : vector<128x16xf32>
      %157 = vector.extract_strided_slice %152 {offsets = [0, 16], sizes = [128, 16], strides = [1, 1]} : vector<128x128xf32> to vector<128x16xf32>
      %158 = vector.extract_strided_slice %151 {offsets = [0, 1], sizes = [128, 1], strides = [1, 1]} : vector<128x4xf32> to vector<128x1xf32>
      %159 = vector.broadcast %158 : vector<128x1xf32> to vector<128x16xf32>
      %160 = arith.mulf %157, %159 : vector<128x16xf32>
      %161 = vector.extract_strided_slice %152 {offsets = [0, 32], sizes = [128, 16], strides = [1, 1]} : vector<128x128xf32> to vector<128x16xf32>
      %162 = vector.extract_strided_slice %151 {offsets = [0, 2], sizes = [128, 1], strides = [1, 1]} : vector<128x4xf32> to vector<128x1xf32>
      %163 = vector.broadcast %162 : vector<128x1xf32> to vector<128x16xf32>
      %164 = arith.mulf %161, %163 : vector<128x16xf32>
      %165 = vector.extract_strided_slice %152 {offsets = [0, 48], sizes = [128, 16], strides = [1, 1]} : vector<128x128xf32> to vector<128x16xf32>
      %166 = vector.extract_strided_slice %151 {offsets = [0, 3], sizes = [128, 1], strides = [1, 1]} : vector<128x4xf32> to vector<128x1xf32>
      %167 = vector.broadcast %166 : vector<128x1xf32> to vector<128x16xf32>
      %168 = arith.mulf %165, %167 : vector<128x16xf32>
      %cst_93 = arith.constant 0.000000e+00 : f32
      %169 = vector.broadcast %cst_93 : f32 to vector<128x64xf32>
      %170 = tpu.concatenate %156, %160, %164, %168, %169 in 1 : vector<128x16xf32>, vector<128x16xf32>, vector<128x16xf32>, vector<128x16xf32>, vector<128x64xf32> -> vector<128x128xf32>
      %c0_94 = arith.constant 0 : index
      %c0_95 = arith.constant 0 : index
      %171 = vector.load %arg6[%c0_94, %c0_95] : memref<1x128xf32, #tpu.memory_space<vmem>>, vector<1x128xf32>
      %172 = vector.broadcast %171 : vector<1x128xf32> to vector<128x128xf32>
      %173 = arith.addf %170, %172 : vector<128x128xf32>
      %cst_96 = arith.constant 0.000000e+00 : f32
      %174 = vector.broadcast %cst_96 : f32 to vector<128x128xf32>
      %175 = arith.cmpf ogt, %173, %174 : vector<128x128xf32>
      %176 = math.exp %173 : vector<128x128xf32>
      %cst_97 = arith.constant 1.000000e+00 : f32
      %177 = vector.broadcast %cst_97 : f32 to vector<128x128xf32>
      %178 = arith.subf %176, %177 : vector<128x128xf32>
      %179 = arith.select %175, %173, %178 : vector<128x128xi1>, vector<128x128xf32>
      %c0_98 = arith.constant 0 : index
      %c0_99 = arith.constant 0 : index
      %180 = vector.load %arg7[%c0_98, %c0_99] : memref<128x128xf32, #tpu.memory_space<vmem>>, vector<128x128xf32>
      tpu.vector_store %arg7[%c0_98, %c0_99], %179 {strides = array<i32>} : memref<128x128xf32, #tpu.memory_space<vmem>>, vector<128x128xf32>,
    } else {
    }
    return
  }
  func.func @transform_0(%arg0: i32, %arg1: i32) -> (i32, i32) {
    %c0_i32 = arith.constant 0 : i32
    %c0_i32_0 = arith.constant 0 : i32
    return %arg1, %c0_i32 : i32, i32
  }
  func.func @transform_1(%arg0: i32, %arg1: i32) -> (i32, i32) {
    %c0_i32 = arith.constant 0 : i32
    %c0_i32_0 = arith.constant 0 : i32
    return %arg0, %c0_i32 : i32, i32
  }
  func.func @transform_2(%arg0: i32, %arg1: i32) -> (i32, i32) {
    %c0_i32 = arith.constant 0 : i32
    %c0_i32_0 = arith.constant 0 : i32
    return %c0_i32, %arg1 : i32, i32
  }
  func.func @transform_3(%arg0: i32, %arg1: i32) -> (i32, i32) {
    %c0_i32 = arith.constant 0 : i32
    return %arg0, %arg1 : i32, i32
  }
  func.func @transform_4(%arg0: i32, %arg1: i32) -> (i32, i32) {
    %c0_i32 = arith.constant 0 : i32
    %c0_i32_0 = arith.constant 0 : i32
    %c0_i32_1 = arith.constant 0 : i32
    return %c0_i32, %c0_i32_0 : i32, i32
  }
  func.func @transform_5(%arg0: i32, %arg1: i32) -> (i32, i32) {
    %c0_i32 = arith.constant 0 : i32
    %c0_i32_0 = arith.constant 0 : i32
    return %arg0, %c0_i32 : i32, i32
  }
}

module attributes {stable_mosaic.version = 11 : i64} {
  func.func @kernel(%arg0: i32, %arg1: i32, %arg2: memref<128x128xbf16, #tpu.memory_space<vmem>>, %arg3: memref<128x1xf32, #tpu.memory_space<vmem>>, %arg4: memref<1x128xf32, #tpu.memory_space<vmem>>, %arg5: memref<128x128xbf16, #tpu.memory_space<vmem>>, %arg6: memref<1x128xf32, #tpu.memory_space<vmem>>, %arg7: memref<128x128xf32, #tpu.memory_space<vmem>>, %arg8: memref<128x1xf32, #tpu.memory_space<vmem>>, %arg9: memref<128x1xf32, #tpu.memory_space<vmem>>, %arg10: memref<128x128xf32, #tpu.memory_space<vmem>>) attributes {dimension_semantics = [#tpu.dimension_semantics<parallel>, #tpu.dimension_semantics<arbitrary>], iteration_bounds = array<i64: 2, 2>, scalar_prefetch = 0 : i64, scratch_operands = 3 : i64, tpu.core_type = #tpu.core_type<tc>, window_params = [{transform_indices = @transform_0, window_bounds = array<i64: 128, 128>}, {transform_indices = @transform_1, window_bounds = array<i64: 128, 1>}, {transform_indices = @transform_2, window_bounds = array<i64: 1, 128>}, {transform_indices = @transform_3, window_bounds = array<i64: 128, 128>}, {pipeline_mode = #tpu.pipeline_mode<synchronous>, transform_indices = @transform_4, window_bounds = array<i64: 1, 128>}, {transform_indices = @transform_5, window_bounds = array<i64: 128, 128>}]} {
    %c0_i32 = arith.constant 0 : i32
    %0 = arith.cmpi eq, %arg1, %c0_i32 : i32
    %1 = arith.extui %0 : i1 to i32
    %c0_i32_0 = arith.constant 0 : i32
    %2 = arith.cmpi ne, %1, %c0_i32_0 : i32
    scf.if %2 {
      %cst_25 = arith.constant 0xFF800000 : f32
      %43 = vector.broadcast %cst_25 : f32 to vector<128x1xf32>
      %c0_26 = arith.constant 0 : index
      %c0_27 = arith.constant 0 : index
      %44 = vector.load %arg8[%c0_26, %c0_27] : memref<128x1xf32, #tpu.memory_space<vmem>>, vector<128x1xf32>
      tpu.vector_store %arg8[%c0_26, %c0_27], %43 {strides = array<i32>} : memref<128x1xf32, #tpu.memory_space<vmem>>, vector<128x1xf32>,
      %cst_28 = arith.constant 0.000000e+00 : f32
      %45 = vector.broadcast %cst_28 : f32 to vector<128x1xf32>
      %c0_29 = arith.constant 0 : index
      %c0_30 = arith.constant 0 : index
      %46 = vector.load %arg9[%c0_29, %c0_30] : memref<128x1xf32, #tpu.memory_space<vmem>>, vector<128x1xf32>
      tpu.vector_store %arg9[%c0_29, %c0_30], %45 {strides = array<i32>} : memref<128x1xf32, #tpu.memory_space<vmem>>, vector<128x1xf32>,
      %cst_31 = arith.constant 0.000000e+00 : f32
      %47 = vector.broadcast %cst_31 : f32 to vector<128x128xf32>
      %c0_32 = arith.constant 0 : index
      %c0_33 = arith.constant 0 : index
      %48 = vector.load %arg10[%c0_32, %c0_33] : memref<128x128xf32, #tpu.memory_space<vmem>>, vector<128x128xf32>
      tpu.vector_store %arg10[%c0_32, %c0_33], %47 {strides = array<i32>} : memref<128x128xf32, #tpu.memory_space<vmem>>, vector<128x128xf32>,
    } else {
    }
    %c0 = arith.constant 0 : index
    %c0_1 = arith.constant 0 : index
    %3 = vector.load %arg5[%c0, %c0_1] : memref<128x128xbf16, #tpu.memory_space<vmem>>, vector<128x128xbf16>
    %4 = arith.extf %3 : vector<128x128xbf16> to vector<128x128xf32>
    %c0_2 = arith.constant 0 : index
    %c0_3 = arith.constant 0 : index
    %5 = vector.load %arg3[%c0_2, %c0_3] : memref<128x1xf32, #tpu.memory_space<vmem>>, vector<128x1xf32>
    %c0_4 = arith.constant 0 : index
    %c0_5 = arith.constant 0 : index
    %6 = vector.load %arg4[%c0_4, %c0_5] : memref<1x128xf32, #tpu.memory_space<vmem>>, vector<1x128xf32>
    %7 = vector.broadcast %5 : vector<128x1xf32> to vector<128x128xf32>
    %8 = vector.broadcast %6 : vector<1x128xf32> to vector<128x128xf32>
    %9 = arith.addf %7, %8 : vector<128x128xf32>
    %cst = arith.constant 0.000000e+00 : f32
    %10 = vector.broadcast %cst : f32 to vector<128x128xf32>
    %11 = arith.cmpf ogt, %9, %10 : vector<128x128xf32>
    %cst_6 = arith.constant 2.000000e-01 : f32
    %12 = vector.broadcast %cst_6 : f32 to vector<128x128xf32>
    %13 = arith.mulf %12, %9 : vector<128x128xf32>
    %14 = arith.select %11, %9, %13 : vector<128x128xi1>, vector<128x128xf32>
    %15 = arith.addf %14, %4 : vector<128x128xf32>
    %c0_7 = arith.constant 0 : index
    %c0_8 = arith.constant 0 : index
    %16 = vector.load %arg8[%c0_7, %c0_8] : memref<128x1xf32, #tpu.memory_space<vmem>>, vector<128x1xf32>
    %cst_9 = arith.constant dense<0xFF800000> : vector<128xf32>
    %17 = vector.multi_reduction <maximumf>, %15, %cst_9 [1] : vector<128x128xf32> to vector<128xf32>
    %18 = vector.shape_cast %17 : vector<128xf32> to vector<128x1xf32>
    %19 = arith.maximumf %16, %18 : vector<128x1xf32>
    %20 = arith.subf %16, %19 : vector<128x1xf32>
    %21 = math.exp %20 : vector<128x1xf32>
    %22 = vector.broadcast %19 : vector<128x1xf32> to vector<128x128xf32>
    %23 = arith.subf %15, %22 : vector<128x128xf32>
    %24 = math.exp %23 : vector<128x128xf32>
    %c0_10 = arith.constant 0 : index
    %c0_11 = arith.constant 0 : index
    %25 = vector.load %arg9[%c0_10, %c0_11] : memref<128x1xf32, #tpu.memory_space<vmem>>, vector<128x1xf32>
    %26 = arith.mulf %21, %25 : vector<128x1xf32>
    %cst_12 = arith.constant dense<0.000000e+00> : vector<128xf32>
    %27 = vector.multi_reduction <add>, %24, %cst_12 [1] : vector<128x128xf32> to vector<128xf32>
    %28 = vector.shape_cast %27 : vector<128xf32> to vector<128x1xf32>
    %29 = arith.addf %26, %28 : vector<128x1xf32>
    %c0_13 = arith.constant 0 : index
    %c0_14 = arith.constant 0 : index
    %30 = vector.load %arg9[%c0_13, %c0_14] : memref<128x1xf32, #tpu.memory_space<vmem>>, vector<128x1xf32>
    tpu.vector_store %arg9[%c0_13, %c0_14], %29 {strides = array<i32>} : memref<128x1xf32, #tpu.memory_space<vmem>>, vector<128x1xf32>,
    %31 = arith.truncf %24 : vector<128x128xf32> to vector<128x128xbf16>
    %c0_15 = arith.constant 0 : index
    %c0_16 = arith.constant 0 : index
    %32 = vector.load %arg2[%c0_15, %c0_16] : memref<128x128xbf16, #tpu.memory_space<vmem>>, vector<128x128xbf16>
    %cst_17 = arith.constant dense<0.000000e+00> : vector<128x128xf32>
    %33 = tpu.matmul %31, %32, %cst_17 {dimension_numbers = #tpu.dot_dimension_numbers<[1], [0], [0], [1], [0, 0, 1, 1], [], []>} : vector<128x128xbf16>, vector<128x128xbf16>, vector<128x128xf32> -> vector<128x128xf32>
    %c0_18 = arith.constant 0 : index
    %c0_19 = arith.constant 0 : index
    %34 = vector.load %arg10[%c0_18, %c0_19] : memref<128x128xf32, #tpu.memory_space<vmem>>, vector<128x128xf32>
    %35 = vector.broadcast %21 : vector<128x1xf32> to vector<128x128xf32>
    %36 = arith.mulf %35, %34 : vector<128x128xf32>
    %37 = arith.addf %36, %33 : vector<128x128xf32>
    %c0_20 = arith.constant 0 : index
    %c0_21 = arith.constant 0 : index
    %38 = vector.load %arg10[%c0_20, %c0_21] : memref<128x128xf32, #tpu.memory_space<vmem>>, vector<128x128xf32>
    tpu.vector_store %arg10[%c0_20, %c0_21], %37 {strides = array<i32>} : memref<128x128xf32, #tpu.memory_space<vmem>>, vector<128x128xf32>,
    %c0_22 = arith.constant 0 : index
    %c0_23 = arith.constant 0 : index
    %39 = vector.load %arg8[%c0_22, %c0_23] : memref<128x1xf32, #tpu.memory_space<vmem>>, vector<128x1xf32>
    tpu.vector_store %arg8[%c0_22, %c0_23], %19 {strides = array<i32>} : memref<128x1xf32, #tpu.memory_space<vmem>>, vector<128x1xf32>,
    %c1_i32 = arith.constant 1 : i32
    %40 = arith.cmpi eq, %arg1, %c1_i32 : i32
    %41 = arith.extui %40 : i1 to i32
    %c0_i32_24 = arith.constant 0 : i32
    %42 = arith.cmpi ne, %41, %c0_i32_24 : i32
    scf.if %42 {
      %c0_25 = arith.constant 0 : index
      %c0_26 = arith.constant 0 : index
      %43 = vector.load %arg9[%c0_25, %c0_26] : memref<128x1xf32, #tpu.memory_space<vmem>>, vector<128x1xf32>
      %cst_27 = arith.constant 9.99999968E-21 : f32
      %44 = vector.broadcast %cst_27 : f32 to vector<128x1xf32>
      %45 = arith.maximumf %43, %44 : vector<128x1xf32>
      %46 = tpu.reciprocal %45 {approx = true} : vector<128x1xf32> -> vector<128x1xf32>
      %c0_28 = arith.constant 0 : index
      %c0_29 = arith.constant 0 : index
      %47 = vector.load %arg10[%c0_28, %c0_29] : memref<128x128xf32, #tpu.memory_space<vmem>>, vector<128x128xf32>
      %48 = vector.broadcast %46 : vector<128x1xf32> to vector<128x128xf32>
      %49 = arith.mulf %47, %48 : vector<128x128xf32>
      %c0_30 = arith.constant 0 : index
      %c0_31 = arith.constant 0 : index
      %50 = vector.load %arg6[%c0_30, %c0_31] : memref<1x128xf32, #tpu.memory_space<vmem>>, vector<1x128xf32>
      %51 = vector.broadcast %50 : vector<1x128xf32> to vector<128x128xf32>
      %52 = arith.addf %49, %51 : vector<128x128xf32>
      %53 = tpu.iota {dimensions = array<i32: 1>} : vector<1x128xi32>
      %c6_i32 = arith.constant 6 : i32
      %54 = vector.broadcast %c6_i32 : i32 to vector<1x128xi32>
      %55 = arith.cmpi slt, %53, %54 : vector<1x128xi32>
      %cst_32 = arith.constant -1.000000e+30 : f32
      %56 = vector.shape_cast %55 : vector<1x128xi1> to vector<1x128xi1>
      %57 = vector.broadcast %56 : vector<1x128xi1> to vector<128x128xi1>
      %58 = vector.broadcast %cst_32 : f32 to vector<128x128xf32>
      %59 = arith.select %57, %52, %58 : vector<128x128xi1>, vector<128x128xf32>
      %cst_33 = arith.constant dense<0xFF800000> : vector<128xf32>
      %60 = vector.multi_reduction <maximumf>, %59, %cst_33 [1] : vector<128x128xf32> to vector<128xf32>
      %61 = vector.shape_cast %60 : vector<128xf32> to vector<128x1xf32>
      %62 = vector.broadcast %61 : vector<128x1xf32> to vector<128x128xf32>
      %63 = arith.subf %59, %62 : vector<128x128xf32>
      %64 = math.exp %63 : vector<128x128xf32>
      %cst_34 = arith.constant dense<0.000000e+00> : vector<128xf32>
      %65 = vector.multi_reduction <add>, %64, %cst_34 [1] : vector<128x128xf32> to vector<128xf32>
      %66 = vector.shape_cast %65 : vector<128xf32> to vector<128x1xf32>
      %67 = math.log %66 : vector<128x1xf32>
      %68 = vector.broadcast %67 : vector<128x1xf32> to vector<128x128xf32>
      %69 = arith.subf %63, %68 : vector<128x128xf32>
      %c0_35 = arith.constant 0 : index
      %c0_36 = arith.constant 0 : index
      %70 = vector.load %arg7[%c0_35, %c0_36] : memref<128x128xf32, #tpu.memory_space<vmem>>, vector<128x128xf32>
      tpu.vector_store %arg7[%c0_35, %c0_36], %69 {strides = array<i32>} : memref<128x128xf32, #tpu.memory_space<vmem>>, vector<128x128xf32>,
    } else {
    }
    return
  }
  func.func @transform_0(%arg0: i32, %arg1: i32) -> (i32, i32) {
    %c0_i32 = arith.constant 0 : i32
    %c0_i32_0 = arith.constant 0 : i32
    return %arg1, %c0_i32 : i32, i32
  }
  func.func @transform_1(%arg0: i32, %arg1: i32) -> (i32, i32) {
    %c0_i32 = arith.constant 0 : i32
    %c0_i32_0 = arith.constant 0 : i32
    return %arg0, %c0_i32 : i32, i32
  }
  func.func @transform_2(%arg0: i32, %arg1: i32) -> (i32, i32) {
    %c0_i32 = arith.constant 0 : i32
    %c0_i32_0 = arith.constant 0 : i32
    return %c0_i32, %arg1 : i32, i32
  }
  func.func @transform_3(%arg0: i32, %arg1: i32) -> (i32, i32) {
    %c0_i32 = arith.constant 0 : i32
    return %arg0, %arg1 : i32, i32
  }
  func.func @transform_4(%arg0: i32, %arg1: i32) -> (i32, i32) {
    %c0_i32 = arith.constant 0 : i32
    %c0_i32_0 = arith.constant 0 : i32
    %c0_i32_1 = arith.constant 0 : i32
    return %c0_i32, %c0_i32_0 : i32, i32
  }
  func.func @transform_5(%arg0: i32, %arg1: i32) -> (i32, i32) {
    %c0_i32 = arith.constant 0 : i32
    %c0_i32_0 = arith.constant 0 : i32
    return %arg0, %c0_i32 : i32, i32
  }
}

</mosaic_0001>

<llo_original>
// kernel: gat_gcn_forward.4
$region0: #{gat_gcn_forward.4}
  #allocation0 [shape = 'u32[]', space=smem, size = 0x4, offset = 0x4, fixed_abs, tag = 'smem constant byte address 0x4 - core index']
  #allocation1 [shape = 'u32[144,128]{1,0:T(1,128)}', space=vmem, size = 0x12000, scoped, tag = 'internal scratch']
  %s0 = inlined_call_operand.vmem [shape: f32[256,8], index: 0, kind: input, shape index: {}]
  %s1 = inlined_call_operand.vmem [shape: f32[8,128], index: 1, kind: input, shape index: {}]
  %s2 = inlined_call_operand.vmem [shape: f32[128,4], index: 2, kind: input, shape index: {}]
  %s3 = inlined_call_operand.vmem [shape: f32[128,4], index: 3, kind: input, shape index: {}]
  %s4 = inlined_call_operand.vmem [shape: bf16[256,128], index: 4, kind: output, shape index: {0}]
  %s5 = inlined_call_operand.vmem [shape: f32[256,4], index: 5, kind: output, shape index: {1}]
  %s6 = inlined_call_operand.vmem [shape: f32[256,4], index: 6, kind: output, shape index: {2}]
  %7 = xla_tuple %s4, %s5, %s6
  %s8 = sld [smem:[#allocation0]]
  $region65: #{gat_gcn_forward.4} parent=0
    _
  %s10 = ssub.s32 1, %s8
  %s11 = scalar_select 0, %s10, %s8
  loop: start=0, step=1, limit=4
  $region2: #{gat_gcn_forward.4} parent=0 // loop_pre_header
    _
  $region3: #{gat_gcn_forward.4} parent=0 // loop_header
    %s13 = sphi 0, %s17
    %p14 = scmp.ge.s32.totalorder %s13, 4
    %s23 = sphi 0, %s25
    %s26 = sphi 0, %s23
    %s27 = sphi 0, %s26
    %s43 = sphi 0, %s27
    %s47 = sphi 0, %s47
    %s49 = sphi 0, %s47
    %s50 = sphi 0, %s49
    %s64 = sphi 0, %s50
    %s68 = sphi 0, %s68
    %s70 = sphi 0, %s68
    %s71 = sphi 0, %s70
    %s85 = sphi 0, %s71
    %s89 = sphi 0, %s89
    %s91 = sphi 0, %s89
    %s92 = sphi 0, %s91
    %s106 = sphi 0, %s92
    %s112 = sphi 0, %s114
    %s115 = sphi 0, %s112
    %s116 = sphi 0, %s115
    %s132 = sphi 0, %s116
    %s138 = sphi 0, %s140
    %s141 = sphi 0, %s138
    %s142 = sphi 0, %s141
    %s158 = sphi 0, %s142
    %s164 = sphi 0, %s166
    %s167 = sphi 0, %s164
    %s168 = sphi 0, %s167
    %s184 = sphi 0, %s168
  $region4: #{gat_gcn_forward.4} parent=0 // loop_header_branch
    %16 = sbr.rel (%p14) target = $region8
  $region5: #{gat_gcn_forward.4} parent=0 // loop_body
    %s18 = ssub.s32 %s13, 1
    %s19 = ssub.s32 %s13, 2
    %s20 = sadd.s32 %s13, 1
    %s21 = ssub.s32 %s13, %s20
    %p22 = scmp.eq.s32.totalorder %s21, 0
    %s24 = sadd.s32 %s23, 1
    %s25 = scalar_select %p22, %s23, %s24
    %p28 = pneg %p22
    %p29 = scmp.eq.s32.totalorder %s13, 1
    %p30 = por %p28, %p29
    %p31 = scmp.ne.s32.totalorder %s23, %s26
    %p32 = scmp.eq.s32.totalorder %s13, 0
    %p33 = por %p31, %p32
    %p34 = scmp.ne.s32.totalorder %s23, %s26
    %p35 = scmp.eq.s32.totalorder %s18, 1
    %p36 = por %p34, %p35
    %p37 = scmp.ne.s32.totalorder %s26, %s27
    %p38 = scmp.eq.s32.totalorder %s18, 0
    %p39 = por %p37, %p38
    %p40 = scmp.ne.s32.totalorder %s26, %s27
    %p41 = scmp.eq.s32.totalorder %s19, 1
    %p42 = por %p40, %p41
    %p44 = scmp.ne.s32.totalorder %s27, %s43
    %p45 = scmp.eq.s32.totalorder %s19, 0
    %p46 = por %p44, %p45
    %s48 = sadd.s32 %s47, 1
    %p51 = scmp.eq.s32.totalorder %s13, 1
    %p52 = scmp.ne.s32.totalorder %s47, %s49
    %p53 = scmp.eq.s32.totalorder %s13, 0
    %p54 = por %p52, %p53
    %p55 = scmp.ne.s32.totalorder %s47, %s49
    %p56 = scmp.eq.s32.totalorder %s18, 1
    %p57 = por %p55, %p56
    %p58 = scmp.ne.s32.totalorder %s49, %s50
    %p59 = scmp.eq.s32.totalorder %s18, 0
    %p60 = por %p58, %p59
    %p61 = scmp.ne.s32.totalorder %s49, %s50
    %p62 = scmp.eq.s32.totalorder %s19, 1
    %p63 = por %p61, %p62
    %p65 = scmp.ne.s32.totalorder %s50, %s64
    %p66 = scmp.eq.s32.totalorder %s19, 0
    %p67 = por %p65, %p66
    %s69 = sadd.s32 %s68, 1
    %p72 = scmp.eq.s32.totalorder %s13, 1
    %p73 = scmp.ne.s32.totalorder %s68, %s70
    %p74 = scmp.eq.s32.totalorder %s13, 0
    %p75 = por %p73, %p74
    %p76 = scmp.ne.s32.totalorder %s68, %s70
    %p77 = scmp.eq.s32.totalorder %s18, 1
    %p78 = por %p76, %p77
    %p79 = scmp.ne.s32.totalorder %s70, %s71
    %p80 = scmp.eq.s32.totalorder %s18, 0
    %p81 = por %p79, %p80
    %p82 = scmp.ne.s32.totalorder %s70, %s71
    %p83 = scmp.eq.s32.totalorder %s19, 1
    %p84 = por %p82, %p83
    %p86 = scmp.ne.s32.totalorder %s71, %s85
    %p87 = scmp.eq.s32.totalorder %s19, 0
    %p88 = por %p86, %p87
    %s90 = sadd.s32 %s89, 1
    %p93 = scmp.eq.s32.totalorder %s13, 1
    %p94 = scmp.ne.s32.totalorder %s89, %s91
    %p95 = scmp.eq.s32.totalorder %s13, 0
    %p96 = por %p94, %p95
    %p97 = scmp.ne.s32.totalorder %s89, %s91
    %p98 = scmp.eq.s32.totalorder %s18, 1
    %p99 = por %p97, %p98
    %p100 = scmp.ne.s32.totalorder %s91, %s92
    %p101 = scmp.eq.s32.totalorder %s18, 0
    %p102 = por %p100, %p101
    %p103 = scmp.ne.s32.totalorder %s91, %s92
    %p104 = scmp.eq.s32.totalorder %s19, 1
    %p105 = por %p103, %p104
    %p107 = scmp.ne.s32.totalorder %s92, %s106
    %p108 = scmp.eq.s32.totalorder %s19, 0
    %p109 = por %p107, %p108
    %s110 = ssub.s32 %s13, %s20
    %p111 = scmp.eq.s32.totalorder %s110, 0
    %s113 = sadd.s32 %s112, 1
    %s114 = scalar_select %p111, %s112, %s113
    %p117 = pneg %p111
    %p118 = scmp.eq.s32.totalorder %s13, 1
    %p119 = por %p117, %p118
    %p120 = scmp.ne.s32.totalorder %s112, %s115
    %p121 = scmp.eq.s32.totalorder %s13, 0
    %p122 = por %p120, %p121
    %p123 = scmp.ne.s32.totalorder %s112, %s115
    %p124 = scmp.eq.s32.totalorder %s18, 1
    %p125 = por %p123, %p124
    %p126 = scmp.ne.s32.totalorder %s115, %s116
    %p127 = scmp.eq.s32.totalorder %s18, 0
    %p128 = por %p126, %p127
    %p129 = scmp.ne.s32.totalorder %s115, %s116
    %p130 = scmp.eq.s32.totalorder %s19, 1
    %p131 = por %p129, %p130
    %p133 = scmp.ne.s32.totalorder %s116, %s132
    %p134 = scmp.eq.s32.totalorder %s19, 0
    %p135 = por %p133, %p134
    %s136 = ssub.s32 %s13, %s20
    %p137 = scmp.eq.s32.totalorder %s136, 0
    %s139 = sadd.s32 %s138, 1
    %s140 = scalar_select %p137, %s138, %s139
    %p143 = pneg %p137
    %p144 = scmp.eq.s32.totalorder %s13, 1
    %p145 = por %p143, %p144
    %p146 = scmp.ne.s32.totalorder %s138, %s141
    %p147 = scmp.eq.s32.totalorder %s13, 0
    %p148 = por %p146, %p147
    %p149 = scmp.ne.s32.totalorder %s138, %s141
    %p150 = scmp.eq.s32.totalorder %s18, 1
    %p151 = por %p149, %p150
    %p152 = scmp.ne.s32.totalorder %s141, %s142
    %p153 = scmp.eq.s32.totalorder %s18, 0
    %p154 = por %p152, %p153
    %p155 = scmp.ne.s32.totalorder %s141, %s142
    %p156 = scmp.eq.s32.totalorder %s19, 1
    %p157 = por %p155, %p156
    %p159 = scmp.ne.s32.totalorder %s142, %s158
    %p160 = scmp.eq.s32.totalorder %s19, 0
    %p161 = por %p159, %p160
    %s162 = ssub.s32 %s13, %s20
    %p163 = scmp.eq.s32.totalorder %s162, 0
    %s165 = sadd.s32 %s164, 1
    %s166 = scalar_select %p163, %s164, %s165
    %p169 = pneg %p163
    %p170 = scmp.eq.s32.totalorder %s13, 1
    %p171 = por %p169, %p170
    %p172 = scmp.ne.s32.totalorder %s164, %s167
    %p173 = scmp.eq.s32.totalorder %s13, 0
    %p174 = por %p172, %p173
    %p175 = scmp.ne.s32.totalorder %s164, %s167
    %p176 = scmp.eq.s32.totalorder %s18, 1
    %p177 = por %p175, %p176
    %p178 = scmp.ne.s32.totalorder %s167, %s168
    %p179 = scmp.eq.s32.totalorder %s18, 0
    %p180 = por %p178, %p179
    %p181 = scmp.ne.s32.totalorder %s167, %s168
    %p182 = scmp.eq.s32.totalorder %s19, 1
    %p183 = por %p181, %p182
    %p185 = scmp.ne.s32.totalorder %s168, %s184
    %p186 = scmp.eq.s32.totalorder %s19, 0
    %p187 = por %p185, %p186
    %p188 = scmp.le.s32.totalorder 1, %s13
    %p189 = scmp.lt.s32.totalorder %s13, 3
    %p190 = pnand %p188, %p189
    %p191 = pneg %p190
    // Predicated region
    $region9: #{gat_gcn_forward.4} parent=5 // pred_check
      _
    $region10: #{gat_gcn_forward.4} parent=5 // pred_check_branch
      %193 = sbr.rel (%p190) target = $region12
    $region11: #{gat_gcn_forward.4} parent=5 // pred_region
      %s194 = ssub.s32 %s13, 1
      // Predicated region
      $region13: #{gat_gcn_forward.4} parent=11 // pred_check
        %p195 = pneg %p60
      $region14: #{gat_gcn_forward.4} parent=11 // pred_check_branch
        %197 = sbr.rel (%p195) target = $region16
      $region15: #{gat_gcn_forward.4} parent=11 // pred_region
        _
      $region16: #{gat_gcn_forward.4} parent=11 // pred_fallthru
        _
      // Predicated region
      $region17: #{gat_gcn_forward.4} parent=11 // pred_check
        %p198 = pneg %p81
      $region18: #{gat_gcn_forward.4} parent=11 // pred_check_branch
        %200 = sbr.rel (%p198) target = $region20
      $region19: #{gat_gcn_forward.4} parent=11 // pred_region
        _
      $region20: #{gat_gcn_forward.4} parent=11 // pred_fallthru
        _
      // Predicated region
      $region21: #{gat_gcn_forward.4} parent=11 // pred_check
        %p201 = pneg %p102
      $region22: #{gat_gcn_forward.4} parent=11 // pred_check_branch
        %203 = sbr.rel (%p201) target = $region24
      $region23: #{gat_gcn_forward.4} parent=11 // pred_region
        _
      $region24: #{gat_gcn_forward.4} parent=11 // pred_fallthru
        _
    $region12: #{gat_gcn_forward.4} parent=5 // pred_fallthru
      _
    %p204 = scmp.lt.s32.totalorder %s13, 2
    // Predicated region
    $region25: #{gat_gcn_forward.4} parent=5 // pred_check
      %p205 = pneg %p204
    $region26: #{gat_gcn_forward.4} parent=5 // pred_check_branch
      %207 = sbr.rel (%p205) target = $region28
    $region27: #{gat_gcn_forward.4} parent=5 // pred_region
      // Predicated region
      $region29: #{gat_gcn_forward.4} parent=27 // pred_check
        %p208 = pneg %p33
      $region30: #{gat_gcn_forward.4} parent=27 // pred_check_branch
        %210 = sbr.rel (%p208) target = $region32
      $region31: #{gat_gcn_forward.4} parent=27 // pred_region
        %s211 = smul.u32 16, %s13
        %p212 = scmp.lt.s32.totalorder %s211, 31
        %s213 = scalar_select %p212, %s211, 31
        %s214 = smul.addr %s213, 8
        %s215 = scalar_lea.vmem %s0, %s214
        %s216 = smul.u32 16, %s13
      $region32: #{gat_gcn_forward.4} parent=27 // pred_fallthru
        _
    $region28: #{gat_gcn_forward.4} parent=5 // pred_fallthru
      _
    %p217 = scmp.le.s32.totalorder 1, %s13
    %p218 = scmp.lt.s32.totalorder %s13, 3
    %p219 = pnand %p217, %p218
    %p220 = pneg %p219
    // Predicated region
    $region33: #{gat_gcn_forward.4} parent=5 // pred_check
      _
    $region34: #{gat_gcn_forward.4} parent=5 // pred_check_branch
      %222 = sbr.rel (%p219) target = $region36
    $region35: #{gat_gcn_forward.4} parent=5 // pred_region
      %s223 = ssub.s32 %s13, 1
      %s224 = smul.u32 16, %s18
      %p225 = scmp.lt.s32.totalorder %s224, 31
      %s226 = scalar_select %p225, %s224, 31
      %s227 = smul.addr %s226, 8
      %s228 = scalar_lea.vmem %s0, %s227
      %p229 = pneg %p39
      %p230 = pneg %p36
      %p231 = pneg %p60
      %p232 = pneg %p57
      %p233 = pneg %p81
      %p234 = pneg %p78
      %p235 = pneg %p102
      %p236 = pneg %p99
      %p237 = pneg %p128
      %p238 = pneg %p125
      %s239 = smul.u32 16, %s18
      %p240 = scmp.lt.s32.totalorder %s239, 31
      %s241 = scalar_select %p240, %s239, 31
      %s242 = smul.addr %s241, 4
      %s243 = scalar_lea.vmem %s4, %s242
      %p244 = pneg %p154
      %p245 = pneg %p151
      %s246 = smul.u32 16, %s18
      %p247 = scmp.lt.s32.totalorder %s246, 31
      %s248 = scalar_select %p247, %s246, 31
      %s249 = smul.addr %s248, 8
      %s250 = scalar_lea.vmem %s5, %s249
      %p251 = pneg %p180
      %p252 = pneg %p177
      %s253 = smul.u32 16, %s18
      %p254 = scmp.lt.s32.totalorder %s253, 31
      %s255 = scalar_select %p254, %s253, 31
      %s256 = smul.addr %s255, 8
      %s257 = scalar_lea.vmem %s6, %s256
      %s258 = smul.u32 16, %s18
      %p259 = scmp.lt.s32.totalorder %s258, 31
      %s260 = scalar_select %p259, %s258, 31
      %s261 = smul.addr %s260, 8
      %s262 = scalar_lea.vmem %s0, %s261
      %s263 = smul.u32 16, %s18
      %s264 = smul.u32 16, %s18
      %p265 = scmp.lt.s32.totalorder %s264, 31
      %s266 = scalar_select %p265, %s264, 31
      %s267 = smul.addr %s266, 4
      %s268 = scalar_lea.vmem %s4, %s267
      %s269 = smul.u32 16, %s18
      %s270 = smul.u32 16, %s18
      %p271 = scmp.lt.s32.totalorder %s270, 31
      %s272 = scalar_select %p271, %s270, 31
      %s273 = smul.addr %s272, 8
      %s274 = scalar_lea.vmem %s5, %s273
      %s275 = smul.u32 16, %s18
      %s276 = smul.u32 16, %s18
      %p277 = scmp.lt.s32.totalorder %s276, 31
      %s278 = scalar_select %p277, %s276, 31
      %s279 = smul.addr %s278, 8
      %s280 = scalar_lea.vmem %s6, %s279
      %s281 = smul.u32 16, %s18
      %v282 = vld [vmem:[%s262] sm:$0xff]
      %v283 = vld [vmem:[%s262 + $0x8] sm:$0xff]
      %v284 = vld [vmem:[%s262 + $0x10] sm:$0xff]
      %v285 = vld [vmem:[%s262 + $0x18] sm:$0xff]
      %v286 = vld [vmem:[%s262 + $0x20] sm:$0xff]
      %v287 = vld [vmem:[%s262 + $0x28] sm:$0xff]
      %v288 = vld [vmem:[%s262 + $0x30] sm:$0xff]
      %v289 = vld [vmem:[%s262 + $0x38] sm:$0xff]
      %v290 = vld [vmem:[%s262 + $0x40] sm:$0xff]
      %v291 = vld [vmem:[%s262 + $0x48] sm:$0xff]
      %v292 = vld [vmem:[%s262 + $0x50] sm:$0xff]
      %v293 = vld [vmem:[%s262 + $0x58] sm:$0xff]
      %v294 = vld [vmem:[%s262 + $0x60] sm:$0xff]
      %v295 = vld [vmem:[%s262 + $0x68] sm:$0xff]
      %v296 = vld [vmem:[%s262 + $0x70] sm:$0xff]
      %v297 = vld [vmem:[%s262 + $0x78] sm:$0xff]
      %v298 = vld [vmem:[%s1] sm:$0xff]
      %vm299 = vcmask 64512
      %v301 = vsel %vm299, %v282, 0
      %v304 = vsel %vm299, %v283, 0
      %v307 = vsel %vm299, %v284, 0
      %v310 = vsel %vm299, %v285, 0
      %v313 = vsel %vm299, %v286, 0
      %v316 = vsel %vm299, %v287, 0
      %v319 = vsel %vm299, %v288, 0
      %v322 = vsel %vm299, %v289, 0
      %v325 = vsel %vm299, %v290, 0
      %v328 = vsel %vm299, %v291, 0
      %v331 = vsel %vm299, %v292, 0
      %v334 = vsel %vm299, %v293, 0
      %v337 = vsel %vm299, %v294, 0
      %v340 = vsel %vm299, %v295, 0
      %v343 = vsel %vm299, %v296, 0
      %v346 = vsel %vm299, %v297, 0
      %348 = vmatprep.subr.mxu0 0.0
      %349 = vmatpush1.msra.mxu0 %v298
      %350 = vmatprep.subr.mxu0 0.0
      %351 = vmatpush1.msra.mxu0 0.0
      %352 = vmatprep.subr.mxu0 0.0
      %353 = vmatpush1.msra.mxu0 0.0
      %354 = vmatprep.subr.mxu0 0.0
      %355 = vmatpush1.msra.mxu0 0.0
      %356 = vmatprep.subr.mxu0 0.0
      %357 = vmatpush1.msra.mxu0 0.0
      %358 = vmatprep.subr.mxu0 0.0
      %359 = vmatpush1.msra.mxu0 0.0
      %360 = vmatprep.subr.mxu0 0.0
      %361 = vmatpush1.msra.mxu0 0.0
      %362 = vmatprep.subr.mxu0 0.0
      %363 = vmatpush1.msra.mxu0 0.0
      %364 = vmatprep.subr.mxu0 0.0
      %365 = vmatpush1.msra.mxu0 0.0
      %366 = vmatprep.subr.mxu0 0.0
      %367 = vmatpush1.msra.mxu0 0.0
      %368 = vmatprep.subr.mxu0 0.0
      %369 = vmatpush1.msra.mxu0 0.0
      %370 = vmatprep.subr.mxu0 0.0
      %371 = vmatpush1.msra.mxu0 0.0
      %372 = vmatprep.subr.mxu0 0.0
      %373 = vmatpush1.msra.mxu0 0.0
      %374 = vmatprep.subr.mxu0 0.0
      %375 = vmatpush1.msra.mxu0 0.0
      %376 = vmatprep.subr.mxu0 0.0
      %377 = vmatpush1.msra.mxu0 0.0
      %378 = vmatprep.subr.mxu0 0.0
      %379 = vmatpush1.msra.mxu0 0.0
      %380 = vmatprep.subr.mxu0 0.0
      %381 = vmatpush1.msra.mxu0 0.0
      %382 = vmatprep.subr.mxu0 0.0
      %383 = vmatpush1.msra.mxu0 0.0
      %384 = vmatprep.subr.mxu0 0.0
      %385 = vmatpush1.msra.mxu0 0.0
      %386 = vmatprep.subr.mxu0 0.0
      %387 = vmatpush1.msra.mxu0 0.0
      %388 = vmatprep.subr.mxu0 0.0
      %389 = vmatpush1.msra.mxu0 0.0
      %390 = vmatprep.subr.mxu0 0.0
      %391 = vmatpush1.msra.mxu0 0.0
      %392 = vmatprep.subr.mxu0 0.0
      %393 = vmatpush1.msra.mxu0 0.0
      %394 = vmatprep.subr.mxu0 0.0
      %395 = vmatpush1.msra.mxu0 0.0
      %396 = vmatprep.subr.mxu0 0.0
      %397 = vmatpush1.msra.mxu0 0.0
      %398 = vmatprep.subr.mxu0 0.0
      %399 = vmatpush1.msra.mxu0 0.0
      %400 = vmatprep.subr.mxu0 0.0
      %401 = vmatpush1.msra.mxu0 0.0
      %402 = vmatprep.subr.mxu0 0.0
      %403 = vmatpush1.msra.mxu0 0.0
      %404 = vmatprep.subr.mxu0 0.0
      %405 = vmatpush1.msra.mxu0 0.0
      %406 = vmatprep.subr.mxu0 0.0
      %407 = vmatpush1.msra.mxu0 0.0
      %408 = vmatprep.subr.mxu0 0.0
      %409 = vmatpush1.msra.mxu0 0.0
      %410 = vmatprep.subr.mxu0 0.0
      %411 = vmatpush1.msra.mxu0 0.0
      %412 = vmatprep.mubr.f32.mxu0 0.0
      %413 = vmatmul.mubr.f32.gmra.mrb[0].mxu0 %v301
      %v414 = vpop.f32.mrb[0].mxu0
      %v415 = vadd.f32 0.0, %v414
      %v416 = vpop.f32.mrb[0].mxu0
      %417 = vmatprep.mubr.f32.mxu0 0.0
      %418 = vmatmul.mubr.f32.gmra.mrb[0].mxu0 %v304
      %v419 = vpop.f32.mrb[0].mxu0
      %v420 = vadd.f32 0.0, %v419
      %v421 = vpop.f32.mrb[0].mxu0
      %422 = vmatprep.mubr.f32.mxu0 0.0
      %423 = vmatmul.mubr.f32.gmra.mrb[0].mxu0 %v307
      %v424 = vpop.f32.mrb[0].mxu0
      %v425 = vadd.f32 0.0, %v424
      %v426 = vpop.f32.mrb[0].mxu0
      %427 = vmatprep.mubr.f32.mxu0 0.0
      %428 = vmatmul.mubr.f32.gmra.mrb[0].mxu0 %v310
      %v429 = vpop.f32.mrb[0].mxu0
      %v430 = vadd.f32 0.0, %v429
      %v431 = vpop.f32.mrb[0].mxu0
      %432 = vmatprep.mubr.f32.mxu0 0.0
      %433 = vmatmul.mubr.f32.gmra.mrb[0].mxu0 %v313
      %v434 = vpop.f32.mrb[0].mxu0
      %v435 = vadd.f32 0.0, %v434
      %v436 = vpop.f32.mrb[0].mxu0
      %437 = vmatprep.mubr.f32.mxu0 0.0
      %438 = vmatmul.mubr.f32.gmra.mrb[0].mxu0 %v316
      %v439 = vpop.f32.mrb[0].mxu0
      %v440 = vadd.f32 0.0, %v439
      %v441 = vpop.f32.mrb[0].mxu0
      %442 = vmatprep.mubr.f32.mxu0 0.0
      %443 = vmatmul.mubr.f32.gmra.mrb[0].mxu0 %v319
      %v444 = vpop.f32.mrb[0].mxu0
      %v445 = vadd.f32 0.0, %v444
      %v446 = vpop.f32.mrb[0].mxu0
      %447 = vmatprep.mubr.f32.mxu0 0.0
      %448 = vmatmul.mubr.f32.gmra.mrb[0].mxu0 %v322
      %v449 = vpop.f32.mrb[0].mxu0
      %v450 = vadd.f32 0.0, %v449
      %v451 = vpop.f32.mrb[0].mxu0
      %452 = vmatprep.mubr.f32.mxu0 0.0
      %453 = vmatmul.mubr.f32.gmra.mrb[0].mxu0 %v325
      %v454 = vpop.f32.mrb[0].mxu0
      %v455 = vadd.f32 0.0, %v454
      %v456 = vpop.f32.mrb[0].mxu0
      %457 = vmatprep.mubr.f32.mxu0 0.0
      %458 = vmatmul.mubr.f32.gmra.mrb[0].mxu0 %v328
      %v459 = vpop.f32.mrb[0].mxu0
      %v460 = vadd.f32 0.0, %v459
      %v461 = vpop.f32.mrb[0].mxu0
      %462 = vmatprep.mubr.f32.mxu0 0.0
      %463 = vmatmul.mubr.f32.gmra.mrb[0].mxu0 %v331
      %v464 = vpop.f32.mrb[0].mxu0
      %v465 = vadd.f32 0.0, %v464
      %v466 = vpop.f32.mrb[0].mxu0
      %467 = vmatprep.mubr.f32.mxu0 0.0
      %468 = vmatmul.mubr.f32.gmra.mrb[0].mxu0 %v334
      %v469 = vpop.f32.mrb[0].mxu0
      %v470 = vadd.f32 0.0, %v469
      %v471 = vpop.f32.mrb[0].mxu0
      %472 = vmatprep.mubr.f32.mxu0 0.0
      %473 = vmatmul.mubr.f32.gmra.mrb[0].mxu0 %v337
      %v474 = vpop.f32.mrb[0].mxu0
      %v475 = vadd.f32 0.0, %v474
      %v476 = vpop.f32.mrb[0].mxu0
      %477 = vmatprep.mubr.f32.mxu0 0.0
      %478 = vmatmul.mubr.f32.gmra.mrb[0].mxu0 %v340
      %v479 = vpop.f32.mrb[0].mxu0
      %v480 = vadd.f32 0.0, %v479
      %v481 = vpop.f32.mrb[0].mxu0
      %482 = vmatprep.mubr.f32.mxu0 0.0
      %483 = vmatmul.mubr.f32.gmra.mrb[0].mxu0 %v343
      %v484 = vpop.f32.mrb[0].mxu0
      %v485 = vadd.f32 0.0, %v484
      %v486 = vpop.f32.mrb[0].mxu0
      %487 = vmatprep.mubr.f32.mxu0 0.0
      %488 = vmatmul.mubr.f32.gmra.mrb[0].mxu0 %v346
      %v489 = vpop.f32.mrb[0].mxu0
      %v490 = vadd.f32 0.0, %v489
      %v491 = vpop.f32.mrb[0].mxu0
      %492 = vdwg.mxu0
      %v493 = vld [vmem:[%s2] sm:$0xff]
      %v494 = vld [vmem:[%s2 + $0x8] sm:$0xff]
      %v495 = vld [vmem:[%s2 + $0x10] sm:$0xff]
      %v496 = vld [vmem:[%s2 + $0x18] sm:$0xff]
      %v497 = vld [vmem:[%s2 + $0x20] sm:$0xff]
      %v498 = vld [vmem:[%s2 + $0x28] sm:$0xff]
      %v499 = vld [vmem:[%s2 + $0x30] sm:$0xff]
      %v500 = vld [vmem:[%s2 + $0x38] sm:$0xff]
      %v501 = vld [vmem:[%s2 + $0x40] sm:$0xff]
      %v502 = vld [vmem:[%s2 + $0x48] sm:$0xff]
      %v503 = vld [vmem:[%s2 + $0x50] sm:$0xff]
      %v504 = vld [vmem:[%s2 + $0x58] sm:$0xff]
      %v505 = vld [vmem:[%s2 + $0x60] sm:$0xff]
      %v506 = vld [vmem:[%s2 + $0x68] sm:$0xff]
      %v507 = vld [vmem:[%s2 + $0x70] sm:$0xff]
      %v508 = vld [vmem:[%s2 + $0x78] sm:$0xff]
      %509 = vmatprep.subr.mxu0 0.0
      %510 = vmatpush1.msra.mxu0 %v493
      %511 = vmatprep.subr.mxu0 0.0
      %512 = vmatpush1.msra.mxu0 %v494
      %513 = vmatprep.subr.mxu0 0.0
      %514 = vmatpush1.msra.mxu0 %v495
      %515 = vmatprep.subr.mxu0 0.0
      %516 = vmatpush1.msra.mxu0 %v496
      %517 = vmatprep.subr.mxu0 0.0
      %518 = vmatpush1.msra.mxu0 %v497
      %519 = vmatprep.subr.mxu0 0.0
      %520 = vmatpush1.msra.mxu0 %v498
      %521 = vmatprep.subr.mxu0 0.0
      %522 = vmatpush1.msra.mxu0 %v499
      %523 = vmatprep.subr.mxu0 0.0
      %524 = vmatpush1.msra.mxu0 %v500
      %525 = vmatprep.subr.mxu0 0.0
      %526 = vmatpush1.msra.mxu0 %v501
      %527 = vmatprep.subr.mxu0 0.0
      %528 = vmatpush1.msra.mxu0 %v502
      %529 = vmatprep.subr.mxu0 0.0
      %530 = vmatpush1.msra.mxu0 %v503
      %531 = vmatprep.subr.mxu0 0.0
      %532 = vmatpush1.msra.mxu0 %v504
      %533 = vmatprep.subr.mxu0 0.0
      %534 = vmatpush1.msra.mxu0 %v505
      %535 = vmatprep.subr.mxu0 0.0
      %536 = vmatpush1.msra.mxu0 %v506
      %537 = vmatprep.subr.mxu0 0.0
      %538 = vmatpush1.msra.mxu0 %v507
      %539 = vmatprep.subr.mxu0 0.0
      %540 = vmatpush1.msra.mxu0 %v508
      %541 = vmatprep.subr.mxu0 0.0
      %542 = vmatpush1.msra.mxu0 0.0
      %543 = vmatprep.subr.mxu0 0.0
      %544 = vmatpush1.msra.mxu0 0.0
      %545 = vmatprep.subr.mxu0 0.0
      %546 = vmatpush1.msra.mxu0 0.0
      %547 = vmatprep.subr.mxu0 0.0
      %548 = vmatpush1.msra.mxu0 0.0
      %549 = vmatprep.subr.mxu0 0.0
      %550 = vmatpush1.msra.mxu0 0.0
      %551 = vmatprep.subr.mxu0 0.0
      %552 = vmatpush1.msra.mxu0 0.0
      %553 = vmatprep.subr.mxu0 0.0
      %554 = vmatpush1.msra.mxu0 0.0
      %555 = vmatprep.subr.mxu0 0.0
      %556 = vmatpush1.msra.mxu0 0.0
      %557 = vmatprep.subr.mxu0 0.0
      %558 = vmatpush1.msra.mxu0 0.0
      %559 = vmatprep.subr.mxu0 0.0
      %560 = vmatpush1.msra.mxu0 0.0
      %561 = vmatprep.subr.mxu0 0.0
      %562 = vmatpush1.msra.mxu0 0.0
      %563 = vmatprep.subr.mxu0 0.0
      %564 = vmatpush1.msra.mxu0 0.0
      %565 = vmatprep.subr.mxu0 0.0
      %566 = vmatpush1.msra.mxu0 0.0
      %567 = vmatprep.subr.mxu0 0.0
      %568 = vmatpush1.msra.mxu0 0.0
      %569 = vmatprep.subr.mxu0 0.0
      %570 = vmatpush1.msra.mxu0 0.0
      %571 = vmatprep.subr.mxu0 0.0
      %572 = vmatpush1.msra.mxu0 0.0
      %573 = vmatprep.mubr.f32.mxu0 0.0
      %574 = vmatmul.mubr.f32.gmra.mrb[0].mxu0 %v415
      %v575 = vpop.f32.mrb[0].mxu0
      %v576 = vadd.f32 0.0, %v575
      %v577 = vpop.f32.mrb[0].mxu0
      %578 = vmatprep.mubr.f32.mxu0 0.0
      %579 = vmatmul.mubr.f32.gmra.mrb[0].mxu0 %v420
      %v580 = vpop.f32.mrb[0].mxu0
      %v581 = vadd.f32 0.0, %v580
      %v582 = vpop.f32.mrb[0].mxu0
      %583 = vmatprep.mubr.f32.mxu0 0.0
      %584 = vmatmul.mubr.f32.gmra.mrb[0].mxu0 %v425
      %v585 = vpop.f32.mrb[0].mxu0
      %v586 = vadd.f32 0.0, %v585
      %v587 = vpop.f32.mrb[0].mxu0
      %588 = vmatprep.mubr.f32.mxu0 0.0
      %589 = vmatmul.mubr.f32.gmra.mrb[0].mxu0 %v430
      %v590 = vpop.f32.mrb[0].mxu0
      %v591 = vadd.f32 0.0, %v590
      %v592 = vpop.f32.mrb[0].mxu0
      %593 = vmatprep.mubr.f32.mxu0 0.0
      %594 = vmatmul.mubr.f32.gmra.mrb[0].mxu0 %v435
      %v595 = vpop.f32.mrb[0].mxu0
      %v596 = vadd.f32 0.0, %v595
      %v597 = vpop.f32.mrb[0].mxu0
      %598 = vmatprep.mubr.f32.mxu0 0.0
      %599 = vmatmul.mubr.f32.gmra.mrb[0].mxu0 %v440
      %v600 = vpop.f32.mrb[0].mxu0
      %v601 = vadd.f32 0.0, %v600
      %v602 = vpop.f32.mrb[0].mxu0
      %603 = vmatprep.mubr.f32.mxu0 0.0
      %604 = vmatmul.mubr.f32.gmra.mrb[0].mxu0 %v445
      %v605 = vpop.f32.mrb[0].mxu0
      %v606 = vadd.f32 0.0, %v605
      %v607 = vpop.f32.mrb[0].mxu0
      %608 = vmatprep.mubr.f32.mxu0 0.0
      %609 = vmatmul.mubr.f32.gmra.mrb[0].mxu0 %v450
      %v610 = vpop.f32.mrb[0].mxu0
      %v611 = vadd.f32 0.0, %v610
      %v612 = vpop.f32.mrb[0].mxu0
      %613 = vmatprep.mubr.f32.mxu0 0.0
      %614 = vmatmul.mubr.f32.gmra.mrb[0].mxu0 %v455
      %v615 = vpop.f32.mrb[0].mxu0
      %v616 = vadd.f32 0.0, %v615
      %v617 = vpop.f32.mrb[0].mxu0
      %618 = vmatprep.mubr.f32.mxu0 0.0
      %619 = vmatmul.mubr.f32.gmra.mrb[0].mxu0 %v460
      %v620 = vpop.f32.mrb[0].mxu0
      %v621 = vadd.f32 0.0, %v620
      %v622 = vpop.f32.mrb[0].mxu0
      %623 = vmatprep.mubr.f32.mxu0 0.0
      %624 = vmatmul.mubr.f32.gmra.mrb[0].mxu0 %v465
      %v625 = vpop.f32.mrb[0].mxu0
      %v626 = vadd.f32 0.0, %v625
      %v627 = vpop.f32.mrb[0].mxu0
      %628 = vmatprep.mubr.f32.mxu0 0.0
      %629 = vmatmul.mubr.f32.gmra.mrb[0].mxu0 %v470
      %v630 = vpop.f32.mrb[0].mxu0
      %v631 = vadd.f32 0.0, %v630
      %v632 = vpop.f32.mrb[0].mxu0
      %633 = vmatprep.mubr.f32.mxu0 0.0
      %634 = vmatmul.mubr.f32.gmra.mrb[0].mxu0 %v475
      %v635 = vpop.f32.mrb[0].mxu0
      %v636 = vadd.f32 0.0, %v635
      %v637 = vpop.f32.mrb[0].mxu0
      %638 = vmatprep.mubr.f32.mxu0 0.0
      %639 = vmatmul.mubr.f32.gmra.mrb[0].mxu0 %v480
      %v640 = vpop.f32.mrb[0].mxu0
      %v641 = vadd.f32 0.0, %v640
      %v642 = vpop.f32.mrb[0].mxu0
      %643 = vmatprep.mubr.f32.mxu0 0.0
      %644 = vmatmul.mubr.f32.gmra.mrb[0].mxu0 %v485
      %v645 = vpop.f32.mrb[0].mxu0
      %v646 = vadd.f32 0.0, %v645
      %v647 = vpop.f32.mrb[0].mxu0
      %648 = vmatprep.mubr.f32.mxu0 0.0
      %649 = vmatmul.mubr.f32.gmra.mrb[0].mxu0 %v490
      %v650 = vpop.f32.mrb[0].mxu0
      %v651 = vadd.f32 0.0, %v650
      %v652 = vpop.f32.mrb[0].mxu0
      %653 = vdwg.mxu0
      %vm654 = vcmask 31744
      %655 = vst.msk [vmem:[%s274] sm:$0xff] %vm654, %v576
      %656 = vst.msk [vmem:[%s274 + $0x8] sm:$0xff] %vm654, %v581
      %657 = vst.msk [vmem:[%s274 + $0x10] sm:$0xff] %vm654, %v586
      %658 = vst.msk [vmem:[%s274 + $0x18] sm:$0xff] %vm654, %v591
      %659 = vst.msk [vmem:[%s274 + $0x20] sm:$0xff] %vm654, %v596
      %660 = vst.msk [vmem:[%s274 + $0x28] sm:$0xff] %vm654, %v601
      %661 = vst.msk [vmem:[%s274 + $0x30] sm:$0xff] %vm654, %v606
      %662 = vst.msk [vmem:[%s274 + $0x38] sm:$0xff] %vm654, %v611
      %663 = vst.msk [vmem:[%s274 + $0x40] sm:$0xff] %vm654, %v616
      %664 = vst.msk [vmem:[%s274 + $0x48] sm:$0xff] %vm654, %v621
      %665 = vst.msk [vmem:[%s274 + $0x50] sm:$0xff] %vm654, %v626
      %666 = vst.msk [vmem:[%s274 + $0x58] sm:$0xff] %vm654, %v631
      %667 = vst.msk [vmem:[%s274 + $0x60] sm:$0xff] %vm654, %v636
      %668 = vst.msk [vmem:[%s274 + $0x68] sm:$0xff] %vm654, %v641
      %669 = vst.msk [vmem:[%s274 + $0x70] sm:$0xff] %vm654, %v646
      %670 = vst.msk [vmem:[%s274 + $0x78] sm:$0xff] %vm654, %v651
      %v671 = vld [vmem:[%s3] sm:$0xff]
      %v672 = vld [vmem:[%s3 + $0x8] sm:$0xff]
      %v673 = vld [vmem:[%s3 + $0x10] sm:$0xff]
      %v674 = vld [vmem:[%s3 + $0x18] sm:$0xff]
      %v675 = vld [vmem:[%s3 + $0x20] sm:$0xff]
      %v676 = vld [vmem:[%s3 + $0x28] sm:$0xff]
      %v677 = vld [vmem:[%s3 + $0x30] sm:$0xff]
      %v678 = vld [vmem:[%s3 + $0x38] sm:$0xff]
      %v679 = vld [vmem:[%s3 + $0x40] sm:$0xff]
      %v680 = vld [vmem:[%s3 + $0x48] sm:$0xff]
      %v681 = vld [vmem:[%s3 + $0x50] sm:$0xff]
      %v682 = vld [vmem:[%s3 + $0x58] sm:$0xff]
      %v683 = vld [vmem:[%s3 + $0x60] sm:$0xff]
      %v684 = vld [vmem:[%s3 + $0x68] sm:$0xff]
      %v685 = vld [vmem:[%s3 + $0x70] sm:$0xff]
      %v686 = vld [vmem:[%s3 + $0x78] sm:$0xff]
      %687 = vmatprep.subr.mxu0 0.0
      %688 = vmatpush1.msra.mxu0 %v671
      %689 = vmatprep.subr.mxu0 0.0
      %690 = vmatpush1.msra.mxu0 %v672
      %691 = vmatprep.subr.mxu0 0.0
      %692 = vmatpush1.msra.mxu0 %v673
      %693 = vmatprep.subr.mxu0 0.0
      %694 = vmatpush1.msra.mxu0 %v674
      %695 = vmatprep.subr.mxu0 0.0
      %696 = vmatpush1.msra.mxu0 %v675
      %697 = vmatprep.subr.mxu0 0.0
      %698 = vmatpush1.msra.mxu0 %v676
      %699 = vmatprep.subr.mxu0 0.0
      %700 = vmatpush1.msra.mxu0 %v677
      %701 = vmatprep.subr.mxu0 0.0
      %702 = vmatpush1.msra.mxu0 %v678
      %703 = vmatprep.subr.mxu0 0.0
      %704 = vmatpush1.msra.mxu0 %v679
      %705 = vmatprep.subr.mxu0 0.0
      %706 = vmatpush1.msra.mxu0 %v680
      %707 = vmatprep.subr.mxu0 0.0
      %708 = vmatpush1.msra.mxu0 %v681
      %709 = vmatprep.subr.mxu0 0.0
      %710 = vmatpush1.msra.mxu0 %v682
      %711 = vmatprep.subr.mxu0 0.0
      %712 = vmatpush1.msra.mxu0 %v683
      %713 = vmatprep.subr.mxu0 0.0
      %714 = vmatpush1.msra.mxu0 %v684
      %715 = vmatprep.subr.mxu0 0.0
      %716 = vmatpush1.msra.mxu0 %v685
      %717 = vmatprep.subr.mxu0 0.0
      %718 = vmatpush1.msra.mxu0 %v686
      %719 = vmatprep.subr.mxu0 0.0
      %720 = vmatpush1.msra.mxu0 0.0
      %721 = vmatprep.subr.mxu0 0.0
      %722 = vmatpush1.msra.mxu0 0.0
      %723 = vmatprep.subr.mxu0 0.0
      %724 = vmatpush1.msra.mxu0 0.0
      %725 = vmatprep.subr.mxu0 0.0
      %726 = vmatpush1.msra.mxu0 0.0
      %727 = vmatprep.subr.mxu0 0.0
      %728 = vmatpush1.msra.mxu0 0.0
      %729 = vmatprep.subr.mxu0 0.0
      %730 = vmatpush1.msra.mxu0 0.0
      %731 = vmatprep.subr.mxu0 0.0
      %732 = vmatpush1.msra.mxu0 0.0
      %733 = vmatprep.subr.mxu0 0.0
      %734 = vmatpush1.msra.mxu0 0.0
      %735 = vmatprep.subr.mxu0 0.0
      %736 = vmatpush1.msra.mxu0 0.0
      %737 = vmatprep.subr.mxu0 0.0
      %738 = vmatpush1.msra.mxu0 0.0
      %739 = vmatprep.subr.mxu0 0.0
      %740 = vmatpush1.msra.mxu0 0.0
      %741 = vmatprep.subr.mxu0 0.0
      %742 = vmatpush1.msra.mxu0 0.0
      %743 = vmatprep.subr.mxu0 0.0
      %744 = vmatpush1.msra.mxu0 0.0
      %745 = vmatprep.subr.mxu0 0.0
      %746 = vmatpush1.msra.mxu0 0.0
      %747 = vmatprep.subr.mxu0 0.0
      %748 = vmatpush1.msra.mxu0 0.0
      %749 = vmatprep.subr.mxu0 0.0
      %750 = vmatpush1.msra.mxu0 0.0
      %751 = vmatprep.mubr.f32.mxu0 0.0
      %752 = vmatmul.mubr.f32.gmra.mrb[0].mxu0 %v415
      %v753 = vpop.f32.mrb[0].mxu0
      %v754 = vadd.f32 0.0, %v753
      %v755 = vpop.f32.mrb[0].mxu0
      %756 = vmatprep.mubr.f32.mxu0 0.0
      %757 = vmatmul.mubr.f32.gmra.mrb[0].mxu0 %v420
      %v758 = vpop.f32.mrb[0].mxu0
      %v759 = vadd.f32 0.0, %v758
      %v760 = vpop.f32.mrb[0].mxu0
      %761 = vmatprep.mubr.f32.mxu0 0.0
      %762 = vmatmul.mubr.f32.gmra.mrb[0].mxu0 %v425
      %v763 = vpop.f32.mrb[0].mxu0
      %v764 = vadd.f32 0.0, %v763
      %v765 = vpop.f32.mrb[0].mxu0
      %766 = vmatprep.mubr.f32.mxu0 0.0
      %767 = vmatmul.mubr.f32.gmra.mrb[0].mxu0 %v430
      %v768 = vpop.f32.mrb[0].mxu0
      %v769 = vadd.f32 0.0, %v768
      %v770 = vpop.f32.mrb[0].mxu0
      %771 = vmatprep.mubr.f32.mxu0 0.0
      %772 = vmatmul.mubr.f32.gmra.mrb[0].mxu0 %v435
      %v773 = vpop.f32.mrb[0].mxu0
      %v774 = vadd.f32 0.0, %v773
      %v775 = vpop.f32.mrb[0].mxu0
      %776 = vmatprep.mubr.f32.mxu0 0.0
      %777 = vmatmul.mubr.f32.gmra.mrb[0].mxu0 %v440
      %v778 = vpop.f32.mrb[0].mxu0
      %v779 = vadd.f32 0.0, %v778
      %v780 = vpop.f32.mrb[0].mxu0
      %781 = vmatprep.mubr.f32.mxu0 0.0
      %782 = vmatmul.mubr.f32.gmra.mrb[0].mxu0 %v445
      %v783 = vpop.f32.mrb[0].mxu0
      %v784 = vadd.f32 0.0, %v783
      %v785 = vpop.f32.mrb[0].mxu0
      %786 = vmatprep.mubr.f32.mxu0 0.0
      %787 = vmatmul.mubr.f32.gmra.mrb[0].mxu0 %v450
      %v788 = vpop.f32.mrb[0].mxu0
      %v789 = vadd.f32 0.0, %v788
      %v790 = vpop.f32.mrb[0].mxu0
      %791 = vmatprep.mubr.f32.mxu0 0.0
      %792 = vmatmul.mubr.f32.gmra.mrb[0].mxu0 %v455
      %v793 = vpop.f32.mrb[0].mxu0
      %v794 = vadd.f32 0.0, %v793
      %v795 = vpop.f32.mrb[0].mxu0
      %796 = vmatprep.mubr.f32.mxu0 0.0
      %797 = vmatmul.mubr.f32.gmra.mrb[0].mxu0 %v460
      %v798 = vpop.f32.mrb[0].mxu0
      %v799 = vadd.f32 0.0, %v798
      %v800 = vpop.f32.mrb[0].mxu0
      %801 = vmatprep.mubr.f32.mxu0 0.0
      %802 = vmatmul.mubr.f32.gmra.mrb[0].mxu0 %v465
      %v803 = vpop.f32.mrb[0].mxu0
      %v804 = vadd.f32 0.0, %v803
      %v805 = vpop.f32.mrb[0].mxu0
      %806 = vmatprep.mubr.f32.mxu0 0.0
      %807 = vmatmul.mubr.f32.gmra.mrb[0].mxu0 %v470
      %v808 = vpop.f32.mrb[0].mxu0
      %v809 = vadd.f32 0.0, %v808
      %v810 = vpop.f32.mrb[0].mxu0
      %811 = vmatprep.mubr.f32.mxu0 0.0
      %812 = vmatmul.mubr.f32.gmra.mrb[0].mxu0 %v475
      %v813 = vpop.f32.mrb[0].mxu0
      %v814 = vadd.f32 0.0, %v813
      %v815 = vpop.f32.mrb[0].mxu0
      %816 = vmatprep.mubr.f32.mxu0 0.0
      %817 = vmatmul.mubr.f32.gmra.mrb[0].mxu0 %v480
      %v818 = vpop.f32.mrb[0].mxu0
      %v819 = vadd.f32 0.0, %v818
      %v820 = vpop.f32.mrb[0].mxu0
      %821 = vmatprep.mubr.f32.mxu0 0.0
      %822 = vmatmul.mubr.f32.gmra.mrb[0].mxu0 %v485
      %v823 = vpop.f32.mrb[0].mxu0
      %v824 = vadd.f32 0.0, %v823
      %v825 = vpop.f32.mrb[0].mxu0
      %826 = vmatprep.mubr.f32.mxu0 0.0
      %827 = vmatmul.mubr.f32.gmra.mrb[0].mxu0 %v490
      %v828 = vpop.f32.mrb[0].mxu0
      %v829 = vadd.f32 0.0, %v828
      %v830 = vpop.f32.mrb[0].mxu0
      %831 = vdwg.mxu0
      %832 = vst.msk [vmem:[%s280] sm:$0xff] %vm654, %v754
      %833 = vst.msk [vmem:[%s280 + $0x8] sm:$0xff] %vm654, %v759
      %834 = vst.msk [vmem:[%s280 + $0x10] sm:$0xff] %vm654, %v764
      %835 = vst.msk [vmem:[%s280 + $0x18] sm:$0xff] %vm654, %v769
      %836 = vst.msk [vmem:[%s280 + $0x20] sm:$0xff] %vm654, %v774
      %837 = vst.msk [vmem:[%s280 + $0x28] sm:$0xff] %vm654, %v779
      %838 = vst.msk [vmem:[%s280 + $0x30] sm:$0xff] %vm654, %v784
      %839 = vst.msk [vmem:[%s280 + $0x38] sm:$0xff] %vm654, %v789
      %840 = vst.msk [vmem:[%s280 + $0x40] sm:$0xff] %vm654, %v794
      %841 = vst.msk [vmem:[%s280 + $0x48] sm:$0xff] %vm654, %v799
      %842 = vst.msk [vmem:[%s280 + $0x50] sm:$0xff] %vm654, %v804
      %843 = vst.msk [vmem:[%s280 + $0x58] sm:$0xff] %vm654, %v809
      %844 = vst.msk [vmem:[%s280 + $0x60] sm:$0xff] %vm654, %v814
      %845 = vst.msk [vmem:[%s280 + $0x68] sm:$0xff] %vm654, %v819
      %846 = vst.msk [vmem:[%s280 + $0x70] sm:$0xff] %vm654, %v824
      %847 = vst.msk [vmem:[%s280 + $0x78] sm:$0xff] %vm654, %v829
      %v848 = vpack.c.bf16 %v420, %v415
      %v849 = vpack.c.bf16 %v430, %v425
      %v850 = vpack.c.bf16 %v440, %v435
      %v851 = vpack.c.bf16 %v450, %v445
      %v852 = vpack.c.bf16 %v460, %v455
      %v853 = vpack.c.bf16 %v470, %v465
      %v854 = vpack.c.bf16 %v480, %v475
      %v855 = vpack.c.bf16 %v490, %v485
      %v864 = vunpack.c.l.b16 %v848
      %v865 = vunpack.c.h.b16 %v848
      %v866 = vunpack.c.l.b16 %v849
      %v867 = vunpack.c.h.b16 %v849
      %v868 = vunpack.c.l.b16 %v850
      %v869 = vunpack.c.h.b16 %v850
      %v870 = vunpack.c.l.b16 %v851
      %v871 = vunpack.c.h.b16 %v851
      %v872 = vunpack.c.l.b16 %v852
      %v873 = vunpack.c.h.b16 %v852
      %v874 = vunpack.c.l.b16 %v853
      %v875 = vunpack.c.h.b16 %v853
      %v876 = vunpack.c.l.b16 %v854
      %v877 = vunpack.c.h.b16 %v854
      %v878 = vunpack.c.l.b16 %v855
      %v879 = vunpack.c.h.b16 %v855
      %v880 = vpack.c.b16 %v864, %v864
      %v881 = vpack.c.b16 %v865, %v865
      %v882 = vpack.c.b16 %v866, %v866
      %v883 = vpack.c.b16 %v867, %v867
      %v884 = vpack.c.b16 %v868, %v868
      %v885 = vpack.c.b16 %v869, %v869
      %v886 = vpack.c.b16 %v870, %v870
      %v887 = vpack.c.b16 %v871, %v871
      %v888 = vpack.c.b16 %v872, %v872
      %v889 = vpack.c.b16 %v873, %v873
      %v890 = vpack.c.b16 %v874, %v874
      %v891 = vpack.c.b16 %v875, %v875
      %v892 = vpack.c.b16 %v876, %v876
      %v893 = vpack.c.b16 %v877, %v877
      %v894 = vpack.c.b16 %v878, %v878
      %v895 = vpack.c.b16 %v879, %v879
      %912 = vst [vmem:[%s268] sm:$0xf] %v880
      %913 = vst [vmem:[%s268 + $0x4] sm:$0xf] %v881
      %914 = vst [vmem:[%s268 + $0x8] sm:$0xf] %v882
      %915 = vst [vmem:[%s268 + $0xc] sm:$0xf] %v883
      %916 = vst [vmem:[%s268 + $0x10] sm:$0xf] %v884
      %917 = vst [vmem:[%s268 + $0x14] sm:$0xf] %v885
      %918 = vst [vmem:[%s268 + $0x18] sm:$0xf] %v886
      %919 = vst [vmem:[%s268 + $0x1c] sm:$0xf] %v887
      %920 = vst [vmem:[%s268 + $0x20] sm:$0xf] %v888
      %921 = vst [vmem:[%s268 + $0x24] sm:$0xf] %v889
      %922 = vst [vmem:[%s268 + $0x28] sm:$0xf] %v890
      %923 = vst [vmem:[%s268 + $0x2c] sm:$0xf] %v891
      %924 = vst [vmem:[%s268 + $0x30] sm:$0xf] %v892
      %925 = vst [vmem:[%s268 + $0x34] sm:$0xf] %v893
      %926 = vst [vmem:[%s268 + $0x38] sm:$0xf] %v894
      %927 = vst [vmem:[%s268 + $0x3c] sm:$0xf] %v895
      %s928 = smul.u32 16, %s18
      %p929 = scmp.lt.s32.totalorder %s928, 31
      %s930 = scalar_select %p929, %s928, 31
      %s931 = smul.addr %s930, 4
      %s932 = scalar_lea.vmem %s4, %s931
      %s933 = smul.u32 16, %s18
      %p934 = scmp.lt.s32.totalorder %s933, 31
      %s935 = scalar_select %p934, %s933, 31
      %s936 = smul.addr %s935, 8
      %s937 = scalar_lea.vmem %s5, %s936
      %s938 = smul.u32 16, %s18
      %p939 = scmp.lt.s32.totalorder %s938, 31
      %s940 = scalar_select %p939, %s938, 31
      %s941 = smul.addr %s940, 8
      %s942 = scalar_lea.vmem %s6, %s941
      // Predicated region
      $region37: #{gat_gcn_forward.4} parent=35 // pred_check
        %p943 = pneg %p125
      $region38: #{gat_gcn_forward.4} parent=35 // pred_check_branch
        %945 = sbr.rel (%p943) target = $region40
      $region39: #{gat_gcn_forward.4} parent=35 // pred_region
        %s946 = smul.u32 16, %s18
      $region40: #{gat_gcn_forward.4} parent=35 // pred_fallthru
        _
      // Predicated region
      $region41: #{gat_gcn_forward.4} parent=35 // pred_check
        %p947 = pneg %p151
      $region42: #{gat_gcn_forward.4} parent=35 // pred_check_branch
        %949 = sbr.rel (%p947) target = $region44
      $region43: #{gat_gcn_forward.4} parent=35 // pred_region
        %s950 = smul.u32 16, %s18
      $region44: #{gat_gcn_forward.4} parent=35 // pred_fallthru
        _
      // Predicated region
      $region45: #{gat_gcn_forward.4} parent=35 // pred_check
        %p951 = pneg %p177
      $region46: #{gat_gcn_forward.4} parent=35 // pred_check_branch
        %953 = sbr.rel (%p951) target = $region48
      $region47: #{gat_gcn_forward.4} parent=35 // pred_region
        %s954 = smul.u32 16, %s18
      $region48: #{gat_gcn_forward.4} parent=35 // pred_fallthru
        _
    $region36: #{gat_gcn_forward.4} parent=5 // pred_fallthru
      _
    %p955 = scmp.le.s32.totalorder 2, %s13
    // Predicated region
    $region49: #{gat_gcn_forward.4} parent=5 // pred_check
      %p956 = pneg %p955
    $region50: #{gat_gcn_forward.4} parent=5 // pred_check_branch
      %958 = sbr.rel (%p956) target = $region52
    $region51: #{gat_gcn_forward.4} parent=5 // pred_region
      %s959 = ssub.s32 %s13, 2
      // Predicated region
      $region53: #{gat_gcn_forward.4} parent=51 // pred_check
        %p960 = pneg %p131
      $region54: #{gat_gcn_forward.4} parent=51 // pred_check_branch
        %962 = sbr.rel (%p960) target = $region56
      $region55: #{gat_gcn_forward.4} parent=51 // pred_region
        %s963 = smul.u32 16, %s19
        %p964 = scmp.lt.s32.totalorder %s963, 31
        %s965 = scalar_select %p964, %s963, 31
        %s966 = smul.addr %s965, 4
        %s967 = scalar_lea.vmem %s4, %s966
      $region56: #{gat_gcn_forward.4} parent=51 // pred_fallthru
        _
      // Predicated region
      $region57: #{gat_gcn_forward.4} parent=51 // pred_check
        %p968 = pneg %p157
      $region58: #{gat_gcn_forward.4} parent=51 // pred_check_branch
        %970 = sbr.rel (%p968) target = $region60
      $region59: #{gat_gcn_forward.4} parent=51 // pred_region
        %s971 = smul.u32 16, %s19
        %p972 = scmp.lt.s32.totalorder %s971, 31
        %s973 = scalar_select %p972, %s971, 31
        %s974 = smul.addr %s973, 8
        %s975 = scalar_lea.vmem %s5, %s974
      $region60: #{gat_gcn_forward.4} parent=51 // pred_fallthru
        _
      // Predicated region
      $region61: #{gat_gcn_forward.4} parent=51 // pred_check
        %p976 = pneg %p183
      $region62: #{gat_gcn_forward.4} parent=51 // pred_check_branch
        %978 = sbr.rel (%p976) target = $region64
      $region63: #{gat_gcn_forward.4} parent=51 // pred_region
        %s979 = smul.u32 16, %s19
        %p980 = scmp.lt.s32.totalorder %s979, 31
        %s981 = scalar_select %p980, %s979, 31
        %s982 = smul.addr %s981, 8
        %s983 = scalar_lea.vmem %s6, %s982
      $region64: #{gat_gcn_forward.4} parent=51 // pred_fallthru
        _
    $region52: #{gat_gcn_forward.4} parent=5 // pred_fallthru
      _
  $region6: #{gat_gcn_forward.4} parent=0 // loop_footer
    %s17 = sadd.s32 1, %s13
  $region7: #{gat_gcn_forward.4} parent=0 // loop_footer_branch
    %12 = sbr.rel target = $region3
  $region8: #{gat_gcn_forward.4} parent=0 // loop_exit
    _

// kernel: gat_gcn_forward.6
$region0: #{gat_gcn_forward.6}
  #allocation0 [shape = 'u32[]', space=smem, size = 0x4, offset = 0x4, fixed_abs, tag = 'smem constant byte address 0x4 - core index']
  #allocation1 [shape = 'u32[144,128]{1,0:T(1,128)}', space=vmem, size = 0x12000, scoped, tag = 'internal scratch']
  %s0 = inlined_call_operand.vmem [shape: f32[256,128], index: 0, kind: input, shape index: {}]
  %s1 = inlined_call_operand.vmem [shape: f32[128,128], index: 1, kind: input, shape index: {}]
  %s2 = inlined_call_operand.vmem [shape: f32[128,1], index: 2, kind: input, shape index: {}]
  %s3 = inlined_call_operand.vmem [shape: f32[128,1], index: 3, kind: input, shape index: {}]
  %s4 = inlined_call_operand.vmem [shape: bf16[256,128], index: 4, kind: output, shape index: {0}]
  %s5 = inlined_call_operand.vmem [shape: f32[256,1], index: 5, kind: output, shape index: {1}]
  %s6 = inlined_call_operand.vmem [shape: f32[256,1], index: 6, kind: output, shape index: {2}]
  %7 = xla_tuple %s4, %s5, %s6
  %s8 = sld [smem:[#allocation0]]
  $region65: #{gat_gcn_forward.6} parent=0
    _
  %s10 = ssub.s32 1, %s8
  %s11 = scalar_select 0, %s10, %s8
  loop: start=0, step=1, limit=4
  $region2: #{gat_gcn_forward.6} parent=0 // loop_pre_header
    _
  $region3: #{gat_gcn_forward.6} parent=0 // loop_header
    %s13 = sphi 0, %s17
    %p14 = scmp.ge.s32.totalorder %s13, 4
    %s23 = sphi 0, %s25
    %s26 = sphi 0, %s23
    %s27 = sphi 0, %s26
    %s43 = sphi 0, %s27
    %s47 = sphi 0, %s47
    %s49 = sphi 0, %s47
    %s50 = sphi 0, %s49
    %s64 = sphi 0, %s50
    %s68 = sphi 0, %s68
    %s70 = sphi 0, %s68
    %s71 = sphi 0, %s70
    %s85 = sphi 0, %s71
    %s89 = sphi 0, %s89
    %s91 = sphi 0, %s89
    %s92 = sphi 0, %s91
    %s106 = sphi 0, %s92
    %s112 = sphi 0, %s114
    %s115 = sphi 0, %s112
    %s116 = sphi 0, %s115
    %s132 = sphi 0, %s116
    %s138 = sphi 0, %s140
    %s141 = sphi 0, %s138
    %s142 = sphi 0, %s141
    %s158 = sphi 0, %s142
    %s164 = sphi 0, %s166
    %s167 = sphi 0, %s164
    %s168 = sphi 0, %s167
    %s184 = sphi 0, %s168
  $region4: #{gat_gcn_forward.6} parent=0 // loop_header_branch
    %16 = sbr.rel (%p14) target = $region8
  $region5: #{gat_gcn_forward.6} parent=0 // loop_body
    %s18 = ssub.s32 %s13, 1
    %s19 = ssub.s32 %s13, 2
    %s20 = sadd.s32 %s13, 1
    %s21 = ssub.s32 %s13, %s20
    %p22 = scmp.eq.s32.totalorder %s21, 0
    %s24 = sadd.s32 %s23, 1
    %s25 = scalar_select %p22, %s23, %s24
    %p28 = pneg %p22
    %p29 = scmp.eq.s32.totalorder %s13, 1
    %p30 = por %p28, %p29
    %p31 = scmp.ne.s32.totalorder %s23, %s26
    %p32 = scmp.eq.s32.totalorder %s13, 0
    %p33 = por %p31, %p32
    %p34 = scmp.ne.s32.totalorder %s23, %s26
    %p35 = scmp.eq.s32.totalorder %s18, 1
    %p36 = por %p34, %p35
    %p37 = scmp.ne.s32.totalorder %s26, %s27
    %p38 = scmp.eq.s32.totalorder %s18, 0
    %p39 = por %p37, %p38
    %p40 = scmp.ne.s32.totalorder %s26, %s27
    %p41 = scmp.eq.s32.totalorder %s19, 1
    %p42 = por %p40, %p41
    %p44 = scmp.ne.s32.totalorder %s27, %s43
    %p45 = scmp.eq.s32.totalorder %s19, 0
    %p46 = por %p44, %p45
    %s48 = sadd.s32 %s47, 1
    %p51 = scmp.eq.s32.totalorder %s13, 1
    %p52 = scmp.ne.s32.totalorder %s47, %s49
    %p53 = scmp.eq.s32.totalorder %s13, 0
    %p54 = por %p52, %p53
    %p55 = scmp.ne.s32.totalorder %s47, %s49
    %p56 = scmp.eq.s32.totalorder %s18, 1
    %p57 = por %p55, %p56
    %p58 = scmp.ne.s32.totalorder %s49, %s50
    %p59 = scmp.eq.s32.totalorder %s18, 0
    %p60 = por %p58, %p59
    %p61 = scmp.ne.s32.totalorder %s49, %s50
    %p62 = scmp.eq.s32.totalorder %s19, 1
    %p63 = por %p61, %p62
    %p65 = scmp.ne.s32.totalorder %s50, %s64
    %p66 = scmp.eq.s32.totalorder %s19, 0
    %p67 = por %p65, %p66
    %s69 = sadd.s32 %s68, 1
    %p72 = scmp.eq.s32.totalorder %s13, 1
    %p73 = scmp.ne.s32.totalorder %s68, %s70
    %p74 = scmp.eq.s32.totalorder %s13, 0
    %p75 = por %p73, %p74
    %p76 = scmp.ne.s32.totalorder %s68, %s70
    %p77 = scmp.eq.s32.totalorder %s18, 1
    %p78 = por %p76, %p77
    %p79 = scmp.ne.s32.totalorder %s70, %s71
    %p80 = scmp.eq.s32.totalorder %s18, 0
    %p81 = por %p79, %p80
    %p82 = scmp.ne.s32.totalorder %s70, %s71
    %p83 = scmp.eq.s32.totalorder %s19, 1
    %p84 = por %p82, %p83
    %p86 = scmp.ne.s32.totalorder %s71, %s85
    %p87 = scmp.eq.s32.totalorder %s19, 0
    %p88 = por %p86, %p87
    %s90 = sadd.s32 %s89, 1
    %p93 = scmp.eq.s32.totalorder %s13, 1
    %p94 = scmp.ne.s32.totalorder %s89, %s91
    %p95 = scmp.eq.s32.totalorder %s13, 0
    %p96 = por %p94, %p95
    %p97 = scmp.ne.s32.totalorder %s89, %s91
    %p98 = scmp.eq.s32.totalorder %s18, 1
    %p99 = por %p97, %p98
    %p100 = scmp.ne.s32.totalorder %s91, %s92
    %p101 = scmp.eq.s32.totalorder %s18, 0
    %p102 = por %p100, %p101
    %p103 = scmp.ne.s32.totalorder %s91, %s92
    %p104 = scmp.eq.s32.totalorder %s19, 1
    %p105 = por %p103, %p104
    %p107 = scmp.ne.s32.totalorder %s92, %s106
    %p108 = scmp.eq.s32.totalorder %s19, 0
    %p109 = por %p107, %p108
    %s110 = ssub.s32 %s13, %s20
    %p111 = scmp.eq.s32.totalorder %s110, 0
    %s113 = sadd.s32 %s112, 1
    %s114 = scalar_select %p111, %s112, %s113
    %p117 = pneg %p111
    %p118 = scmp.eq.s32.totalorder %s13, 1
    %p119 = por %p117, %p118
    %p120 = scmp.ne.s32.totalorder %s112, %s115
    %p121 = scmp.eq.s32.totalorder %s13, 0
    %p122 = por %p120, %p121
    %p123 = scmp.ne.s32.totalorder %s112, %s115
    %p124 = scmp.eq.s32.totalorder %s18, 1
    %p125 = por %p123, %p124
    %p126 = scmp.ne.s32.totalorder %s115, %s116
    %p127 = scmp.eq.s32.totalorder %s18, 0
    %p128 = por %p126, %p127
    %p129 = scmp.ne.s32.totalorder %s115, %s116
    %p130 = scmp.eq.s32.totalorder %s19, 1
    %p131 = por %p129, %p130
    %p133 = scmp.ne.s32.totalorder %s116, %s132
    %p134 = scmp.eq.s32.totalorder %s19, 0
    %p135 = por %p133, %p134
    %s136 = ssub.s32 %s13, %s20
    %p137 = scmp.eq.s32.totalorder %s136, 0
    %s139 = sadd.s32 %s138, 1
    %s140 = scalar_select %p137, %s138, %s139
    %p143 = pneg %p137
    %p144 = scmp.eq.s32.totalorder %s13, 1
    %p145 = por %p143, %p144
    %p146 = scmp.ne.s32.totalorder %s138, %s141
    %p147 = scmp.eq.s32.totalorder %s13, 0
    %p148 = por %p146, %p147
    %p149 = scmp.ne.s32.totalorder %s138, %s141
    %p150 = scmp.eq.s32.totalorder %s18, 1
    %p151 = por %p149, %p150
    %p152 = scmp.ne.s32.totalorder %s141, %s142
    %p153 = scmp.eq.s32.totalorder %s18, 0
    %p154 = por %p152, %p153
    %p155 = scmp.ne.s32.totalorder %s141, %s142
    %p156 = scmp.eq.s32.totalorder %s19, 1
    %p157 = por %p155, %p156
    %p159 = scmp.ne.s32.totalorder %s142, %s158
    %p160 = scmp.eq.s32.totalorder %s19, 0
    %p161 = por %p159, %p160
    %s162 = ssub.s32 %s13, %s20
    %p163 = scmp.eq.s32.totalorder %s162, 0
    %s165 = sadd.s32 %s164, 1
    %s166 = scalar_select %p163, %s164, %s165
    %p169 = pneg %p163
    %p170 = scmp.eq.s32.totalorder %s13, 1
    %p171 = por %p169, %p170
    %p172 = scmp.ne.s32.totalorder %s164, %s167
    %p173 = scmp.eq.s32.totalorder %s13, 0
    %p174 = por %p172, %p173
    %p175 = scmp.ne.s32.totalorder %s164, %s167
    %p176 = scmp.eq.s32.totalorder %s18, 1
    %p177 = por %p175, %p176
    %p178 = scmp.ne.s32.totalorder %s167, %s168
    %p179 = scmp.eq.s32.totalorder %s18, 0
    %p180 = por %p178, %p179
    %p181 = scmp.ne.s32.totalorder %s167, %s168
    %p182 = scmp.eq.s32.totalorder %s19, 1
    %p183 = por %p181, %p182
    %p185 = scmp.ne.s32.totalorder %s168, %s184
    %p186 = scmp.eq.s32.totalorder %s19, 0
    %p187 = por %p185, %p186
    %p188 = scmp.le.s32.totalorder 1, %s13
    %p189 = scmp.lt.s32.totalorder %s13, 3
    %p190 = pnand %p188, %p189
    %p191 = pneg %p190
    // Predicated region
    $region9: #{gat_gcn_forward.6} parent=5 // pred_check
      _
    $region10: #{gat_gcn_forward.6} parent=5 // pred_check_branch
      %193 = sbr.rel (%p190) target = $region12
    $region11: #{gat_gcn_forward.6} parent=5 // pred_region
      %s194 = ssub.s32 %s13, 1
      // Predicated region
      $region13: #{gat_gcn_forward.6} parent=11 // pred_check
        %p195 = pneg %p60
      $region14: #{gat_gcn_forward.6} parent=11 // pred_check_branch
        %197 = sbr.rel (%p195) target = $region16
      $region15: #{gat_gcn_forward.6} parent=11 // pred_region
        _
      $region16: #{gat_gcn_forward.6} parent=11 // pred_fallthru
        _
      // Predicated region
      $region17: #{gat_gcn_forward.6} parent=11 // pred_check
        %p198 = pneg %p81
      $region18: #{gat_gcn_forward.6} parent=11 // pred_check_branch
        %200 = sbr.rel (%p198) target = $region20
      $region19: #{gat_gcn_forward.6} parent=11 // pred_region
        _
      $region20: #{gat_gcn_forward.6} parent=11 // pred_fallthru
        _
      // Predicated region
      $region21: #{gat_gcn_forward.6} parent=11 // pred_check
        %p201 = pneg %p102
      $region22: #{gat_gcn_forward.6} parent=11 // pred_check_branch
        %203 = sbr.rel (%p201) target = $region24
      $region23: #{gat_gcn_forward.6} parent=11 // pred_region
        _
      $region24: #{gat_gcn_forward.6} parent=11 // pred_fallthru
        _
    $region12: #{gat_gcn_forward.6} parent=5 // pred_fallthru
      _
    %p204 = scmp.lt.s32.totalorder %s13, 2
    // Predicated region
    $region25: #{gat_gcn_forward.6} parent=5 // pred_check
      %p205 = pneg %p204
    $region26: #{gat_gcn_forward.6} parent=5 // pred_check_branch
      %207 = sbr.rel (%p205) target = $region28
    $region27: #{gat_gcn_forward.6} parent=5 // pred_region
      // Predicated region
      $region29: #{gat_gcn_forward.6} parent=27 // pred_check
        %p208 = pneg %p33
      $region30: #{gat_gcn_forward.6} parent=27 // pred_check_branch
        %210 = sbr.rel (%p208) target = $region32
      $region31: #{gat_gcn_forward.6} parent=27 // pred_region
        %s211 = smul.u32 16, %s13
        %p212 = scmp.lt.s32.totalorder %s211, 31
        %s213 = scalar_select %p212, %s211, 31
        %s214 = smul.addr %s213, 8
        %s215 = scalar_lea.vmem %s0, %s214
        %s216 = smul.u32 16, %s13
      $region32: #{gat_gcn_forward.6} parent=27 // pred_fallthru
        _
    $region28: #{gat_gcn_forward.6} parent=5 // pred_fallthru
      _
    %p217 = scmp.le.s32.totalorder 1, %s13
    %p218 = scmp.lt.s32.totalorder %s13, 3
    %p219 = pnand %p217, %p218
    %p220 = pneg %p219
    // Predicated region
    $region33: #{gat_gcn_forward.6} parent=5 // pred_check
      _
    $region34: #{gat_gcn_forward.6} parent=5 // pred_check_branch
      %222 = sbr.rel (%p219) target = $region36
    $region35: #{gat_gcn_forward.6} parent=5 // pred_region
      %s223 = ssub.s32 %s13, 1
      %s224 = smul.u32 16, %s18
      %p225 = scmp.lt.s32.totalorder %s224, 31
      %s226 = scalar_select %p225, %s224, 31
      %s227 = smul.addr %s226, 8
      %s228 = scalar_lea.vmem %s0, %s227
      %p229 = pneg %p39
      %p230 = pneg %p36
      %p231 = pneg %p60
      %p232 = pneg %p57
      %p233 = pneg %p81
      %p234 = pneg %p78
      %p235 = pneg %p102
      %p236 = pneg %p99
      %p237 = pneg %p128
      %p238 = pneg %p125
      %s239 = smul.u32 16, %s18
      %p240 = scmp.lt.s32.totalorder %s239, 31
      %s241 = scalar_select %p240, %s239, 31
      %s242 = smul.addr %s241, 4
      %s243 = scalar_lea.vmem %s4, %s242
      %p244 = pneg %p154
      %p245 = pneg %p151
      %s246 = smul.u32 16, %s18
      %p247 = scmp.lt.s32.totalorder %s246, 31
      %s248 = scalar_select %p247, %s246, 31
      %s249 = smul.addr %s248, 8
      %s250 = scalar_lea.vmem %s5, %s249
      %p251 = pneg %p180
      %p252 = pneg %p177
      %s253 = smul.u32 16, %s18
      %p254 = scmp.lt.s32.totalorder %s253, 31
      %s255 = scalar_select %p254, %s253, 31
      %s256 = smul.addr %s255, 8
      %s257 = scalar_lea.vmem %s6, %s256
      %s258 = smul.u32 16, %s18
      %p259 = scmp.lt.s32.totalorder %s258, 31
      %s260 = scalar_select %p259, %s258, 31
      %s261 = smul.addr %s260, 8
      %s262 = scalar_lea.vmem %s0, %s261
      %s263 = smul.u32 16, %s18
      %s264 = smul.u32 16, %s18
      %p265 = scmp.lt.s32.totalorder %s264, 31
      %s266 = scalar_select %p265, %s264, 31
      %s267 = smul.addr %s266, 4
      %s268 = scalar_lea.vmem %s4, %s267
      %s269 = smul.u32 16, %s18
      %s270 = smul.u32 16, %s18
      %p271 = scmp.lt.s32.totalorder %s270, 31
      %s272 = scalar_select %p271, %s270, 31
      %s273 = smul.addr %s272, 8
      %s274 = scalar_lea.vmem %s5, %s273
      %s275 = smul.u32 16, %s18
      %s276 = smul.u32 16, %s18
      %p277 = scmp.lt.s32.totalorder %s276, 31
      %s278 = scalar_select %p277, %s276, 31
      %s279 = smul.addr %s278, 8
      %s280 = scalar_lea.vmem %s6, %s279
      %s281 = smul.u32 16, %s18
      %v282 = vld [vmem:[%s262] sm:$0xff]
      %v283 = vld [vmem:[%s262 + $0x8] sm:$0xff]
      %v284 = vld [vmem:[%s262 + $0x10] sm:$0xff]
      %v285 = vld [vmem:[%s262 + $0x18] sm:$0xff]
      %v286 = vld [vmem:[%s262 + $0x20] sm:$0xff]
      %v287 = vld [vmem:[%s262 + $0x28] sm:$0xff]
      %v288 = vld [vmem:[%s262 + $0x30] sm:$0xff]
      %v289 = vld [vmem:[%s262 + $0x38] sm:$0xff]
      %v290 = vld [vmem:[%s262 + $0x40] sm:$0xff]
      %v291 = vld [vmem:[%s262 + $0x48] sm:$0xff]
      %v292 = vld [vmem:[%s262 + $0x50] sm:$0xff]
      %v293 = vld [vmem:[%s262 + $0x58] sm:$0xff]
      %v294 = vld [vmem:[%s262 + $0x60] sm:$0xff]
      %v295 = vld [vmem:[%s262 + $0x68] sm:$0xff]
      %v296 = vld [vmem:[%s262 + $0x70] sm:$0xff]
      %v297 = vld [vmem:[%s262 + $0x78] sm:$0xff]
      %v298 = vld [vmem:[%s1] sm:$0xff]
      %v299 = vld [vmem:[%s1 + $0x8] sm:$0xff]
      %v300 = vld [vmem:[%s1 + $0x10] sm:$0xff]
      %v301 = vld [vmem:[%s1 + $0x18] sm:$0xff]
      %v302 = vld [vmem:[%s1 + $0x20] sm:$0xff]
      %v303 = vld [vmem:[%s1 + $0x28] sm:$0xff]
      %v304 = vld [vmem:[%s1 + $0x30] sm:$0xff]
      %v305 = vld [vmem:[%s1 + $0x38] sm:$0xff]
      %v306 = vld [vmem:[%s1 + $0x40] sm:$0xff]
      %v307 = vld [vmem:[%s1 + $0x48] sm:$0xff]
      %v308 = vld [vmem:[%s1 + $0x50] sm:$0xff]
      %v309 = vld [vmem:[%s1 + $0x58] sm:$0xff]
      %v310 = vld [vmem:[%s1 + $0x60] sm:$0xff]
      %v311 = vld [vmem:[%s1 + $0x68] sm:$0xff]
      %v312 = vld [vmem:[%s1 + $0x70] sm:$0xff]
      %v313 = vld [vmem:[%s1 + $0x78] sm:$0xff]
      %314 = vmatprep.subr.mxu0 0.0
      %315 = vmatpush1.msra.mxu0 %v298
      %316 = vmatprep.subr.mxu0 0.0
      %317 = vmatpush1.msra.mxu0 %v299
      %318 = vmatprep.subr.mxu0 0.0
      %319 = vmatpush1.msra.mxu0 %v300
      %320 = vmatprep.subr.mxu0 0.0
      %321 = vmatpush1.msra.mxu0 %v301
      %322 = vmatprep.subr.mxu0 0.0
      %323 = vmatpush1.msra.mxu0 %v302
      %324 = vmatprep.subr.mxu0 0.0
      %325 = vmatpush1.msra.mxu0 %v303
      %326 = vmatprep.subr.mxu0 0.0
      %327 = vmatpush1.msra.mxu0 %v304
      %328 = vmatprep.subr.mxu0 0.0
      %329 = vmatpush1.msra.mxu0 %v305
      %330 = vmatprep.subr.mxu0 0.0
      %331 = vmatpush1.msra.mxu0 %v306
      %332 = vmatprep.subr.mxu0 0.0
      %333 = vmatpush1.msra.mxu0 %v307
      %334 = vmatprep.subr.mxu0 0.0
      %335 = vmatpush1.msra.mxu0 %v308
      %336 = vmatprep.subr.mxu0 0.0
      %337 = vmatpush1.msra.mxu0 %v309
      %338 = vmatprep.subr.mxu0 0.0
      %339 = vmatpush1.msra.mxu0 %v310
      %340 = vmatprep.subr.mxu0 0.0
      %341 = vmatpush1.msra.mxu0 %v311
      %342 = vmatprep.subr.mxu0 0.0
      %343 = vmatpush1.msra.mxu0 %v312
      %344 = vmatprep.subr.mxu0 0.0
      %345 = vmatpush1.msra.mxu0 %v313
      %346 = vmatprep.subr.mxu0 0.0
      %347 = vmatpush1.msra.mxu0 0.0
      %348 = vmatprep.subr.mxu0 0.0
      %349 = vmatpush1.msra.mxu0 0.0
      %350 = vmatprep.subr.mxu0 0.0
      %351 = vmatpush1.msra.mxu0 0.0
      %352 = vmatprep.subr.mxu0 0.0
      %353 = vmatpush1.msra.mxu0 0.0
      %354 = vmatprep.subr.mxu0 0.0
      %355 = vmatpush1.msra.mxu0 0.0
      %356 = vmatprep.subr.mxu0 0.0
      %357 = vmatpush1.msra.mxu0 0.0
      %358 = vmatprep.subr.mxu0 0.0
      %359 = vmatpush1.msra.mxu0 0.0
      %360 = vmatprep.subr.mxu0 0.0
      %361 = vmatpush1.msra.mxu0 0.0
      %362 = vmatprep.subr.mxu0 0.0
      %363 = vmatpush1.msra.mxu0 0.0
      %364 = vmatprep.subr.mxu0 0.0
      %365 = vmatpush1.msra.mxu0 0.0
      %366 = vmatprep.subr.mxu0 0.0
      %367 = vmatpush1.msra.mxu0 0.0
      %368 = vmatprep.subr.mxu0 0.0
      %369 = vmatpush1.msra.mxu0 0.0
      %370 = vmatprep.subr.mxu0 0.0
      %371 = vmatpush1.msra.mxu0 0.0
      %372 = vmatprep.subr.mxu0 0.0
      %373 = vmatpush1.msra.mxu0 0.0
      %374 = vmatprep.subr.mxu0 0.0
      %375 = vmatpush1.msra.mxu0 0.0
      %376 = vmatprep.subr.mxu0 0.0
      %377 = vmatpush1.msra.mxu0 0.0
      %378 = vmatprep.mubr.f32.mxu0 0.0
      %379 = vmatmul.mubr.f32.gmra.mrb[0].mxu0 %v282
      %v380 = vpop.f32.mrb[0].mxu0
      %v381 = vadd.f32 0.0, %v380
      %v382 = vpop.f32.mrb[0].mxu0
      %383 = vmatprep.mubr.f32.mxu0 0.0
      %384 = vmatmul.mubr.f32.gmra.mrb[0].mxu0 %v283
      %v385 = vpop.f32.mrb[0].mxu0
      %v386 = vadd.f32 0.0, %v385
      %v387 = vpop.f32.mrb[0].mxu0
      %388 = vmatprep.mubr.f32.mxu0 0.0
      %389 = vmatmul.mubr.f32.gmra.mrb[0].mxu0 %v284
      %v390 = vpop.f32.mrb[0].mxu0
      %v391 = vadd.f32 0.0, %v390
      %v392 = vpop.f32.mrb[0].mxu0
      %393 = vmatprep.mubr.f32.mxu0 0.0
      %394 = vmatmul.mubr.f32.gmra.mrb[0].mxu0 %v285
      %v395 = vpop.f32.mrb[0].mxu0
      %v396 = vadd.f32 0.0, %v395
      %v397 = vpop.f32.mrb[0].mxu0
      %398 = vmatprep.mubr.f32.mxu0 0.0
      %399 = vmatmul.mubr.f32.gmra.mrb[0].mxu0 %v286
      %v400 = vpop.f32.mrb[0].mxu0
      %v401 = vadd.f32 0.0, %v400
      %v402 = vpop.f32.mrb[0].mxu0
      %403 = vmatprep.mubr.f32.mxu0 0.0
      %404 = vmatmul.mubr.f32.gmra.mrb[0].mxu0 %v287
      %v405 = vpop.f32.mrb[0].mxu0
      %v406 = vadd.f32 0.0, %v405
      %v407 = vpop.f32.mrb[0].mxu0
      %408 = vmatprep.mubr.f32.mxu0 0.0
      %409 = vmatmul.mubr.f32.gmra.mrb[0].mxu0 %v288
      %v410 = vpop.f32.mrb[0].mxu0
      %v411 = vadd.f32 0.0, %v410
      %v412 = vpop.f32.mrb[0].mxu0
      %413 = vmatprep.mubr.f32.mxu0 0.0
      %414 = vmatmul.mubr.f32.gmra.mrb[0].mxu0 %v289
      %v415 = vpop.f32.mrb[0].mxu0
      %v416 = vadd.f32 0.0, %v415
      %v417 = vpop.f32.mrb[0].mxu0
      %418 = vmatprep.mubr.f32.mxu0 0.0
      %419 = vmatmul.mubr.f32.gmra.mrb[0].mxu0 %v290
      %v420 = vpop.f32.mrb[0].mxu0
      %v421 = vadd.f32 0.0, %v420
      %v422 = vpop.f32.mrb[0].mxu0
      %423 = vmatprep.mubr.f32.mxu0 0.0
      %424 = vmatmul.mubr.f32.gmra.mrb[0].mxu0 %v291
      %v425 = vpop.f32.mrb[0].mxu0
      %v426 = vadd.f32 0.0, %v425
      %v427 = vpop.f32.mrb[0].mxu0
      %428 = vmatprep.mubr.f32.mxu0 0.0
      %429 = vmatmul.mubr.f32.gmra.mrb[0].mxu0 %v292
      %v430 = vpop.f32.mrb[0].mxu0
      %v431 = vadd.f32 0.0, %v430
      %v432 = vpop.f32.mrb[0].mxu0
      %433 = vmatprep.mubr.f32.mxu0 0.0
      %434 = vmatmul.mubr.f32.gmra.mrb[0].mxu0 %v293
      %v435 = vpop.f32.mrb[0].mxu0
      %v436 = vadd.f32 0.0, %v435
      %v437 = vpop.f32.mrb[0].mxu0
      %438 = vmatprep.mubr.f32.mxu0 0.0
      %439 = vmatmul.mubr.f32.gmra.mrb[0].mxu0 %v294
      %v440 = vpop.f32.mrb[0].mxu0
      %v441 = vadd.f32 0.0, %v440
      %v442 = vpop.f32.mrb[0].mxu0
      %443 = vmatprep.mubr.f32.mxu0 0.0
      %444 = vmatmul.mubr.f32.gmra.mrb[0].mxu0 %v295
      %v445 = vpop.f32.mrb[0].mxu0
      %v446 = vadd.f32 0.0, %v445
      %v447 = vpop.f32.mrb[0].mxu0
      %448 = vmatprep.mubr.f32.mxu0 0.0
      %449 = vmatmul.mubr.f32.gmra.mrb[0].mxu0 %v296
      %v450 = vpop.f32.mrb[0].mxu0
      %v451 = vadd.f32 0.0, %v450
      %v452 = vpop.f32.mrb[0].mxu0
      %453 = vmatprep.mubr.f32.mxu0 0.0
      %454 = vmatmul.mubr.f32.gmra.mrb[0].mxu0 %v297
      %v455 = vpop.f32.mrb[0].mxu0
      %v456 = vadd.f32 0.0, %v455
      %v457 = vpop.f32.mrb[0].mxu0
      %458 = vdwg.mxu0
      %v459 = vld [vmem:[%s2] sm:$0xff]
      %v460 = vld [vmem:[%s2 + $0x8] sm:$0xff]
      %v461 = vld [vmem:[%s2 + $0x10] sm:$0xff]
      %v462 = vld [vmem:[%s2 + $0x18] sm:$0xff]
      %v463 = vld [vmem:[%s2 + $0x20] sm:$0xff]
      %v464 = vld [vmem:[%s2 + $0x28] sm:$0xff]
      %v465 = vld [vmem:[%s2 + $0x30] sm:$0xff]
      %v466 = vld [vmem:[%s2 + $0x38] sm:$0xff]
      %v467 = vld [vmem:[%s2 + $0x40] sm:$0xff]
      %v468 = vld [vmem:[%s2 + $0x48] sm:$0xff]
      %v469 = vld [vmem:[%s2 + $0x50] sm:$0xff]
      %v470 = vld [vmem:[%s2 + $0x58] sm:$0xff]
      %v471 = vld [vmem:[%s2 + $0x60] sm:$0xff]
      %v472 = vld [vmem:[%s2 + $0x68] sm:$0xff]
      %v473 = vld [vmem:[%s2 + $0x70] sm:$0xff]
      %v474 = vld [vmem:[%s2 + $0x78] sm:$0xff]
      %475 = vmatprep.subr.mxu0 0.0
      %476 = vmatpush1.msra.mxu0 %v459
      %477 = vmatprep.subr.mxu0 0.0
      %478 = vmatpush1.msra.mxu0 %v460
      %479 = vmatprep.subr.mxu0 0.0
      %480 = vmatpush1.msra.mxu0 %v461
      %481 = vmatprep.subr.mxu0 0.0
      %482 = vmatpush1.msra.mxu0 %v462
      %483 = vmatprep.subr.mxu0 0.0
      %484 = vmatpush1.msra.mxu0 %v463
      %485 = vmatprep.subr.mxu0 0.0
      %486 = vmatpush1.msra.mxu0 %v464
      %487 = vmatprep.subr.mxu0 0.0
      %488 = vmatpush1.msra.mxu0 %v465
      %489 = vmatprep.subr.mxu0 0.0
      %490 = vmatpush1.msra.mxu0 %v466
      %491 = vmatprep.subr.mxu0 0.0
      %492 = vmatpush1.msra.mxu0 %v467
      %493 = vmatprep.subr.mxu0 0.0
      %494 = vmatpush1.msra.mxu0 %v468
      %495 = vmatprep.subr.mxu0 0.0
      %496 = vmatpush1.msra.mxu0 %v469
      %497 = vmatprep.subr.mxu0 0.0
      %498 = vmatpush1.msra.mxu0 %v470
      %499 = vmatprep.subr.mxu0 0.0
      %500 = vmatpush1.msra.mxu0 %v471
      %501 = vmatprep.subr.mxu0 0.0
      %502 = vmatpush1.msra.mxu0 %v472
      %503 = vmatprep.subr.mxu0 0.0
      %504 = vmatpush1.msra.mxu0 %v473
      %505 = vmatprep.subr.mxu0 0.0
      %506 = vmatpush1.msra.mxu0 %v474
      %507 = vmatprep.subr.mxu0 0.0
      %508 = vmatpush1.msra.mxu0 0.0
      %509 = vmatprep.subr.mxu0 0.0
      %510 = vmatpush1.msra.mxu0 0.0
      %511 = vmatprep.subr.mxu0 0.0
      %512 = vmatpush1.msra.mxu0 0.0
      %513 = vmatprep.subr.mxu0 0.0
      %514 = vmatpush1.msra.mxu0 0.0
      %515 = vmatprep.subr.mxu0 0.0
      %516 = vmatpush1.msra.mxu0 0.0
      %517 = vmatprep.subr.mxu0 0.0
      %518 = vmatpush1.msra.mxu0 0.0
      %519 = vmatprep.subr.mxu0 0.0
      %520 = vmatpush1.msra.mxu0 0.0
      %521 = vmatprep.subr.mxu0 0.0
      %522 = vmatpush1.msra.mxu0 0.0
      %523 = vmatprep.subr.mxu0 0.0
      %524 = vmatpush1.msra.mxu0 0.0
      %525 = vmatprep.subr.mxu0 0.0
      %526 = vmatpush1.msra.mxu0 0.0
      %527 = vmatprep.subr.mxu0 0.0
      %528 = vmatpush1.msra.mxu0 0.0
      %529 = vmatprep.subr.mxu0 0.0
      %530 = vmatpush1.msra.mxu0 0.0
      %531 = vmatprep.subr.mxu0 0.0
      %532 = vmatpush1.msra.mxu0 0.0
      %533 = vmatprep.subr.mxu0 0.0
      %534 = vmatpush1.msra.mxu0 0.0
      %535 = vmatprep.subr.mxu0 0.0
      %536 = vmatpush1.msra.mxu0 0.0
      %537 = vmatprep.subr.mxu0 0.0
      %538 = vmatpush1.msra.mxu0 0.0
      %539 = vmatprep.mubr.f32.mxu0 0.0
      %540 = vmatmul.mubr.f32.gmra.mrb[0].mxu0 %v381
      %v541 = vpop.f32.mrb[0].mxu0
      %v542 = vadd.f32 0.0, %v541
      %v543 = vpop.f32.mrb[0].mxu0
      %544 = vmatprep.mubr.f32.mxu0 0.0
      %545 = vmatmul.mubr.f32.gmra.mrb[0].mxu0 %v386
      %v546 = vpop.f32.mrb[0].mxu0
      %v547 = vadd.f32 0.0, %v546
      %v548 = vpop.f32.mrb[0].mxu0
      %549 = vmatprep.mubr.f32.mxu0 0.0
      %550 = vmatmul.mubr.f32.gmra.mrb[0].mxu0 %v391
      %v551 = vpop.f32.mrb[0].mxu0
      %v552 = vadd.f32 0.0, %v551
      %v553 = vpop.f32.mrb[0].mxu0
      %554 = vmatprep.mubr.f32.mxu0 0.0
      %555 = vmatmul.mubr.f32.gmra.mrb[0].mxu0 %v396
      %v556 = vpop.f32.mrb[0].mxu0
      %v557 = vadd.f32 0.0, %v556
      %v558 = vpop.f32.mrb[0].mxu0
      %559 = vmatprep.mubr.f32.mxu0 0.0
      %560 = vmatmul.mubr.f32.gmra.mrb[0].mxu0 %v401
      %v561 = vpop.f32.mrb[0].mxu0
      %v562 = vadd.f32 0.0, %v561
      %v563 = vpop.f32.mrb[0].mxu0
      %564 = vmatprep.mubr.f32.mxu0 0.0
      %565 = vmatmul.mubr.f32.gmra.mrb[0].mxu0 %v406
      %v566 = vpop.f32.mrb[0].mxu0
      %v567 = vadd.f32 0.0, %v566
      %v568 = vpop.f32.mrb[0].mxu0
      %569 = vmatprep.mubr.f32.mxu0 0.0
      %570 = vmatmul.mubr.f32.gmra.mrb[0].mxu0 %v411
      %v571 = vpop.f32.mrb[0].mxu0
      %v572 = vadd.f32 0.0, %v571
      %v573 = vpop.f32.mrb[0].mxu0
      %574 = vmatprep.mubr.f32.mxu0 0.0
      %575 = vmatmul.mubr.f32.gmra.mrb[0].mxu0 %v416
      %v576 = vpop.f32.mrb[0].mxu0
      %v577 = vadd.f32 0.0, %v576
      %v578 = vpop.f32.mrb[0].mxu0
      %579 = vmatprep.mubr.f32.mxu0 0.0
      %580 = vmatmul.mubr.f32.gmra.mrb[0].mxu0 %v421
      %v581 = vpop.f32.mrb[0].mxu0
      %v582 = vadd.f32 0.0, %v581
      %v583 = vpop.f32.mrb[0].mxu0
      %584 = vmatprep.mubr.f32.mxu0 0.0
      %585 = vmatmul.mubr.f32.gmra.mrb[0].mxu0 %v426
      %v586 = vpop.f32.mrb[0].mxu0
      %v587 = vadd.f32 0.0, %v586
      %v588 = vpop.f32.mrb[0].mxu0
      %589 = vmatprep.mubr.f32.mxu0 0.0
      %590 = vmatmul.mubr.f32.gmra.mrb[0].mxu0 %v431
      %v591 = vpop.f32.mrb[0].mxu0
      %v592 = vadd.f32 0.0, %v591
      %v593 = vpop.f32.mrb[0].mxu0
      %594 = vmatprep.mubr.f32.mxu0 0.0
      %595 = vmatmul.mubr.f32.gmra.mrb[0].mxu0 %v436
      %v596 = vpop.f32.mrb[0].mxu0
      %v597 = vadd.f32 0.0, %v596
      %v598 = vpop.f32.mrb[0].mxu0
      %599 = vmatprep.mubr.f32.mxu0 0.0
      %600 = vmatmul.mubr.f32.gmra.mrb[0].mxu0 %v441
      %v601 = vpop.f32.mrb[0].mxu0
      %v602 = vadd.f32 0.0, %v601
      %v603 = vpop.f32.mrb[0].mxu0
      %604 = vmatprep.mubr.f32.mxu0 0.0
      %605 = vmatmul.mubr.f32.gmra.mrb[0].mxu0 %v446
      %v606 = vpop.f32.mrb[0].mxu0
      %v607 = vadd.f32 0.0, %v606
      %v608 = vpop.f32.mrb[0].mxu0
      %609 = vmatprep.mubr.f32.mxu0 0.0
      %610 = vmatmul.mubr.f32.gmra.mrb[0].mxu0 %v451
      %v611 = vpop.f32.mrb[0].mxu0
      %v612 = vadd.f32 0.0, %v611
      %v613 = vpop.f32.mrb[0].mxu0
      %614 = vmatprep.mubr.f32.mxu0 0.0
      %615 = vmatmul.mubr.f32.gmra.mrb[0].mxu0 %v456
      %v616 = vpop.f32.mrb[0].mxu0
      %v617 = vadd.f32 0.0, %v616
      %v618 = vpop.f32.mrb[0].mxu0
      %619 = vdwg.mxu0
      %vm620 = vcmask 7168
      %621 = vst.msk [vmem:[%s274] sm:$0xff] %vm620, %v542
      %622 = vst.msk [vmem:[%s274 + $0x8] sm:$0xff] %vm620, %v547
      %623 = vst.msk [vmem:[%s274 + $0x10] sm:$0xff] %vm620, %v552
      %624 = vst.msk [vmem:[%s274 + $0x18] sm:$0xff] %vm620, %v557
      %625 = vst.msk [vmem:[%s274 + $0x20] sm:$0xff] %vm620, %v562
      %626 = vst.msk [vmem:[%s274 + $0x28] sm:$0xff] %vm620, %v567
      %627 = vst.msk [vmem:[%s274 + $0x30] sm:$0xff] %vm620, %v572
      %628 = vst.msk [vmem:[%s274 + $0x38] sm:$0xff] %vm620, %v577
      %629 = vst.msk [vmem:[%s274 + $0x40] sm:$0xff] %vm620, %v582
      %630 = vst.msk [vmem:[%s274 + $0x48] sm:$0xff] %vm620, %v587
      %631 = vst.msk [vmem:[%s274 + $0x50] sm:$0xff] %vm620, %v592
      %632 = vst.msk [vmem:[%s274 + $0x58] sm:$0xff] %vm620, %v597
      %633 = vst.msk [vmem:[%s274 + $0x60] sm:$0xff] %vm620, %v602
      %634 = vst.msk [vmem:[%s274 + $0x68] sm:$0xff] %vm620, %v607
      %635 = vst.msk [vmem:[%s274 + $0x70] sm:$0xff] %vm620, %v612
      %636 = vst.msk [vmem:[%s274 + $0x78] sm:$0xff] %vm620, %v617
      %v637 = vld [vmem:[%s3] sm:$0xff]
      %v638 = vld [vmem:[%s3 + $0x8] sm:$0xff]
      %v639 = vld [vmem:[%s3 + $0x10] sm:$0xff]
      %v640 = vld [vmem:[%s3 + $0x18] sm:$0xff]
      %v641 = vld [vmem:[%s3 + $0x20] sm:$0xff]
      %v642 = vld [vmem:[%s3 + $0x28] sm:$0xff]
      %v643 = vld [vmem:[%s3 + $0x30] sm:$0xff]
      %v644 = vld [vmem:[%s3 + $0x38] sm:$0xff]
      %v645 = vld [vmem:[%s3 + $0x40] sm:$0xff]
      %v646 = vld [vmem:[%s3 + $0x48] sm:$0xff]
      %v647 = vld [vmem:[%s3 + $0x50] sm:$0xff]
      %v648 = vld [vmem:[%s3 + $0x58] sm:$0xff]
      %v649 = vld [vmem:[%s3 + $0x60] sm:$0xff]
      %v650 = vld [vmem:[%s3 + $0x68] sm:$0xff]
      %v651 = vld [vmem:[%s3 + $0x70] sm:$0xff]
      %v652 = vld [vmem:[%s3 + $0x78] sm:$0xff]
      %653 = vmatprep.subr.mxu0 0.0
      %654 = vmatpush1.msra.mxu0 %v637
      %655 = vmatprep.subr.mxu0 0.0
      %656 = vmatpush1.msra.mxu0 %v638
      %657 = vmatprep.subr.mxu0 0.0
      %658 = vmatpush1.msra.mxu0 %v639
      %659 = vmatprep.subr.mxu0 0.0
      %660 = vmatpush1.msra.mxu0 %v640
      %661 = vmatprep.subr.mxu0 0.0
      %662 = vmatpush1.msra.mxu0 %v641
      %663 = vmatprep.subr.mxu0 0.0
      %664 = vmatpush1.msra.mxu0 %v642
      %665 = vmatprep.subr.mxu0 0.0
      %666 = vmatpush1.msra.mxu0 %v643
      %667 = vmatprep.subr.mxu0 0.0
      %668 = vmatpush1.msra.mxu0 %v644
      %669 = vmatprep.subr.mxu0 0.0
      %670 = vmatpush1.msra.mxu0 %v645
      %671 = vmatprep.subr.mxu0 0.0
      %672 = vmatpush1.msra.mxu0 %v646
      %673 = vmatprep.subr.mxu0 0.0
      %674 = vmatpush1.msra.mxu0 %v647
      %675 = vmatprep.subr.mxu0 0.0
      %676 = vmatpush1.msra.mxu0 %v648
      %677 = vmatprep.subr.mxu0 0.0
      %678 = vmatpush1.msra.mxu0 %v649
      %679 = vmatprep.subr.mxu0 0.0
      %680 = vmatpush1.msra.mxu0 %v650
      %681 = vmatprep.subr.mxu0 0.0
      %682 = vmatpush1.msra.mxu0 %v651
      %683 = vmatprep.subr.mxu0 0.0
      %684 = vmatpush1.msra.mxu0 %v652
      %685 = vmatprep.subr.mxu0 0.0
      %686 = vmatpush1.msra.mxu0 0.0
      %687 = vmatprep.subr.mxu0 0.0
      %688 = vmatpush1.msra.mxu0 0.0
      %689 = vmatprep.subr.mxu0 0.0
      %690 = vmatpush1.msra.mxu0 0.0
      %691 = vmatprep.subr.mxu0 0.0
      %692 = vmatpush1.msra.mxu0 0.0
      %693 = vmatprep.subr.mxu0 0.0
      %694 = vmatpush1.msra.mxu0 0.0
      %695 = vmatprep.subr.mxu0 0.0
      %696 = vmatpush1.msra.mxu0 0.0
      %697 = vmatprep.subr.mxu0 0.0
      %698 = vmatpush1.msra.mxu0 0.0
      %699 = vmatprep.subr.mxu0 0.0
      %700 = vmatpush1.msra.mxu0 0.0
      %701 = vmatprep.subr.mxu0 0.0
      %702 = vmatpush1.msra.mxu0 0.0
      %703 = vmatprep.subr.mxu0 0.0
      %704 = vmatpush1.msra.mxu0 0.0
      %705 = vmatprep.subr.mxu0 0.0
      %706 = vmatpush1.msra.mxu0 0.0
      %707 = vmatprep.subr.mxu0 0.0
      %708 = vmatpush1.msra.mxu0 0.0
      %709 = vmatprep.subr.mxu0 0.0
      %710 = vmatpush1.msra.mxu0 0.0
      %711 = vmatprep.subr.mxu0 0.0
      %712 = vmatpush1.msra.mxu0 0.0
      %713 = vmatprep.subr.mxu0 0.0
      %714 = vmatpush1.msra.mxu0 0.0
      %715 = vmatprep.subr.mxu0 0.0
      %716 = vmatpush1.msra.mxu0 0.0
      %717 = vmatprep.mubr.f32.mxu0 0.0
      %718 = vmatmul.mubr.f32.gmra.mrb[0].mxu0 %v381
      %v719 = vpop.f32.mrb[0].mxu0
      %v720 = vadd.f32 0.0, %v719
      %v721 = vpop.f32.mrb[0].mxu0
      %722 = vmatprep.mubr.f32.mxu0 0.0
      %723 = vmatmul.mubr.f32.gmra.mrb[0].mxu0 %v386
      %v724 = vpop.f32.mrb[0].mxu0
      %v725 = vadd.f32 0.0, %v724
      %v726 = vpop.f32.mrb[0].mxu0
      %727 = vmatprep.mubr.f32.mxu0 0.0
      %728 = vmatmul.mubr.f32.gmra.mrb[0].mxu0 %v391
      %v729 = vpop.f32.mrb[0].mxu0
      %v730 = vadd.f32 0.0, %v729
      %v731 = vpop.f32.mrb[0].mxu0
      %732 = vmatprep.mubr.f32.mxu0 0.0
      %733 = vmatmul.mubr.f32.gmra.mrb[0].mxu0 %v396
      %v734 = vpop.f32.mrb[0].mxu0
      %v735 = vadd.f32 0.0, %v734
      %v736 = vpop.f32.mrb[0].mxu0
      %737 = vmatprep.mubr.f32.mxu0 0.0
      %738 = vmatmul.mubr.f32.gmra.mrb[0].mxu0 %v401
      %v739 = vpop.f32.mrb[0].mxu0
      %v740 = vadd.f32 0.0, %v739
      %v741 = vpop.f32.mrb[0].mxu0
      %742 = vmatprep.mubr.f32.mxu0 0.0
      %743 = vmatmul.mubr.f32.gmra.mrb[0].mxu0 %v406
      %v744 = vpop.f32.mrb[0].mxu0
      %v745 = vadd.f32 0.0, %v744
      %v746 = vpop.f32.mrb[0].mxu0
      %747 = vmatprep.mubr.f32.mxu0 0.0
      %748 = vmatmul.mubr.f32.gmra.mrb[0].mxu0 %v411
      %v749 = vpop.f32.mrb[0].mxu0
      %v750 = vadd.f32 0.0, %v749
      %v751 = vpop.f32.mrb[0].mxu0
      %752 = vmatprep.mubr.f32.mxu0 0.0
      %753 = vmatmul.mubr.f32.gmra.mrb[0].mxu0 %v416
      %v754 = vpop.f32.mrb[0].mxu0
      %v755 = vadd.f32 0.0, %v754
      %v756 = vpop.f32.mrb[0].mxu0
      %757 = vmatprep.mubr.f32.mxu0 0.0
      %758 = vmatmul.mubr.f32.gmra.mrb[0].mxu0 %v421
      %v759 = vpop.f32.mrb[0].mxu0
      %v760 = vadd.f32 0.0, %v759
      %v761 = vpop.f32.mrb[0].mxu0
      %762 = vmatprep.mubr.f32.mxu0 0.0
      %763 = vmatmul.mubr.f32.gmra.mrb[0].mxu0 %v426
      %v764 = vpop.f32.mrb[0].mxu0
      %v765 = vadd.f32 0.0, %v764
      %v766 = vpop.f32.mrb[0].mxu0
      %767 = vmatprep.mubr.f32.mxu0 0.0
      %768 = vmatmul.mubr.f32.gmra.mrb[0].mxu0 %v431
      %v769 = vpop.f32.mrb[0].mxu0
      %v770 = vadd.f32 0.0, %v769
      %v771 = vpop.f32.mrb[0].mxu0
      %772 = vmatprep.mubr.f32.mxu0 0.0
      %773 = vmatmul.mubr.f32.gmra.mrb[0].mxu0 %v436
      %v774 = vpop.f32.mrb[0].mxu0
      %v775 = vadd.f32 0.0, %v774
      %v776 = vpop.f32.mrb[0].mxu0
      %777 = vmatprep.mubr.f32.mxu0 0.0
      %778 = vmatmul.mubr.f32.gmra.mrb[0].mxu0 %v441
      %v779 = vpop.f32.mrb[0].mxu0
      %v780 = vadd.f32 0.0, %v779
      %v781 = vpop.f32.mrb[0].mxu0
      %782 = vmatprep.mubr.f32.mxu0 0.0
      %783 = vmatmul.mubr.f32.gmra.mrb[0].mxu0 %v446
      %v784 = vpop.f32.mrb[0].mxu0
      %v785 = vadd.f32 0.0, %v784
      %v786 = vpop.f32.mrb[0].mxu0
      %787 = vmatprep.mubr.f32.mxu0 0.0
      %788 = vmatmul.mubr.f32.gmra.mrb[0].mxu0 %v451
      %v789 = vpop.f32.mrb[0].mxu0
      %v790 = vadd.f32 0.0, %v789
      %v791 = vpop.f32.mrb[0].mxu0
      %792 = vmatprep.mubr.f32.mxu0 0.0
      %793 = vmatmul.mubr.f32.gmra.mrb[0].mxu0 %v456
      %v794 = vpop.f32.mrb[0].mxu0
      %v795 = vadd.f32 0.0, %v794
      %v796 = vpop.f32.mrb[0].mxu0
      %797 = vdwg.mxu0
      %798 = vst.msk [vmem:[%s280] sm:$0xff] %vm620, %v720
      %799 = vst.msk [vmem:[%s280 + $0x8] sm:$0xff] %vm620, %v725
      %800 = vst.msk [vmem:[%s280 + $0x10] sm:$0xff] %vm620, %v730
      %801 = vst.msk [vmem:[%s280 + $0x18] sm:$0xff] %vm620, %v735
      %802 = vst.msk [vmem:[%s280 + $0x20] sm:$0xff] %vm620, %v740
      %803 = vst.msk [vmem:[%s280 + $0x28] sm:$0xff] %vm620, %v745
      %804 = vst.msk [vmem:[%s280 + $0x30] sm:$0xff] %vm620, %v750
      %805 = vst.msk [vmem:[%s280 + $0x38] sm:$0xff] %vm620, %v755
      %806 = vst.msk [vmem:[%s280 + $0x40] sm:$0xff] %vm620, %v760
      %807 = vst.msk [vmem:[%s280 + $0x48] sm:$0xff] %vm620, %v765
      %808 = vst.msk [vmem:[%s280 + $0x50] sm:$0xff] %vm620, %v770
      %809 = vst.msk [vmem:[%s280 + $0x58] sm:$0xff] %vm620, %v775
      %810 = vst.msk [vmem:[%s280 + $0x60] sm:$0xff] %vm620, %v780
      %811 = vst.msk [vmem:[%s280 + $0x68] sm:$0xff] %vm620, %v785
      %812 = vst.msk [vmem:[%s280 + $0x70] sm:$0xff] %vm620, %v790
      %813 = vst.msk [vmem:[%s280 + $0x78] sm:$0xff] %vm620, %v795
      %v814 = vpack.c.bf16 %v386, %v381
      %v815 = vpack.c.bf16 %v396, %v391
      %v816 = vpack.c.bf16 %v406, %v401
      %v817 = vpack.c.bf16 %v416, %v411
      %v818 = vpack.c.bf16 %v426, %v421
      %v819 = vpack.c.bf16 %v436, %v431
      %v820 = vpack.c.bf16 %v446, %v441
      %v821 = vpack.c.bf16 %v456, %v451
      %v830 = vunpack.c.l.b16 %v814
      %v831 = vunpack.c.h.b16 %v814
      %v832 = vunpack.c.l.b16 %v815
      %v833 = vunpack.c.h.b16 %v815
      %v834 = vunpack.c.l.b16 %v816
      %v835 = vunpack.c.h.b16 %v816
      %v836 = vunpack.c.l.b16 %v817
      %v837 = vunpack.c.h.b16 %v817
      %v838 = vunpack.c.l.b16 %v818
      %v839 = vunpack.c.h.b16 %v818
      %v840 = vunpack.c.l.b16 %v819
      %v841 = vunpack.c.h.b16 %v819
      %v842 = vunpack.c.l.b16 %v820
      %v843 = vunpack.c.h.b16 %v820
      %v844 = vunpack.c.l.b16 %v821
      %v845 = vunpack.c.h.b16 %v821
      %v846 = vpack.c.b16 %v830, %v830
      %v847 = vpack.c.b16 %v831, %v831
      %v848 = vpack.c.b16 %v832, %v832
      %v849 = vpack.c.b16 %v833, %v833
      %v850 = vpack.c.b16 %v834, %v834
      %v851 = vpack.c.b16 %v835, %v835
      %v852 = vpack.c.b16 %v836, %v836
      %v853 = vpack.c.b16 %v837, %v837
      %v854 = vpack.c.b16 %v838, %v838
      %v855 = vpack.c.b16 %v839, %v839
      %v856 = vpack.c.b16 %v840, %v840
      %v857 = vpack.c.b16 %v841, %v841
      %v858 = vpack.c.b16 %v842, %v842
      %v859 = vpack.c.b16 %v843, %v843
      %v860 = vpack.c.b16 %v844, %v844
      %v861 = vpack.c.b16 %v845, %v845
      %878 = vst [vmem:[%s268] sm:$0xf] %v846
      %879 = vst [vmem:[%s268 + $0x4] sm:$0xf] %v847
      %880 = vst [vmem:[%s268 + $0x8] sm:$0xf] %v848
      %881 = vst [vmem:[%s268 + $0xc] sm:$0xf] %v849
      %882 = vst [vmem:[%s268 + $0x10] sm:$0xf] %v850
      %883 = vst [vmem:[%s268 + $0x14] sm:$0xf] %v851
      %884 = vst [vmem:[%s268 + $0x18] sm:$0xf] %v852
      %885 = vst [vmem:[%s268 + $0x1c] sm:$0xf] %v853
      %886 = vst [vmem:[%s268 + $0x20] sm:$0xf] %v854
      %887 = vst [vmem:[%s268 + $0x24] sm:$0xf] %v855
      %888 = vst [vmem:[%s268 + $0x28] sm:$0xf] %v856
      %889 = vst [vmem:[%s268 + $0x2c] sm:$0xf] %v857
      %890 = vst [vmem:[%s268 + $0x30] sm:$0xf] %v858
      %891 = vst [vmem:[%s268 + $0x34] sm:$0xf] %v859
      %892 = vst [vmem:[%s268 + $0x38] sm:$0xf] %v860
      %893 = vst [vmem:[%s268 + $0x3c] sm:$0xf] %v861
      %s894 = smul.u32 16, %s18
      %p895 = scmp.lt.s32.totalorder %s894, 31
      %s896 = scalar_select %p895, %s894, 31
      %s897 = smul.addr %s896, 4
      %s898 = scalar_lea.vmem %s4, %s897
      %s899 = smul.u32 16, %s18
      %p900 = scmp.lt.s32.totalorder %s899, 31
      %s901 = scalar_select %p900, %s899, 31
      %s902 = smul.addr %s901, 8
      %s903 = scalar_lea.vmem %s5, %s902
      %s904 = smul.u32 16, %s18
      %p905 = scmp.lt.s32.totalorder %s904, 31
      %s906 = scalar_select %p905, %s904, 31
      %s907 = smul.addr %s906, 8
      %s908 = scalar_lea.vmem %s6, %s907
      // Predicated region
      $region37: #{gat_gcn_forward.6} parent=35 // pred_check
        %p909 = pneg %p125
      $region38: #{gat_gcn_forward.6} parent=35 // pred_check_branch
        %911 = sbr.rel (%p909) target = $region40
      $region39: #{gat_gcn_forward.6} parent=35 // pred_region
        %s912 = smul.u32 16, %s18
      $region40: #{gat_gcn_forward.6} parent=35 // pred_fallthru
        _
      // Predicated region
      $region41: #{gat_gcn_forward.6} parent=35 // pred_check
        %p913 = pneg %p151
      $region42: #{gat_gcn_forward.6} parent=35 // pred_check_branch
        %915 = sbr.rel (%p913) target = $region44
      $region43: #{gat_gcn_forward.6} parent=35 // pred_region
        %s916 = smul.u32 16, %s18
      $region44: #{gat_gcn_forward.6} parent=35 // pred_fallthru
        _
      // Predicated region
      $region45: #{gat_gcn_forward.6} parent=35 // pred_check
        %p917 = pneg %p177
      $region46: #{gat_gcn_forward.6} parent=35 // pred_check_branch
        %919 = sbr.rel (%p917) target = $region48
      $region47: #{gat_gcn_forward.6} parent=35 // pred_region
        %s920 = smul.u32 16, %s18
      $region48: #{gat_gcn_forward.6} parent=35 // pred_fallthru
        _
    $region36: #{gat_gcn_forward.6} parent=5 // pred_fallthru
      _
    %p921 = scmp.le.s32.totalorder 2, %s13
    // Predicated region
    $region49: #{gat_gcn_forward.6} parent=5 // pred_check
      %p922 = pneg %p921
    $region50: #{gat_gcn_forward.6} parent=5 // pred_check_branch
      %924 = sbr.rel (%p922) target = $region52
    $region51: #{gat_gcn_forward.6} parent=5 // pred_region
      %s925 = ssub.s32 %s13, 2
      // Predicated region
      $region53: #{gat_gcn_forward.6} parent=51 // pred_check
        %p926 = pneg %p131
      $region54: #{gat_gcn_forward.6} parent=51 // pred_check_branch
        %928 = sbr.rel (%p926) target = $region56
      $region55: #{gat_gcn_forward.6} parent=51 // pred_region
        %s929 = smul.u32 16, %s19
        %p930 = scmp.lt.s32.totalorder %s929, 31
        %s931 = scalar_select %p930, %s929, 31
        %s932 = smul.addr %s931, 4
        %s933 = scalar_lea.vmem %s4, %s932
      $region56: #{gat_gcn_forward.6} parent=51 // pred_fallthru
        _
      // Predicated region
      $region57: #{gat_gcn_forward.6} parent=51 // pred_check
        %p934 = pneg %p157
      $region58: #{gat_gcn_forward.6} parent=51 // pred_check_branch
        %936 = sbr.rel (%p934) target = $region60
      $region59: #{gat_gcn_forward.6} parent=51 // pred_region
        %s937 = smul.u32 16, %s19
        %p938 = scmp.lt.s32.totalorder %s937, 31
        %s939 = scalar_select %p938, %s937, 31
        %s940 = smul.addr %s939, 8
        %s941 = scalar_lea.vmem %s5, %s940
      $region60: #{gat_gcn_forward.6} parent=51 // pred_fallthru
        _
      // Predicated region
      $region61: #{gat_gcn_forward.6} parent=51 // pred_check
        %p942 = pneg %p183
      $region62: #{gat_gcn_forward.6} parent=51 // pred_check_branch
        %944 = sbr.rel (%p942) target = $region64
      $region63: #{gat_gcn_forward.6} parent=51 // pred_region
        %s945 = smul.u32 16, %s19
        %p946 = scmp.lt.s32.totalorder %s945, 31
        %s947 = scalar_select %p946, %s945, 31
        %s948 = smul.addr %s947, 8
        %s949 = scalar_lea.vmem %s6, %s948
      $region64: #{gat_gcn_forward.6} parent=51 // pred_fallthru
        _
    $region52: #{gat_gcn_forward.6} parent=5 // pred_fallthru
      _
  $region6: #{gat_gcn_forward.6} parent=0 // loop_footer
    %s17 = sadd.s32 1, %s13
  $region7: #{gat_gcn_forward.6} parent=0 // loop_footer_branch
    %12 = sbr.rel target = $region3
  $region8: #{gat_gcn_forward.6} parent=0 // loop_exit
    _

// kernel: gat_gcn_forward.7
$region0: #{gat_gcn_forward.7}
  #allocation0 [shape = 'u32[]', space=smem, size = 0x4, offset = 0x4, fixed_abs, tag = 'smem constant byte address 0x4 - core index']
  #allocation1 [shape = 'u32[144,128]{1,0:T(1,128)}', space=vmem, size = 0x12000, scoped, tag = 'internal scratch']
  #allocation2 [shape = 'f32[128,1]{1,0:T(8,128)}', space=vmem, size = 0x10000, scoped, tag = 'scratch operand']
  #allocation3 [shape = 'f32[128,1]{1,0:T(8,128)}', space=vmem, size = 0x10000, scoped, tag = 'scratch operand']
  #allocation4 [shape = 'f32[128,128]{1,0:T(8,128)}', space=vmem, size = 0x10000, scoped, tag = 'scratch operand']
  %s0 = inlined_call_operand.vmem [shape: bf16[256,128], index: 0, kind: input, shape index: {}]
  %s1 = inlined_call_operand.vmem [shape: f32[256,1], index: 1, kind: input, shape index: {}]
  %s2 = inlined_call_operand.vmem [shape: f32[1,256], index: 2, kind: input, shape index: {}]
  %s3 = inlined_call_operand.vmem [shape: bf16[256,256], index: 3, kind: input, shape index: {}]
  %s4 = inlined_call_operand.vmem [shape: f32[1,128], index: 4, kind: input, shape index: {}]
  %s5 = inlined_call_operand.vmem [shape: f32[256,128], index: 5, kind: output, shape index: {}]
  %s6 = sld [smem:[#allocation0]]
  $region102: #{gat_gcn_forward.7} parent=0
    _
  %s8 = ssub.s32 1, %s6
  %s9 = scalar_select 0, %s8, %s6
  $region1: #{gat_gcn_forward.7} parent=0
    #allocation5 [shape = 'u8[65536]{0}', space=vmem, size = 0x10000, scoped, tag = 'input window, operand 3']
    loop: start=0, step=1, limit=6
    $region2: #{gat_gcn_forward.7} parent=1 // loop_pre_header
      _
    $region3: #{gat_gcn_forward.7} parent=1 // loop_header
      %s11 = sphi 0, %s15
      %p12 = scmp.ge.s32.totalorder %s11, 6
      %s18 = sphi 0, %s30
      %s19 = sphi 0, %s26
      %s20 = sphi 0, %s18
      %s21 = sphi 0, %s19
      %s22 = sphi 0, %s20
      %s23 = sphi 0, %s21
      %s33 = sphi 0, %s35
      %s36 = sphi 0, %s33
      %s37 = sphi 0, %s36
      %s53 = sphi 0, %s37
      %s59 = sphi 0, %s61
      %s62 = sphi 0, %s59
      %s63 = sphi 0, %s62
      %s79 = sphi 0, %s63
      %s85 = sphi 0, %s87
      %s88 = sphi 0, %s85
      %s89 = sphi 0, %s88
      %s105 = sphi 0, %s89
      %s113 = sphi 0, %s115
      %s116 = sphi 0, %s113
      %s117 = sphi 0, %s116
      %s133 = sphi 0, %s117
      %s137 = sphi 0, %s137
      %s139 = sphi 0, %s137
      %s140 = sphi 0, %s139
      %s154 = sphi 0, %s140
      %s160 = sphi 0, %s162
      %s163 = sphi 0, %s160
      %s164 = sphi 0, %s163
      %s180 = sphi 0, %s164
    $region4: #{gat_gcn_forward.7} parent=1 // loop_header_branch
      %14 = sbr.rel (%p12) target = $region8
    $region5: #{gat_gcn_forward.7} parent=1 // loop_body
      %s16 = ssub.s32 %s11, 1
      %s17 = ssub.s32 %s11, 2
      %s24 = sadd.s32 1, %s19
      %p25 = scmp.ge.s32.totalorder %s24, 2
      %s26 = scalar_select %p25, 0, %s24
      %s27 = sadd.s32 1, %s18
      %s28 = scalar_select %p25, %s27, %s18
      %p29 = scmp.ge.s32.totalorder %s28, 2
      %s30 = scalar_select %p29, 0, %s28
      %s31 = ssub.s32 %s19, %s26
      %p32 = scmp.eq.s32.totalorder %s31, 0
      %s34 = sadd.s32 %s33, 1
      %s35 = scalar_select %p32, %s33, %s34
      %p38 = pneg %p32
      %p39 = scmp.eq.s32.totalorder %s11, 3
      %p40 = por %p38, %p39
      %p41 = scmp.ne.s32.totalorder %s33, %s36
      %p42 = scmp.eq.s32.totalorder %s11, 0
      %p43 = por %p41, %p42
      %p44 = scmp.ne.s32.totalorder %s33, %s36
      %p45 = scmp.eq.s32.totalorder %s16, 3
      %p46 = por %p44, %p45
      %p47 = scmp.ne.s32.totalorder %s36, %s37
      %p48 = scmp.eq.s32.totalorder %s16, 0
      %p49 = por %p47, %p48
      %p50 = scmp.ne.s32.totalorder %s36, %s37
      %p51 = scmp.eq.s32.totalorder %s17, 3
      %p52 = por %p50, %p51
      %p54 = scmp.ne.s32.totalorder %s37, %s53
      %p55 = scmp.eq.s32.totalorder %s17, 0
      %p56 = por %p54, %p55
      %s57 = ssub.s32 %s18, %s30
      %p58 = scmp.eq.s32.totalorder %s57, 0
      %s60 = sadd.s32 %s59, 1
      %s61 = scalar_select %p58, %s59, %s60
      %p64 = pneg %p58
      %p65 = scmp.eq.s32.totalorder %s11, 3
      %p66 = por %p64, %p65
      %p67 = scmp.ne.s32.totalorder %s59, %s62
      %p68 = scmp.eq.s32.totalorder %s11, 0
      %p69 = por %p67, %p68
      %p70 = scmp.ne.s32.totalorder %s59, %s62
      %p71 = scmp.eq.s32.totalorder %s16, 3
      %p72 = por %p70, %p71
      %p73 = scmp.ne.s32.totalorder %s62, %s63
      %p74 = scmp.eq.s32.totalorder %s16, 0
      %p75 = por %p73, %p74
      %p76 = scmp.ne.s32.totalorder %s62, %s63
      %p77 = scmp.eq.s32.totalorder %s17, 3
      %p78 = por %p76, %p77
      %p80 = scmp.ne.s32.totalorder %s63, %s79
      %p81 = scmp.eq.s32.totalorder %s17, 0
      %p82 = por %p80, %p81
      %s83 = ssub.s32 %s19, %s26
      %p84 = scmp.eq.s32.totalorder %s83, 0
      %s86 = sadd.s32 %s85, 1
      %s87 = scalar_select %p84, %s85, %s86
      %p90 = pneg %p84
      %p91 = scmp.eq.s32.totalorder %s11, 3
      %p92 = por %p90, %p91
      %p93 = scmp.ne.s32.totalorder %s85, %s88
      %p94 = scmp.eq.s32.totalorder %s11, 0
      %p95 = por %p93, %p94
      %p96 = scmp.ne.s32.totalorder %s85, %s88
      %p97 = scmp.eq.s32.totalorder %s16, 3
      %p98 = por %p96, %p97
      %p99 = scmp.ne.s32.totalorder %s88, %s89
      %p100 = scmp.eq.s32.totalorder %s16, 0
      %p101 = por %p99, %p100
      %p102 = scmp.ne.s32.totalorder %s88, %s89
      %p103 = scmp.eq.s32.totalorder %s17, 3
      %p104 = por %p102, %p103
      %p106 = scmp.ne.s32.totalorder %s89, %s105
      %p107 = scmp.eq.s32.totalorder %s17, 0
      %p108 = por %p106, %p107
      %s109 = ssub.s32 %s18, %s30
      %s110 = ssub.s32 %s19, %s26
      %s111 = sor.u32 %s109, %s110
      %p112 = scmp.eq.s32.totalorder %s111, 0
      %s114 = sadd.s32 %s113, 1
      %s115 = scalar_select %p112, %s113, %s114
      %p118 = pneg %p112
      %p119 = scmp.eq.s32.totalorder %s11, 3
      %p120 = por %p118, %p119
      %p121 = scmp.ne.s32.totalorder %s113, %s116
      %p122 = scmp.eq.s32.totalorder %s11, 0
      %p123 = por %p121, %p122
      %p124 = scmp.ne.s32.totalorder %s113, %s116
      %p125 = scmp.eq.s32.totalorder %s16, 3
      %p126 = por %p124, %p125
      %p127 = scmp.ne.s32.totalorder %s116, %s117
      %p128 = scmp.eq.s32.totalorder %s16, 0
      %p129 = por %p127, %p128
      %p130 = scmp.ne.s32.totalorder %s116, %s117
      %p131 = scmp.eq.s32.totalorder %s17, 3
      %p132 = por %p130, %p131
      %p134 = scmp.ne.s32.totalorder %s117, %s133
      %p135 = scmp.eq.s32.totalorder %s17, 0
      %p136 = por %p134, %p135
      %s138 = sadd.s32 %s137, 1
      %p141 = scmp.eq.s32.totalorder %s11, 3
      %p142 = scmp.ne.s32.totalorder %s137, %s139
      %p143 = scmp.eq.s32.totalorder %s11, 0
      %p144 = por %p142, %p143
      %p145 = scmp.ne.s32.totalorder %s137, %s139
      %p146 = scmp.eq.s32.totalorder %s16, 3
      %p147 = por %p145, %p146
      %p148 = scmp.ne.s32.totalorder %s139, %s140
      %p149 = scmp.eq.s32.totalorder %s16, 0
      %p150 = por %p148, %p149
      %p151 = scmp.ne.s32.totalorder %s139, %s140
      %p152 = scmp.eq.s32.totalorder %s17, 3
      %p153 = por %p151, %p152
      %p155 = scmp.ne.s32.totalorder %s140, %s154
      %p156 = scmp.eq.s32.totalorder %s17, 0
      %p157 = por %p155, %p156
      %s158 = ssub.s32 %s18, %s30
      %p159 = scmp.eq.s32.totalorder %s158, 0
      %s161 = sadd.s32 %s160, 1
      %s162 = scalar_select %p159, %s160, %s161
      %p165 = pneg %p159
      %p166 = scmp.eq.s32.totalorder %s11, 3
      %p167 = por %p165, %p166
      %p168 = scmp.ne.s32.totalorder %s160, %s163
      %p169 = scmp.eq.s32.totalorder %s11, 0
      %p170 = por %p168, %p169
      %p171 = scmp.ne.s32.totalorder %s160, %s163
      %p172 = scmp.eq.s32.totalorder %s16, 3
      %p173 = por %p171, %p172
      %p174 = scmp.ne.s32.totalorder %s163, %s164
      %p175 = scmp.eq.s32.totalorder %s16, 0
      %p176 = por %p174, %p175
      %p177 = scmp.ne.s32.totalorder %s163, %s164
      %p178 = scmp.eq.s32.totalorder %s17, 3
      %p179 = por %p177, %p178
      %p181 = scmp.ne.s32.totalorder %s164, %s180
      %p182 = scmp.eq.s32.totalorder %s17, 0
      %p183 = por %p181, %p182
      %p184 = scmp.le.s32.totalorder 1, %s11
      %p185 = scmp.lt.s32.totalorder %s11, 5
      %p186 = pnand %p184, %p185
      %p187 = pneg %p186
      // Predicated region
      $region9: #{gat_gcn_forward.7} parent=5 // pred_check
        _
      $region10: #{gat_gcn_forward.7} parent=5 // pred_check_branch
        %189 = sbr.rel (%p186) target = $region12
      $region11: #{gat_gcn_forward.7} parent=5 // pred_region
        %s190 = ssub.s32 %s11, 1
        // Predicated region
        $region13: #{gat_gcn_forward.7} parent=11 // pred_check
          %p191 = pneg %p150
        $region14: #{gat_gcn_forward.7} parent=11 // pred_check_branch
          %193 = sbr.rel (%p191) target = $region16
        $region15: #{gat_gcn_forward.7} parent=11 // pred_region
          _
        $region16: #{gat_gcn_forward.7} parent=11 // pred_fallthru
          _
      $region12: #{gat_gcn_forward.7} parent=5 // pred_fallthru
        _
      %p194 = scmp.lt.s32.totalorder %s11, 4
      // Predicated region
      $region17: #{gat_gcn_forward.7} parent=5 // pred_check
        %p195 = pneg %p194
      $region18: #{gat_gcn_forward.7} parent=5 // pred_check_branch
        %197 = sbr.rel (%p195) target = $region20
      $region19: #{gat_gcn_forward.7} parent=5 // pred_region
        // Predicated region
        $region21: #{gat_gcn_forward.7} parent=19 // pred_check
          %p198 = pneg %p43
        $region22: #{gat_gcn_forward.7} parent=19 // pred_check_branch
          %200 = sbr.rel (%p198) target = $region24
        $region23: #{gat_gcn_forward.7} parent=19 // pred_region
          %s201 = smul.u32 16, %s19
          %p202 = scmp.lt.s32.totalorder %s201, 31
          %s203 = scalar_select %p202, %s201, 31
          %s204 = smul.addr %s203, 4
          %s205 = scalar_lea.vmem %s0, %s204
          %s206 = smul.u32 16, %s19
        $region24: #{gat_gcn_forward.7} parent=19 // pred_fallthru
          _
        // Predicated region
        $region25: #{gat_gcn_forward.7} parent=19 // pred_check
          %p207 = pneg %p69
        $region26: #{gat_gcn_forward.7} parent=19 // pred_check_branch
          %209 = sbr.rel (%p207) target = $region28
        $region27: #{gat_gcn_forward.7} parent=19 // pred_region
          %s210 = smul.u32 16, %s18
          %p211 = scmp.lt.s32.totalorder %s210, 31
          %s212 = scalar_select %p211, %s210, 31
          %s213 = smul.addr %s212, 8
          %s214 = scalar_lea.vmem %s1, %s213
          %s215 = smul.u32 16, %s18
        $region28: #{gat_gcn_forward.7} parent=19 // pred_fallthru
          _
        // Predicated region
        $region29: #{gat_gcn_forward.7} parent=19 // pred_check
          %p216 = pneg %p95
        $region30: #{gat_gcn_forward.7} parent=19 // pred_check_branch
          %218 = sbr.rel (%p216) target = $region32
        $region31: #{gat_gcn_forward.7} parent=19 // pred_region
          %p219 = scmp.lt.s32.totalorder %s19, 1
          %s220 = scalar_select %p219, %s19, 1
          %s221 = scalar_lea.vmem %s2, %s220
        $region32: #{gat_gcn_forward.7} parent=19 // pred_fallthru
          _
        // Predicated region
        $region33: #{gat_gcn_forward.7} parent=19 // pred_check
          %p222 = pneg %p123
        $region34: #{gat_gcn_forward.7} parent=19 // pred_check_branch
          %224 = sbr.rel (%p222) target = $region36
        $region35: #{gat_gcn_forward.7} parent=19 // pred_region
          %s225 = sand.u32 %s113, 1
          %s226 = sand.u32 %s113, 1
          %s227 = smul.addr %s226, 64
          %s228 = scalar_lea.vmem [#allocation5], %s227
          %s229 = smul.u32 16, %s18
          %s230 = smul.addr %s229, 2
          %s231 = sadd.s32 %s19, %s230
          %s232 = smul.addr %s231, 4
          %s233 = scalar_lea.vmem %s3, %s232
          // Predicated region
          $region37: #{gat_gcn_forward.7} parent=35 // pred_check
            _
          $region38: #{gat_gcn_forward.7} parent=35 // pred_check_branch
            %235 = sbr.rel (0) target = $region40
          $region39: #{gat_gcn_forward.7} parent=35 // pred_region
            // Predicated region
            $region41: #{gat_gcn_forward.7} parent=39 // pred_check
              _
            $region42: #{gat_gcn_forward.7} parent=39 // pred_check_branch
              %237 = sbr.rel target = $region44
            $region43: #{gat_gcn_forward.7} parent=39 // pred_region
              // Predicated region
              $region56: #{gat_gcn_forward.7} parent=43 // pred_check
                _
              $region57: #{gat_gcn_forward.7} parent=43 // pred_check_branch
                %282 = sbr.rel (0) target = $region59
              $region58: #{gat_gcn_forward.7} parent=43 // pred_region
                loop: start=0, step=1, limit=1
                $region60: #{gat_gcn_forward.7} parent=58 // loop_pre_header
                  _
                $region61: #{gat_gcn_forward.7} parent=58 // loop_header
                  %s284 = sphi 0, %s288
                  %p285 = scmp.ge.s32.totalorder %s284, 1
                  %s289 = sphi %s233, %s233
                  %s290 = sphi %s228, %s228
                $region62: #{gat_gcn_forward.7} parent=58 // loop_header_branch
                  %287 = sbr.rel (%p285) target = $region66
                $region63: #{gat_gcn_forward.7} parent=58 // loop_body
                  _
                $region64: #{gat_gcn_forward.7} parent=58 // loop_footer
                  %s288 = sadd.s32 1, %s284
                $region65: #{gat_gcn_forward.7} parent=58 // loop_footer_branch
                  %283 = sbr.rel target = $region61
                $region66: #{gat_gcn_forward.7} parent=58 // loop_exit
                  _
                loop: start=0, step=1, limit=1
                $region67: #{gat_gcn_forward.7} parent=58 // loop_pre_header
                  _
                $region68: #{gat_gcn_forward.7} parent=58 // loop_header
                  %s293 = sphi 0, %s297
                  %p294 = scmp.ge.s32.totalorder %s293, 1
                  %s298 = sphi %s233, %s233
                  %s299 = sphi %s228, %s228
                $region69: #{gat_gcn_forward.7} parent=58 // loop_header_branch
                  %296 = sbr.rel (%p294) target = $region73
                $region70: #{gat_gcn_forward.7} parent=58 // loop_body
                  %v300 = vld [vmem:[%s298] sm:$0xf]
                  %301 = vst [vmem:[%s299] sm:$0xf] %v300
                  %v302 = vld [vmem:[%s298 + $0x8] sm:$0xf]
                  %303 = vst [vmem:[%s299 + $0x4] sm:$0xf] %v302
                  %v304 = vld [vmem:[%s298 + $0x10] sm:$0xf]
                  %305 = vst [vmem:[%s299 + $0x8] sm:$0xf] %v304
                  %v306 = vld [vmem:[%s298 + $0x18] sm:$0xf]
                  %307 = vst [vmem:[%s299 + $0xc] sm:$0xf] %v306
                  %v308 = vld [vmem:[%s298 + $0x20] sm:$0xf]
                  %309 = vst [vmem:[%s299 + $0x10] sm:$0xf] %v308
                  %v310 = vld [vmem:[%s298 + $0x28] sm:$0xf]
                  %311 = vst [vmem:[%s299 + $0x14] sm:$0xf] %v310
                  %v312 = vld [vmem:[%s298 + $0x30] sm:$0xf]
                  %313 = vst [vmem:[%s299 + $0x18] sm:$0xf] %v312
                  %v314 = vld [vmem:[%s298 + $0x38] sm:$0xf]
                  %315 = vst [vmem:[%s299 + $0x1c] sm:$0xf] %v314
                  %v316 = vld [vmem:[%s298 + $0x40] sm:$0xf]
                  %317 = vst [vmem:[%s299 + $0x20] sm:$0xf] %v316
                  %v318 = vld [vmem:[%s298 + $0x48] sm:$0xf]
                  %319 = vst [vmem:[%s299 + $0x24] sm:$0xf] %v318
                  %v320 = vld [vmem:[%s298 + $0x50] sm:$0xf]
                  %321 = vst [vmem:[%s299 + $0x28] sm:$0xf] %v320
                  %v322 = vld [vmem:[%s298 + $0x58] sm:$0xf]
                  %323 = vst [vmem:[%s299 + $0x2c] sm:$0xf] %v322
                  %v324 = vld [vmem:[%s298 + $0x60] sm:$0xf]
                  %325 = vst [vmem:[%s299 + $0x30] sm:$0xf] %v324
                  %v326 = vld [vmem:[%s298 + $0x68] sm:$0xf]
                  %327 = vst [vmem:[%s299 + $0x34] sm:$0xf] %v326
                  %v328 = vld [vmem:[%s298 + $0x70] sm:$0xf]
                  %329 = vst [vmem:[%s299 + $0x38] sm:$0xf] %v328
                  %v330 = vld [vmem:[%s298 + $0x78] sm:$0xf]
                  %331 = vst [vmem:[%s299 + $0x3c] sm:$0xf] %v330
                $region71: #{gat_gcn_forward.7} parent=58 // loop_footer
                  %s297 = sadd.s32 1, %s293
                $region72: #{gat_gcn_forward.7} parent=58 // loop_footer_branch
                  %292 = sbr.rel target = $region68
                $region73: #{gat_gcn_forward.7} parent=58 // loop_exit
                  _
              $region59: #{gat_gcn_forward.7} parent=43 // pred_fallthru
                _
            $region44: #{gat_gcn_forward.7} parent=39 // pred_fallthru
              _
            // Predicated region
            $region45: #{gat_gcn_forward.7} parent=39 // pred_check
              _
            $region46: #{gat_gcn_forward.7} parent=39 // pred_check_branch
              %239 = sbr.rel (0) target = $region48
            $region47: #{gat_gcn_forward.7} parent=39 // pred_region
              loop: start=0, step=1, limit=1
              $region49: #{gat_gcn_forward.7} parent=47 // loop_pre_header
                _
              $region50: #{gat_gcn_forward.7} parent=47 // loop_header
                %s242 = sphi 0, %s246
                %p243 = scmp.ge.s32.totalorder %s242, 1
                %s247 = sphi %s233, %s233
                %s248 = sphi %s228, %s228
              $region51: #{gat_gcn_forward.7} parent=47 // loop_header_branch
                %245 = sbr.rel (%p243) target = $region55
              $region52: #{gat_gcn_forward.7} parent=47 // loop_body
                %v249 = vld [vmem:[%s247] sm:$0xf]
                %250 = vst [vmem:[%s248] sm:$0xf] %v249
                %v251 = vld [vmem:[%s247 + $0x8] sm:$0xf]
                %252 = vst [vmem:[%s248 + $0x4] sm:$0xf] %v251
                %v253 = vld [vmem:[%s247 + $0x10] sm:$0xf]
                %254 = vst [vmem:[%s248 + $0x8] sm:$0xf] %v253
                %v255 = vld [vmem:[%s247 + $0x18] sm:$0xf]
                %256 = vst [vmem:[%s248 + $0xc] sm:$0xf] %v255
                %v257 = vld [vmem:[%s247 + $0x20] sm:$0xf]
                %258 = vst [vmem:[%s248 + $0x10] sm:$0xf] %v257
                %v259 = vld [vmem:[%s247 + $0x28] sm:$0xf]
                %260 = vst [vmem:[%s248 + $0x14] sm:$0xf] %v259
                %v261 = vld [vmem:[%s247 + $0x30] sm:$0xf]
                %262 = vst [vmem:[%s248 + $0x18] sm:$0xf] %v261
                %v263 = vld [vmem:[%s247 + $0x38] sm:$0xf]
                %264 = vst [vmem:[%s248 + $0x1c] sm:$0xf] %v263
                %v265 = vld [vmem:[%s247 + $0x40] sm:$0xf]
                %266 = vst [vmem:[%s248 + $0x20] sm:$0xf] %v265
                %v267 = vld [vmem:[%s247 + $0x48] sm:$0xf]
                %268 = vst [vmem:[%s248 + $0x24] sm:$0xf] %v267
                %v269 = vld [vmem:[%s247 + $0x50] sm:$0xf]
                %270 = vst [vmem:[%s248 + $0x28] sm:$0xf] %v269
                %v271 = vld [vmem:[%s247 + $0x58] sm:$0xf]
                %272 = vst [vmem:[%s248 + $0x2c] sm:$0xf] %v271
                %v273 = vld [vmem:[%s247 + $0x60] sm:$0xf]
                %274 = vst [vmem:[%s248 + $0x30] sm:$0xf] %v273
                %v275 = vld [vmem:[%s247 + $0x68] sm:$0xf]
                %276 = vst [vmem:[%s248 + $0x34] sm:$0xf] %v275
                %v277 = vld [vmem:[%s247 + $0x70] sm:$0xf]
                %278 = vst [vmem:[%s248 + $0x38] sm:$0xf] %v277
                %v279 = vld [vmem:[%s247 + $0x78] sm:$0xf]
                %280 = vst [vmem:[%s248 + $0x3c] sm:$0xf] %v279
              $region53: #{gat_gcn_forward.7} parent=47 // loop_footer
                %s246 = sadd.s32 1, %s242
              $region54: #{gat_gcn_forward.7} parent=47 // loop_footer_branch
                %241 = sbr.rel target = $region50
              $region55: #{gat_gcn_forward.7} parent=47 // loop_exit
                _
            $region48: #{gat_gcn_forward.7} parent=39 // pred_fallthru
              _
          $region40: #{gat_gcn_forward.7} parent=35 // pred_fallthru
            _
          %332 = vnop
        $region36: #{gat_gcn_forward.7} parent=19 // pred_fallthru
          _
      $region20: #{gat_gcn_forward.7} parent=5 // pred_fallthru
        _
      %p333 = scmp.le.s32.totalorder 1, %s11
      %p334 = scmp.lt.s32.totalorder %s11, 5
      %p335 = pnand %p333, %p334
      %p336 = pneg %p335
      // Predicated region
      $region74: #{gat_gcn_forward.7} parent=5 // pred_check
        _
      $region75: #{gat_gcn_forward.7} parent=5 // pred_check_branch
        %338 = sbr.rel (%p335) target = $region77
      $region76: #{gat_gcn_forward.7} parent=5 // pred_region
        %s339 = ssub.s32 %s11, 1
        %s340 = sand.u32 %s116, 1
        %s341 = sand.u32 %s116, 1
        %s342 = smul.addr %s341, 64
        %s343 = scalar_lea.vmem [#allocation5], %s342
        // Predicated region
        $region78: #{gat_gcn_forward.7} parent=76 // pred_check
          %p344 = pneg %p129
        $region79: #{gat_gcn_forward.7} parent=76 // pred_check_branch
          %346 = sbr.rel (%p344) target = $region81
        $region80: #{gat_gcn_forward.7} parent=76 // pred_region
          _
        $region81: #{gat_gcn_forward.7} parent=76 // pred_fallthru
          _
        %s347 = smul.u32 16, %s21
        %p348 = scmp.lt.s32.totalorder %s347, 31
        %s349 = scalar_select %p348, %s347, 31
        %s350 = smul.addr %s349, 4
        %s351 = scalar_lea.vmem %s0, %s350
        %p352 = pneg %p49
        %p353 = pneg %p46
        %s354 = smul.u32 16, %s20
        %p355 = scmp.lt.s32.totalorder %s354, 31
        %s356 = scalar_select %p355, %s354, 31
        %s357 = smul.addr %s356, 8
        %s358 = scalar_lea.vmem %s1, %s357
        %p359 = pneg %p75
        %p360 = pneg %p72
        %p361 = scmp.lt.s32.totalorder %s21, 1
        %s362 = scalar_select %p361, %s21, 1
        %s363 = scalar_lea.vmem %s2, %s362
        %p364 = pneg %p101
        %p365 = pneg %p98
        %s366 = sand.u32 %s116, 1
        %s367 = sand.u32 %s116, 1
        %s368 = smul.addr %s367, 64
        %s369 = scalar_lea.vmem [#allocation5], %s368
        %p370 = pneg %p129
        %p371 = pneg %p126
        %p372 = pneg %p150
        %p373 = pneg %p147
        %p374 = pneg %p176
        %p375 = pneg %p173
        %s376 = smul.u32 16, %s20
        %p377 = scmp.lt.s32.totalorder %s376, 31
        %s378 = scalar_select %p377, %s376, 31
        %s379 = smul.addr %s378, 8
        %s380 = scalar_lea.vmem %s5, %s379
        %s381 = smul.u32 16, %s21
        %p382 = scmp.lt.s32.totalorder %s381, 31
        %s383 = scalar_select %p382, %s381, 31
        %s384 = smul.addr %s383, 4
        %s385 = scalar_lea.vmem %s0, %s384
        %s386 = smul.u32 16, %s21
        %s387 = smul.u32 16, %s20
        %p388 = scmp.lt.s32.totalorder %s387, 31
        %s389 = scalar_select %p388, %s387, 31
        %s390 = smul.addr %s389, 8
        %s391 = scalar_lea.vmem %s1, %s390
        %s392 = smul.u32 16, %s20
        %p393 = scmp.lt.s32.totalorder %s21, 1
        %s394 = scalar_select %p393, %s21, 1
        %s395 = scalar_lea.vmem %s2, %s394
        %s396 = smul.u32 16, %s20
        %s397 = smul.u32 16, %s20
        %p398 = scmp.lt.s32.totalorder %s397, 31
        %s399 = scalar_select %p398, %s397, 31
        %s400 = smul.addr %s399, 8
        %s401 = scalar_lea.vmem %s5, %s400
        %s402 = smul.u32 16, %s20
        %p404 = scmp.eq.s32.totalorder %s21, 0
        // Predicated region
        $region82: #{gat_gcn_forward.7} parent=76 // pred_check
          %p405 = pneg %p404
        $region83: #{gat_gcn_forward.7} parent=76 // pred_check_branch
          %407 = sbr.rel (%p405) target = $region85
        $region84: #{gat_gcn_forward.7} parent=76 // pred_region
          %vm408 = vcmask 7168
          %409 = vst.msk [vmem:[#allocation2] sm:$0xff] %vm408, -inf
          %410 = vst.msk [vmem:[#allocation2 + $0x8] sm:$0xff] %vm408, -inf
          %411 = vst.msk [vmem:[#allocation2 + $0x10] sm:$0xff] %vm408, -inf
          %412 = vst.msk [vmem:[#allocation2 + $0x18] sm:$0xff] %vm408, -inf
          %413 = vst.msk [vmem:[#allocation2 + $0x20] sm:$0xff] %vm408, -inf
          %414 = vst.msk [vmem:[#allocation2 + $0x28] sm:$0xff] %vm408, -inf
          %415 = vst.msk [vmem:[#allocation2 + $0x30] sm:$0xff] %vm408, -inf
          %416 = vst.msk [vmem:[#allocation2 + $0x38] sm:$0xff] %vm408, -inf
          %417 = vst.msk [vmem:[#allocation2 + $0x40] sm:$0xff] %vm408, -inf
          %418 = vst.msk [vmem:[#allocation2 + $0x48] sm:$0xff] %vm408, -inf
          %419 = vst.msk [vmem:[#allocation2 + $0x50] sm:$0xff] %vm408, -inf
          %420 = vst.msk [vmem:[#allocation2 + $0x58] sm:$0xff] %vm408, -inf
          %421 = vst.msk [vmem:[#allocation2 + $0x60] sm:$0xff] %vm408, -inf
          %422 = vst.msk [vmem:[#allocation2 + $0x68] sm:$0xff] %vm408, -inf
          %423 = vst.msk [vmem:[#allocation2 + $0x70] sm:$0xff] %vm408, -inf
          %424 = vst.msk [vmem:[#allocation2 + $0x78] sm:$0xff] %vm408, -inf
          %425 = vst.msk [vmem:[#allocation3] sm:$0xff] %vm408, 0.0
          %426 = vst.msk [vmem:[#allocation3 + $0x8] sm:$0xff] %vm408, 0.0
          %427 = vst.msk [vmem:[#allocation3 + $0x10] sm:$0xff] %vm408, 0.0
          %428 = vst.msk [vmem:[#allocation3 + $0x18] sm:$0xff] %vm408, 0.0
          %429 = vst.msk [vmem:[#allocation3 + $0x20] sm:$0xff] %vm408, 0.0
          %430 = vst.msk [vmem:[#allocation3 + $0x28] sm:$0xff] %vm408, 0.0
          %431 = vst.msk [vmem:[#allocation3 + $0x30] sm:$0xff] %vm408, 0.0
          %432 = vst.msk [vmem:[#allocation3 + $0x38] sm:$0xff] %vm408, 0.0
          %433 = vst.msk [vmem:[#allocation3 + $0x40] sm:$0xff] %vm408, 0.0
          %434 = vst.msk [vmem:[#allocation3 + $0x48] sm:$0xff] %vm408, 0.0
          %435 = vst.msk [vmem:[#allocation3 + $0x50] sm:$0xff] %vm408, 0.0
          %436 = vst.msk [vmem:[#allocation3 + $0x58] sm:$0xff] %vm408, 0.0
          %437 = vst.msk [vmem:[#allocation3 + $0x60] sm:$0xff] %vm408, 0.0
          %438 = vst.msk [vmem:[#allocation3 + $0x68] sm:$0xff] %vm408, 0.0
          %439 = vst.msk [vmem:[#allocation3 + $0x70] sm:$0xff] %vm408, 0.0
          %440 = vst.msk [vmem:[#allocation3 + $0x78] sm:$0xff] %vm408, 0.0
          %441 = vst [vmem:[#allocation4] sm:$0xff] 0.0
          %442 = vst [vmem:[#allocation4 + $0x8] sm:$0xff] 0.0
          %443 = vst [vmem:[#allocation4 + $0x10] sm:$0xff] 0.0
          %444 = vst [vmem:[#allocation4 + $0x18] sm:$0xff] 0.0
          %445 = vst [vmem:[#allocation4 + $0x20] sm:$0xff] 0.0
          %446 = vst [vmem:[#allocation4 + $0x28] sm:$0xff] 0.0
          %447 = vst [vmem:[#allocation4 + $0x30] sm:$0xff] 0.0
          %448 = vst [vmem:[#allocation4 + $0x38] sm:$0xff] 0.0
          %449 = vst [vmem:[#allocation4 + $0x40] sm:$0xff] 0.0
          %450 = vst [vmem:[#allocation4 + $0x48] sm:$0xff] 0.0
          %451 = vst [vmem:[#allocation4 + $0x50] sm:$0xff] 0.0
          %452 = vst [vmem:[#allocation4 + $0x58] sm:$0xff] 0.0
          %453 = vst [vmem:[#allocation4 + $0x60] sm:$0xff] 0.0
          %454 = vst [vmem:[#allocation4 + $0x68] sm:$0xff] 0.0
          %455 = vst [vmem:[#allocation4 + $0x70] sm:$0xff] 0.0
          %456 = vst [vmem:[#allocation4 + $0x78] sm:$0xff] 0.0
        $region85: #{gat_gcn_forward.7} parent=76 // pred_fallthru
          _
        %v457 = vld [vmem:[%s343] sm:$0xf]
        %v458 = vld [vmem:[%s343 + $0x4] sm:$0xf]
        %v459 = vld [vmem:[%s343 + $0x8] sm:$0xf]
        %v460 = vld [vmem:[%s343 + $0xc] sm:$0xf]
        %v461 = vld [vmem:[%s343 + $0x10] sm:$0xf]
        %v462 = vld [vmem:[%s343 + $0x14] sm:$0xf]
        %v463 = vld [vmem:[%s343 + $0x18] sm:$0xf]
        %v464 = vld [vmem:[%s343 + $0x1c] sm:$0xf]
        %v465 = vld [vmem:[%s343 + $0x20] sm:$0xf]
        %v466 = vld [vmem:[%s343 + $0x24] sm:$0xf]
        %v467 = vld [vmem:[%s343 + $0x28] sm:$0xf]
        %v468 = vld [vmem:[%s343 + $0x2c] sm:$0xf]
        %v469 = vld [vmem:[%s343 + $0x30] sm:$0xf]
        %v470 = vld [vmem:[%s343 + $0x34] sm:$0xf]
        %v471 = vld [vmem:[%s343 + $0x38] sm:$0xf]
        %v472 = vld [vmem:[%s343 + $0x3c] sm:$0xf]
        %v473 = vunpack.c.l.bf16 %v457
        %v474 = vunpack.c.l.bf16 %v458
        %v475 = vunpack.c.l.bf16 %v459
        %v476 = vunpack.c.l.bf16 %v460
        %v477 = vunpack.c.l.bf16 %v461
        %v478 = vunpack.c.l.bf16 %v462
        %v479 = vunpack.c.l.bf16 %v463
        %v480 = vunpack.c.l.bf16 %v464
        %v481 = vunpack.c.l.bf16 %v465
        %v482 = vunpack.c.l.bf16 %v466
        %v483 = vunpack.c.l.bf16 %v467
        %v484 = vunpack.c.l.bf16 %v468
        %v485 = vunpack.c.l.bf16 %v469
        %v486 = vunpack.c.l.bf16 %v470
        %v487 = vunpack.c.l.bf16 %v471
        %v488 = vunpack.c.l.bf16 %v472
        %v489 = vld [vmem:[%s391] sm:$0xff]
        %v490 = vld [vmem:[%s391 + $0x8] sm:$0xff]
        %v491 = vld [vmem:[%s391 + $0x10] sm:$0xff]
        %v492 = vld [vmem:[%s391 + $0x18] sm:$0xff]
        %v493 = vld [vmem:[%s391 + $0x20] sm:$0xff]
        %v494 = vld [vmem:[%s391 + $0x28] sm:$0xff]
        %v495 = vld [vmem:[%s391 + $0x30] sm:$0xff]
        %v496 = vld [vmem:[%s391 + $0x38] sm:$0xff]
        %v497 = vld [vmem:[%s391 + $0x40] sm:$0xff]
        %v498 = vld [vmem:[%s391 + $0x48] sm:$0xff]
        %v499 = vld [vmem:[%s391 + $0x50] sm:$0xff]
        %v500 = vld [vmem:[%s391 + $0x58] sm:$0xff]
        %v501 = vld [vmem:[%s391 + $0x60] sm:$0xff]
        %v502 = vld [vmem:[%s391 + $0x68] sm:$0xff]
        %v503 = vld [vmem:[%s391 + $0x70] sm:$0xff]
        %v504 = vld [vmem:[%s391 + $0x78] sm:$0xff]
        %v505 = vld [vmem:[%s395] sm:$0x1]
        %507 = vset.pattern.permute.xlu0 0
        %508 = vperm.xlu0 %507, %v489
        %v509 = vpop.permute.xlu0 %508
        %512 = vset.pattern.permute.xlu0 0
        %513 = vperm.xlu0 %512, %v490
        %v514 = vpop.permute.xlu0 %513
        %517 = vset.pattern.permute.xlu0 0
        %518 = vperm.xlu0 %517, %v491
        %v519 = vpop.permute.xlu0 %518
        %522 = vset.pattern.permute.xlu0 0
        %523 = vperm.xlu0 %522, %v492
        %v524 = vpop.permute.xlu0 %523
        %527 = vset.pattern.permute.xlu0 0
        %528 = vperm.xlu0 %527, %v493
        %v529 = vpop.permute.xlu0 %528
        %532 = vset.pattern.permute.xlu0 0
        %533 = vperm.xlu0 %532, %v494
        %v534 = vpop.permute.xlu0 %533
        %537 = vset.pattern.permute.xlu0 0
        %538 = vperm.xlu0 %537, %v495
        %v539 = vpop.permute.xlu0 %538
        %542 = vset.pattern.permute.xlu0 0
        %543 = vperm.xlu0 %542, %v496
        %v544 = vpop.permute.xlu0 %543
        %547 = vset.pattern.permute.xlu0 0
        %548 = vperm.xlu0 %547, %v497
        %v549 = vpop.permute.xlu0 %548
        %552 = vset.pattern.permute.xlu0 0
        %553 = vperm.xlu0 %552, %v498
        %v554 = vpop.permute.xlu0 %553
        %557 = vset.pattern.permute.xlu0 0
        %558 = vperm.xlu0 %557, %v499
        %v559 = vpop.permute.xlu0 %558
        %562 = vset.pattern.permute.xlu0 0
        %563 = vperm.xlu0 %562, %v500
        %v564 = vpop.permute.xlu0 %563
        %567 = vset.pattern.permute.xlu0 0
        %568 = vperm.xlu0 %567, %v501
        %v569 = vpop.permute.xlu0 %568
        %572 = vset.pattern.permute.xlu0 0
        %573 = vperm.xlu0 %572, %v502
        %v574 = vpop.permute.xlu0 %573
        %577 = vset.pattern.permute.xlu0 0
        %578 = vperm.xlu0 %577, %v503
        %v579 = vpop.permute.xlu0 %578
        %582 = vset.pattern.permute.xlu0 0
        %583 = vperm.xlu0 %582, %v504
        %v584 = vpop.permute.xlu0 %583
        %v587 = vlaneseq
        %v588 = vshrl.u32 %v587, 7
        %v589 = vsub.s32 0, %v588
        %v590 = vrot.slane %v505, %v589
        %v592 = vadd.f32 %v509, %v590
        %v593 = vadd.f32 %v514, %v590
        %v594 = vadd.f32 %v519, %v590
        %v595 = vadd.f32 %v524, %v590
        %v596 = vadd.f32 %v529, %v590
        %v597 = vadd.f32 %v534, %v590
        %v598 = vadd.f32 %v539, %v590
        %v599 = vadd.f32 %v544, %v590
        %v600 = vadd.f32 %v549, %v590
        %v601 = vadd.f32 %v554, %v590
        %v602 = vadd.f32 %v559, %v590
        %v603 = vadd.f32 %v564, %v590
        %v604 = vadd.f32 %v569, %v590
        %v605 = vadd.f32 %v574, %v590
        %v606 = vadd.f32 %v579, %v590
        %v607 = vadd.f32 %v584, %v590
        %vm608 = vcmp.gt.f32.partialorder %v592, 0.0
        %vm609 = vcmp.gt.f32.partialorder %v593, 0.0
        %vm610 = vcmp.gt.f32.partialorder %v594, 0.0
        %vm611 = vcmp.gt.f32.partialorder %v595, 0.0
        %vm612 = vcmp.gt.f32.partialorder %v596, 0.0
        %vm613 = vcmp.gt.f32.partialorder %v597, 0.0
        %vm614 = vcmp.gt.f32.partialorder %v598, 0.0
        %vm615 = vcmp.gt.f32.partialorder %v599, 0.0
        %vm616 = vcmp.gt.f32.partialorder %v600, 0.0
        %vm617 = vcmp.gt.f32.partialorder %v601, 0.0
        %vm618 = vcmp.gt.f32.partialorder %v602, 0.0
        %vm619 = vcmp.gt.f32.partialorder %v603, 0.0
        %vm620 = vcmp.gt.f32.partialorder %v604, 0.0
        %vm621 = vcmp.gt.f32.partialorder %v605, 0.0
        %vm622 = vcmp.gt.f32.partialorder %v606, 0.0
        %vm623 = vcmp.gt.f32.partialorder %v607, 0.0
        %v624 = vmul.f32 %v592, 0.2
        %v625 = vmul.f32 %v593, 0.2
        %v626 = vmul.f32 %v594, 0.2
        %v627 = vmul.f32 %v595, 0.2
        %v628 = vmul.f32 %v596, 0.2
        %v629 = vmul.f32 %v597, 0.2
        %v630 = vmul.f32 %v598, 0.2
        %v631 = vmul.f32 %v599, 0.2
        %v632 = vmul.f32 %v600, 0.2
        %v633 = vmul.f32 %v601, 0.2
        %v634 = vmul.f32 %v602, 0.2
        %v635 = vmul.f32 %v603, 0.2
        %v636 = vmul.f32 %v604, 0.2
        %v637 = vmul.f32 %v605, 0.2
        %v638 = vmul.f32 %v606, 0.2
        %v639 = vmul.f32 %v607, 0.2
        %v640 = vsel %vm608, %v592, %v624
        %v641 = vsel %vm609, %v593, %v625
        %v642 = vsel %vm610, %v594, %v626
        %v643 = vsel %vm611, %v595, %v627
        %v644 = vsel %vm612, %v596, %v628
        %v645 = vsel %vm613, %v597, %v629
        %v646 = vsel %vm614, %v598, %v630
        %v647 = vsel %vm615, %v599, %v631
        %v648 = vsel %vm616, %v600, %v632
        %v649 = vsel %vm617, %v601, %v633
        %v650 = vsel %vm618, %v602, %v634
        %v651 = vsel %vm619, %v603, %v635
        %v652 = vsel %vm620, %v604, %v636
        %v653 = vsel %vm621, %v605, %v637
        %v654 = vsel %vm622, %v606, %v638
        %v655 = vsel %vm623, %v607, %v639
        %v656 = vadd.f32 %v640, %v473
        %v657 = vadd.f32 %v641, %v474
        %v658 = vadd.f32 %v642, %v475
        %v659 = vadd.f32 %v643, %v476
        %v660 = vadd.f32 %v644, %v477
        %v661 = vadd.f32 %v645, %v478
        %v662 = vadd.f32 %v646, %v479
        %v663 = vadd.f32 %v647, %v480
        %v664 = vadd.f32 %v648, %v481
        %v665 = vadd.f32 %v649, %v482
        %v666 = vadd.f32 %v650, %v483
        %v667 = vadd.f32 %v651, %v484
        %v668 = vadd.f32 %v652, %v485
        %v669 = vadd.f32 %v653, %v486
        %v670 = vadd.f32 %v654, %v487
        %v671 = vadd.f32 %v655, %v488
        %v672 = vld [vmem:[#allocation2] sm:$0xff]
        %v673 = vld [vmem:[#allocation2 + $0x8] sm:$0xff]
        %v674 = vld [vmem:[#allocation2 + $0x10] sm:$0xff]
        %v675 = vld [vmem:[#allocation2 + $0x18] sm:$0xff]
        %v676 = vld [vmem:[#allocation2 + $0x20] sm:$0xff]
        %v677 = vld [vmem:[#allocation2 + $0x28] sm:$0xff]
        %v678 = vld [vmem:[#allocation2 + $0x30] sm:$0xff]
        %v679 = vld [vmem:[#allocation2 + $0x38] sm:$0xff]
        %v680 = vld [vmem:[#allocation2 + $0x40] sm:$0xff]
        %v681 = vld [vmem:[#allocation2 + $0x48] sm:$0xff]
        %v682 = vld [vmem:[#allocation2 + $0x50] sm:$0xff]
        %v683 = vld [vmem:[#allocation2 + $0x58] sm:$0xff]
        %v684 = vld [vmem:[#allocation2 + $0x60] sm:$0xff]
        %v685 = vld [vmem:[#allocation2 + $0x68] sm:$0xff]
        %v686 = vld [vmem:[#allocation2 + $0x70] sm:$0xff]
        %v687 = vld [vmem:[#allocation2 + $0x78] sm:$0xff]
        %688 = vmax.xlane.f32.xlu0 %v656
        %v689 = vpop.xlane.xlu0 %688
        %690 = vmax.xlane.f32.xlu0 %v657
        %v691 = vpop.xlane.xlu0 %690
        %692 = vmax.xlane.f32.xlu0 %v658
        %v693 = vpop.xlane.xlu0 %692
        %694 = vmax.xlane.f32.xlu0 %v659
        %v695 = vpop.xlane.xlu0 %694
        %696 = vmax.xlane.f32.xlu0 %v660
        %v697 = vpop.xlane.xlu0 %696
        %698 = vmax.xlane.f32.xlu0 %v661
        %v699 = vpop.xlane.xlu0 %698
        %700 = vmax.xlane.f32.xlu0 %v662
        %v701 = vpop.xlane.xlu0 %700
        %702 = vmax.xlane.f32.xlu0 %v663
        %v703 = vpop.xlane.xlu0 %702
        %704 = vmax.xlane.f32.xlu0 %v664
        %v705 = vpop.xlane.xlu0 %704
        %706 = vmax.xlane.f32.xlu0 %v665
        %v707 = vpop.xlane.xlu0 %706
        %708 = vmax.xlane.f32.xlu0 %v666
        %v709 = vpop.xlane.xlu0 %708
        %710 = vmax.xlane.f32.xlu0 %v667
        %v711 = vpop.xlane.xlu0 %710
        %712 = vmax.xlane.f32.xlu0 %v668
        %v713 = vpop.xlane.xlu0 %712
        %714 = vmax.xlane.f32.xlu0 %v669
        %v715 = vpop.xlane.xlu0 %714
        %716 = vmax.xlane.f32.xlu0 %v670
        %v717 = vpop.xlane.xlu0 %716
        %718 = vmax.xlane.f32.xlu0 %v671
        %v719 = vpop.xlane.xlu0 %718
        %v720 = vmax.f32 %v672, %v689
        %v721 = vmax.f32 %v673, %v691
        %v722 = vmax.f32 %v674, %v693
        %v723 = vmax.f32 %v675, %v695
        %v724 = vmax.f32 %v676, %v697
        %v725 = vmax.f32 %v677, %v699
        %v726 = vmax.f32 %v678, %v701
        %v727 = vmax.f32 %v679, %v703
        %v728 = vmax.f32 %v680, %v705
        %v729 = vmax.f32 %v681, %v707
        %v730 = vmax.f32 %v682, %v709
        %v731 = vmax.f32 %v683, %v711
        %v732 = vmax.f32 %v684, %v713
        %v733 = vmax.f32 %v685, %v715
        %v734 = vmax.f32 %v686, %v717
        %v735 = vmax.f32 %v687, %v719
        %v736 = vsub.f32 %v672, %v720
        %v737 = vsub.f32 %v673, %v721
        %v738 = vsub.f32 %v674, %v722
        %v739 = vsub.f32 %v675, %v723
        %v740 = vsub.f32 %v676, %v724
        %v741 = vsub.f32 %v677, %v725
        %v742 = vsub.f32 %v678, %v726
        %v743 = vsub.f32 %v679, %v727
        %v744 = vsub.f32 %v680, %v728
        %v745 = vsub.f32 %v681, %v729
        %v746 = vsub.f32 %v682, %v730
        %v747 = vsub.f32 %v683, %v731
        %v748 = vsub.f32 %v684, %v732
        %v749 = vsub.f32 %v685, %v733
        %v750 = vsub.f32 %v686, %v734
        %v751 = vsub.f32 %v687, %v735
        %v752 = vmul.f32 %v736, 1.442695
        %v753 = vpow.pop %v752
        %v754 = vmul.f32 %v737, 1.442695
        %v755 = vpow.pop %v754
        %v756 = vmul.f32 %v738, 1.442695
        %v757 = vpow.pop %v756
        %v758 = vmul.f32 %v739, 1.442695
        %v759 = vpow.pop %v758
        %v760 = vmul.f32 %v740, 1.442695
        %v761 = vpow.pop %v760
        %v762 = vmul.f32 %v741, 1.442695
        %v763 = vpow.pop %v762
        %v764 = vmul.f32 %v742, 1.442695
        %v765 = vpow.pop %v764
        %v766 = vmul.f32 %v743, 1.442695
        %v767 = vpow.pop %v766
        %v768 = vmul.f32 %v744, 1.442695
        %v769 = vpow.pop %v768
        %v770 = vmul.f32 %v745, 1.442695
        %v771 = vpow.pop %v770
        %v772 = vmul.f32 %v746, 1.442695
        %v773 = vpow.pop %v772
        %v774 = vmul.f32 %v747, 1.442695
        %v775 = vpow.pop %v774
        %v776 = vmul.f32 %v748, 1.442695
        %v777 = vpow.pop %v776
        %v778 = vmul.f32 %v749, 1.442695
        %v779 = vpow.pop %v778
        %v780 = vmul.f32 %v750, 1.442695
        %v781 = vpow.pop %v780
        %v782 = vmul.f32 %v751, 1.442695
        %v783 = vpow.pop %v782
        %785 = vset.pattern.permute.xlu0 0
        %786 = vperm.xlu0 %785, %v720
        %v787 = vpop.permute.xlu0 %786
        %790 = vset.pattern.permute.xlu0 0
        %791 = vperm.xlu0 %790, %v721
        %v792 = vpop.permute.xlu0 %791
        %795 = vset.pattern.permute.xlu0 0
        %796 = vperm.xlu0 %795, %v722
        %v797 = vpop.permute.xlu0 %796
        %800 = vset.pattern.permute.xlu0 0
        %801 = vperm.xlu0 %800, %v723
        %v802 = vpop.permute.xlu0 %801
        %805 = vset.pattern.permute.xlu0 0
        %806 = vperm.xlu0 %805, %v724
        %v807 = vpop.permute.xlu0 %806
        %810 = vset.pattern.permute.xlu0 0
        %811 = vperm.xlu0 %810, %v725
        %v812 = vpop.permute.xlu0 %811
        %815 = vset.pattern.permute.xlu0 0
        %816 = vperm.xlu0 %815, %v726
        %v817 = vpop.permute.xlu0 %816
        %820 = vset.pattern.permute.xlu0 0
        %821 = vperm.xlu0 %820, %v727
        %v822 = vpop.permute.xlu0 %821
        %825 = vset.pattern.permute.xlu0 0
        %826 = vperm.xlu0 %825, %v728
        %v827 = vpop.permute.xlu0 %826
        %830 = vset.pattern.permute.xlu0 0
        %831 = vperm.xlu0 %830, %v729
        %v832 = vpop.permute.xlu0 %831
        %835 = vset.pattern.permute.xlu0 0
        %836 = vperm.xlu0 %835, %v730
        %v837 = vpop.permute.xlu0 %836
        %840 = vset.pattern.permute.xlu0 0
        %841 = vperm.xlu0 %840, %v731
        %v842 = vpop.permute.xlu0 %841
        %845 = vset.pattern.permute.xlu0 0
        %846 = vperm.xlu0 %845, %v732
        %v847 = vpop.permute.xlu0 %846
        %850 = vset.pattern.permute.xlu0 0
        %851 = vperm.xlu0 %850, %v733
        %v852 = vpop.permute.xlu0 %851
        %855 = vset.pattern.permute.xlu0 0
        %856 = vperm.xlu0 %855, %v734
        %v857 = vpop.permute.xlu0 %856
        %860 = vset.pattern.permute.xlu0 0
        %861 = vperm.xlu0 %860, %v735
        %v862 = vpop.permute.xlu0 %861
        %v864 = vsub.f32 %v656, %v787
        %v865 = vsub.f32 %v657, %v792
        %v866 = vsub.f32 %v658, %v797
        %v867 = vsub.f32 %v659, %v802
        %v868 = vsub.f32 %v660, %v807
        %v869 = vsub.f32 %v661, %v812
        %v870 = vsub.f32 %v662, %v817
        %v871 = vsub.f32 %v663, %v822
        %v872 = vsub.f32 %v664, %v827
        %v873 = vsub.f32 %v665, %v832
        %v874 = vsub.f32 %v666, %v837
        %v875 = vsub.f32 %v667, %v842
        %v876 = vsub.f32 %v668, %v847
        %v877 = vsub.f32 %v669, %v852
        %v878 = vsub.f32 %v670, %v857
        %v879 = vsub.f32 %v671, %v862
        %v880 = vmul.f32 %v864, 1.442695
        %v881 = vpow.pop %v880
        %v882 = vmul.f32 %v865, 1.442695
        %v883 = vpow.pop %v882
        %v884 = vmul.f32 %v866, 1.442695
        %v885 = vpow.pop %v884
        %v886 = vmul.f32 %v867, 1.442695
        %v887 = vpow.pop %v886
        %v888 = vmul.f32 %v868, 1.442695
        %v889 = vpow.pop %v888
        %v890 = vmul.f32 %v869, 1.442695
        %v891 = vpow.pop %v890
        %v892 = vmul.f32 %v870, 1.442695
        %v893 = vpow.pop %v892
        %v894 = vmul.f32 %v871, 1.442695
        %v895 = vpow.pop %v894
        %v896 = vmul.f32 %v872, 1.442695
        %v897 = vpow.pop %v896
        %v898 = vmul.f32 %v873, 1.442695
        %v899 = vpow.pop %v898
        %v900 = vmul.f32 %v874, 1.442695
        %v901 = vpow.pop %v900
        %v902 = vmul.f32 %v875, 1.442695
        %v903 = vpow.pop %v902
        %v904 = vmul.f32 %v876, 1.442695
        %v905 = vpow.pop %v904
        %v906 = vmul.f32 %v877, 1.442695
        %v907 = vpow.pop %v906
        %v908 = vmul.f32 %v878, 1.442695
        %v909 = vpow.pop %v908
        %v910 = vmul.f32 %v879, 1.442695
        %v911 = vpow.pop %v910
        %v912 = vld [vmem:[#allocation3] sm:$0xff]
        %v913 = vld [vmem:[#allocation3 + $0x8] sm:$0xff]
        %v914 = vld [vmem:[#allocation3 + $0x10] sm:$0xff]
        %v915 = vld [vmem:[#allocation3 + $0x18] sm:$0xff]
        %v916 = vld [vmem:[#allocation3 + $0x20] sm:$0xff]
        %v917 = vld [vmem:[#allocation3 + $0x28] sm:$0xff]
        %v918 = vld [vmem:[#allocation3 + $0x30] sm:$0xff]
        %v919 = vld [vmem:[#allocation3 + $0x38] sm:$0xff]
        %v920 = vld [vmem:[#allocation3 + $0x40] sm:$0xff]
        %v921 = vld [vmem:[#allocation3 + $0x48] sm:$0xff]
        %v922 = vld [vmem:[#allocation3 + $0x50] sm:$0xff]
        %v923 = vld [vmem:[#allocation3 + $0x58] sm:$0xff]
        %v924 = vld [vmem:[#allocation3 + $0x60] sm:$0xff]
        %v925 = vld [vmem:[#allocation3 + $0x68] sm:$0xff]
        %v926 = vld [vmem:[#allocation3 + $0x70] sm:$0xff]
        %v927 = vld [vmem:[#allocation3 + $0x78] sm:$0xff]
        %v928 = vmul.f32 %v753, %v912
        %v929 = vmul.f32 %v755, %v913
        %v930 = vmul.f32 %v757, %v914
        %v931 = vmul.f32 %v759, %v915
        %v932 = vmul.f32 %v761, %v916
        %v933 = vmul.f32 %v763, %v917
        %v934 = vmul.f32 %v765, %v918
        %v935 = vmul.f32 %v767, %v919
        %v936 = vmul.f32 %v769, %v920
        %v937 = vmul.f32 %v771, %v921
        %v938 = vmul.f32 %v773, %v922
        %v939 = vmul.f32 %v775, %v923
        %v940 = vmul.f32 %v777, %v924
        %v941 = vmul.f32 %v779, %v925
        %v942 = vmul.f32 %v781, %v926
        %v943 = vmul.f32 %v783, %v927
        %944 = vadd.xlane.f32.xlu0 %v881
        %v945 = vpop.xlane.xlu0 %944
        %946 = vadd.xlane.f32.xlu0 %v883
        %v947 = vpop.xlane.xlu0 %946
        %948 = vadd.xlane.f32.xlu0 %v885
        %v949 = vpop.xlane.xlu0 %948
        %950 = vadd.xlane.f32.xlu0 %v887
        %v951 = vpop.xlane.xlu0 %950
        %952 = vadd.xlane.f32.xlu0 %v889
        %v953 = vpop.xlane.xlu0 %952
        %954 = vadd.xlane.f32.xlu0 %v891
        %v955 = vpop.xlane.xlu0 %954
        %956 = vadd.xlane.f32.xlu0 %v893
        %v957 = vpop.xlane.xlu0 %956
        %958 = vadd.xlane.f32.xlu0 %v895
        %v959 = vpop.xlane.xlu0 %958
        %960 = vadd.xlane.f32.xlu0 %v897
        %v961 = vpop.xlane.xlu0 %960
        %962 = vadd.xlane.f32.xlu0 %v899
        %v963 = vpop.xlane.xlu0 %962
        %964 = vadd.xlane.f32.xlu0 %v901
        %v965 = vpop.xlane.xlu0 %964
        %966 = vadd.xlane.f32.xlu0 %v903
        %v967 = vpop.xlane.xlu0 %966
        %968 = vadd.xlane.f32.xlu0 %v905
        %v969 = vpop.xlane.xlu0 %968
        %970 = vadd.xlane.f32.xlu0 %v907
        %v971 = vpop.xlane.xlu0 %970
        %972 = vadd.xlane.f32.xlu0 %v909
        %v973 = vpop.xlane.xlu0 %972
        %974 = vadd.xlane.f32.xlu0 %v911
        %v975 = vpop.xlane.xlu0 %974
        %v976 = vadd.f32 %v928, %v945
        %v977 = vadd.f32 %v929, %v947
        %v978 = vadd.f32 %v930, %v949
        %v979 = vadd.f32 %v931, %v951
        %v980 = vadd.f32 %v932, %v953
        %v981 = vadd.f32 %v933, %v955
        %v982 = vadd.f32 %v934, %v957
        %v983 = vadd.f32 %v935, %v959
        %v984 = vadd.f32 %v936, %v961
        %v985 = vadd.f32 %v937, %v963
        %v986 = vadd.f32 %v938, %v965
        %v987 = vadd.f32 %v939, %v967
        %v988 = vadd.f32 %v940, %v969
        %v989 = vadd.f32 %v941, %v971
        %v990 = vadd.f32 %v942, %v973
        %v991 = vadd.f32 %v943, %v975
        %vm992 = vcmask 7168
        %993 = vst.msk [vmem:[#allocation3] sm:$0xff] %vm992, %v976
        %994 = vst.msk [vmem:[#allocation3 + $0x8] sm:$0xff] %vm992, %v977
        %995 = vst.msk [vmem:[#allocation3 + $0x10] sm:$0xff] %vm992, %v978
        %996 = vst.msk [vmem:[#allocation3 + $0x18] sm:$0xff] %vm992, %v979
        %997 = vst.msk [vmem:[#allocation3 + $0x20] sm:$0xff] %vm992, %v980
        %998 = vst.msk [vmem:[#allocation3 + $0x28] sm:$0xff] %vm992, %v981
        %999 = vst.msk [vmem:[#allocation3 + $0x30] sm:$0xff] %vm992, %v982
        %1000 = vst.msk [vmem:[#allocation3 + $0x38] sm:$0xff] %vm992, %v983
        %1001 = vst.msk [vmem:[#allocation3 + $0x40] sm:$0xff] %vm992, %v984
        %1002 = vst.msk [vmem:[#allocation3 + $0x48] sm:$0xff] %vm992, %v985
        %1003 = vst.msk [vmem:[#allocation3 + $0x50] sm:$0xff] %vm992, %v986
        %1004 = vst.msk [vmem:[#allocation3 + $0x58] sm:$0xff] %vm992, %v987
        %1005 = vst.msk [vmem:[#allocation3 + $0x60] sm:$0xff] %vm992, %v988
        %1006 = vst.msk [vmem:[#allocation3 + $0x68] sm:$0xff] %vm992, %v989
        %1007 = vst.msk [vmem:[#allocation3 + $0x70] sm:$0xff] %vm992, %v990
        %1008 = vst.msk [vmem:[#allocation3 + $0x78] sm:$0xff] %vm992, %v991
        %v1009 = vpack.c.bf16 %v883, %v881
        %v1010 = vpack.c.bf16 %v887, %v885
        %v1011 = vpack.c.bf16 %v891, %v889
        %v1012 = vpack.c.bf16 %v895, %v893
        %v1013 = vpack.c.bf16 %v899, %v897
        %v1014 = vpack.c.bf16 %v903, %v901
        %v1015 = vpack.c.bf16 %v907, %v905
        %v1016 = vpack.c.bf16 %v911, %v909
        %v1017 = vld [vmem:[%s385] sm:$0xf]
        %v1018 = vld [vmem:[%s385 + $0x4] sm:$0xf]
        %v1019 = vld [vmem:[%s385 + $0x8] sm:$0xf]
        %v1020 = vld [vmem:[%s385 + $0xc] sm:$0xf]
        %v1021 = vld [vmem:[%s385 + $0x10] sm:$0xf]
        %v1022 = vld [vmem:[%s385 + $0x14] sm:$0xf]
        %v1023 = vld [vmem:[%s385 + $0x18] sm:$0xf]
        %v1024 = vld [vmem:[%s385 + $0x1c] sm:$0xf]
        %v1025 = vld [vmem:[%s385 + $0x20] sm:$0xf]
        %v1026 = vld [vmem:[%s385 + $0x24] sm:$0xf]
        %v1027 = vld [vmem:[%s385 + $0x28] sm:$0xf]
        %v1028 = vld [vmem:[%s385 + $0x2c] sm:$0xf]
        %v1029 = vld [vmem:[%s385 + $0x30] sm:$0xf]
        %v1030 = vld [vmem:[%s385 + $0x34] sm:$0xf]
        %v1031 = vld [vmem:[%s385 + $0x38] sm:$0xf]
        %v1032 = vld [vmem:[%s385 + $0x3c] sm:$0xf]
        %v1049 = vunpack.c.l.b16 %v1017
        %v1050 = vunpack.c.l.b16 %v1018
        %v1051 = vunpack.c.l.b16 %v1019
        %v1052 = vunpack.c.l.b16 %v1020
        %v1053 = vunpack.c.l.b16 %v1021
        %v1054 = vunpack.c.l.b16 %v1022
        %v1055 = vunpack.c.l.b16 %v1023
        %v1056 = vunpack.c.l.b16 %v1024
        %v1057 = vunpack.c.l.b16 %v1025
        %v1058 = vunpack.c.l.b16 %v1026
        %v1059 = vunpack.c.l.b16 %v1027
        %v1060 = vunpack.c.l.b16 %v1028
        %v1061 = vunpack.c.l.b16 %v1029
        %v1062 = vunpack.c.l.b16 %v1030
        %v1063 = vunpack.c.l.b16 %v1031
        %v1064 = vunpack.c.l.b16 %v1032
        %v1065 = vpack.c.b16 %v1050, %v1049
        %v1066 = vpack.c.b16 %v1052, %v1051
        %v1067 = vpack.c.b16 %v1054, %v1053
        %v1068 = vpack.c.b16 %v1056, %v1055
        %v1069 = vpack.c.b16 %v1058, %v1057
        %v1070 = vpack.c.b16 %v1060, %v1059
        %v1071 = vpack.c.b16 %v1062, %v1061
        %v1072 = vpack.c.b16 %v1064, %v1063
        %1081 = vmatprep.subr.bf16.mxu0 0
        %1082 = vmatpush1.bf16.msra.mxu0 %v1065
        %1083 = vmatprep.subr.bf16.mxu0 0
        %1084 = vmatpush1.bf16.msra.mxu0 %v1066
        %1085 = vmatprep.subr.bf16.mxu0 0
        %1086 = vmatpush1.bf16.msra.mxu0 %v1067
        %1087 = vmatprep.subr.bf16.mxu0 0
        %1088 = vmatpush1.bf16.msra.mxu0 %v1068
        %1089 = vmatprep.subr.bf16.mxu0 0
        %1090 = vmatpush1.bf16.msra.mxu0 %v1069
        %1091 = vmatprep.subr.bf16.mxu0 0
        %1092 = vmatpush1.bf16.msra.mxu0 %v1070
        %1093 = vmatprep.subr.bf16.mxu0 0
        %1094 = vmatpush1.bf16.msra.mxu0 %v1071
        %1095 = vmatprep.subr.bf16.mxu0 0
        %1096 = vmatpush1.bf16.msra.mxu0 %v1072
        %1097 = vmatprep.subr.bf16.mxu0 0
        %1098 = vmatpush1.bf16.msra.mxu0 0
        %1099 = vmatprep.subr.bf16.mxu0 0
        %1100 = vmatpush1.bf16.msra.mxu0 0
        %1101 = vmatprep.subr.bf16.mxu0 0
        %1102 = vmatpush1.bf16.msra.mxu0 0
        %1103 = vmatprep.subr.bf16.mxu0 0
        %1104 = vmatpush1.bf16.msra.mxu0 0
        %1105 = vmatprep.subr.bf16.mxu0 0
        %1106 = vmatpush1.bf16.msra.mxu0 0
        %1107 = vmatprep.subr.bf16.mxu0 0
        %1108 = vmatpush1.bf16.msra.mxu0 0
        %1109 = vmatprep.subr.bf16.mxu0 0
        %1110 = vmatpush1.bf16.msra.mxu0 0
        %1111 = vmatprep.subr.bf16.mxu0 0
        %1112 = vmatpush1.bf16.msra.mxu0 0
        %1113 = vmatprep.mubr.bf16.mxu0 0
        %1114 = vmatmul.mubr.bf16.gmra.mrb[0].mxu0 %v1009
        %v1115 = vpop.f32.mrb[0].mxu0
        %v1116 = vadd.f32 0.0, %v1115
        %v1117 = vpop.f32.mrb[0].mxu0
        %v1118 = vpop.f32.mrb[0].mxu0
        %v1119 = vadd.f32 0.0, %v1118
        %v1120 = vpop.f32.mrb[0].mxu0
        %1121 = vmatprep.mubr.bf16.mxu0 0
        %1122 = vmatmul.mubr.bf16.gmra.mrb[0].mxu0 %v1010
        %v1123 = vpop.f32.mrb[0].mxu0
        %v1124 = vadd.f32 0.0, %v1123
        %v1125 = vpop.f32.mrb[0].mxu0
        %v1126 = vpop.f32.mrb[0].mxu0
        %v1127 = vadd.f32 0.0, %v1126
        %v1128 = vpop.f32.mrb[0].mxu0
        %1129 = vmatprep.mubr.bf16.mxu0 0
        %1130 = vmatmul.mubr.bf16.gmra.mrb[0].mxu0 %v1011
        %v1131 = vpop.f32.mrb[0].mxu0
        %v1132 = vadd.f32 0.0, %v1131
        %v1133 = vpop.f32.mrb[0].mxu0
        %v1134 = vpop.f32.mrb[0].mxu0
        %v1135 = vadd.f32 0.0, %v1134
        %v1136 = vpop.f32.mrb[0].mxu0
        %1137 = vmatprep.mubr.bf16.mxu0 0
        %1138 = vmatmul.mubr.bf16.gmra.mrb[0].mxu0 %v1012
        %v1139 = vpop.f32.mrb[0].mxu0
        %v1140 = vadd.f32 0.0, %v1139
        %v1141 = vpop.f32.mrb[0].mxu0
        %v1142 = vpop.f32.mrb[0].mxu0
        %v1143 = vadd.f32 0.0, %v1142
        %v1144 = vpop.f32.mrb[0].mxu0
        %1145 = vmatprep.mubr.bf16.mxu0 0
        %1146 = vmatmul.mubr.bf16.gmra.mrb[0].mxu0 %v1013
        %v1147 = vpop.f32.mrb[0].mxu0
        %v1148 = vadd.f32 0.0, %v1147
        %v1149 = vpop.f32.mrb[0].mxu0
        %v1150 = vpop.f32.mrb[0].mxu0
        %v1151 = vadd.f32 0.0, %v1150
        %v1152 = vpop.f32.mrb[0].mxu0
        %1153 = vmatprep.mubr.bf16.mxu0 0
        %1154 = vmatmul.mubr.bf16.gmra.mrb[0].mxu0 %v1014
        %v1155 = vpop.f32.mrb[0].mxu0
        %v1156 = vadd.f32 0.0, %v1155
        %v1157 = vpop.f32.mrb[0].mxu0
        %v1158 = vpop.f32.mrb[0].mxu0
        %v1159 = vadd.f32 0.0, %v1158
        %v1160 = vpop.f32.mrb[0].mxu0
        %1161 = vmatprep.mubr.bf16.mxu0 0
        %1162 = vmatmul.mubr.bf16.gmra.mrb[0].mxu0 %v1015
        %v1163 = vpop.f32.mrb[0].mxu0
        %v1164 = vadd.f32 0.0, %v1163
        %v1165 = vpop.f32.mrb[0].mxu0
        %v1166 = vpop.f32.mrb[0].mxu0
        %v1167 = vadd.f32 0.0, %v1166
        %v1168 = vpop.f32.mrb[0].mxu0
        %1169 = vmatprep.mubr.bf16.mxu0 0
        %1170 = vmatmul.mubr.bf16.gmra.mrb[0].mxu0 %v1016
        %v1171 = vpop.f32.mrb[0].mxu0
        %v1172 = vadd.f32 0.0, %v1171
        %v1173 = vpop.f32.mrb[0].mxu0
        %v1174 = vpop.f32.mrb[0].mxu0
        %v1175 = vadd.f32 0.0, %v1174
        %v1176 = vpop.f32.mrb[0].mxu0
        %1177 = vdwg.mxu0
        %v1178 = vld [vmem:[#allocation4] sm:$0xff]
        %v1179 = vld [vmem:[#allocation4 + $0x8] sm:$0xff]
        %v1180 = vld [vmem:[#allocation4 + $0x10] sm:$0xff]
        %v1181 = vld [vmem:[#allocation4 + $0x18] sm:$0xff]
        %v1182 = vld [vmem:[#allocation4 + $0x20] sm:$0xff]
        %v1183 = vld [vmem:[#allocation4 + $0x28] sm:$0xff]
        %v1184 = vld [vmem:[#allocation4 + $0x30] sm:$0xff]
        %v1185 = vld [vmem:[#allocation4 + $0x38] sm:$0xff]
        %v1186 = vld [vmem:[#allocation4 + $0x40] sm:$0xff]
        %v1187 = vld [vmem:[#allocation4 + $0x48] sm:$0xff]
        %v1188 = vld [vmem:[#allocation4 + $0x50] sm:$0xff]
        %v1189 = vld [vmem:[#allocation4 + $0x58] sm:$0xff]
        %v1190 = vld [vmem:[#allocation4 + $0x60] sm:$0xff]
        %v1191 = vld [vmem:[#allocation4 + $0x68] sm:$0xff]
        %v1192 = vld [vmem:[#allocation4 + $0x70] sm:$0xff]
        %v1193 = vld [vmem:[#allocation4 + $0x78] sm:$0xff]
        %1195 = vset.pattern.permute.xlu0 0
        %1196 = vperm.xlu0 %1195, %v753
        %v1197 = vpop.permute.xlu0 %1196
        %1200 = vset.pattern.permute.xlu0 0
        %1201 = vperm.xlu0 %1200, %v755
        %v1202 = vpop.permute.xlu0 %1201
        %1205 = vset.pattern.permute.xlu0 0
        %1206 = vperm.xlu0 %1205, %v757
        %v1207 = vpop.permute.xlu0 %1206
        %1210 = vset.pattern.permute.xlu0 0
        %1211 = vperm.xlu0 %1210, %v759
        %v1212 = vpop.permute.xlu0 %1211
        %1215 = vset.pattern.permute.xlu0 0
        %1216 = vperm.xlu0 %1215, %v761
        %v1217 = vpop.permute.xlu0 %1216
        %1220 = vset.pattern.permute.xlu0 0
        %1221 = vperm.xlu0 %1220, %v763
        %v1222 = vpop.permute.xlu0 %1221
        %1225 = vset.pattern.permute.xlu0 0
        %1226 = vperm.xlu0 %1225, %v765
        %v1227 = vpop.permute.xlu0 %1226
        %1230 = vset.pattern.permute.xlu0 0
        %1231 = vperm.xlu0 %1230, %v767
        %v1232 = vpop.permute.xlu0 %1231
        %1235 = vset.pattern.permute.xlu0 0
        %1236 = vperm.xlu0 %1235, %v769
        %v1237 = vpop.permute.xlu0 %1236
        %1240 = vset.pattern.permute.xlu0 0
        %1241 = vperm.xlu0 %1240, %v771
        %v1242 = vpop.permute.xlu0 %1241
        %1245 = vset.pattern.permute.xlu0 0
        %1246 = vperm.xlu0 %1245, %v773
        %v1247 = vpop.permute.xlu0 %1246
        %1250 = vset.pattern.permute.xlu0 0
        %1251 = vperm.xlu0 %1250, %v775
        %v1252 = vpop.permute.xlu0 %1251
        %1255 = vset.pattern.permute.xlu0 0
        %1256 = vperm.xlu0 %1255, %v777
        %v1257 = vpop.permute.xlu0 %1256
        %1260 = vset.pattern.permute.xlu0 0
        %1261 = vperm.xlu0 %1260, %v779
        %v1262 = vpop.permute.xlu0 %1261
        %1265 = vset.pattern.permute.xlu0 0
        %1266 = vperm.xlu0 %1265, %v781
        %v1267 = vpop.permute.xlu0 %1266
        %1270 = vset.pattern.permute.xlu0 0
        %1271 = vperm.xlu0 %1270, %v783
        %v1272 = vpop.permute.xlu0 %1271
        %v1274 = vmul.f32 %v1197, %v1178
        %v1275 = vmul.f32 %v1202, %v1179
        %v1276 = vmul.f32 %v1207, %v1180
        %v1277 = vmul.f32 %v1212, %v1181
        %v1278 = vmul.f32 %v1217, %v1182
        %v1279 = vmul.f32 %v1222, %v1183
        %v1280 = vmul.f32 %v1227, %v1184
        %v1281 = vmul.f32 %v1232, %v1185
        %v1282 = vmul.f32 %v1237, %v1186
        %v1283 = vmul.f32 %v1242, %v1187
        %v1284 = vmul.f32 %v1247, %v1188
        %v1285 = vmul.f32 %v1252, %v1189
        %v1286 = vmul.f32 %v1257, %v1190
        %v1287 = vmul.f32 %v1262, %v1191
        %v1288 = vmul.f32 %v1267, %v1192
        %v1289 = vmul.f32 %v1272, %v1193
        %v1290 = vadd.f32 %v1274, %v1116
        %v1291 = vadd.f32 %v1275, %v1119
        %v1292 = vadd.f32 %v1276, %v1124
        %v1293 = vadd.f32 %v1277, %v1127
        %v1294 = vadd.f32 %v1278, %v1132
        %v1295 = vadd.f32 %v1279, %v1135
        %v1296 = vadd.f32 %v1280, %v1140
        %v1297 = vadd.f32 %v1281, %v1143
        %v1298 = vadd.f32 %v1282, %v1148
        %v1299 = vadd.f32 %v1283, %v1151
        %v1300 = vadd.f32 %v1284, %v1156
        %v1301 = vadd.f32 %v1285, %v1159
        %v1302 = vadd.f32 %v1286, %v1164
        %v1303 = vadd.f32 %v1287, %v1167
        %v1304 = vadd.f32 %v1288, %v1172
        %v1305 = vadd.f32 %v1289, %v1175
        %1306 = vst [vmem:[#allocation4] sm:$0xff] %v1290
        %1307 = vst [vmem:[#allocation4 + $0x8] sm:$0xff] %v1291
        %1308 = vst [vmem:[#allocation4 + $0x10] sm:$0xff] %v1292
        %1309 = vst [vmem:[#allocation4 + $0x18] sm:$0xff] %v1293
        %1310 = vst [vmem:[#allocation4 + $0x20] sm:$0xff] %v1294
        %1311 = vst [vmem:[#allocation4 + $0x28] sm:$0xff] %v1295
        %1312 = vst [vmem:[#allocation4 + $0x30] sm:$0xff] %v1296
        %1313 = vst [vmem:[#allocation4 + $0x38] sm:$0xff] %v1297
        %1314 = vst [vmem:[#allocation4 + $0x40] sm:$0xff] %v1298
        %1315 = vst [vmem:[#allocation4 + $0x48] sm:$0xff] %v1299
        %1316 = vst [vmem:[#allocation4 + $0x50] sm:$0xff] %v1300
        %1317 = vst [vmem:[#allocation4 + $0x58] sm:$0xff] %v1301
        %1318 = vst [vmem:[#allocation4 + $0x60] sm:$0xff] %v1302
        %1319 = vst [vmem:[#allocation4 + $0x68] sm:$0xff] %v1303
        %1320 = vst [vmem:[#allocation4 + $0x70] sm:$0xff] %v1304
        %1321 = vst [vmem:[#allocation4 + $0x78] sm:$0xff] %v1305
        %1322 = vst.msk [vmem:[#allocation2] sm:$0xff] %vm992, %v720
        %1323 = vst.msk [vmem:[#allocation2 + $0x8] sm:$0xff] %vm992, %v721
        %1324 = vst.msk [vmem:[#allocation2 + $0x10] sm:$0xff] %vm992, %v722
        %1325 = vst.msk [vmem:[#allocation2 + $0x18] sm:$0xff] %vm992, %v723
        %1326 = vst.msk [vmem:[#allocation2 + $0x20] sm:$0xff] %vm992, %v724
        %1327 = vst.msk [vmem:[#allocation2 + $0x28] sm:$0xff] %vm992, %v725
        %1328 = vst.msk [vmem:[#allocation2 + $0x30] sm:$0xff] %vm992, %v726
        %1329 = vst.msk [vmem:[#allocation2 + $0x38] sm:$0xff] %vm992, %v727
        %1330 = vst.msk [vmem:[#allocation2 + $0x40] sm:$0xff] %vm992, %v728
        %1331 = vst.msk [vmem:[#allocation2 + $0x48] sm:$0xff] %vm992, %v729
        %1332 = vst.msk [vmem:[#allocation2 + $0x50] sm:$0xff] %vm992, %v730
        %1333 = vst.msk [vmem:[#allocation2 + $0x58] sm:$0xff] %vm992, %v731
        %1334 = vst.msk [vmem:[#allocation2 + $0x60] sm:$0xff] %vm992, %v732
        %1335 = vst.msk [vmem:[#allocation2 + $0x68] sm:$0xff] %vm992, %v733
        %1336 = vst.msk [vmem:[#allocation2 + $0x70] sm:$0xff] %vm992, %v734
        %1337 = vst.msk [vmem:[#allocation2 + $0x78] sm:$0xff] %vm992, %v735
        %p1338 = scmp.eq.s32.totalorder %s21, 1
        // Predicated region
        $region86: #{gat_gcn_forward.7} parent=76 // pred_check
          %p1339 = pneg %p1338
        $region87: #{gat_gcn_forward.7} parent=76 // pred_check_branch
          %1341 = sbr.rel (%p1339) target = $region89
        $region88: #{gat_gcn_forward.7} parent=76 // pred_region
          %v1342 = vld [vmem:[#allocation3] sm:$0xff]
          %v1343 = vld [vmem:[#allocation3 + $0x8] sm:$0xff]
          %v1344 = vld [vmem:[#allocation3 + $0x10] sm:$0xff]
          %v1345 = vld [vmem:[#allocation3 + $0x18] sm:$0xff]
          %v1346 = vld [vmem:[#allocation3 + $0x20] sm:$0xff]
          %v1347 = vld [vmem:[#allocation3 + $0x28] sm:$0xff]
          %v1348 = vld [vmem:[#allocation3 + $0x30] sm:$0xff]
          %v1349 = vld [vmem:[#allocation3 + $0x38] sm:$0xff]
          %v1350 = vld [vmem:[#allocation3 + $0x40] sm:$0xff]
          %v1351 = vld [vmem:[#allocation3 + $0x48] sm:$0xff]
          %v1352 = vld [vmem:[#allocation3 + $0x50] sm:$0xff]
          %v1353 = vld [vmem:[#allocation3 + $0x58] sm:$0xff]
          %v1354 = vld [vmem:[#allocation3 + $0x60] sm:$0xff]
          %v1355 = vld [vmem:[#allocation3 + $0x68] sm:$0xff]
          %v1356 = vld [vmem:[#allocation3 + $0x70] sm:$0xff]
          %v1357 = vld [vmem:[#allocation3 + $0x78] sm:$0xff]
          %v1358 = vmax.f32 %v1342, 1e-20
          %v1359 = vmax.f32 %v1343, 1e-20
          %v1360 = vmax.f32 %v1344, 1e-20
          %v1361 = vmax.f32 %v1345, 1e-20
          %v1362 = vmax.f32 %v1346, 1e-20
          %v1363 = vmax.f32 %v1347, 1e-20
          %v1364 = vmax.f32 %v1348, 1e-20
          %v1365 = vmax.f32 %v1349, 1e-20
          %v1366 = vmax.f32 %v1350, 1e-20
          %v1367 = vmax.f32 %v1351, 1e-20
          %v1368 = vmax.f32 %v1352, 1e-20
          %v1369 = vmax.f32 %v1353, 1e-20
          %v1370 = vmax.f32 %v1354, 1e-20
          %v1371 = vmax.f32 %v1355, 1e-20
          %v1372 = vmax.f32 %v1356, 1e-20
          %v1373 = vmax.f32 %v1357, 1e-20
          %v1374 = vrcp.pop %v1358
          %v1375 = vrcp.pop %v1359
          %v1376 = vrcp.pop %v1360
          %v1377 = vrcp.pop %v1361
          %v1378 = vrcp.pop %v1362
          %v1379 = vrcp.pop %v1363
          %v1380 = vrcp.pop %v1364
          %v1381 = vrcp.pop %v1365
          %v1382 = vrcp.pop %v1366
          %v1383 = vrcp.pop %v1367
          %v1384 = vrcp.pop %v1368
          %v1385 = vrcp.pop %v1369
          %v1386 = vrcp.pop %v1370
          %v1387 = vrcp.pop %v1371
          %v1388 = vrcp.pop %v1372
          %v1389 = vrcp.pop %v1373
          %v1390 = vld [vmem:[#allocation4] sm:$0xff]
          %v1391 = vld [vmem:[#allocation4 + $0x8] sm:$0xff]
          %v1392 = vld [vmem:[#allocation4 + $0x10] sm:$0xff]
          %v1393 = vld [vmem:[#allocation4 + $0x18] sm:$0xff]
          %v1394 = vld [vmem:[#allocation4 + $0x20] sm:$0xff]
          %v1395 = vld [vmem:[#allocation4 + $0x28] sm:$0xff]
          %v1396 = vld [vmem:[#allocation4 + $0x30] sm:$0xff]
          %v1397 = vld [vmem:[#allocation4 + $0x38] sm:$0xff]
          %v1398 = vld [vmem:[#allocation4 + $0x40] sm:$0xff]
          %v1399 = vld [vmem:[#allocation4 + $0x48] sm:$0xff]
          %v1400 = vld [vmem:[#allocation4 + $0x50] sm:$0xff]
          %v1401 = vld [vmem:[#allocation4 + $0x58] sm:$0xff]
          %v1402 = vld [vmem:[#allocation4 + $0x60] sm:$0xff]
          %v1403 = vld [vmem:[#allocation4 + $0x68] sm:$0xff]
          %v1404 = vld [vmem:[#allocation4 + $0x70] sm:$0xff]
          %v1405 = vld [vmem:[#allocation4 + $0x78] sm:$0xff]
          %1407 = vset.pattern.permute.xlu0 0
          %1408 = vperm.xlu0 %1407, %v1374
          %v1409 = vpop.permute.xlu0 %1408
          %1412 = vset.pattern.permute.xlu0 0
          %1413 = vperm.xlu0 %1412, %v1375
          %v1414 = vpop.permute.xlu0 %1413
          %1417 = vset.pattern.permute.xlu0 0
          %1418 = vperm.xlu0 %1417, %v1376
          %v1419 = vpop.permute.xlu0 %1418
          %1422 = vset.pattern.permute.xlu0 0
          %1423 = vperm.xlu0 %1422, %v1377
          %v1424 = vpop.permute.xlu0 %1423
          %1427 = vset.pattern.permute.xlu0 0
          %1428 = vperm.xlu0 %1427, %v1378
          %v1429 = vpop.permute.xlu0 %1428
          %1432 = vset.pattern.permute.xlu0 0
          %1433 = vperm.xlu0 %1432, %v1379
          %v1434 = vpop.permute.xlu0 %1433
          %1437 = vset.pattern.permute.xlu0 0
          %1438 = vperm.xlu0 %1437, %v1380
          %v1439 = vpop.permute.xlu0 %1438
          %1442 = vset.pattern.permute.xlu0 0
          %1443 = vperm.xlu0 %1442, %v1381
          %v1444 = vpop.permute.xlu0 %1443
          %1447 = vset.pattern.permute.xlu0 0
          %1448 = vperm.xlu0 %1447, %v1382
          %v1449 = vpop.permute.xlu0 %1448
          %1452 = vset.pattern.permute.xlu0 0
          %1453 = vperm.xlu0 %1452, %v1383
          %v1454 = vpop.permute.xlu0 %1453
          %1457 = vset.pattern.permute.xlu0 0
          %1458 = vperm.xlu0 %1457, %v1384
          %v1459 = vpop.permute.xlu0 %1458
          %1462 = vset.pattern.permute.xlu0 0
          %1463 = vperm.xlu0 %1462, %v1385
          %v1464 = vpop.permute.xlu0 %1463
          %1467 = vset.pattern.permute.xlu0 0
          %1468 = vperm.xlu0 %1467, %v1386
          %v1469 = vpop.permute.xlu0 %1468
          %1472 = vset.pattern.permute.xlu0 0
          %1473 = vperm.xlu0 %1472, %v1387
          %v1474 = vpop.permute.xlu0 %1473
          %1477 = vset.pattern.permute.xlu0 0
          %1478 = vperm.xlu0 %1477, %v1388
          %v1479 = vpop.permute.xlu0 %1478
          %1482 = vset.pattern.permute.xlu0 0
          %1483 = vperm.xlu0 %1482, %v1389
          %v1484 = vpop.permute.xlu0 %1483
          %v1486 = vmul.f32 %v1390, %v1409
          %v1487 = vmul.f32 %v1391, %v1414
          %v1488 = vmul.f32 %v1392, %v1419
          %v1489 = vmul.f32 %v1393, %v1424
          %v1490 = vmul.f32 %v1394, %v1429
          %v1491 = vmul.f32 %v1395, %v1434
          %v1492 = vmul.f32 %v1396, %v1439
          %v1493 = vmul.f32 %v1397, %v1444
          %v1494 = vmul.f32 %v1398, %v1449
          %v1495 = vmul.f32 %v1399, %v1454
          %v1496 = vmul.f32 %v1400, %v1459
          %v1497 = vmul.f32 %v1401, %v1464
          %v1498 = vmul.f32 %v1402, %v1469
          %v1499 = vmul.f32 %v1403, %v1474
          %v1500 = vmul.f32 %v1404, %v1479
          %v1501 = vmul.f32 %v1405, %v1484
          %v1502 = vld [vmem:[%s4] sm:$0x1]
          %v1504 = vlaneseq
          %v1505 = vshrl.u32 %v1504, 7
          %v1506 = vsub.s32 0, %v1505
          %v1507 = vrot.slane %v1502, %v1506
          %v1509 = vadd.f32 %v1486, %v1507
          %v1510 = vadd.f32 %v1487, %v1507
          %v1511 = vadd.f32 %v1488, %v1507
          %v1512 = vadd.f32 %v1489, %v1507
          %v1513 = vadd.f32 %v1490, %v1507
          %v1514 = vadd.f32 %v1491, %v1507
          %v1515 = vadd.f32 %v1492, %v1507
          %v1516 = vadd.f32 %v1493, %v1507
          %v1517 = vadd.f32 %v1494, %v1507
          %v1518 = vadd.f32 %v1495, %v1507
          %v1519 = vadd.f32 %v1496, %v1507
          %v1520 = vadd.f32 %v1497, %v1507
          %v1521 = vadd.f32 %v1498, %v1507
          %v1522 = vadd.f32 %v1499, %v1507
          %v1523 = vadd.f32 %v1500, %v1507
          %v1524 = vadd.f32 %v1501, %v1507
          %v1525 = vlaneseq
          %v1526 = vand.u32 %v1525, 127
          %vm1527 = vcmp.lt.s32.totalorder %v1526, 6
          %v1528 = vsel %vm1527, 1, 0
          %vm1529 = vcmp.eq.s32.totalorder %v1528, 1
          %v1530 = vsel %vm1529, %v1509, -1e+30
          %v1531 = vsel %vm1529, %v1510, -1e+30
          %v1532 = vsel %vm1529, %v1511, -1e+30
          %v1533 = vsel %vm1529, %v1512, -1e+30
          %v1534 = vsel %vm1529, %v1513, -1e+30
          %v1535 = vsel %vm1529, %v1514, -1e+30
          %v1536 = vsel %vm1529, %v1515, -1e+30
          %v1537 = vsel %vm1529, %v1516, -1e+30
          %v1538 = vsel %vm1529, %v1517, -1e+30
          %v1539 = vsel %vm1529, %v1518, -1e+30
          %v1540 = vsel %vm1529, %v1519, -1e+30
          %v1541 = vsel %vm1529, %v1520, -1e+30
          %v1542 = vsel %vm1529, %v1521, -1e+30
          %v1543 = vsel %vm1529, %v1522, -1e+30
          %v1544 = vsel %vm1529, %v1523, -1e+30
          %v1545 = vsel %vm1529, %v1524, -1e+30
          %1546 = vmax.xlane.f32.xlu0 %v1530
          %v1547 = vpop.xlane.xlu0 %1546
          %1548 = vmax.xlane.f32.xlu0 %v1531
          %v1549 = vpop.xlane.xlu0 %1548
          %1550 = vmax.xlane.f32.xlu0 %v1532
          %v1551 = vpop.xlane.xlu0 %1550
          %1552 = vmax.xlane.f32.xlu0 %v1533
          %v1553 = vpop.xlane.xlu0 %1552
          %1554 = vmax.xlane.f32.xlu0 %v1534
          %v1555 = vpop.xlane.xlu0 %1554
          %1556 = vmax.xlane.f32.xlu0 %v1535
          %v1557 = vpop.xlane.xlu0 %1556
          %1558 = vmax.xlane.f32.xlu0 %v1536
          %v1559 = vpop.xlane.xlu0 %1558
          %1560 = vmax.xlane.f32.xlu0 %v1537
          %v1561 = vpop.xlane.xlu0 %1560
          %1562 = vmax.xlane.f32.xlu0 %v1538
          %v1563 = vpop.xlane.xlu0 %1562
          %1564 = vmax.xlane.f32.xlu0 %v1539
          %v1565 = vpop.xlane.xlu0 %1564
          %1566 = vmax.xlane.f32.xlu0 %v1540
          %v1567 = vpop.xlane.xlu0 %1566
          %1568 = vmax.xlane.f32.xlu0 %v1541
          %v1569 = vpop.xlane.xlu0 %1568
          %1570 = vmax.xlane.f32.xlu0 %v1542
          %v1571 = vpop.xlane.xlu0 %1570
          %1572 = vmax.xlane.f32.xlu0 %v1543
          %v1573 = vpop.xlane.xlu0 %1572
          %1574 = vmax.xlane.f32.xlu0 %v1544
          %v1575 = vpop.xlane.xlu0 %1574
          %1576 = vmax.xlane.f32.xlu0 %v1545
          %v1577 = vpop.xlane.xlu0 %1576
          %v1578 = vsub.f32 %v1530, %v1547
          %v1579 = vsub.f32 %v1531, %v1549
          %v1580 = vsub.f32 %v1532, %v1551
          %v1581 = vsub.f32 %v1533, %v1553
          %v1582 = vsub.f32 %v1534, %v1555
          %v1583 = vsub.f32 %v1535, %v1557
          %v1584 = vsub.f32 %v1536, %v1559
          %v1585 = vsub.f32 %v1537, %v1561
          %v1586 = vsub.f32 %v1538, %v1563
          %v1587 = vsub.f32 %v1539, %v1565
          %v1588 = vsub.f32 %v1540, %v1567
          %v1589 = vsub.f32 %v1541, %v1569
          %v1590 = vsub.f32 %v1542, %v1571
          %v1591 = vsub.f32 %v1543, %v1573
          %v1592 = vsub.f32 %v1544, %v1575
          %v1593 = vsub.f32 %v1545, %v1577
          %v1594 = vmul.f32 %v1578, 1.442695
          %v1595 = vpow.pop %v1594
          %v1596 = vmul.f32 %v1579, 1.442695
          %v1597 = vpow.pop %v1596
          %v1598 = vmul.f32 %v1580, 1.442695
          %v1599 = vpow.pop %v1598
          %v1600 = vmul.f32 %v1581, 1.442695
          %v1601 = vpow.pop %v1600
          %v1602 = vmul.f32 %v1582, 1.442695
          %v1603 = vpow.pop %v1602
          %v1604 = vmul.f32 %v1583, 1.442695
          %v1605 = vpow.pop %v1604
          %v1606 = vmul.f32 %v1584, 1.442695
          %v1607 = vpow.pop %v1606
          %v1608 = vmul.f32 %v1585, 1.442695
          %v1609 = vpow.pop %v1608
          %v1610 = vmul.f32 %v1586, 1.442695
          %v1611 = vpow.pop %v1610
          %v1612 = vmul.f32 %v1587, 1.442695
          %v1613 = vpow.pop %v1612
          %v1614 = vmul.f32 %v1588, 1.442695
          %v1615 = vpow.pop %v1614
          %v1616 = vmul.f32 %v1589, 1.442695
          %v1617 = vpow.pop %v1616
          %v1618 = vmul.f32 %v1590, 1.442695
          %v1619 = vpow.pop %v1618
          %v1620 = vmul.f32 %v1591, 1.442695
          %v1621 = vpow.pop %v1620
          %v1622 = vmul.f32 %v1592, 1.442695
          %v1623 = vpow.pop %v1622
          %v1624 = vmul.f32 %v1593, 1.442695
          %v1625 = vpow.pop %v1624
          %1626 = vadd.xlane.f32.xlu0 %v1595
          %v1627 = vpop.xlane.xlu0 %1626
          %1628 = vadd.xlane.f32.xlu0 %v1597
          %v1629 = vpop.xlane.xlu0 %1628
          %1630 = vadd.xlane.f32.xlu0 %v1599
          %v1631 = vpop.xlane.xlu0 %1630
          %1632 = vadd.xlane.f32.xlu0 %v1601
          %v1633 = vpop.xlane.xlu0 %1632
          %1634 = vadd.xlane.f32.xlu0 %v1603
          %v1635 = vpop.xlane.xlu0 %1634
          %1636 = vadd.xlane.f32.xlu0 %v1605
          %v1637 = vpop.xlane.xlu0 %1636
          %1638 = vadd.xlane.f32.xlu0 %v1607
          %v1639 = vpop.xlane.xlu0 %1638
          %1640 = vadd.xlane.f32.xlu0 %v1609
          %v1641 = vpop.xlane.xlu0 %1640
          %1642 = vadd.xlane.f32.xlu0 %v1611
          %v1643 = vpop.xlane.xlu0 %1642
          %1644 = vadd.xlane.f32.xlu0 %v1613
          %v1645 = vpop.xlane.xlu0 %1644
          %1646 = vadd.xlane.f32.xlu0 %v1615
          %v1647 = vpop.xlane.xlu0 %1646
          %1648 = vadd.xlane.f32.xlu0 %v1617
          %v1649 = vpop.xlane.xlu0 %1648
          %1650 = vadd.xlane.f32.xlu0 %v1619
          %v1651 = vpop.xlane.xlu0 %1650
          %1652 = vadd.xlane.f32.xlu0 %v1621
          %v1653 = vpop.xlane.xlu0 %1652
          %1654 = vadd.xlane.f32.xlu0 %v1623
          %v1655 = vpop.xlane.xlu0 %1654
          %1656 = vadd.xlane.f32.xlu0 %v1625
          %v1657 = vpop.xlane.xlu0 %1656
          %v1658 = vlog2.pop %v1627
          %v1659 = vmul.f32 %v1658, 0.6931472
          %v1660 = vlog2.pop %v1629
          %v1661 = vmul.f32 %v1660, 0.6931472
          %v1662 = vlog2.pop %v1631
          %v1663 = vmul.f32 %v1662, 0.6931472
          %v1664 = vlog2.pop %v1633
          %v1665 = vmul.f32 %v1664, 0.6931472
          %v1666 = vlog2.pop %v1635
          %v1667 = vmul.f32 %v1666, 0.6931472
          %v1668 = vlog2.pop %v1637
          %v1669 = vmul.f32 %v1668, 0.6931472
          %v1670 = vlog2.pop %v1639
          %v1671 = vmul.f32 %v1670, 0.6931472
          %v1672 = vlog2.pop %v1641
          %v1673 = vmul.f32 %v1672, 0.6931472
          %v1674 = vlog2.pop %v1643
          %v1675 = vmul.f32 %v1674, 0.6931472
          %v1676 = vlog2.pop %v1645
          %v1677 = vmul.f32 %v1676, 0.6931472
          %v1678 = vlog2.pop %v1647
          %v1679 = vmul.f32 %v1678, 0.6931472
          %v1680 = vlog2.pop %v1649
          %v1681 = vmul.f32 %v1680, 0.6931472
          %v1682 = vlog2.pop %v1651
          %v1683 = vmul.f32 %v1682, 0.6931472
          %v1684 = vlog2.pop %v1653
          %v1685 = vmul.f32 %v1684, 0.6931472
          %v1686 = vlog2.pop %v1655
          %v1687 = vmul.f32 %v1686, 0.6931472
          %v1688 = vlog2.pop %v1657
          %v1689 = vmul.f32 %v1688, 0.6931472
          %v1690 = vsub.f32 %v1578, %v1659
          %v1691 = vsub.f32 %v1579, %v1661
          %v1692 = vsub.f32 %v1580, %v1663
          %v1693 = vsub.f32 %v1581, %v1665
          %v1694 = vsub.f32 %v1582, %v1667
          %v1695 = vsub.f32 %v1583, %v1669
          %v1696 = vsub.f32 %v1584, %v1671
          %v1697 = vsub.f32 %v1585, %v1673
          %v1698 = vsub.f32 %v1586, %v1675
          %v1699 = vsub.f32 %v1587, %v1677
          %v1700 = vsub.f32 %v1588, %v1679
          %v1701 = vsub.f32 %v1589, %v1681
          %v1702 = vsub.f32 %v1590, %v1683
          %v1703 = vsub.f32 %v1591, %v1685
          %v1704 = vsub.f32 %v1592, %v1687
          %v1705 = vsub.f32 %v1593, %v1689
          %1706 = vst [vmem:[%s401] sm:$0xff] %v1690
          %1707 = vst [vmem:[%s401 + $0x8] sm:$0xff] %v1691
          %1708 = vst [vmem:[%s401 + $0x10] sm:$0xff] %v1692
          %1709 = vst [vmem:[%s401 + $0x18] sm:$0xff] %v1693
          %1710 = vst [vmem:[%s401 + $0x20] sm:$0xff] %v1694
          %1711 = vst [vmem:[%s401 + $0x28] sm:$0xff] %v1695
          %1712 = vst [vmem:[%s401 + $0x30] sm:$0xff] %v1696
          %1713 = vst [vmem:[%s401 + $0x38] sm:$0xff] %v1697
          %1714 = vst [vmem:[%s401 + $0x40] sm:$0xff] %v1698
          %1715 = vst [vmem:[%s401 + $0x48] sm:$0xff] %v1699
          %1716 = vst [vmem:[%s401 + $0x50] sm:$0xff] %v1700
          %1717 = vst [vmem:[%s401 + $0x58] sm:$0xff] %v1701
          %1718 = vst [vmem:[%s401 + $0x60] sm:$0xff] %v1702
          %1719 = vst [vmem:[%s401 + $0x68] sm:$0xff] %v1703
          %1720 = vst [vmem:[%s401 + $0x70] sm:$0xff] %v1704
          %1721 = vst [vmem:[%s401 + $0x78] sm:$0xff] %v1705
        $region89: #{gat_gcn_forward.7} parent=76 // pred_fallthru
          _
        %s1722 = smul.u32 16, %s20
        %p1723 = scmp.lt.s32.totalorder %s1722, 31
        %s1724 = scalar_select %p1723, %s1722, 31
        %s1725 = smul.addr %s1724, 8
        %s1726 = scalar_lea.vmem %s5, %s1725
        // Predicated region
        $region90: #{gat_gcn_forward.7} parent=76 // pred_check
          %p1727 = pneg %p173
        $region91: #{gat_gcn_forward.7} parent=76 // pred_check_branch
          %1729 = sbr.rel (%p1727) target = $region93
        $region92: #{gat_gcn_forward.7} parent=76 // pred_region
          %s1730 = smul.u32 16, %s20
        $region93: #{gat_gcn_forward.7} parent=76 // pred_fallthru
          _
      $region77: #{gat_gcn_forward.7} parent=5 // pred_fallthru
        _
      %p1731 = scmp.le.s32.totalorder 2, %s11
      // Predicated region
      $region94: #{gat_gcn_forward.7} parent=5 // pred_check
        %p1732 = pneg %p1731
      $region95: #{gat_gcn_forward.7} parent=5 // pred_check_branch
        %1734 = sbr.rel (%p1732) target = $region97
      $region96: #{gat_gcn_forward.7} parent=5 // pred_region
        %s1735 = ssub.s32 %s11, 2
        // Predicated region
        $region98: #{gat_gcn_forward.7} parent=96 // pred_check
          %p1736 = pneg %p179
        $region99: #{gat_gcn_forward.7} parent=96 // pred_check_branch
          %1738 = sbr.rel (%p1736) target = $region101
        $region100: #{gat_gcn_forward.7} parent=96 // pred_region
          %s1739 = smul.u32 16, %s22
          %p1740 = scmp.lt.s32.totalorder %s1739, 31
          %s1741 = scalar_select %p1740, %s1739, 31
          %s1742 = smul.addr %s1741, 8
          %s1743 = scalar_lea.vmem %s5, %s1742
        $region101: #{gat_gcn_forward.7} parent=96 // pred_fallthru
          _
      $region97: #{gat_gcn_forward.7} parent=5 // pred_fallthru
        _
    $region6: #{gat_gcn_forward.7} parent=1 // loop_footer
      %s15 = sadd.s32 1, %s11
    $region7: #{gat_gcn_forward.7} parent=1 // loop_footer_branch
      %10 = sbr.rel target = $region3
    $region8: #{gat_gcn_forward.7} parent=1 // loop_exit
      _

// kernel: gat_gcn_forward.5
$region0: #{gat_gcn_forward.5}
  #allocation0 [shape = 'u32[]', space=smem, size = 0x4, offset = 0x4, fixed_abs, tag = 'smem constant byte address 0x4 - core index']
  #allocation1 [shape = 'u32[144,128]{1,0:T(1,128)}', space=vmem, size = 0x12000, scoped, tag = 'internal scratch']
  #allocation2 [shape = 'f32[128,4]{1,0:T(8,128)}', space=vmem, size = 0x10000, scoped, tag = 'scratch operand']
  #allocation3 [shape = 'f32[128,4]{1,0:T(8,128)}', space=vmem, size = 0x10000, scoped, tag = 'scratch operand']
  #allocation4 [shape = 'f32[128,128]{1,0:T(8,128)}', space=vmem, size = 0x10000, scoped, tag = 'scratch operand']
  %s0 = inlined_call_operand.vmem [shape: bf16[256,128], index: 0, kind: input, shape index: {}]
  %s1 = inlined_call_operand.vmem [shape: f32[256,4], index: 1, kind: input, shape index: {}]
  %s2 = inlined_call_operand.vmem [shape: f32[4,256], index: 2, kind: input, shape index: {}]
  %s3 = inlined_call_operand.vmem [shape: bf16[256,256], index: 3, kind: input, shape index: {}]
  %s4 = inlined_call_operand.vmem [shape: f32[1,128], index: 4, kind: input, shape index: {}]
  %s5 = inlined_call_operand.vmem [shape: f32[256,128], index: 5, kind: output, shape index: {}]
  %s6 = sld [smem:[#allocation0]]
  $region102: #{gat_gcn_forward.5} parent=0
    _
  %s8 = ssub.s32 1, %s6
  %s9 = scalar_select 0, %s8, %s6
  $region1: #{gat_gcn_forward.5} parent=0
    #allocation5 [shape = 'u8[65536]{0}', space=vmem, size = 0x10000, scoped, tag = 'input window, operand 3']
    loop: start=0, step=1, limit=6
    $region2: #{gat_gcn_forward.5} parent=1 // loop_pre_header
      _
    $region3: #{gat_gcn_forward.5} parent=1 // loop_header
      %s11 = sphi 0, %s15
      %p12 = scmp.ge.s32.totalorder %s11, 6
      %s18 = sphi 0, %s30
      %s19 = sphi 0, %s26
      %s20 = sphi 0, %s18
      %s21 = sphi 0, %s19
      %s22 = sphi 0, %s20
      %s23 = sphi 0, %s21
      %s33 = sphi 0, %s35
      %s36 = sphi 0, %s33
      %s37 = sphi 0, %s36
      %s53 = sphi 0, %s37
      %s59 = sphi 0, %s61
      %s62 = sphi 0, %s59
      %s63 = sphi 0, %s62
      %s79 = sphi 0, %s63
      %s85 = sphi 0, %s87
      %s88 = sphi 0, %s85
      %s89 = sphi 0, %s88
      %s105 = sphi 0, %s89
      %s113 = sphi 0, %s115
      %s116 = sphi 0, %s113
      %s117 = sphi 0, %s116
      %s133 = sphi 0, %s117
      %s137 = sphi 0, %s137
      %s139 = sphi 0, %s137
      %s140 = sphi 0, %s139
      %s154 = sphi 0, %s140
      %s160 = sphi 0, %s162
      %s163 = sphi 0, %s160
      %s164 = sphi 0, %s163
      %s180 = sphi 0, %s164
    $region4: #{gat_gcn_forward.5} parent=1 // loop_header_branch
      %14 = sbr.rel (%p12) target = $region8
    $region5: #{gat_gcn_forward.5} parent=1 // loop_body
      %s16 = ssub.s32 %s11, 1
      %s17 = ssub.s32 %s11, 2
      %s24 = sadd.s32 1, %s19
      %p25 = scmp.ge.s32.totalorder %s24, 2
      %s26 = scalar_select %p25, 0, %s24
      %s27 = sadd.s32 1, %s18
      %s28 = scalar_select %p25, %s27, %s18
      %p29 = scmp.ge.s32.totalorder %s28, 2
      %s30 = scalar_select %p29, 0, %s28
      %s31 = ssub.s32 %s19, %s26
      %p32 = scmp.eq.s32.totalorder %s31, 0
      %s34 = sadd.s32 %s33, 1
      %s35 = scalar_select %p32, %s33, %s34
      %p38 = pneg %p32
      %p39 = scmp.eq.s32.totalorder %s11, 3
      %p40 = por %p38, %p39
      %p41 = scmp.ne.s32.totalorder %s33, %s36
      %p42 = scmp.eq.s32.totalorder %s11, 0
      %p43 = por %p41, %p42
      %p44 = scmp.ne.s32.totalorder %s33, %s36
      %p45 = scmp.eq.s32.totalorder %s16, 3
      %p46 = por %p44, %p45
      %p47 = scmp.ne.s32.totalorder %s36, %s37
      %p48 = scmp.eq.s32.totalorder %s16, 0
      %p49 = por %p47, %p48
      %p50 = scmp.ne.s32.totalorder %s36, %s37
      %p51 = scmp.eq.s32.totalorder %s17, 3
      %p52 = por %p50, %p51
      %p54 = scmp.ne.s32.totalorder %s37, %s53
      %p55 = scmp.eq.s32.totalorder %s17, 0
      %p56 = por %p54, %p55
      %s57 = ssub.s32 %s18, %s30
      %p58 = scmp.eq.s32.totalorder %s57, 0
      %s60 = sadd.s32 %s59, 1
      %s61 = scalar_select %p58, %s59, %s60
      %p64 = pneg %p58
      %p65 = scmp.eq.s32.totalorder %s11, 3
      %p66 = por %p64, %p65
      %p67 = scmp.ne.s32.totalorder %s59, %s62
      %p68 = scmp.eq.s32.totalorder %s11, 0
      %p69 = por %p67, %p68
      %p70 = scmp.ne.s32.totalorder %s59, %s62
      %p71 = scmp.eq.s32.totalorder %s16, 3
      %p72 = por %p70, %p71
      %p73 = scmp.ne.s32.totalorder %s62, %s63
      %p74 = scmp.eq.s32.totalorder %s16, 0
      %p75 = por %p73, %p74
      %p76 = scmp.ne.s32.totalorder %s62, %s63
      %p77 = scmp.eq.s32.totalorder %s17, 3
      %p78 = por %p76, %p77
      %p80 = scmp.ne.s32.totalorder %s63, %s79
      %p81 = scmp.eq.s32.totalorder %s17, 0
      %p82 = por %p80, %p81
      %s83 = ssub.s32 %s19, %s26
      %p84 = scmp.eq.s32.totalorder %s83, 0
      %s86 = sadd.s32 %s85, 1
      %s87 = scalar_select %p84, %s85, %s86
      %p90 = pneg %p84
      %p91 = scmp.eq.s32.totalorder %s11, 3
      %p92 = por %p90, %p91
      %p93 = scmp.ne.s32.totalorder %s85, %s88
      %p94 = scmp.eq.s32.totalorder %s11, 0
      %p95 = por %p93, %p94
      %p96 = scmp.ne.s32.totalorder %s85, %s88
      %p97 = scmp.eq.s32.totalorder %s16, 3
      %p98 = por %p96, %p97
      %p99 = scmp.ne.s32.totalorder %s88, %s89
      %p100 = scmp.eq.s32.totalorder %s16, 0
      %p101 = por %p99, %p100
      %p102 = scmp.ne.s32.totalorder %s88, %s89
      %p103 = scmp.eq.s32.totalorder %s17, 3
      %p104 = por %p102, %p103
      %p106 = scmp.ne.s32.totalorder %s89, %s105
      %p107 = scmp.eq.s32.totalorder %s17, 0
      %p108 = por %p106, %p107
      %s109 = ssub.s32 %s18, %s30
      %s110 = ssub.s32 %s19, %s26
      %s111 = sor.u32 %s109, %s110
      %p112 = scmp.eq.s32.totalorder %s111, 0
      %s114 = sadd.s32 %s113, 1
      %s115 = scalar_select %p112, %s113, %s114
      %p118 = pneg %p112
      %p119 = scmp.eq.s32.totalorder %s11, 3
      %p120 = por %p118, %p119
      %p121 = scmp.ne.s32.totalorder %s113, %s116
      %p122 = scmp.eq.s32.totalorder %s11, 0
      %p123 = por %p121, %p122
      %p124 = scmp.ne.s32.totalorder %s113, %s116
      %p125 = scmp.eq.s32.totalorder %s16, 3
      %p126 = por %p124, %p125
      %p127 = scmp.ne.s32.totalorder %s116, %s117
      %p128 = scmp.eq.s32.totalorder %s16, 0
      %p129 = por %p127, %p128
      %p130 = scmp.ne.s32.totalorder %s116, %s117
      %p131 = scmp.eq.s32.totalorder %s17, 3
      %p132 = por %p130, %p131
      %p134 = scmp.ne.s32.totalorder %s117, %s133
      %p135 = scmp.eq.s32.totalorder %s17, 0
      %p136 = por %p134, %p135
      %s138 = sadd.s32 %s137, 1
      %p141 = scmp.eq.s32.totalorder %s11, 3
      %p142 = scmp.ne.s32.totalorder %s137, %s139
      %p143 = scmp.eq.s32.totalorder %s11, 0
      %p144 = por %p142, %p143
      %p145 = scmp.ne.s32.totalorder %s137, %s139
      %p146 = scmp.eq.s32.totalorder %s16, 3
      %p147 = por %p145, %p146
      %p148 = scmp.ne.s32.totalorder %s139, %s140
      %p149 = scmp.eq.s32.totalorder %s16, 0
      %p150 = por %p148, %p149
      %p151 = scmp.ne.s32.totalorder %s139, %s140
      %p152 = scmp.eq.s32.totalorder %s17, 3
      %p153 = por %p151, %p152
      %p155 = scmp.ne.s32.totalorder %s140, %s154
      %p156 = scmp.eq.s32.totalorder %s17, 0
      %p157 = por %p155, %p156
      %s158 = ssub.s32 %s18, %s30
      %p159 = scmp.eq.s32.totalorder %s158, 0
      %s161 = sadd.s32 %s160, 1
      %s162 = scalar_select %p159, %s160, %s161
      %p165 = pneg %p159
      %p166 = scmp.eq.s32.totalorder %s11, 3
      %p167 = por %p165, %p166
      %p168 = scmp.ne.s32.totalorder %s160, %s163
      %p169 = scmp.eq.s32.totalorder %s11, 0
      %p170 = por %p168, %p169
      %p171 = scmp.ne.s32.totalorder %s160, %s163
      %p172 = scmp.eq.s32.totalorder %s16, 3
      %p173 = por %p171, %p172
      %p174 = scmp.ne.s32.totalorder %s163, %s164
      %p175 = scmp.eq.s32.totalorder %s16, 0
      %p176 = por %p174, %p175
      %p177 = scmp.ne.s32.totalorder %s163, %s164
      %p178 = scmp.eq.s32.totalorder %s17, 3
      %p179 = por %p177, %p178
      %p181 = scmp.ne.s32.totalorder %s164, %s180
      %p182 = scmp.eq.s32.totalorder %s17, 0
      %p183 = por %p181, %p182
      %p184 = scmp.le.s32.totalorder 1, %s11
      %p185 = scmp.lt.s32.totalorder %s11, 5
      %p186 = pnand %p184, %p185
      %p187 = pneg %p186
      // Predicated region
      $region9: #{gat_gcn_forward.5} parent=5 // pred_check
        _
      $region10: #{gat_gcn_forward.5} parent=5 // pred_check_branch
        %189 = sbr.rel (%p186) target = $region12
      $region11: #{gat_gcn_forward.5} parent=5 // pred_region
        %s190 = ssub.s32 %s11, 1
        // Predicated region
        $region13: #{gat_gcn_forward.5} parent=11 // pred_check
          %p191 = pneg %p150
        $region14: #{gat_gcn_forward.5} parent=11 // pred_check_branch
          %193 = sbr.rel (%p191) target = $region16
        $region15: #{gat_gcn_forward.5} parent=11 // pred_region
          _
        $region16: #{gat_gcn_forward.5} parent=11 // pred_fallthru
          _
      $region12: #{gat_gcn_forward.5} parent=5 // pred_fallthru
        _
      %p194 = scmp.lt.s32.totalorder %s11, 4
      // Predicated region
      $region17: #{gat_gcn_forward.5} parent=5 // pred_check
        %p195 = pneg %p194
      $region18: #{gat_gcn_forward.5} parent=5 // pred_check_branch
        %197 = sbr.rel (%p195) target = $region20
      $region19: #{gat_gcn_forward.5} parent=5 // pred_region
        // Predicated region
        $region21: #{gat_gcn_forward.5} parent=19 // pred_check
          %p198 = pneg %p43
        $region22: #{gat_gcn_forward.5} parent=19 // pred_check_branch
          %200 = sbr.rel (%p198) target = $region24
        $region23: #{gat_gcn_forward.5} parent=19 // pred_region
          %s201 = smul.u32 16, %s19
          %p202 = scmp.lt.s32.totalorder %s201, 31
          %s203 = scalar_select %p202, %s201, 31
          %s204 = smul.addr %s203, 4
          %s205 = scalar_lea.vmem %s0, %s204
          %s206 = smul.u32 16, %s19
        $region24: #{gat_gcn_forward.5} parent=19 // pred_fallthru
          _
        // Predicated region
        $region25: #{gat_gcn_forward.5} parent=19 // pred_check
          %p207 = pneg %p69
        $region26: #{gat_gcn_forward.5} parent=19 // pred_check_branch
          %209 = sbr.rel (%p207) target = $region28
        $region27: #{gat_gcn_forward.5} parent=19 // pred_region
          %s210 = smul.u32 16, %s18
          %p211 = scmp.lt.s32.totalorder %s210, 31
          %s212 = scalar_select %p211, %s210, 31
          %s213 = smul.addr %s212, 8
          %s214 = scalar_lea.vmem %s1, %s213
          %s215 = smul.u32 16, %s18
        $region28: #{gat_gcn_forward.5} parent=19 // pred_fallthru
          _
        // Predicated region
        $region29: #{gat_gcn_forward.5} parent=19 // pred_check
          %p216 = pneg %p95
        $region30: #{gat_gcn_forward.5} parent=19 // pred_check_branch
          %218 = sbr.rel (%p216) target = $region32
        $region31: #{gat_gcn_forward.5} parent=19 // pred_region
          %p219 = scmp.lt.s32.totalorder %s19, 1
          %s220 = scalar_select %p219, %s19, 1
          %s221 = smul.addr %s220, 4
          %s222 = scalar_lea.vmem %s2, %s221
        $region32: #{gat_gcn_forward.5} parent=19 // pred_fallthru
          _
        // Predicated region
        $region33: #{gat_gcn_forward.5} parent=19 // pred_check
          %p223 = pneg %p123
        $region34: #{gat_gcn_forward.5} parent=19 // pred_check_branch
          %225 = sbr.rel (%p223) target = $region36
        $region35: #{gat_gcn_forward.5} parent=19 // pred_region
          %s226 = sand.u32 %s113, 1
          %s227 = sand.u32 %s113, 1
          %s228 = smul.addr %s227, 64
          %s229 = scalar_lea.vmem [#allocation5], %s228
          %s230 = smul.u32 16, %s18
          %s231 = smul.addr %s230, 2
          %s232 = sadd.s32 %s19, %s231
          %s233 = smul.addr %s232, 4
          %s234 = scalar_lea.vmem %s3, %s233
          // Predicated region
          $region37: #{gat_gcn_forward.5} parent=35 // pred_check
            _
          $region38: #{gat_gcn_forward.5} parent=35 // pred_check_branch
            %236 = sbr.rel (0) target = $region40
          $region39: #{gat_gcn_forward.5} parent=35 // pred_region
            // Predicated region
            $region41: #{gat_gcn_forward.5} parent=39 // pred_check
              _
            $region42: #{gat_gcn_forward.5} parent=39 // pred_check_branch
              %238 = sbr.rel target = $region44
            $region43: #{gat_gcn_forward.5} parent=39 // pred_region
              // Predicated region
              $region56: #{gat_gcn_forward.5} parent=43 // pred_check
                _
              $region57: #{gat_gcn_forward.5} parent=43 // pred_check_branch
                %283 = sbr.rel (0) target = $region59
              $region58: #{gat_gcn_forward.5} parent=43 // pred_region
                loop: start=0, step=1, limit=1
                $region60: #{gat_gcn_forward.5} parent=58 // loop_pre_header
                  _
                $region61: #{gat_gcn_forward.5} parent=58 // loop_header
                  %s285 = sphi 0, %s289
                  %p286 = scmp.ge.s32.totalorder %s285, 1
                  %s290 = sphi %s234, %s234
                  %s291 = sphi %s229, %s229
                $region62: #{gat_gcn_forward.5} parent=58 // loop_header_branch
                  %288 = sbr.rel (%p286) target = $region66
                $region63: #{gat_gcn_forward.5} parent=58 // loop_body
                  _
                $region64: #{gat_gcn_forward.5} parent=58 // loop_footer
                  %s289 = sadd.s32 1, %s285
                $region65: #{gat_gcn_forward.5} parent=58 // loop_footer_branch
                  %284 = sbr.rel target = $region61
                $region66: #{gat_gcn_forward.5} parent=58 // loop_exit
                  _
                loop: start=0, step=1, limit=1
                $region67: #{gat_gcn_forward.5} parent=58 // loop_pre_header
                  _
                $region68: #{gat_gcn_forward.5} parent=58 // loop_header
                  %s294 = sphi 0, %s298
                  %p295 = scmp.ge.s32.totalorder %s294, 1
                  %s299 = sphi %s234, %s234
                  %s300 = sphi %s229, %s229
                $region69: #{gat_gcn_forward.5} parent=58 // loop_header_branch
                  %297 = sbr.rel (%p295) target = $region73
                $region70: #{gat_gcn_forward.5} parent=58 // loop_body
                  %v301 = vld [vmem:[%s299] sm:$0xf]
                  %302 = vst [vmem:[%s300] sm:$0xf] %v301
                  %v303 = vld [vmem:[%s299 + $0x8] sm:$0xf]
                  %304 = vst [vmem:[%s300 + $0x4] sm:$0xf] %v303
                  %v305 = vld [vmem:[%s299 + $0x10] sm:$0xf]
                  %306 = vst [vmem:[%s300 + $0x8] sm:$0xf] %v305
                  %v307 = vld [vmem:[%s299 + $0x18] sm:$0xf]
                  %308 = vst [vmem:[%s300 + $0xc] sm:$0xf] %v307
                  %v309 = vld [vmem:[%s299 + $0x20] sm:$0xf]
                  %310 = vst [vmem:[%s300 + $0x10] sm:$0xf] %v309
                  %v311 = vld [vmem:[%s299 + $0x28] sm:$0xf]
                  %312 = vst [vmem:[%s300 + $0x14] sm:$0xf] %v311
                  %v313 = vld [vmem:[%s299 + $0x30] sm:$0xf]
                  %314 = vst [vmem:[%s300 + $0x18] sm:$0xf] %v313
                  %v315 = vld [vmem:[%s299 + $0x38] sm:$0xf]
                  %316 = vst [vmem:[%s300 + $0x1c] sm:$0xf] %v315
                  %v317 = vld [vmem:[%s299 + $0x40] sm:$0xf]
                  %318 = vst [vmem:[%s300 + $0x20] sm:$0xf] %v317
                  %v319 = vld [vmem:[%s299 + $0x48] sm:$0xf]
                  %320 = vst [vmem:[%s300 + $0x24] sm:$0xf] %v319
                  %v321 = vld [vmem:[%s299 + $0x50] sm:$0xf]
                  %322 = vst [vmem:[%s300 + $0x28] sm:$0xf] %v321
                  %v323 = vld [vmem:[%s299 + $0x58] sm:$0xf]
                  %324 = vst [vmem:[%s300 + $0x2c] sm:$0xf] %v323
                  %v325 = vld [vmem:[%s299 + $0x60] sm:$0xf]
                  %326 = vst [vmem:[%s300 + $0x30] sm:$0xf] %v325
                  %v327 = vld [vmem:[%s299 + $0x68] sm:$0xf]
                  %328 = vst [vmem:[%s300 + $0x34] sm:$0xf] %v327
                  %v329 = vld [vmem:[%s299 + $0x70] sm:$0xf]
                  %330 = vst [vmem:[%s300 + $0x38] sm:$0xf] %v329
                  %v331 = vld [vmem:[%s299 + $0x78] sm:$0xf]
                  %332 = vst [vmem:[%s300 + $0x3c] sm:$0xf] %v331
                $region71: #{gat_gcn_forward.5} parent=58 // loop_footer
                  %s298 = sadd.s32 1, %s294
                $region72: #{gat_gcn_forward.5} parent=58 // loop_footer_branch
                  %293 = sbr.rel target = $region68
                $region73: #{gat_gcn_forward.5} parent=58 // loop_exit
                  _
              $region59: #{gat_gcn_forward.5} parent=43 // pred_fallthru
                _
            $region44: #{gat_gcn_forward.5} parent=39 // pred_fallthru
              _
            // Predicated region
            $region45: #{gat_gcn_forward.5} parent=39 // pred_check
              _
            $region46: #{gat_gcn_forward.5} parent=39 // pred_check_branch
              %240 = sbr.rel (0) target = $region48
            $region47: #{gat_gcn_forward.5} parent=39 // pred_region
              loop: start=0, step=1, limit=1
              $region49: #{gat_gcn_forward.5} parent=47 // loop_pre_header
                _
              $region50: #{gat_gcn_forward.5} parent=47 // loop_header
                %s243 = sphi 0, %s247
                %p244 = scmp.ge.s32.totalorder %s243, 1
                %s248 = sphi %s234, %s234
                %s249 = sphi %s229, %s229
              $region51: #{gat_gcn_forward.5} parent=47 // loop_header_branch
                %246 = sbr.rel (%p244) target = $region55
              $region52: #{gat_gcn_forward.5} parent=47 // loop_body
                %v250 = vld [vmem:[%s248] sm:$0xf]
                %251 = vst [vmem:[%s249] sm:$0xf] %v250
                %v252 = vld [vmem:[%s248 + $0x8] sm:$0xf]
                %253 = vst [vmem:[%s249 + $0x4] sm:$0xf] %v252
                %v254 = vld [vmem:[%s248 + $0x10] sm:$0xf]
                %255 = vst [vmem:[%s249 + $0x8] sm:$0xf] %v254
                %v256 = vld [vmem:[%s248 + $0x18] sm:$0xf]
                %257 = vst [vmem:[%s249 + $0xc] sm:$0xf] %v256
                %v258 = vld [vmem:[%s248 + $0x20] sm:$0xf]
                %259 = vst [vmem:[%s249 + $0x10] sm:$0xf] %v258
                %v260 = vld [vmem:[%s248 + $0x28] sm:$0xf]
                %261 = vst [vmem:[%s249 + $0x14] sm:$0xf] %v260
                %v262 = vld [vmem:[%s248 + $0x30] sm:$0xf]
                %263 = vst [vmem:[%s249 + $0x18] sm:$0xf] %v262
                %v264 = vld [vmem:[%s248 + $0x38] sm:$0xf]
                %265 = vst [vmem:[%s249 + $0x1c] sm:$0xf] %v264
                %v266 = vld [vmem:[%s248 + $0x40] sm:$0xf]
                %267 = vst [vmem:[%s249 + $0x20] sm:$0xf] %v266
                %v268 = vld [vmem:[%s248 + $0x48] sm:$0xf]
                %269 = vst [vmem:[%s249 + $0x24] sm:$0xf] %v268
                %v270 = vld [vmem:[%s248 + $0x50] sm:$0xf]
                %271 = vst [vmem:[%s249 + $0x28] sm:$0xf] %v270
                %v272 = vld [vmem:[%s248 + $0x58] sm:$0xf]
                %273 = vst [vmem:[%s249 + $0x2c] sm:$0xf] %v272
                %v274 = vld [vmem:[%s248 + $0x60] sm:$0xf]
                %275 = vst [vmem:[%s249 + $0x30] sm:$0xf] %v274
                %v276 = vld [vmem:[%s248 + $0x68] sm:$0xf]
                %277 = vst [vmem:[%s249 + $0x34] sm:$0xf] %v276
                %v278 = vld [vmem:[%s248 + $0x70] sm:$0xf]
                %279 = vst [vmem:[%s249 + $0x38] sm:$0xf] %v278
                %v280 = vld [vmem:[%s248 + $0x78] sm:$0xf]
                %281 = vst [vmem:[%s249 + $0x3c] sm:$0xf] %v280
              $region53: #{gat_gcn_forward.5} parent=47 // loop_footer
                %s247 = sadd.s32 1, %s243
              $region54: #{gat_gcn_forward.5} parent=47 // loop_footer_branch
                %242 = sbr.rel target = $region50
              $region55: #{gat_gcn_forward.5} parent=47 // loop_exit
                _
            $region48: #{gat_gcn_forward.5} parent=39 // pred_fallthru
              _
          $region40: #{gat_gcn_forward.5} parent=35 // pred_fallthru
            _
          %333 = vnop
        $region36: #{gat_gcn_forward.5} parent=19 // pred_fallthru
          _
      $region20: #{gat_gcn_forward.5} parent=5 // pred_fallthru
        _
      %p334 = scmp.le.s32.totalorder 1, %s11
      %p335 = scmp.lt.s32.totalorder %s11, 5
      %p336 = pnand %p334, %p335
      %p337 = pneg %p336
      // Predicated region
      $region74: #{gat_gcn_forward.5} parent=5 // pred_check
        _
      $region75: #{gat_gcn_forward.5} parent=5 // pred_check_branch
        %339 = sbr.rel (%p336) target = $region77
      $region76: #{gat_gcn_forward.5} parent=5 // pred_region
        %s340 = ssub.s32 %s11, 1
        %s341 = sand.u32 %s116, 1
        %s342 = sand.u32 %s116, 1
        %s343 = smul.addr %s342, 64
        %s344 = scalar_lea.vmem [#allocation5], %s343
        // Predicated region
        $region78: #{gat_gcn_forward.5} parent=76 // pred_check
          %p345 = pneg %p129
        $region79: #{gat_gcn_forward.5} parent=76 // pred_check_branch
          %347 = sbr.rel (%p345) target = $region81
        $region80: #{gat_gcn_forward.5} parent=76 // pred_region
          _
        $region81: #{gat_gcn_forward.5} parent=76 // pred_fallthru
          _
        %s348 = smul.u32 16, %s21
        %p349 = scmp.lt.s32.totalorder %s348, 31
        %s350 = scalar_select %p349, %s348, 31
        %s351 = smul.addr %s350, 4
        %s352 = scalar_lea.vmem %s0, %s351
        %p353 = pneg %p49
        %p354 = pneg %p46
        %s355 = smul.u32 16, %s20
        %p356 = scmp.lt.s32.totalorder %s355, 31
        %s357 = scalar_select %p356, %s355, 31
        %s358 = smul.addr %s357, 8
        %s359 = scalar_lea.vmem %s1, %s358
        %p360 = pneg %p75
        %p361 = pneg %p72
        %p362 = scmp.lt.s32.totalorder %s21, 1
        %s363 = scalar_select %p362, %s21, 1
        %s364 = smul.addr %s363, 4
        %s365 = scalar_lea.vmem %s2, %s364
        %p366 = pneg %p101
        %p367 = pneg %p98
        %s368 = sand.u32 %s116, 1
        %s369 = sand.u32 %s116, 1
        %s370 = smul.addr %s369, 64
        %s371 = scalar_lea.vmem [#allocation5], %s370
        %p372 = pneg %p129
        %p373 = pneg %p126
        %p374 = pneg %p150
        %p375 = pneg %p147
        %p376 = pneg %p176
        %p377 = pneg %p173
        %s378 = smul.u32 16, %s20
        %p379 = scmp.lt.s32.totalorder %s378, 31
        %s380 = scalar_select %p379, %s378, 31
        %s381 = smul.addr %s380, 8
        %s382 = scalar_lea.vmem %s5, %s381
        %s383 = smul.u32 16, %s21
        %p384 = scmp.lt.s32.totalorder %s383, 31
        %s385 = scalar_select %p384, %s383, 31
        %s386 = smul.addr %s385, 4
        %s387 = scalar_lea.vmem %s0, %s386
        %s388 = smul.u32 16, %s21
        %s389 = smul.u32 16, %s20
        %p390 = scmp.lt.s32.totalorder %s389, 31
        %s391 = scalar_select %p390, %s389, 31
        %s392 = smul.addr %s391, 8
        %s393 = scalar_lea.vmem %s1, %s392
        %s394 = smul.u32 16, %s20
        %p395 = scmp.lt.s32.totalorder %s21, 1
        %s396 = scalar_select %p395, %s21, 1
        %s397 = smul.addr %s396, 4
        %s398 = scalar_lea.vmem %s2, %s397
        %s399 = smul.u32 16, %s20
        %s400 = smul.u32 16, %s20
        %p401 = scmp.lt.s32.totalorder %s400, 31
        %s402 = scalar_select %p401, %s400, 31
        %s403 = smul.addr %s402, 8
        %s404 = scalar_lea.vmem %s5, %s403
        %s405 = smul.u32 16, %s20
        %p407 = scmp.eq.s32.totalorder %s21, 0
        // Predicated region
        $region82: #{gat_gcn_forward.5} parent=76 // pred_check
          %p408 = pneg %p407
        $region83: #{gat_gcn_forward.5} parent=76 // pred_check_branch
          %410 = sbr.rel (%p408) target = $region85
        $region84: #{gat_gcn_forward.5} parent=76 // pred_region
          %vm411 = vcmask 31744
          %412 = vst.msk [vmem:[#allocation2] sm:$0xff] %vm411, -inf
          %413 = vst.msk [vmem:[#allocation2 + $0x8] sm:$0xff] %vm411, -inf
          %414 = vst.msk [vmem:[#allocation2 + $0x10] sm:$0xff] %vm411, -inf
          %415 = vst.msk [vmem:[#allocation2 + $0x18] sm:$0xff] %vm411, -inf
          %416 = vst.msk [vmem:[#allocation2 + $0x20] sm:$0xff] %vm411, -inf
          %417 = vst.msk [vmem:[#allocation2 + $0x28] sm:$0xff] %vm411, -inf
          %418 = vst.msk [vmem:[#allocation2 + $0x30] sm:$0xff] %vm411, -inf
          %419 = vst.msk [vmem:[#allocation2 + $0x38] sm:$0xff] %vm411, -inf
          %420 = vst.msk [vmem:[#allocation2 + $0x40] sm:$0xff] %vm411, -inf
          %421 = vst.msk [vmem:[#allocation2 + $0x48] sm:$0xff] %vm411, -inf
          %422 = vst.msk [vmem:[#allocation2 + $0x50] sm:$0xff] %vm411, -inf
          %423 = vst.msk [vmem:[#allocation2 + $0x58] sm:$0xff] %vm411, -inf
          %424 = vst.msk [vmem:[#allocation2 + $0x60] sm:$0xff] %vm411, -inf
          %425 = vst.msk [vmem:[#allocation2 + $0x68] sm:$0xff] %vm411, -inf
          %426 = vst.msk [vmem:[#allocation2 + $0x70] sm:$0xff] %vm411, -inf
          %427 = vst.msk [vmem:[#allocation2 + $0x78] sm:$0xff] %vm411, -inf
          %428 = vst.msk [vmem:[#allocation3] sm:$0xff] %vm411, 0.0
          %429 = vst.msk [vmem:[#allocation3 + $0x8] sm:$0xff] %vm411, 0.0
          %430 = vst.msk [vmem:[#allocation3 + $0x10] sm:$0xff] %vm411, 0.0
          %431 = vst.msk [vmem:[#allocation3 + $0x18] sm:$0xff] %vm411, 0.0
          %432 = vst.msk [vmem:[#allocation3 + $0x20] sm:$0xff] %vm411, 0.0
          %433 = vst.msk [vmem:[#allocation3 + $0x28] sm:$0xff] %vm411, 0.0
          %434 = vst.msk [vmem:[#allocation3 + $0x30] sm:$0xff] %vm411, 0.0
          %435 = vst.msk [vmem:[#allocation3 + $0x38] sm:$0xff] %vm411, 0.0
          %436 = vst.msk [vmem:[#allocation3 + $0x40] sm:$0xff] %vm411, 0.0
          %437 = vst.msk [vmem:[#allocation3 + $0x48] sm:$0xff] %vm411, 0.0
          %438 = vst.msk [vmem:[#allocation3 + $0x50] sm:$0xff] %vm411, 0.0
          %439 = vst.msk [vmem:[#allocation3 + $0x58] sm:$0xff] %vm411, 0.0
          %440 = vst.msk [vmem:[#allocation3 + $0x60] sm:$0xff] %vm411, 0.0
          %441 = vst.msk [vmem:[#allocation3 + $0x68] sm:$0xff] %vm411, 0.0
          %442 = vst.msk [vmem:[#allocation3 + $0x70] sm:$0xff] %vm411, 0.0
          %443 = vst.msk [vmem:[#allocation3 + $0x78] sm:$0xff] %vm411, 0.0
          %444 = vst [vmem:[#allocation4] sm:$0xff] 0.0
          %445 = vst [vmem:[#allocation4 + $0x8] sm:$0xff] 0.0
          %446 = vst [vmem:[#allocation4 + $0x10] sm:$0xff] 0.0
          %447 = vst [vmem:[#allocation4 + $0x18] sm:$0xff] 0.0
          %448 = vst [vmem:[#allocation4 + $0x20] sm:$0xff] 0.0
          %449 = vst [vmem:[#allocation4 + $0x28] sm:$0xff] 0.0
          %450 = vst [vmem:[#allocation4 + $0x30] sm:$0xff] 0.0
          %451 = vst [vmem:[#allocation4 + $0x38] sm:$0xff] 0.0
          %452 = vst [vmem:[#allocation4 + $0x40] sm:$0xff] 0.0
          %453 = vst [vmem:[#allocation4 + $0x48] sm:$0xff] 0.0
          %454 = vst [vmem:[#allocation4 + $0x50] sm:$0xff] 0.0
          %455 = vst [vmem:[#allocation4 + $0x58] sm:$0xff] 0.0
          %456 = vst [vmem:[#allocation4 + $0x60] sm:$0xff] 0.0
          %457 = vst [vmem:[#allocation4 + $0x68] sm:$0xff] 0.0
          %458 = vst [vmem:[#allocation4 + $0x70] sm:$0xff] 0.0
          %459 = vst [vmem:[#allocation4 + $0x78] sm:$0xff] 0.0
        $region85: #{gat_gcn_forward.5} parent=76 // pred_fallthru
          _
        %v460 = vld [vmem:[%s344] sm:$0xf]
        %v461 = vld [vmem:[%s344 + $0x4] sm:$0xf]
        %v462 = vld [vmem:[%s344 + $0x8] sm:$0xf]
        %v463 = vld [vmem:[%s344 + $0xc] sm:$0xf]
        %v464 = vld [vmem:[%s344 + $0x10] sm:$0xf]
        %v465 = vld [vmem:[%s344 + $0x14] sm:$0xf]
        %v466 = vld [vmem:[%s344 + $0x18] sm:$0xf]
        %v467 = vld [vmem:[%s344 + $0x1c] sm:$0xf]
        %v468 = vld [vmem:[%s344 + $0x20] sm:$0xf]
        %v469 = vld [vmem:[%s344 + $0x24] sm:$0xf]
        %v470 = vld [vmem:[%s344 + $0x28] sm:$0xf]
        %v471 = vld [vmem:[%s344 + $0x2c] sm:$0xf]
        %v472 = vld [vmem:[%s344 + $0x30] sm:$0xf]
        %v473 = vld [vmem:[%s344 + $0x34] sm:$0xf]
        %v474 = vld [vmem:[%s344 + $0x38] sm:$0xf]
        %v475 = vld [vmem:[%s344 + $0x3c] sm:$0xf]
        %v476 = vunpack.c.l.bf16 %v460
        %v477 = vunpack.c.l.bf16 %v461
        %v478 = vunpack.c.l.bf16 %v462
        %v479 = vunpack.c.l.bf16 %v463
        %v480 = vunpack.c.l.bf16 %v464
        %v481 = vunpack.c.l.bf16 %v465
        %v482 = vunpack.c.l.bf16 %v466
        %v483 = vunpack.c.l.bf16 %v467
        %v484 = vunpack.c.l.bf16 %v468
        %v485 = vunpack.c.l.bf16 %v469
        %v486 = vunpack.c.l.bf16 %v470
        %v487 = vunpack.c.l.bf16 %v471
        %v488 = vunpack.c.l.bf16 %v472
        %v489 = vunpack.c.l.bf16 %v473
        %v490 = vunpack.c.l.bf16 %v474
        %v491 = vunpack.c.l.bf16 %v475
        %v492 = vld [vmem:[%s393] sm:$0xff]
        %v493 = vld [vmem:[%s393 + $0x8] sm:$0xff]
        %v494 = vld [vmem:[%s393 + $0x10] sm:$0xff]
        %v495 = vld [vmem:[%s393 + $0x18] sm:$0xff]
        %v496 = vld [vmem:[%s393 + $0x20] sm:$0xff]
        %v497 = vld [vmem:[%s393 + $0x28] sm:$0xff]
        %v498 = vld [vmem:[%s393 + $0x30] sm:$0xff]
        %v499 = vld [vmem:[%s393 + $0x38] sm:$0xff]
        %v500 = vld [vmem:[%s393 + $0x40] sm:$0xff]
        %v501 = vld [vmem:[%s393 + $0x48] sm:$0xff]
        %v502 = vld [vmem:[%s393 + $0x50] sm:$0xff]
        %v503 = vld [vmem:[%s393 + $0x58] sm:$0xff]
        %v504 = vld [vmem:[%s393 + $0x60] sm:$0xff]
        %v505 = vld [vmem:[%s393 + $0x68] sm:$0xff]
        %v506 = vld [vmem:[%s393 + $0x70] sm:$0xff]
        %v507 = vld [vmem:[%s393 + $0x78] sm:$0xff]
        %v508 = vld [vmem:[%s398] sm:$0x1]
        %510 = vset.pattern.permute.xlu0 0
        %511 = vperm.xlu0 %510, %v492
        %v512 = vpop.permute.xlu0 %511
        %515 = vset.pattern.permute.xlu0 0
        %516 = vperm.xlu0 %515, %v493
        %v517 = vpop.permute.xlu0 %516
        %520 = vset.pattern.permute.xlu0 0
        %521 = vperm.xlu0 %520, %v494
        %v522 = vpop.permute.xlu0 %521
        %525 = vset.pattern.permute.xlu0 0
        %526 = vperm.xlu0 %525, %v495
        %v527 = vpop.permute.xlu0 %526
        %530 = vset.pattern.permute.xlu0 0
        %531 = vperm.xlu0 %530, %v496
        %v532 = vpop.permute.xlu0 %531
        %535 = vset.pattern.permute.xlu0 0
        %536 = vperm.xlu0 %535, %v497
        %v537 = vpop.permute.xlu0 %536
        %540 = vset.pattern.permute.xlu0 0
        %541 = vperm.xlu0 %540, %v498
        %v542 = vpop.permute.xlu0 %541
        %545 = vset.pattern.permute.xlu0 0
        %546 = vperm.xlu0 %545, %v499
        %v547 = vpop.permute.xlu0 %546
        %550 = vset.pattern.permute.xlu0 0
        %551 = vperm.xlu0 %550, %v500
        %v552 = vpop.permute.xlu0 %551
        %555 = vset.pattern.permute.xlu0 0
        %556 = vperm.xlu0 %555, %v501
        %v557 = vpop.permute.xlu0 %556
        %560 = vset.pattern.permute.xlu0 0
        %561 = vperm.xlu0 %560, %v502
        %v562 = vpop.permute.xlu0 %561
        %565 = vset.pattern.permute.xlu0 0
        %566 = vperm.xlu0 %565, %v503
        %v567 = vpop.permute.xlu0 %566
        %570 = vset.pattern.permute.xlu0 0
        %571 = vperm.xlu0 %570, %v504
        %v572 = vpop.permute.xlu0 %571
        %575 = vset.pattern.permute.xlu0 0
        %576 = vperm.xlu0 %575, %v505
        %v577 = vpop.permute.xlu0 %576
        %580 = vset.pattern.permute.xlu0 0
        %581 = vperm.xlu0 %580, %v506
        %v582 = vpop.permute.xlu0 %581
        %585 = vset.pattern.permute.xlu0 0
        %586 = vperm.xlu0 %585, %v507
        %v587 = vpop.permute.xlu0 %586
        %v589 = vlaneseq
        %v590 = vshrl.u32 %v589, 7
        %v591 = vsub.s32 0, %v590
        %v592 = vrot.slane %v508, %v591
        %v593 = vadd.f32 %v512, %v592
        %v594 = vadd.f32 %v517, %v592
        %v595 = vadd.f32 %v522, %v592
        %v596 = vadd.f32 %v527, %v592
        %v597 = vadd.f32 %v532, %v592
        %v598 = vadd.f32 %v537, %v592
        %v599 = vadd.f32 %v542, %v592
        %v600 = vadd.f32 %v547, %v592
        %v601 = vadd.f32 %v552, %v592
        %v602 = vadd.f32 %v557, %v592
        %v603 = vadd.f32 %v562, %v592
        %v604 = vadd.f32 %v567, %v592
        %v605 = vadd.f32 %v572, %v592
        %v606 = vadd.f32 %v577, %v592
        %v607 = vadd.f32 %v582, %v592
        %v608 = vadd.f32 %v587, %v592
        %vm609 = vcmp.gt.f32.partialorder %v593, 0.0
        %vm610 = vcmp.gt.f32.partialorder %v594, 0.0
        %vm611 = vcmp.gt.f32.partialorder %v595, 0.0
        %vm612 = vcmp.gt.f32.partialorder %v596, 0.0
        %vm613 = vcmp.gt.f32.partialorder %v597, 0.0
        %vm614 = vcmp.gt.f32.partialorder %v598, 0.0
        %vm615 = vcmp.gt.f32.partialorder %v599, 0.0
        %vm616 = vcmp.gt.f32.partialorder %v600, 0.0
        %vm617 = vcmp.gt.f32.partialorder %v601, 0.0
        %vm618 = vcmp.gt.f32.partialorder %v602, 0.0
        %vm619 = vcmp.gt.f32.partialorder %v603, 0.0
        %vm620 = vcmp.gt.f32.partialorder %v604, 0.0
        %vm621 = vcmp.gt.f32.partialorder %v605, 0.0
        %vm622 = vcmp.gt.f32.partialorder %v606, 0.0
        %vm623 = vcmp.gt.f32.partialorder %v607, 0.0
        %vm624 = vcmp.gt.f32.partialorder %v608, 0.0
        %v625 = vmul.f32 %v593, 0.2
        %v626 = vmul.f32 %v594, 0.2
        %v627 = vmul.f32 %v595, 0.2
        %v628 = vmul.f32 %v596, 0.2
        %v629 = vmul.f32 %v597, 0.2
        %v630 = vmul.f32 %v598, 0.2
        %v631 = vmul.f32 %v599, 0.2
        %v632 = vmul.f32 %v600, 0.2
        %v633 = vmul.f32 %v601, 0.2
        %v634 = vmul.f32 %v602, 0.2
        %v635 = vmul.f32 %v603, 0.2
        %v636 = vmul.f32 %v604, 0.2
        %v637 = vmul.f32 %v605, 0.2
        %v638 = vmul.f32 %v606, 0.2
        %v639 = vmul.f32 %v607, 0.2
        %v640 = vmul.f32 %v608, 0.2
        %v641 = vsel %vm609, %v593, %v625
        %v642 = vsel %vm610, %v594, %v626
        %v643 = vsel %vm611, %v595, %v627
        %v644 = vsel %vm612, %v596, %v628
        %v645 = vsel %vm613, %v597, %v629
        %v646 = vsel %vm614, %v598, %v630
        %v647 = vsel %vm615, %v599, %v631
        %v648 = vsel %vm616, %v600, %v632
        %v649 = vsel %vm617, %v601, %v633
        %v650 = vsel %vm618, %v602, %v634
        %v651 = vsel %vm619, %v603, %v635
        %v652 = vsel %vm620, %v604, %v636
        %v653 = vsel %vm621, %v605, %v637
        %v654 = vsel %vm622, %v606, %v638
        %v655 = vsel %vm623, %v607, %v639
        %v656 = vsel %vm624, %v608, %v640
        %v657 = vadd.f32 %v641, %v476
        %v658 = vadd.f32 %v642, %v477
        %v659 = vadd.f32 %v643, %v478
        %v660 = vadd.f32 %v644, %v479
        %v661 = vadd.f32 %v645, %v480
        %v662 = vadd.f32 %v646, %v481
        %v663 = vadd.f32 %v647, %v482
        %v664 = vadd.f32 %v648, %v483
        %v665 = vadd.f32 %v649, %v484
        %v666 = vadd.f32 %v650, %v485
        %v667 = vadd.f32 %v651, %v486
        %v668 = vadd.f32 %v652, %v487
        %v669 = vadd.f32 %v653, %v488
        %v670 = vadd.f32 %v654, %v489
        %v671 = vadd.f32 %v655, %v490
        %v672 = vadd.f32 %v656, %v491
        %v673 = vld [vmem:[#allocation2] sm:$0xff]
        %v674 = vld [vmem:[#allocation2 + $0x8] sm:$0xff]
        %v675 = vld [vmem:[#allocation2 + $0x10] sm:$0xff]
        %v676 = vld [vmem:[#allocation2 + $0x18] sm:$0xff]
        %v677 = vld [vmem:[#allocation2 + $0x20] sm:$0xff]
        %v678 = vld [vmem:[#allocation2 + $0x28] sm:$0xff]
        %v679 = vld [vmem:[#allocation2 + $0x30] sm:$0xff]
        %v680 = vld [vmem:[#allocation2 + $0x38] sm:$0xff]
        %v681 = vld [vmem:[#allocation2 + $0x40] sm:$0xff]
        %v682 = vld [vmem:[#allocation2 + $0x48] sm:$0xff]
        %v683 = vld [vmem:[#allocation2 + $0x50] sm:$0xff]
        %v684 = vld [vmem:[#allocation2 + $0x58] sm:$0xff]
        %v685 = vld [vmem:[#allocation2 + $0x60] sm:$0xff]
        %v686 = vld [vmem:[#allocation2 + $0x68] sm:$0xff]
        %v687 = vld [vmem:[#allocation2 + $0x70] sm:$0xff]
        %v688 = vld [vmem:[#allocation2 + $0x78] sm:$0xff]
        %689 = vmax.xlane.f32.xlu0 %v657
        %v690 = vpop.xlane.xlu0 %689
        %691 = vmax.xlane.f32.xlu0 %v658
        %v692 = vpop.xlane.xlu0 %691
        %693 = vmax.xlane.f32.xlu0 %v659
        %v694 = vpop.xlane.xlu0 %693
        %695 = vmax.xlane.f32.xlu0 %v660
        %v696 = vpop.xlane.xlu0 %695
        %697 = vmax.xlane.f32.xlu0 %v661
        %v698 = vpop.xlane.xlu0 %697
        %699 = vmax.xlane.f32.xlu0 %v662
        %v700 = vpop.xlane.xlu0 %699
        %701 = vmax.xlane.f32.xlu0 %v663
        %v702 = vpop.xlane.xlu0 %701
        %703 = vmax.xlane.f32.xlu0 %v664
        %v704 = vpop.xlane.xlu0 %703
        %705 = vmax.xlane.f32.xlu0 %v665
        %v706 = vpop.xlane.xlu0 %705
        %707 = vmax.xlane.f32.xlu0 %v666
        %v708 = vpop.xlane.xlu0 %707
        %709 = vmax.xlane.f32.xlu0 %v667
        %v710 = vpop.xlane.xlu0 %709
        %711 = vmax.xlane.f32.xlu0 %v668
        %v712 = vpop.xlane.xlu0 %711
        %713 = vmax.xlane.f32.xlu0 %v669
        %v714 = vpop.xlane.xlu0 %713
        %715 = vmax.xlane.f32.xlu0 %v670
        %v716 = vpop.xlane.xlu0 %715
        %717 = vmax.xlane.f32.xlu0 %v671
        %v718 = vpop.xlane.xlu0 %717
        %719 = vmax.xlane.f32.xlu0 %v672
        %v720 = vpop.xlane.xlu0 %719
        %v721 = vmax.f32 %v673, %v690
        %v722 = vmax.f32 %v674, %v692
        %v723 = vmax.f32 %v675, %v694
        %v724 = vmax.f32 %v676, %v696
        %v725 = vmax.f32 %v677, %v698
        %v726 = vmax.f32 %v678, %v700
        %v727 = vmax.f32 %v679, %v702
        %v728 = vmax.f32 %v680, %v704
        %v729 = vmax.f32 %v681, %v706
        %v730 = vmax.f32 %v682, %v708
        %v731 = vmax.f32 %v683, %v710
        %v732 = vmax.f32 %v684, %v712
        %v733 = vmax.f32 %v685, %v714
        %v734 = vmax.f32 %v686, %v716
        %v735 = vmax.f32 %v687, %v718
        %v736 = vmax.f32 %v688, %v720
        %v737 = vsub.f32 %v673, %v721
        %v738 = vsub.f32 %v674, %v722
        %v739 = vsub.f32 %v675, %v723
        %v740 = vsub.f32 %v676, %v724
        %v741 = vsub.f32 %v677, %v725
        %v742 = vsub.f32 %v678, %v726
        %v743 = vsub.f32 %v679, %v727
        %v744 = vsub.f32 %v680, %v728
        %v745 = vsub.f32 %v681, %v729
        %v746 = vsub.f32 %v682, %v730
        %v747 = vsub.f32 %v683, %v731
        %v748 = vsub.f32 %v684, %v732
        %v749 = vsub.f32 %v685, %v733
        %v750 = vsub.f32 %v686, %v734
        %v751 = vsub.f32 %v687, %v735
        %v752 = vsub.f32 %v688, %v736
        %v753 = vmul.f32 %v737, 1.442695
        %v754 = vpow.pop %v753
        %v755 = vmul.f32 %v738, 1.442695
        %v756 = vpow.pop %v755
        %v757 = vmul.f32 %v739, 1.442695
        %v758 = vpow.pop %v757
        %v759 = vmul.f32 %v740, 1.442695
        %v760 = vpow.pop %v759
        %v761 = vmul.f32 %v741, 1.442695
        %v762 = vpow.pop %v761
        %v763 = vmul.f32 %v742, 1.442695
        %v764 = vpow.pop %v763
        %v765 = vmul.f32 %v743, 1.442695
        %v766 = vpow.pop %v765
        %v767 = vmul.f32 %v744, 1.442695
        %v768 = vpow.pop %v767
        %v769 = vmul.f32 %v745, 1.442695
        %v770 = vpow.pop %v769
        %v771 = vmul.f32 %v746, 1.442695
        %v772 = vpow.pop %v771
        %v773 = vmul.f32 %v747, 1.442695
        %v774 = vpow.pop %v773
        %v775 = vmul.f32 %v748, 1.442695
        %v776 = vpow.pop %v775
        %v777 = vmul.f32 %v749, 1.442695
        %v778 = vpow.pop %v777
        %v779 = vmul.f32 %v750, 1.442695
        %v780 = vpow.pop %v779
        %v781 = vmul.f32 %v751, 1.442695
        %v782 = vpow.pop %v781
        %v783 = vmul.f32 %v752, 1.442695
        %v784 = vpow.pop %v783
        %786 = vset.pattern.permute.xlu0 0
        %787 = vperm.xlu0 %786, %v721
        %v788 = vpop.permute.xlu0 %787
        %791 = vset.pattern.permute.xlu0 0
        %792 = vperm.xlu0 %791, %v722
        %v793 = vpop.permute.xlu0 %792
        %796 = vset.pattern.permute.xlu0 0
        %797 = vperm.xlu0 %796, %v723
        %v798 = vpop.permute.xlu0 %797
        %801 = vset.pattern.permute.xlu0 0
        %802 = vperm.xlu0 %801, %v724
        %v803 = vpop.permute.xlu0 %802
        %806 = vset.pattern.permute.xlu0 0
        %807 = vperm.xlu0 %806, %v725
        %v808 = vpop.permute.xlu0 %807
        %811 = vset.pattern.permute.xlu0 0
        %812 = vperm.xlu0 %811, %v726
        %v813 = vpop.permute.xlu0 %812
        %816 = vset.pattern.permute.xlu0 0
        %817 = vperm.xlu0 %816, %v727
        %v818 = vpop.permute.xlu0 %817
        %821 = vset.pattern.permute.xlu0 0
        %822 = vperm.xlu0 %821, %v728
        %v823 = vpop.permute.xlu0 %822
        %826 = vset.pattern.permute.xlu0 0
        %827 = vperm.xlu0 %826, %v729
        %v828 = vpop.permute.xlu0 %827
        %831 = vset.pattern.permute.xlu0 0
        %832 = vperm.xlu0 %831, %v730
        %v833 = vpop.permute.xlu0 %832
        %836 = vset.pattern.permute.xlu0 0
        %837 = vperm.xlu0 %836, %v731
        %v838 = vpop.permute.xlu0 %837
        %841 = vset.pattern.permute.xlu0 0
        %842 = vperm.xlu0 %841, %v732
        %v843 = vpop.permute.xlu0 %842
        %846 = vset.pattern.permute.xlu0 0
        %847 = vperm.xlu0 %846, %v733
        %v848 = vpop.permute.xlu0 %847
        %851 = vset.pattern.permute.xlu0 0
        %852 = vperm.xlu0 %851, %v734
        %v853 = vpop.permute.xlu0 %852
        %856 = vset.pattern.permute.xlu0 0
        %857 = vperm.xlu0 %856, %v735
        %v858 = vpop.permute.xlu0 %857
        %861 = vset.pattern.permute.xlu0 0
        %862 = vperm.xlu0 %861, %v736
        %v863 = vpop.permute.xlu0 %862
        %v865 = vsub.f32 %v657, %v788
        %v866 = vsub.f32 %v658, %v793
        %v867 = vsub.f32 %v659, %v798
        %v868 = vsub.f32 %v660, %v803
        %v869 = vsub.f32 %v661, %v808
        %v870 = vsub.f32 %v662, %v813
        %v871 = vsub.f32 %v663, %v818
        %v872 = vsub.f32 %v664, %v823
        %v873 = vsub.f32 %v665, %v828
        %v874 = vsub.f32 %v666, %v833
        %v875 = vsub.f32 %v667, %v838
        %v876 = vsub.f32 %v668, %v843
        %v877 = vsub.f32 %v669, %v848
        %v878 = vsub.f32 %v670, %v853
        %v879 = vsub.f32 %v671, %v858
        %v880 = vsub.f32 %v672, %v863
        %v881 = vmul.f32 %v865, 1.442695
        %v882 = vpow.pop %v881
        %v883 = vmul.f32 %v866, 1.442695
        %v884 = vpow.pop %v883
        %v885 = vmul.f32 %v867, 1.442695
        %v886 = vpow.pop %v885
        %v887 = vmul.f32 %v868, 1.442695
        %v888 = vpow.pop %v887
        %v889 = vmul.f32 %v869, 1.442695
        %v890 = vpow.pop %v889
        %v891 = vmul.f32 %v870, 1.442695
        %v892 = vpow.pop %v891
        %v893 = vmul.f32 %v871, 1.442695
        %v894 = vpow.pop %v893
        %v895 = vmul.f32 %v872, 1.442695
        %v896 = vpow.pop %v895
        %v897 = vmul.f32 %v873, 1.442695
        %v898 = vpow.pop %v897
        %v899 = vmul.f32 %v874, 1.442695
        %v900 = vpow.pop %v899
        %v901 = vmul.f32 %v875, 1.442695
        %v902 = vpow.pop %v901
        %v903 = vmul.f32 %v876, 1.442695
        %v904 = vpow.pop %v903
        %v905 = vmul.f32 %v877, 1.442695
        %v906 = vpow.pop %v905
        %v907 = vmul.f32 %v878, 1.442695
        %v908 = vpow.pop %v907
        %v909 = vmul.f32 %v879, 1.442695
        %v910 = vpow.pop %v909
        %v911 = vmul.f32 %v880, 1.442695
        %v912 = vpow.pop %v911
        %v913 = vld [vmem:[#allocation3] sm:$0xff]
        %v914 = vld [vmem:[#allocation3 + $0x8] sm:$0xff]
        %v915 = vld [vmem:[#allocation3 + $0x10] sm:$0xff]
        %v916 = vld [vmem:[#allocation3 + $0x18] sm:$0xff]
        %v917 = vld [vmem:[#allocation3 + $0x20] sm:$0xff]
        %v918 = vld [vmem:[#allocation3 + $0x28] sm:$0xff]
        %v919 = vld [vmem:[#allocation3 + $0x30] sm:$0xff]
        %v920 = vld [vmem:[#allocation3 + $0x38] sm:$0xff]
        %v921 = vld [vmem:[#allocation3 + $0x40] sm:$0xff]
        %v922 = vld [vmem:[#allocation3 + $0x48] sm:$0xff]
        %v923 = vld [vmem:[#allocation3 + $0x50] sm:$0xff]
        %v924 = vld [vmem:[#allocation3 + $0x58] sm:$0xff]
        %v925 = vld [vmem:[#allocation3 + $0x60] sm:$0xff]
        %v926 = vld [vmem:[#allocation3 + $0x68] sm:$0xff]
        %v927 = vld [vmem:[#allocation3 + $0x70] sm:$0xff]
        %v928 = vld [vmem:[#allocation3 + $0x78] sm:$0xff]
        %v929 = vmul.f32 %v754, %v913
        %v930 = vmul.f32 %v756, %v914
        %v931 = vmul.f32 %v758, %v915
        %v932 = vmul.f32 %v760, %v916
        %v933 = vmul.f32 %v762, %v917
        %v934 = vmul.f32 %v764, %v918
        %v935 = vmul.f32 %v766, %v919
        %v936 = vmul.f32 %v768, %v920
        %v937 = vmul.f32 %v770, %v921
        %v938 = vmul.f32 %v772, %v922
        %v939 = vmul.f32 %v774, %v923
        %v940 = vmul.f32 %v776, %v924
        %v941 = vmul.f32 %v778, %v925
        %v942 = vmul.f32 %v780, %v926
        %v943 = vmul.f32 %v782, %v927
        %v944 = vmul.f32 %v784, %v928
        %945 = vadd.xlane.f32.xlu0 %v882
        %v946 = vpop.xlane.xlu0 %945
        %947 = vadd.xlane.f32.xlu0 %v884
        %v948 = vpop.xlane.xlu0 %947
        %949 = vadd.xlane.f32.xlu0 %v886
        %v950 = vpop.xlane.xlu0 %949
        %951 = vadd.xlane.f32.xlu0 %v888
        %v952 = vpop.xlane.xlu0 %951
        %953 = vadd.xlane.f32.xlu0 %v890
        %v954 = vpop.xlane.xlu0 %953
        %955 = vadd.xlane.f32.xlu0 %v892
        %v956 = vpop.xlane.xlu0 %955
        %957 = vadd.xlane.f32.xlu0 %v894
        %v958 = vpop.xlane.xlu0 %957
        %959 = vadd.xlane.f32.xlu0 %v896
        %v960 = vpop.xlane.xlu0 %959
        %961 = vadd.xlane.f32.xlu0 %v898
        %v962 = vpop.xlane.xlu0 %961
        %963 = vadd.xlane.f32.xlu0 %v900
        %v964 = vpop.xlane.xlu0 %963
        %965 = vadd.xlane.f32.xlu0 %v902
        %v966 = vpop.xlane.xlu0 %965
        %967 = vadd.xlane.f32.xlu0 %v904
        %v968 = vpop.xlane.xlu0 %967
        %969 = vadd.xlane.f32.xlu0 %v906
        %v970 = vpop.xlane.xlu0 %969
        %971 = vadd.xlane.f32.xlu0 %v908
        %v972 = vpop.xlane.xlu0 %971
        %973 = vadd.xlane.f32.xlu0 %v910
        %v974 = vpop.xlane.xlu0 %973
        %975 = vadd.xlane.f32.xlu0 %v912
        %v976 = vpop.xlane.xlu0 %975
        %v977 = vadd.f32 %v929, %v946
        %v978 = vadd.f32 %v930, %v948
        %v979 = vadd.f32 %v931, %v950
        %v980 = vadd.f32 %v932, %v952
        %v981 = vadd.f32 %v933, %v954
        %v982 = vadd.f32 %v934, %v956
        %v983 = vadd.f32 %v935, %v958
        %v984 = vadd.f32 %v936, %v960
        %v985 = vadd.f32 %v937, %v962
        %v986 = vadd.f32 %v938, %v964
        %v987 = vadd.f32 %v939, %v966
        %v988 = vadd.f32 %v940, %v968
        %v989 = vadd.f32 %v941, %v970
        %v990 = vadd.f32 %v942, %v972
        %v991 = vadd.f32 %v943, %v974
        %v992 = vadd.f32 %v944, %v976
        %vm993 = vcmask 7168
        %994 = vst.msk [vmem:[#allocation3] sm:$0xff] %vm993, %v977
        %995 = vst.msk [vmem:[#allocation3 + $0x8] sm:$0xff] %vm993, %v978
        %996 = vst.msk [vmem:[#allocation3 + $0x10] sm:$0xff] %vm993, %v979
        %997 = vst.msk [vmem:[#allocation3 + $0x18] sm:$0xff] %vm993, %v980
        %998 = vst.msk [vmem:[#allocation3 + $0x20] sm:$0xff] %vm993, %v981
        %999 = vst.msk [vmem:[#allocation3 + $0x28] sm:$0xff] %vm993, %v982
        %1000 = vst.msk [vmem:[#allocation3 + $0x30] sm:$0xff] %vm993, %v983
        %1001 = vst.msk [vmem:[#allocation3 + $0x38] sm:$0xff] %vm993, %v984
        %1002 = vst.msk [vmem:[#allocation3 + $0x40] sm:$0xff] %vm993, %v985
        %1003 = vst.msk [vmem:[#allocation3 + $0x48] sm:$0xff] %vm993, %v986
        %1004 = vst.msk [vmem:[#allocation3 + $0x50] sm:$0xff] %vm993, %v987
        %1005 = vst.msk [vmem:[#allocation3 + $0x58] sm:$0xff] %vm993, %v988
        %1006 = vst.msk [vmem:[#allocation3 + $0x60] sm:$0xff] %vm993, %v989
        %1007 = vst.msk [vmem:[#allocation3 + $0x68] sm:$0xff] %vm993, %v990
        %1008 = vst.msk [vmem:[#allocation3 + $0x70] sm:$0xff] %vm993, %v991
        %1009 = vst.msk [vmem:[#allocation3 + $0x78] sm:$0xff] %vm993, %v992
        %v1010 = vpack.c.bf16 %v884, %v882
        %v1011 = vpack.c.bf16 %v888, %v886
        %v1012 = vpack.c.bf16 %v892, %v890
        %v1013 = vpack.c.bf16 %v896, %v894
        %v1014 = vpack.c.bf16 %v900, %v898
        %v1015 = vpack.c.bf16 %v904, %v902
        %v1016 = vpack.c.bf16 %v908, %v906
        %v1017 = vpack.c.bf16 %v912, %v910
        %v1018 = vld [vmem:[%s387] sm:$0xf]
        %v1019 = vld [vmem:[%s387 + $0x4] sm:$0xf]
        %v1020 = vld [vmem:[%s387 + $0x8] sm:$0xf]
        %v1021 = vld [vmem:[%s387 + $0xc] sm:$0xf]
        %v1022 = vld [vmem:[%s387 + $0x10] sm:$0xf]
        %v1023 = vld [vmem:[%s387 + $0x14] sm:$0xf]
        %v1024 = vld [vmem:[%s387 + $0x18] sm:$0xf]
        %v1025 = vld [vmem:[%s387 + $0x1c] sm:$0xf]
        %v1026 = vld [vmem:[%s387 + $0x20] sm:$0xf]
        %v1027 = vld [vmem:[%s387 + $0x24] sm:$0xf]
        %v1028 = vld [vmem:[%s387 + $0x28] sm:$0xf]
        %v1029 = vld [vmem:[%s387 + $0x2c] sm:$0xf]
        %v1030 = vld [vmem:[%s387 + $0x30] sm:$0xf]
        %v1031 = vld [vmem:[%s387 + $0x34] sm:$0xf]
        %v1032 = vld [vmem:[%s387 + $0x38] sm:$0xf]
        %v1033 = vld [vmem:[%s387 + $0x3c] sm:$0xf]
        %v1050 = vunpack.c.l.b16 %v1018
        %v1051 = vunpack.c.l.b16 %v1019
        %v1052 = vunpack.c.l.b16 %v1020
        %v1053 = vunpack.c.l.b16 %v1021
        %v1054 = vunpack.c.l.b16 %v1022
        %v1055 = vunpack.c.l.b16 %v1023
        %v1056 = vunpack.c.l.b16 %v1024
        %v1057 = vunpack.c.l.b16 %v1025
        %v1058 = vunpack.c.l.b16 %v1026
        %v1059 = vunpack.c.l.b16 %v1027
        %v1060 = vunpack.c.l.b16 %v1028
        %v1061 = vunpack.c.l.b16 %v1029
        %v1062 = vunpack.c.l.b16 %v1030
        %v1063 = vunpack.c.l.b16 %v1031
        %v1064 = vunpack.c.l.b16 %v1032
        %v1065 = vunpack.c.l.b16 %v1033
        %v1066 = vpack.c.b16 %v1051, %v1050
        %v1067 = vpack.c.b16 %v1053, %v1052
        %v1068 = vpack.c.b16 %v1055, %v1054
        %v1069 = vpack.c.b16 %v1057, %v1056
        %v1070 = vpack.c.b16 %v1059, %v1058
        %v1071 = vpack.c.b16 %v1061, %v1060
        %v1072 = vpack.c.b16 %v1063, %v1062
        %v1073 = vpack.c.b16 %v1065, %v1064
        %1082 = vmatprep.subr.bf16.mxu0 0
        %1083 = vmatpush1.bf16.msra.mxu0 %v1066
        %1084 = vmatprep.subr.bf16.mxu0 0
        %1085 = vmatpush1.bf16.msra.mxu0 %v1067
        %1086 = vmatprep.subr.bf16.mxu0 0
        %1087 = vmatpush1.bf16.msra.mxu0 %v1068
        %1088 = vmatprep.subr.bf16.mxu0 0
        %1089 = vmatpush1.bf16.msra.mxu0 %v1069
        %1090 = vmatprep.subr.bf16.mxu0 0
        %1091 = vmatpush1.bf16.msra.mxu0 %v1070
        %1092 = vmatprep.subr.bf16.mxu0 0
        %1093 = vmatpush1.bf16.msra.mxu0 %v1071
        %1094 = vmatprep.subr.bf16.mxu0 0
        %1095 = vmatpush1.bf16.msra.mxu0 %v1072
        %1096 = vmatprep.subr.bf16.mxu0 0
        %1097 = vmatpush1.bf16.msra.mxu0 %v1073
        %1098 = vmatprep.subr.bf16.mxu0 0
        %1099 = vmatpush1.bf16.msra.mxu0 0
        %1100 = vmatprep.subr.bf16.mxu0 0
        %1101 = vmatpush1.bf16.msra.mxu0 0
        %1102 = vmatprep.subr.bf16.mxu0 0
        %1103 = vmatpush1.bf16.msra.mxu0 0
        %1104 = vmatprep.subr.bf16.mxu0 0
        %1105 = vmatpush1.bf16.msra.mxu0 0
        %1106 = vmatprep.subr.bf16.mxu0 0
        %1107 = vmatpush1.bf16.msra.mxu0 0
        %1108 = vmatprep.subr.bf16.mxu0 0
        %1109 = vmatpush1.bf16.msra.mxu0 0
        %1110 = vmatprep.subr.bf16.mxu0 0
        %1111 = vmatpush1.bf16.msra.mxu0 0
        %1112 = vmatprep.subr.bf16.mxu0 0
        %1113 = vmatpush1.bf16.msra.mxu0 0
        %1114 = vmatprep.mubr.bf16.mxu0 0
        %1115 = vmatmul.mubr.bf16.gmra.mrb[0].mxu0 %v1010
        %v1116 = vpop.f32.mrb[0].mxu0
        %v1117 = vadd.f32 0.0, %v1116
        %v1118 = vpop.f32.mrb[0].mxu0
        %v1119 = vpop.f32.mrb[0].mxu0
        %v1120 = vadd.f32 0.0, %v1119
        %v1121 = vpop.f32.mrb[0].mxu0
        %1122 = vmatprep.mubr.bf16.mxu0 0
        %1123 = vmatmul.mubr.bf16.gmra.mrb[0].mxu0 %v1011
        %v1124 = vpop.f32.mrb[0].mxu0
        %v1125 = vadd.f32 0.0, %v1124
        %v1126 = vpop.f32.mrb[0].mxu0
        %v1127 = vpop.f32.mrb[0].mxu0
        %v1128 = vadd.f32 0.0, %v1127
        %v1129 = vpop.f32.mrb[0].mxu0
        %1130 = vmatprep.mubr.bf16.mxu0 0
        %1131 = vmatmul.mubr.bf16.gmra.mrb[0].mxu0 %v1012
        %v1132 = vpop.f32.mrb[0].mxu0
        %v1133 = vadd.f32 0.0, %v1132
        %v1134 = vpop.f32.mrb[0].mxu0
        %v1135 = vpop.f32.mrb[0].mxu0
        %v1136 = vadd.f32 0.0, %v1135
        %v1137 = vpop.f32.mrb[0].mxu0
        %1138 = vmatprep.mubr.bf16.mxu0 0
        %1139 = vmatmul.mubr.bf16.gmra.mrb[0].mxu0 %v1013
        %v1140 = vpop.f32.mrb[0].mxu0
        %v1141 = vadd.f32 0.0, %v1140
        %v1142 = vpop.f32.mrb[0].mxu0
        %v1143 = vpop.f32.mrb[0].mxu0
        %v1144 = vadd.f32 0.0, %v1143
        %v1145 = vpop.f32.mrb[0].mxu0
        %1146 = vmatprep.mubr.bf16.mxu0 0
        %1147 = vmatmul.mubr.bf16.gmra.mrb[0].mxu0 %v1014
        %v1148 = vpop.f32.mrb[0].mxu0
        %v1149 = vadd.f32 0.0, %v1148
        %v1150 = vpop.f32.mrb[0].mxu0
        %v1151 = vpop.f32.mrb[0].mxu0
        %v1152 = vadd.f32 0.0, %v1151
        %v1153 = vpop.f32.mrb[0].mxu0
        %1154 = vmatprep.mubr.bf16.mxu0 0
        %1155 = vmatmul.mubr.bf16.gmra.mrb[0].mxu0 %v1015
        %v1156 = vpop.f32.mrb[0].mxu0
        %v1157 = vadd.f32 0.0, %v1156
        %v1158 = vpop.f32.mrb[0].mxu0
        %v1159 = vpop.f32.mrb[0].mxu0
        %v1160 = vadd.f32 0.0, %v1159
        %v1161 = vpop.f32.mrb[0].mxu0
        %1162 = vmatprep.mubr.bf16.mxu0 0
        %1163 = vmatmul.mubr.bf16.gmra.mrb[0].mxu0 %v1016
        %v1164 = vpop.f32.mrb[0].mxu0
        %v1165 = vadd.f32 0.0, %v1164
        %v1166 = vpop.f32.mrb[0].mxu0
        %v1167 = vpop.f32.mrb[0].mxu0
        %v1168 = vadd.f32 0.0, %v1167
        %v1169 = vpop.f32.mrb[0].mxu0
        %1170 = vmatprep.mubr.bf16.mxu0 0
        %1171 = vmatmul.mubr.bf16.gmra.mrb[0].mxu0 %v1017
        %v1172 = vpop.f32.mrb[0].mxu0
        %v1173 = vadd.f32 0.0, %v1172
        %v1174 = vpop.f32.mrb[0].mxu0
        %v1175 = vpop.f32.mrb[0].mxu0
        %v1176 = vadd.f32 0.0, %v1175
        %v1177 = vpop.f32.mrb[0].mxu0
        %1178 = vdwg.mxu0
        %v1179 = vld [vmem:[#allocation4] sm:$0xff]
        %v1180 = vld [vmem:[#allocation4 + $0x8] sm:$0xff]
        %v1181 = vld [vmem:[#allocation4 + $0x10] sm:$0xff]
        %v1182 = vld [vmem:[#allocation4 + $0x18] sm:$0xff]
        %v1183 = vld [vmem:[#allocation4 + $0x20] sm:$0xff]
        %v1184 = vld [vmem:[#allocation4 + $0x28] sm:$0xff]
        %v1185 = vld [vmem:[#allocation4 + $0x30] sm:$0xff]
        %v1186 = vld [vmem:[#allocation4 + $0x38] sm:$0xff]
        %v1187 = vld [vmem:[#allocation4 + $0x40] sm:$0xff]
        %v1188 = vld [vmem:[#allocation4 + $0x48] sm:$0xff]
        %v1189 = vld [vmem:[#allocation4 + $0x50] sm:$0xff]
        %v1190 = vld [vmem:[#allocation4 + $0x58] sm:$0xff]
        %v1191 = vld [vmem:[#allocation4 + $0x60] sm:$0xff]
        %v1192 = vld [vmem:[#allocation4 + $0x68] sm:$0xff]
        %v1193 = vld [vmem:[#allocation4 + $0x70] sm:$0xff]
        %v1194 = vld [vmem:[#allocation4 + $0x78] sm:$0xff]
        %1196 = vset.pattern.permute.xlu0 0
        %1197 = vperm.xlu0 %1196, %v754
        %v1198 = vpop.permute.xlu0 %1197
        %1201 = vset.pattern.permute.xlu0 0
        %1202 = vperm.xlu0 %1201, %v756
        %v1203 = vpop.permute.xlu0 %1202
        %1206 = vset.pattern.permute.xlu0 0
        %1207 = vperm.xlu0 %1206, %v758
        %v1208 = vpop.permute.xlu0 %1207
        %1211 = vset.pattern.permute.xlu0 0
        %1212 = vperm.xlu0 %1211, %v760
        %v1213 = vpop.permute.xlu0 %1212
        %1216 = vset.pattern.permute.xlu0 0
        %1217 = vperm.xlu0 %1216, %v762
        %v1218 = vpop.permute.xlu0 %1217
        %1221 = vset.pattern.permute.xlu0 0
        %1222 = vperm.xlu0 %1221, %v764
        %v1223 = vpop.permute.xlu0 %1222
        %1226 = vset.pattern.permute.xlu0 0
        %1227 = vperm.xlu0 %1226, %v766
        %v1228 = vpop.permute.xlu0 %1227
        %1231 = vset.pattern.permute.xlu0 0
        %1232 = vperm.xlu0 %1231, %v768
        %v1233 = vpop.permute.xlu0 %1232
        %1236 = vset.pattern.permute.xlu0 0
        %1237 = vperm.xlu0 %1236, %v770
        %v1238 = vpop.permute.xlu0 %1237
        %1241 = vset.pattern.permute.xlu0 0
        %1242 = vperm.xlu0 %1241, %v772
        %v1243 = vpop.permute.xlu0 %1242
        %1246 = vset.pattern.permute.xlu0 0
        %1247 = vperm.xlu0 %1246, %v774
        %v1248 = vpop.permute.xlu0 %1247
        %1251 = vset.pattern.permute.xlu0 0
        %1252 = vperm.xlu0 %1251, %v776
        %v1253 = vpop.permute.xlu0 %1252
        %1256 = vset.pattern.permute.xlu0 0
        %1257 = vperm.xlu0 %1256, %v778
        %v1258 = vpop.permute.xlu0 %1257
        %1261 = vset.pattern.permute.xlu0 0
        %1262 = vperm.xlu0 %1261, %v780
        %v1263 = vpop.permute.xlu0 %1262
        %1266 = vset.pattern.permute.xlu0 0
        %1267 = vperm.xlu0 %1266, %v782
        %v1268 = vpop.permute.xlu0 %1267
        %1271 = vset.pattern.permute.xlu0 0
        %1272 = vperm.xlu0 %1271, %v784
        %v1273 = vpop.permute.xlu0 %1272
        %v1275 = vmul.f32 %v1198, %v1179
        %v1276 = vmul.f32 %v1203, %v1180
        %v1277 = vmul.f32 %v1208, %v1181
        %v1278 = vmul.f32 %v1213, %v1182
        %v1279 = vmul.f32 %v1218, %v1183
        %v1280 = vmul.f32 %v1223, %v1184
        %v1281 = vmul.f32 %v1228, %v1185
        %v1282 = vmul.f32 %v1233, %v1186
        %v1283 = vmul.f32 %v1238, %v1187
        %v1284 = vmul.f32 %v1243, %v1188
        %v1285 = vmul.f32 %v1248, %v1189
        %v1286 = vmul.f32 %v1253, %v1190
        %v1287 = vmul.f32 %v1258, %v1191
        %v1288 = vmul.f32 %v1263, %v1192
        %v1289 = vmul.f32 %v1268, %v1193
        %v1290 = vmul.f32 %v1273, %v1194
        %v1291 = vadd.f32 %v1275, %v1117
        %v1292 = vadd.f32 %v1276, %v1120
        %v1293 = vadd.f32 %v1277, %v1125
        %v1294 = vadd.f32 %v1278, %v1128
        %v1295 = vadd.f32 %v1279, %v1133
        %v1296 = vadd.f32 %v1280, %v1136
        %v1297 = vadd.f32 %v1281, %v1141
        %v1298 = vadd.f32 %v1282, %v1144
        %v1299 = vadd.f32 %v1283, %v1149
        %v1300 = vadd.f32 %v1284, %v1152
        %v1301 = vadd.f32 %v1285, %v1157
        %v1302 = vadd.f32 %v1286, %v1160
        %v1303 = vadd.f32 %v1287, %v1165
        %v1304 = vadd.f32 %v1288, %v1168
        %v1305 = vadd.f32 %v1289, %v1173
        %v1306 = vadd.f32 %v1290, %v1176
        %vm1307 = vcmask 130048
        %1308 = vst.msk [vmem:[#allocation4] sm:$0xff] %vm1307, %v1291
        %1309 = vst.msk [vmem:[#allocation4 + $0x8] sm:$0xff] %vm1307, %v1292
        %1310 = vst.msk [vmem:[#allocation4 + $0x10] sm:$0xff] %vm1307, %v1293
        %1311 = vst.msk [vmem:[#allocation4 + $0x18] sm:$0xff] %vm1307, %v1294
        %1312 = vst.msk [vmem:[#allocation4 + $0x20] sm:$0xff] %vm1307, %v1295
        %1313 = vst.msk [vmem:[#allocation4 + $0x28] sm:$0xff] %vm1307, %v1296
        %1314 = vst.msk [vmem:[#allocation4 + $0x30] sm:$0xff] %vm1307, %v1297
        %1315 = vst.msk [vmem:[#allocation4 + $0x38] sm:$0xff] %vm1307, %v1298
        %1316 = vst.msk [vmem:[#allocation4 + $0x40] sm:$0xff] %vm1307, %v1299
        %1317 = vst.msk [vmem:[#allocation4 + $0x48] sm:$0xff] %vm1307, %v1300
        %1318 = vst.msk [vmem:[#allocation4 + $0x50] sm:$0xff] %vm1307, %v1301
        %1319 = vst.msk [vmem:[#allocation4 + $0x58] sm:$0xff] %vm1307, %v1302
        %1320 = vst.msk [vmem:[#allocation4 + $0x60] sm:$0xff] %vm1307, %v1303
        %1321 = vst.msk [vmem:[#allocation4 + $0x68] sm:$0xff] %vm1307, %v1304
        %1322 = vst.msk [vmem:[#allocation4 + $0x70] sm:$0xff] %vm1307, %v1305
        %1323 = vst.msk [vmem:[#allocation4 + $0x78] sm:$0xff] %vm1307, %v1306
        %1324 = vst.msk [vmem:[#allocation2] sm:$0xff] %vm993, %v721
        %1325 = vst.msk [vmem:[#allocation2 + $0x8] sm:$0xff] %vm993, %v722
        %1326 = vst.msk [vmem:[#allocation2 + $0x10] sm:$0xff] %vm993, %v723
        %1327 = vst.msk [vmem:[#allocation2 + $0x18] sm:$0xff] %vm993, %v724
        %1328 = vst.msk [vmem:[#allocation2 + $0x20] sm:$0xff] %vm993, %v725
        %1329 = vst.msk [vmem:[#allocation2 + $0x28] sm:$0xff] %vm993, %v726
        %1330 = vst.msk [vmem:[#allocation2 + $0x30] sm:$0xff] %vm993, %v727
        %1331 = vst.msk [vmem:[#allocation2 + $0x38] sm:$0xff] %vm993, %v728
        %1332 = vst.msk [vmem:[#allocation2 + $0x40] sm:$0xff] %vm993, %v729
        %1333 = vst.msk [vmem:[#allocation2 + $0x48] sm:$0xff] %vm993, %v730
        %1334 = vst.msk [vmem:[#allocation2 + $0x50] sm:$0xff] %vm993, %v731
        %1335 = vst.msk [vmem:[#allocation2 + $0x58] sm:$0xff] %vm993, %v732
        %1336 = vst.msk [vmem:[#allocation2 + $0x60] sm:$0xff] %vm993, %v733
        %1337 = vst.msk [vmem:[#allocation2 + $0x68] sm:$0xff] %vm993, %v734
        %1338 = vst.msk [vmem:[#allocation2 + $0x70] sm:$0xff] %vm993, %v735
        %1339 = vst.msk [vmem:[#allocation2 + $0x78] sm:$0xff] %vm993, %v736
        %v1340 = vld [vmem:[%s393] sm:$0xff]
        %v1341 = vld [vmem:[%s393 + $0x8] sm:$0xff]
        %v1342 = vld [vmem:[%s393 + $0x10] sm:$0xff]
        %v1343 = vld [vmem:[%s393 + $0x18] sm:$0xff]
        %v1344 = vld [vmem:[%s393 + $0x20] sm:$0xff]
        %v1345 = vld [vmem:[%s393 + $0x28] sm:$0xff]
        %v1346 = vld [vmem:[%s393 + $0x30] sm:$0xff]
        %v1347 = vld [vmem:[%s393 + $0x38] sm:$0xff]
        %v1348 = vld [vmem:[%s393 + $0x40] sm:$0xff]
        %v1349 = vld [vmem:[%s393 + $0x48] sm:$0xff]
        %v1350 = vld [vmem:[%s393 + $0x50] sm:$0xff]
        %v1351 = vld [vmem:[%s393 + $0x58] sm:$0xff]
        %v1352 = vld [vmem:[%s393 + $0x60] sm:$0xff]
        %v1353 = vld [vmem:[%s393 + $0x68] sm:$0xff]
        %v1354 = vld [vmem:[%s393 + $0x70] sm:$0xff]
        %v1355 = vld [vmem:[%s393 + $0x78] sm:$0xff]
        %v1356 = vld [vmem:[%s398 + $0x1] sm:$0x1]
        %1358 = vset.pattern.permute.xlu0 1
        %1359 = vperm.xlu0 %1358, %v1340
        %v1360 = vpop.permute.xlu0 %1359
        %1363 = vset.pattern.permute.xlu0 1
        %1364 = vperm.xlu0 %1363, %v1341
        %v1365 = vpop.permute.xlu0 %1364
        %1368 = vset.pattern.permute.xlu0 1
        %1369 = vperm.xlu0 %1368, %v1342
        %v1370 = vpop.permute.xlu0 %1369
        %1373 = vset.pattern.permute.xlu0 1
        %1374 = vperm.xlu0 %1373, %v1343
        %v1375 = vpop.permute.xlu0 %1374
        %1378 = vset.pattern.permute.xlu0 1
        %1379 = vperm.xlu0 %1378, %v1344
        %v1380 = vpop.permute.xlu0 %1379
        %1383 = vset.pattern.permute.xlu0 1
        %1384 = vperm.xlu0 %1383, %v1345
        %v1385 = vpop.permute.xlu0 %1384
        %1388 = vset.pattern.permute.xlu0 1
        %1389 = vperm.xlu0 %1388, %v1346
        %v1390 = vpop.permute.xlu0 %1389
        %1393 = vset.pattern.permute.xlu0 1
        %1394 = vperm.xlu0 %1393, %v1347
        %v1395 = vpop.permute.xlu0 %1394
        %1398 = vset.pattern.permute.xlu0 1
        %1399 = vperm.xlu0 %1398, %v1348
        %v1400 = vpop.permute.xlu0 %1399
        %1403 = vset.pattern.permute.xlu0 1
        %1404 = vperm.xlu0 %1403, %v1349
        %v1405 = vpop.permute.xlu0 %1404
        %1408 = vset.pattern.permute.xlu0 1
        %1409 = vperm.xlu0 %1408, %v1350
        %v1410 = vpop.permute.xlu0 %1409
        %1413 = vset.pattern.permute.xlu0 1
        %1414 = vperm.xlu0 %1413, %v1351
        %v1415 = vpop.permute.xlu0 %1414
        %1418 = vset.pattern.permute.xlu0 1
        %1419 = vperm.xlu0 %1418, %v1352
        %v1420 = vpop.permute.xlu0 %1419
        %1423 = vset.pattern.permute.xlu0 1
        %1424 = vperm.xlu0 %1423, %v1353
        %v1425 = vpop.permute.xlu0 %1424
        %1428 = vset.pattern.permute.xlu0 1
        %1429 = vperm.xlu0 %1428, %v1354
        %v1430 = vpop.permute.xlu0 %1429
        %1433 = vset.pattern.permute.xlu0 1
        %1434 = vperm.xlu0 %1433, %v1355
        %v1435 = vpop.permute.xlu0 %1434
        %v1437 = vlaneseq
        %v1438 = vshrl.u32 %v1437, 7
        %v1439 = vsub.s32 0, %v1438
        %v1440 = vrot.slane %v1356, %v1439
        %v1441 = vadd.f32 %v1360, %v1440
        %v1442 = vadd.f32 %v1365, %v1440
        %v1443 = vadd.f32 %v1370, %v1440
        %v1444 = vadd.f32 %v1375, %v1440
        %v1445 = vadd.f32 %v1380, %v1440
        %v1446 = vadd.f32 %v1385, %v1440
        %v1447 = vadd.f32 %v1390, %v1440
        %v1448 = vadd.f32 %v1395, %v1440
        %v1449 = vadd.f32 %v1400, %v1440
        %v1450 = vadd.f32 %v1405, %v1440
        %v1451 = vadd.f32 %v1410, %v1440
        %v1452 = vadd.f32 %v1415, %v1440
        %v1453 = vadd.f32 %v1420, %v1440
        %v1454 = vadd.f32 %v1425, %v1440
        %v1455 = vadd.f32 %v1430, %v1440
        %v1456 = vadd.f32 %v1435, %v1440
        %vm1457 = vcmp.gt.f32.partialorder %v1441, 0.0
        %vm1458 = vcmp.gt.f32.partialorder %v1442, 0.0
        %vm1459 = vcmp.gt.f32.partialorder %v1443, 0.0
        %vm1460 = vcmp.gt.f32.partialorder %v1444, 0.0
        %vm1461 = vcmp.gt.f32.partialorder %v1445, 0.0
        %vm1462 = vcmp.gt.f32.partialorder %v1446, 0.0
        %vm1463 = vcmp.gt.f32.partialorder %v1447, 0.0
        %vm1464 = vcmp.gt.f32.partialorder %v1448, 0.0
        %vm1465 = vcmp.gt.f32.partialorder %v1449, 0.0
        %vm1466 = vcmp.gt.f32.partialorder %v1450, 0.0
        %vm1467 = vcmp.gt.f32.partialorder %v1451, 0.0
        %vm1468 = vcmp.gt.f32.partialorder %v1452, 0.0
        %vm1469 = vcmp.gt.f32.partialorder %v1453, 0.0
        %vm1470 = vcmp.gt.f32.partialorder %v1454, 0.0
        %vm1471 = vcmp.gt.f32.partialorder %v1455, 0.0
        %vm1472 = vcmp.gt.f32.partialorder %v1456, 0.0
        %v1473 = vmul.f32 %v1441, 0.2
        %v1474 = vmul.f32 %v1442, 0.2
        %v1475 = vmul.f32 %v1443, 0.2
        %v1476 = vmul.f32 %v1444, 0.2
        %v1477 = vmul.f32 %v1445, 0.2
        %v1478 = vmul.f32 %v1446, 0.2
        %v1479 = vmul.f32 %v1447, 0.2
        %v1480 = vmul.f32 %v1448, 0.2
        %v1481 = vmul.f32 %v1449, 0.2
        %v1482 = vmul.f32 %v1450, 0.2
        %v1483 = vmul.f32 %v1451, 0.2
        %v1484 = vmul.f32 %v1452, 0.2
        %v1485 = vmul.f32 %v1453, 0.2
        %v1486 = vmul.f32 %v1454, 0.2
        %v1487 = vmul.f32 %v1455, 0.2
        %v1488 = vmul.f32 %v1456, 0.2
        %v1489 = vsel %vm1457, %v1441, %v1473
        %v1490 = vsel %vm1458, %v1442, %v1474
        %v1491 = vsel %vm1459, %v1443, %v1475
        %v1492 = vsel %vm1460, %v1444, %v1476
        %v1493 = vsel %vm1461, %v1445, %v1477
        %v1494 = vsel %vm1462, %v1446, %v1478
        %v1495 = vsel %vm1463, %v1447, %v1479
        %v1496 = vsel %vm1464, %v1448, %v1480
        %v1497 = vsel %vm1465, %v1449, %v1481
        %v1498 = vsel %vm1466, %v1450, %v1482
        %v1499 = vsel %vm1467, %v1451, %v1483
        %v1500 = vsel %vm1468, %v1452, %v1484
        %v1501 = vsel %vm1469, %v1453, %v1485
        %v1502 = vsel %vm1470, %v1454, %v1486
        %v1503 = vsel %vm1471, %v1455, %v1487
        %v1504 = vsel %vm1472, %v1456, %v1488
        %v1505 = vadd.f32 %v1489, %v476
        %v1506 = vadd.f32 %v1490, %v477
        %v1507 = vadd.f32 %v1491, %v478
        %v1508 = vadd.f32 %v1492, %v479
        %v1509 = vadd.f32 %v1493, %v480
        %v1510 = vadd.f32 %v1494, %v481
        %v1511 = vadd.f32 %v1495, %v482
        %v1512 = vadd.f32 %v1496, %v483
        %v1513 = vadd.f32 %v1497, %v484
        %v1514 = vadd.f32 %v1498, %v485
        %v1515 = vadd.f32 %v1499, %v486
        %v1516 = vadd.f32 %v1500, %v487
        %v1517 = vadd.f32 %v1501, %v488
        %v1518 = vadd.f32 %v1502, %v489
        %v1519 = vadd.f32 %v1503, %v490
        %v1520 = vadd.f32 %v1504, %v491
        %v1521 = vld [vmem:[#allocation2] sm:$0xff]
        %v1522 = vld [vmem:[#allocation2 + $0x8] sm:$0xff]
        %v1523 = vld [vmem:[#allocation2 + $0x10] sm:$0xff]
        %v1524 = vld [vmem:[#allocation2 + $0x18] sm:$0xff]
        %v1525 = vld [vmem:[#allocation2 + $0x20] sm:$0xff]
        %v1526 = vld [vmem:[#allocation2 + $0x28] sm:$0xff]
        %v1527 = vld [vmem:[#allocation2 + $0x30] sm:$0xff]
        %v1528 = vld [vmem:[#allocation2 + $0x38] sm:$0xff]
        %v1529 = vld [vmem:[#allocation2 + $0x40] sm:$0xff]
        %v1530 = vld [vmem:[#allocation2 + $0x48] sm:$0xff]
        %v1531 = vld [vmem:[#allocation2 + $0x50] sm:$0xff]
        %v1532 = vld [vmem:[#allocation2 + $0x58] sm:$0xff]
        %v1533 = vld [vmem:[#allocation2 + $0x60] sm:$0xff]
        %v1534 = vld [vmem:[#allocation2 + $0x68] sm:$0xff]
        %v1535 = vld [vmem:[#allocation2 + $0x70] sm:$0xff]
        %v1536 = vld [vmem:[#allocation2 + $0x78] sm:$0xff]
        %1537 = vmax.xlane.f32.xlu0 %v1505
        %v1538 = vpop.xlane.xlu0 %1537
        %1539 = vmax.xlane.f32.xlu0 %v1506
        %v1540 = vpop.xlane.xlu0 %1539
        %1541 = vmax.xlane.f32.xlu0 %v1507
        %v1542 = vpop.xlane.xlu0 %1541
        %1543 = vmax.xlane.f32.xlu0 %v1508
        %v1544 = vpop.xlane.xlu0 %1543
        %1545 = vmax.xlane.f32.xlu0 %v1509
        %v1546 = vpop.xlane.xlu0 %1545
        %1547 = vmax.xlane.f32.xlu0 %v1510
        %v1548 = vpop.xlane.xlu0 %1547
        %1549 = vmax.xlane.f32.xlu0 %v1511
        %v1550 = vpop.xlane.xlu0 %1549
        %1551 = vmax.xlane.f32.xlu0 %v1512
        %v1552 = vpop.xlane.xlu0 %1551
        %1553 = vmax.xlane.f32.xlu0 %v1513
        %v1554 = vpop.xlane.xlu0 %1553
        %1555 = vmax.xlane.f32.xlu0 %v1514
        %v1556 = vpop.xlane.xlu0 %1555
        %1557 = vmax.xlane.f32.xlu0 %v1515
        %v1558 = vpop.xlane.xlu0 %1557
        %1559 = vmax.xlane.f32.xlu0 %v1516
        %v1560 = vpop.xlane.xlu0 %1559
        %1561 = vmax.xlane.f32.xlu0 %v1517
        %v1562 = vpop.xlane.xlu0 %1561
        %1563 = vmax.xlane.f32.xlu0 %v1518
        %v1564 = vpop.xlane.xlu0 %1563
        %1565 = vmax.xlane.f32.xlu0 %v1519
        %v1566 = vpop.xlane.xlu0 %1565
        %1567 = vmax.xlane.f32.xlu0 %v1520
        %v1568 = vpop.xlane.xlu0 %1567
        %v1569 = vmax.f32 %v1521, %v1538
        %v1570 = vmax.f32 %v1522, %v1540
        %v1571 = vmax.f32 %v1523, %v1542
        %v1572 = vmax.f32 %v1524, %v1544
        %v1573 = vmax.f32 %v1525, %v1546
        %v1574 = vmax.f32 %v1526, %v1548
        %v1575 = vmax.f32 %v1527, %v1550
        %v1576 = vmax.f32 %v1528, %v1552
        %v1577 = vmax.f32 %v1529, %v1554
        %v1578 = vmax.f32 %v1530, %v1556
        %v1579 = vmax.f32 %v1531, %v1558
        %v1580 = vmax.f32 %v1532, %v1560
        %v1581 = vmax.f32 %v1533, %v1562
        %v1582 = vmax.f32 %v1534, %v1564
        %v1583 = vmax.f32 %v1535, %v1566
        %v1584 = vmax.f32 %v1536, %v1568
        %v1585 = vsub.f32 %v1521, %v1569
        %v1586 = vsub.f32 %v1522, %v1570
        %v1587 = vsub.f32 %v1523, %v1571
        %v1588 = vsub.f32 %v1524, %v1572
        %v1589 = vsub.f32 %v1525, %v1573
        %v1590 = vsub.f32 %v1526, %v1574
        %v1591 = vsub.f32 %v1527, %v1575
        %v1592 = vsub.f32 %v1528, %v1576
        %v1593 = vsub.f32 %v1529, %v1577
        %v1594 = vsub.f32 %v1530, %v1578
        %v1595 = vsub.f32 %v1531, %v1579
        %v1596 = vsub.f32 %v1532, %v1580
        %v1597 = vsub.f32 %v1533, %v1581
        %v1598 = vsub.f32 %v1534, %v1582
        %v1599 = vsub.f32 %v1535, %v1583
        %v1600 = vsub.f32 %v1536, %v1584
        %v1601 = vmul.f32 %v1585, 1.442695
        %v1602 = vpow.pop %v1601
        %v1603 = vmul.f32 %v1586, 1.442695
        %v1604 = vpow.pop %v1603
        %v1605 = vmul.f32 %v1587, 1.442695
        %v1606 = vpow.pop %v1605
        %v1607 = vmul.f32 %v1588, 1.442695
        %v1608 = vpow.pop %v1607
        %v1609 = vmul.f32 %v1589, 1.442695
        %v1610 = vpow.pop %v1609
        %v1611 = vmul.f32 %v1590, 1.442695
        %v1612 = vpow.pop %v1611
        %v1613 = vmul.f32 %v1591, 1.442695
        %v1614 = vpow.pop %v1613
        %v1615 = vmul.f32 %v1592, 1.442695
        %v1616 = vpow.pop %v1615
        %v1617 = vmul.f32 %v1593, 1.442695
        %v1618 = vpow.pop %v1617
        %v1619 = vmul.f32 %v1594, 1.442695
        %v1620 = vpow.pop %v1619
        %v1621 = vmul.f32 %v1595, 1.442695
        %v1622 = vpow.pop %v1621
        %v1623 = vmul.f32 %v1596, 1.442695
        %v1624 = vpow.pop %v1623
        %v1625 = vmul.f32 %v1597, 1.442695
        %v1626 = vpow.pop %v1625
        %v1627 = vmul.f32 %v1598, 1.442695
        %v1628 = vpow.pop %v1627
        %v1629 = vmul.f32 %v1599, 1.442695
        %v1630 = vpow.pop %v1629
        %v1631 = vmul.f32 %v1600, 1.442695
        %v1632 = vpow.pop %v1631
        %1634 = vset.pattern.permute.xlu0 1
        %1635 = vperm.xlu0 %1634, %v1569
        %v1636 = vpop.permute.xlu0 %1635
        %1639 = vset.pattern.permute.xlu0 1
        %1640 = vperm.xlu0 %1639, %v1570
        %v1641 = vpop.permute.xlu0 %1640
        %1644 = vset.pattern.permute.xlu0 1
        %1645 = vperm.xlu0 %1644, %v1571
        %v1646 = vpop.permute.xlu0 %1645
        %1649 = vset.pattern.permute.xlu0 1
        %1650 = vperm.xlu0 %1649, %v1572
        %v1651 = vpop.permute.xlu0 %1650
        %1654 = vset.pattern.permute.xlu0 1
        %1655 = vperm.xlu0 %1654, %v1573
        %v1656 = vpop.permute.xlu0 %1655
        %1659 = vset.pattern.permute.xlu0 1
        %1660 = vperm.xlu0 %1659, %v1574
        %v1661 = vpop.permute.xlu0 %1660
        %1664 = vset.pattern.permute.xlu0 1
        %1665 = vperm.xlu0 %1664, %v1575
        %v1666 = vpop.permute.xlu0 %1665
        %1669 = vset.pattern.permute.xlu0 1
        %1670 = vperm.xlu0 %1669, %v1576
        %v1671 = vpop.permute.xlu0 %1670
        %1674 = vset.pattern.permute.xlu0 1
        %1675 = vperm.xlu0 %1674, %v1577
        %v1676 = vpop.permute.xlu0 %1675
        %1679 = vset.pattern.permute.xlu0 1
        %1680 = vperm.xlu0 %1679, %v1578
        %v1681 = vpop.permute.xlu0 %1680
        %1684 = vset.pattern.permute.xlu0 1
        %1685 = vperm.xlu0 %1684, %v1579
        %v1686 = vpop.permute.xlu0 %1685
        %1689 = vset.pattern.permute.xlu0 1
        %1690 = vperm.xlu0 %1689, %v1580
        %v1691 = vpop.permute.xlu0 %1690
        %1694 = vset.pattern.permute.xlu0 1
        %1695 = vperm.xlu0 %1694, %v1581
        %v1696 = vpop.permute.xlu0 %1695
        %1699 = vset.pattern.permute.xlu0 1
        %1700 = vperm.xlu0 %1699, %v1582
        %v1701 = vpop.permute.xlu0 %1700
        %1704 = vset.pattern.permute.xlu0 1
        %1705 = vperm.xlu0 %1704, %v1583
        %v1706 = vpop.permute.xlu0 %1705
        %1709 = vset.pattern.permute.xlu0 1
        %1710 = vperm.xlu0 %1709, %v1584
        %v1711 = vpop.permute.xlu0 %1710
        %v1713 = vsub.f32 %v1505, %v1636
        %v1714 = vsub.f32 %v1506, %v1641
        %v1715 = vsub.f32 %v1507, %v1646
        %v1716 = vsub.f32 %v1508, %v1651
        %v1717 = vsub.f32 %v1509, %v1656
        %v1718 = vsub.f32 %v1510, %v1661
        %v1719 = vsub.f32 %v1511, %v1666
        %v1720 = vsub.f32 %v1512, %v1671
        %v1721 = vsub.f32 %v1513, %v1676
        %v1722 = vsub.f32 %v1514, %v1681
        %v1723 = vsub.f32 %v1515, %v1686
        %v1724 = vsub.f32 %v1516, %v1691
        %v1725 = vsub.f32 %v1517, %v1696
        %v1726 = vsub.f32 %v1518, %v1701
        %v1727 = vsub.f32 %v1519, %v1706
        %v1728 = vsub.f32 %v1520, %v1711
        %v1729 = vmul.f32 %v1713, 1.442695
        %v1730 = vpow.pop %v1729
        %v1731 = vmul.f32 %v1714, 1.442695
        %v1732 = vpow.pop %v1731
        %v1733 = vmul.f32 %v1715, 1.442695
        %v1734 = vpow.pop %v1733
        %v1735 = vmul.f32 %v1716, 1.442695
        %v1736 = vpow.pop %v1735
        %v1737 = vmul.f32 %v1717, 1.442695
        %v1738 = vpow.pop %v1737
        %v1739 = vmul.f32 %v1718, 1.442695
        %v1740 = vpow.pop %v1739
        %v1741 = vmul.f32 %v1719, 1.442695
        %v1742 = vpow.pop %v1741
        %v1743 = vmul.f32 %v1720, 1.442695
        %v1744 = vpow.pop %v1743
        %v1745 = vmul.f32 %v1721, 1.442695
        %v1746 = vpow.pop %v1745
        %v1747 = vmul.f32 %v1722, 1.442695
        %v1748 = vpow.pop %v1747
        %v1749 = vmul.f32 %v1723, 1.442695
        %v1750 = vpow.pop %v1749
        %v1751 = vmul.f32 %v1724, 1.442695
        %v1752 = vpow.pop %v1751
        %v1753 = vmul.f32 %v1725, 1.442695
        %v1754 = vpow.pop %v1753
        %v1755 = vmul.f32 %v1726, 1.442695
        %v1756 = vpow.pop %v1755
        %v1757 = vmul.f32 %v1727, 1.442695
        %v1758 = vpow.pop %v1757
        %v1759 = vmul.f32 %v1728, 1.442695
        %v1760 = vpow.pop %v1759
        %v1761 = vld [vmem:[#allocation3] sm:$0xff]
        %v1762 = vld [vmem:[#allocation3 + $0x8] sm:$0xff]
        %v1763 = vld [vmem:[#allocation3 + $0x10] sm:$0xff]
        %v1764 = vld [vmem:[#allocation3 + $0x18] sm:$0xff]
        %v1765 = vld [vmem:[#allocation3 + $0x20] sm:$0xff]
        %v1766 = vld [vmem:[#allocation3 + $0x28] sm:$0xff]
        %v1767 = vld [vmem:[#allocation3 + $0x30] sm:$0xff]
        %v1768 = vld [vmem:[#allocation3 + $0x38] sm:$0xff]
        %v1769 = vld [vmem:[#allocation3 + $0x40] sm:$0xff]
        %v1770 = vld [vmem:[#allocation3 + $0x48] sm:$0xff]
        %v1771 = vld [vmem:[#allocation3 + $0x50] sm:$0xff]
        %v1772 = vld [vmem:[#allocation3 + $0x58] sm:$0xff]
        %v1773 = vld [vmem:[#allocation3 + $0x60] sm:$0xff]
        %v1774 = vld [vmem:[#allocation3 + $0x68] sm:$0xff]
        %v1775 = vld [vmem:[#allocation3 + $0x70] sm:$0xff]
        %v1776 = vld [vmem:[#allocation3 + $0x78] sm:$0xff]
        %v1777 = vmul.f32 %v1602, %v1761
        %v1778 = vmul.f32 %v1604, %v1762
        %v1779 = vmul.f32 %v1606, %v1763
        %v1780 = vmul.f32 %v1608, %v1764
        %v1781 = vmul.f32 %v1610, %v1765
        %v1782 = vmul.f32 %v1612, %v1766
        %v1783 = vmul.f32 %v1614, %v1767
        %v1784 = vmul.f32 %v1616, %v1768
        %v1785 = vmul.f32 %v1618, %v1769
        %v1786 = vmul.f32 %v1620, %v1770
        %v1787 = vmul.f32 %v1622, %v1771
        %v1788 = vmul.f32 %v1624, %v1772
        %v1789 = vmul.f32 %v1626, %v1773
        %v1790 = vmul.f32 %v1628, %v1774
        %v1791 = vmul.f32 %v1630, %v1775
        %v1792 = vmul.f32 %v1632, %v1776
        %1793 = vadd.xlane.f32.xlu0 %v1730
        %v1794 = vpop.xlane.xlu0 %1793
        %1795 = vadd.xlane.f32.xlu0 %v1732
        %v1796 = vpop.xlane.xlu0 %1795
        %1797 = vadd.xlane.f32.xlu0 %v1734
        %v1798 = vpop.xlane.xlu0 %1797
        %1799 = vadd.xlane.f32.xlu0 %v1736
        %v1800 = vpop.xlane.xlu0 %1799
        %1801 = vadd.xlane.f32.xlu0 %v1738
        %v1802 = vpop.xlane.xlu0 %1801
        %1803 = vadd.xlane.f32.xlu0 %v1740
        %v1804 = vpop.xlane.xlu0 %1803
        %1805 = vadd.xlane.f32.xlu0 %v1742
        %v1806 = vpop.xlane.xlu0 %1805
        %1807 = vadd.xlane.f32.xlu0 %v1744
        %v1808 = vpop.xlane.xlu0 %1807
        %1809 = vadd.xlane.f32.xlu0 %v1746
        %v1810 = vpop.xlane.xlu0 %1809
        %1811 = vadd.xlane.f32.xlu0 %v1748
        %v1812 = vpop.xlane.xlu0 %1811
        %1813 = vadd.xlane.f32.xlu0 %v1750
        %v1814 = vpop.xlane.xlu0 %1813
        %1815 = vadd.xlane.f32.xlu0 %v1752
        %v1816 = vpop.xlane.xlu0 %1815
        %1817 = vadd.xlane.f32.xlu0 %v1754
        %v1818 = vpop.xlane.xlu0 %1817
        %1819 = vadd.xlane.f32.xlu0 %v1756
        %v1820 = vpop.xlane.xlu0 %1819
        %1821 = vadd.xlane.f32.xlu0 %v1758
        %v1822 = vpop.xlane.xlu0 %1821
        %1823 = vadd.xlane.f32.xlu0 %v1760
        %v1824 = vpop.xlane.xlu0 %1823
        %v1825 = vadd.f32 %v1777, %v1794
        %v1826 = vadd.f32 %v1778, %v1796
        %v1827 = vadd.f32 %v1779, %v1798
        %v1828 = vadd.f32 %v1780, %v1800
        %v1829 = vadd.f32 %v1781, %v1802
        %v1830 = vadd.f32 %v1782, %v1804
        %v1831 = vadd.f32 %v1783, %v1806
        %v1832 = vadd.f32 %v1784, %v1808
        %v1833 = vadd.f32 %v1785, %v1810
        %v1834 = vadd.f32 %v1786, %v1812
        %v1835 = vadd.f32 %v1787, %v1814
        %v1836 = vadd.f32 %v1788, %v1816
        %v1837 = vadd.f32 %v1789, %v1818
        %v1838 = vadd.f32 %v1790, %v1820
        %v1839 = vadd.f32 %v1791, %v1822
        %v1840 = vadd.f32 %v1792, %v1824
        %vm1841 = vcmask 15368
        %1842 = vst.msk [vmem:[#allocation3] sm:$0xff] %vm1841, %v1825
        %1843 = vst.msk [vmem:[#allocation3 + $0x8] sm:$0xff] %vm1841, %v1826
        %1844 = vst.msk [vmem:[#allocation3 + $0x10] sm:$0xff] %vm1841, %v1827
        %1845 = vst.msk [vmem:[#allocation3 + $0x18] sm:$0xff] %vm1841, %v1828
        %1846 = vst.msk [vmem:[#allocation3 + $0x20] sm:$0xff] %vm1841, %v1829
        %1847 = vst.msk [vmem:[#allocation3 + $0x28] sm:$0xff] %vm1841, %v1830
        %1848 = vst.msk [vmem:[#allocation3 + $0x30] sm:$0xff] %vm1841, %v1831
        %1849 = vst.msk [vmem:[#allocation3 + $0x38] sm:$0xff] %vm1841, %v1832
        %1850 = vst.msk [vmem:[#allocation3 + $0x40] sm:$0xff] %vm1841, %v1833
        %1851 = vst.msk [vmem:[#allocation3 + $0x48] sm:$0xff] %vm1841, %v1834
        %1852 = vst.msk [vmem:[#allocation3 + $0x50] sm:$0xff] %vm1841, %v1835
        %1853 = vst.msk [vmem:[#allocation3 + $0x58] sm:$0xff] %vm1841, %v1836
        %1854 = vst.msk [vmem:[#allocation3 + $0x60] sm:$0xff] %vm1841, %v1837
        %1855 = vst.msk [vmem:[#allocation3 + $0x68] sm:$0xff] %vm1841, %v1838
        %1856 = vst.msk [vmem:[#allocation3 + $0x70] sm:$0xff] %vm1841, %v1839
        %1857 = vst.msk [vmem:[#allocation3 + $0x78] sm:$0xff] %vm1841, %v1840
        %v1858 = vpack.c.bf16 %v1732, %v1730
        %v1859 = vpack.c.bf16 %v1736, %v1734
        %v1860 = vpack.c.bf16 %v1740, %v1738
        %v1861 = vpack.c.bf16 %v1744, %v1742
        %v1862 = vpack.c.bf16 %v1748, %v1746
        %v1863 = vpack.c.bf16 %v1752, %v1750
        %v1864 = vpack.c.bf16 %v1756, %v1754
        %v1865 = vpack.c.bf16 %v1760, %v1758
        %v1866 = vld [vmem:[%s387] sm:$0xf]
        %v1867 = vld [vmem:[%s387 + $0x4] sm:$0xf]
        %v1868 = vld [vmem:[%s387 + $0x8] sm:$0xf]
        %v1869 = vld [vmem:[%s387 + $0xc] sm:$0xf]
        %v1870 = vld [vmem:[%s387 + $0x10] sm:$0xf]
        %v1871 = vld [vmem:[%s387 + $0x14] sm:$0xf]
        %v1872 = vld [vmem:[%s387 + $0x18] sm:$0xf]
        %v1873 = vld [vmem:[%s387 + $0x1c] sm:$0xf]
        %v1874 = vld [vmem:[%s387 + $0x20] sm:$0xf]
        %v1875 = vld [vmem:[%s387 + $0x24] sm:$0xf]
        %v1876 = vld [vmem:[%s387 + $0x28] sm:$0xf]
        %v1877 = vld [vmem:[%s387 + $0x2c] sm:$0xf]
        %v1878 = vld [vmem:[%s387 + $0x30] sm:$0xf]
        %v1879 = vld [vmem:[%s387 + $0x34] sm:$0xf]
        %v1880 = vld [vmem:[%s387 + $0x38] sm:$0xf]
        %v1881 = vld [vmem:[%s387 + $0x3c] sm:$0xf]
        %v1898 = vunpack.c.l.b16 %v1866
        %v1899 = vunpack.c.l.b16 %v1867
        %v1900 = vunpack.c.l.b16 %v1868
        %v1901 = vunpack.c.l.b16 %v1869
        %v1902 = vunpack.c.l.b16 %v1870
        %v1903 = vunpack.c.l.b16 %v1871
        %v1904 = vunpack.c.l.b16 %v1872
        %v1905 = vunpack.c.l.b16 %v1873
        %v1906 = vunpack.c.l.b16 %v1874
        %v1907 = vunpack.c.l.b16 %v1875
        %v1908 = vunpack.c.l.b16 %v1876
        %v1909 = vunpack.c.l.b16 %v1877
        %v1910 = vunpack.c.l.b16 %v1878
        %v1911 = vunpack.c.l.b16 %v1879
        %v1912 = vunpack.c.l.b16 %v1880
        %v1913 = vunpack.c.l.b16 %v1881
        %v1914 = vpack.c.b16 %v1899, %v1898
        %v1915 = vpack.c.b16 %v1901, %v1900
        %v1916 = vpack.c.b16 %v1903, %v1902
        %v1917 = vpack.c.b16 %v1905, %v1904
        %v1918 = vpack.c.b16 %v1907, %v1906
        %v1919 = vpack.c.b16 %v1909, %v1908
        %v1920 = vpack.c.b16 %v1911, %v1910
        %v1921 = vpack.c.b16 %v1913, %v1912
        %1922 = vrot.lane.b32.xlu0 %v1914, 112
        %v1923 = vpop.permute.xlu0 %1922
        %1924 = vrot.lane.b32.xlu0 %v1915, 112
        %v1925 = vpop.permute.xlu0 %1924
        %1926 = vrot.lane.b32.xlu0 %v1916, 112
        %v1927 = vpop.permute.xlu0 %1926
        %1928 = vrot.lane.b32.xlu0 %v1917, 112
        %v1929 = vpop.permute.xlu0 %1928
        %1930 = vrot.lane.b32.xlu0 %v1918, 112
        %v1931 = vpop.permute.xlu0 %1930
        %1932 = vrot.lane.b32.xlu0 %v1919, 112
        %v1933 = vpop.permute.xlu0 %1932
        %1934 = vrot.lane.b32.xlu0 %v1920, 112
        %v1935 = vpop.permute.xlu0 %1934
        %1936 = vrot.lane.b32.xlu0 %v1921, 112
        %v1937 = vpop.permute.xlu0 %1936
        %1946 = vmatprep.subr.bf16.mxu0 0
        %1947 = vmatpush1.bf16.msra.mxu0 %v1923
        %1948 = vmatprep.subr.bf16.mxu0 0
        %1949 = vmatpush1.bf16.msra.mxu0 %v1925
        %1950 = vmatprep.subr.bf16.mxu0 0
        %1951 = vmatpush1.bf16.msra.mxu0 %v1927
        %1952 = vmatprep.subr.bf16.mxu0 0
        %1953 = vmatpush1.bf16.msra.mxu0 %v1929
        %1954 = vmatprep.subr.bf16.mxu0 0
        %1955 = vmatpush1.bf16.msra.mxu0 %v1931
        %1956 = vmatprep.subr.bf16.mxu0 0
        %1957 = vmatpush1.bf16.msra.mxu0 %v1933
        %1958 = vmatprep.subr.bf16.mxu0 0
        %1959 = vmatpush1.bf16.msra.mxu0 %v1935
        %1960 = vmatprep.subr.bf16.mxu0 0
        %1961 = vmatpush1.bf16.msra.mxu0 %v1937
        %1962 = vmatprep.subr.bf16.mxu0 0
        %1963 = vmatpush1.bf16.msra.mxu0 0
        %1964 = vmatprep.subr.bf16.mxu0 0
        %1965 = vmatpush1.bf16.msra.mxu0 0
        %1966 = vmatprep.subr.bf16.mxu0 0
        %1967 = vmatpush1.bf16.msra.mxu0 0
        %1968 = vmatprep.subr.bf16.mxu0 0
        %1969 = vmatpush1.bf16.msra.mxu0 0
        %1970 = vmatprep.subr.bf16.mxu0 0
        %1971 = vmatpush1.bf16.msra.mxu0 0
        %1972 = vmatprep.subr.bf16.mxu0 0
        %1973 = vmatpush1.bf16.msra.mxu0 0
        %1974 = vmatprep.subr.bf16.mxu0 0
        %1975 = vmatpush1.bf16.msra.mxu0 0
        %1976 = vmatprep.subr.bf16.mxu0 0
        %1977 = vmatpush1.bf16.msra.mxu0 0
        %1978 = vmatprep.mubr.bf16.mxu0 0
        %1979 = vmatmul.mubr.bf16.gmra.mrb[0].mxu0 %v1858
        %v1980 = vpop.f32.mrb[0].mxu0
        %v1981 = vadd.f32 0.0, %v1980
        %v1982 = vpop.f32.mrb[0].mxu0
        %v1983 = vpop.f32.mrb[0].mxu0
        %v1984 = vadd.f32 0.0, %v1983
        %v1985 = vpop.f32.mrb[0].mxu0
        %1986 = vmatprep.mubr.bf16.mxu0 0
        %1987 = vmatmul.mubr.bf16.gmra.mrb[0].mxu0 %v1859
        %v1988 = vpop.f32.mrb[0].mxu0
        %v1989 = vadd.f32 0.0, %v1988
        %v1990 = vpop.f32.mrb[0].mxu0
        %v1991 = vpop.f32.mrb[0].mxu0
        %v1992 = vadd.f32 0.0, %v1991
        %v1993 = vpop.f32.mrb[0].mxu0
        %1994 = vmatprep.mubr.bf16.mxu0 0
        %1995 = vmatmul.mubr.bf16.gmra.mrb[0].mxu0 %v1860
        %v1996 = vpop.f32.mrb[0].mxu0
        %v1997 = vadd.f32 0.0, %v1996
        %v1998 = vpop.f32.mrb[0].mxu0
        %v1999 = vpop.f32.mrb[0].mxu0
        %v2000 = vadd.f32 0.0, %v1999
        %v2001 = vpop.f32.mrb[0].mxu0
        %2002 = vmatprep.mubr.bf16.mxu0 0
        %2003 = vmatmul.mubr.bf16.gmra.mrb[0].mxu0 %v1861
        %v2004 = vpop.f32.mrb[0].mxu0
        %v2005 = vadd.f32 0.0, %v2004
        %v2006 = vpop.f32.mrb[0].mxu0
        %v2007 = vpop.f32.mrb[0].mxu0
        %v2008 = vadd.f32 0.0, %v2007
        %v2009 = vpop.f32.mrb[0].mxu0
        %2010 = vmatprep.mubr.bf16.mxu0 0
        %2011 = vmatmul.mubr.bf16.gmra.mrb[0].mxu0 %v1862
        %v2012 = vpop.f32.mrb[0].mxu0
        %v2013 = vadd.f32 0.0, %v2012
        %v2014 = vpop.f32.mrb[0].mxu0
        %v2015 = vpop.f32.mrb[0].mxu0
        %v2016 = vadd.f32 0.0, %v2015
        %v2017 = vpop.f32.mrb[0].mxu0
        %2018 = vmatprep.mubr.bf16.mxu0 0
        %2019 = vmatmul.mubr.bf16.gmra.mrb[0].mxu0 %v1863
        %v2020 = vpop.f32.mrb[0].mxu0
        %v2021 = vadd.f32 0.0, %v2020
        %v2022 = vpop.f32.mrb[0].mxu0
        %v2023 = vpop.f32.mrb[0].mxu0
        %v2024 = vadd.f32 0.0, %v2023
        %v2025 = vpop.f32.mrb[0].mxu0
        %2026 = vmatprep.mubr.bf16.mxu0 0
        %2027 = vmatmul.mubr.bf16.gmra.mrb[0].mxu0 %v1864
        %v2028 = vpop.f32.mrb[0].mxu0
        %v2029 = vadd.f32 0.0, %v2028
        %v2030 = vpop.f32.mrb[0].mxu0
        %v2031 = vpop.f32.mrb[0].mxu0
        %v2032 = vadd.f32 0.0, %v2031
        %v2033 = vpop.f32.mrb[0].mxu0
        %2034 = vmatprep.mubr.bf16.mxu0 0
        %2035 = vmatmul.mubr.bf16.gmra.mrb[0].mxu0 %v1865
        %v2036 = vpop.f32.mrb[0].mxu0
        %v2037 = vadd.f32 0.0, %v2036
        %v2038 = vpop.f32.mrb[0].mxu0
        %v2039 = vpop.f32.mrb[0].mxu0
        %v2040 = vadd.f32 0.0, %v2039
        %v2041 = vpop.f32.mrb[0].mxu0
        %2042 = vdwg.mxu0
        %v2043 = vld [vmem:[#allocation4] sm:$0xff]
        %v2044 = vld [vmem:[#allocation4 + $0x8] sm:$0xff]
        %v2045 = vld [vmem:[#allocation4 + $0x10] sm:$0xff]
        %v2046 = vld [vmem:[#allocation4 + $0x18] sm:$0xff]
        %v2047 = vld [vmem:[#allocation4 + $0x20] sm:$0xff]
        %v2048 = vld [vmem:[#allocation4 + $0x28] sm:$0xff]
        %v2049 = vld [vmem:[#allocation4 + $0x30] sm:$0xff]
        %v2050 = vld [vmem:[#allocation4 + $0x38] sm:$0xff]
        %v2051 = vld [vmem:[#allocation4 + $0x40] sm:$0xff]
        %v2052 = vld [vmem:[#allocation4 + $0x48] sm:$0xff]
        %v2053 = vld [vmem:[#allocation4 + $0x50] sm:$0xff]
        %v2054 = vld [vmem:[#allocation4 + $0x58] sm:$0xff]
        %v2055 = vld [vmem:[#allocation4 + $0x60] sm:$0xff]
        %v2056 = vld [vmem:[#allocation4 + $0x68] sm:$0xff]
        %v2057 = vld [vmem:[#allocation4 + $0x70] sm:$0xff]
        %v2058 = vld [vmem:[#allocation4 + $0x78] sm:$0xff]
        %2060 = vset.pattern.permute.xlu0 1
        %2061 = vperm.xlu0 %2060, %v1602
        %v2062 = vpop.permute.xlu0 %2061
        %2065 = vset.pattern.permute.xlu0 1
        %2066 = vperm.xlu0 %2065, %v1604
        %v2067 = vpop.permute.xlu0 %2066
        %2070 = vset.pattern.permute.xlu0 1
        %2071 = vperm.xlu0 %2070, %v1606
        %v2072 = vpop.permute.xlu0 %2071
        %2075 = vset.pattern.permute.xlu0 1
        %2076 = vperm.xlu0 %2075, %v1608
        %v2077 = vpop.permute.xlu0 %2076
        %2080 = vset.pattern.permute.xlu0 1
        %2081 = vperm.xlu0 %2080, %v1610
        %v2082 = vpop.permute.xlu0 %2081
        %2085 = vset.pattern.permute.xlu0 1
        %2086 = vperm.xlu0 %2085, %v1612
        %v2087 = vpop.permute.xlu0 %2086
        %2090 = vset.pattern.permute.xlu0 1
        %2091 = vperm.xlu0 %2090, %v1614
        %v2092 = vpop.permute.xlu0 %2091
        %2095 = vset.pattern.permute.xlu0 1
        %2096 = vperm.xlu0 %2095, %v1616
        %v2097 = vpop.permute.xlu0 %2096
        %2100 = vset.pattern.permute.xlu0 1
        %2101 = vperm.xlu0 %2100, %v1618
        %v2102 = vpop.permute.xlu0 %2101
        %2105 = vset.pattern.permute.xlu0 1
        %2106 = vperm.xlu0 %2105, %v1620
        %v2107 = vpop.permute.xlu0 %2106
        %2110 = vset.pattern.permute.xlu0 1
        %2111 = vperm.xlu0 %2110, %v1622
        %v2112 = vpop.permute.xlu0 %2111
        %2115 = vset.pattern.permute.xlu0 1
        %2116 = vperm.xlu0 %2115, %v1624
        %v2117 = vpop.permute.xlu0 %2116
        %2120 = vset.pattern.permute.xlu0 1
        %2121 = vperm.xlu0 %2120, %v1626
        %v2122 = vpop.permute.xlu0 %2121
        %2125 = vset.pattern.permute.xlu0 1
        %2126 = vperm.xlu0 %2125, %v1628
        %v2127 = vpop.permute.xlu0 %2126
        %2130 = vset.pattern.permute.xlu0 1
        %2131 = vperm.xlu0 %2130, %v1630
        %v2132 = vpop.permute.xlu0 %2131
        %2135 = vset.pattern.permute.xlu0 1
        %2136 = vperm.xlu0 %2135, %v1632
        %v2137 = vpop.permute.xlu0 %2136
        %v2139 = vmul.f32 %v2062, %v2043
        %v2140 = vmul.f32 %v2067, %v2044
        %v2141 = vmul.f32 %v2072, %v2045
        %v2142 = vmul.f32 %v2077, %v2046
        %v2143 = vmul.f32 %v2082, %v2047
        %v2144 = vmul.f32 %v2087, %v2048
        %v2145 = vmul.f32 %v2092, %v2049
        %v2146 = vmul.f32 %v2097, %v2050
        %v2147 = vmul.f32 %v2102, %v2051
        %v2148 = vmul.f32 %v2107, %v2052
        %v2149 = vmul.f32 %v2112, %v2053
        %v2150 = vmul.f32 %v2117, %v2054
        %v2151 = vmul.f32 %v2122, %v2055
        %v2152 = vmul.f32 %v2127, %v2056
        %v2153 = vmul.f32 %v2132, %v2057
        %v2154 = vmul.f32 %v2137, %v2058
        %2171 = vrot.lane.b32.xlu0 %v1981, 16
        %v2172 = vpop.permute.xlu0 %2171
        %2173 = vrot.lane.b32.xlu0 %v1984, 16
        %v2174 = vpop.permute.xlu0 %2173
        %2175 = vrot.lane.b32.xlu0 %v1989, 16
        %v2176 = vpop.permute.xlu0 %2175
        %2177 = vrot.lane.b32.xlu0 %v1992, 16
        %v2178 = vpop.permute.xlu0 %2177
        %2179 = vrot.lane.b32.xlu0 %v1997, 16
        %v2180 = vpop.permute.xlu0 %2179
        %2181 = vrot.lane.b32.xlu0 %v2000, 16
        %v2182 = vpop.permute.xlu0 %2181
        %2183 = vrot.lane.b32.xlu0 %v2005, 16
        %v2184 = vpop.permute.xlu0 %2183
        %2185 = vrot.lane.b32.xlu0 %v2008, 16
        %v2186 = vpop.permute.xlu0 %2185
        %2187 = vrot.lane.b32.xlu0 %v2013, 16
        %v2188 = vpop.permute.xlu0 %2187
        %2189 = vrot.lane.b32.xlu0 %v2016, 16
        %v2190 = vpop.permute.xlu0 %2189
        %2191 = vrot.lane.b32.xlu0 %v2021, 16
        %v2192 = vpop.permute.xlu0 %2191
        %2193 = vrot.lane.b32.xlu0 %v2024, 16
        %v2194 = vpop.permute.xlu0 %2193
        %2195 = vrot.lane.b32.xlu0 %v2029, 16
        %v2196 = vpop.permute.xlu0 %2195
        %2197 = vrot.lane.b32.xlu0 %v2032, 16
        %v2198 = vpop.permute.xlu0 %2197
        %2199 = vrot.lane.b32.xlu0 %v2037, 16
        %v2200 = vpop.permute.xlu0 %2199
        %2201 = vrot.lane.b32.xlu0 %v2040, 16
        %v2202 = vpop.permute.xlu0 %2201
        %v2219 = vadd.f32 %v2139, %v2172
        %v2220 = vadd.f32 %v2140, %v2174
        %v2221 = vadd.f32 %v2141, %v2176
        %v2222 = vadd.f32 %v2142, %v2178
        %v2223 = vadd.f32 %v2143, %v2180
        %v2224 = vadd.f32 %v2144, %v2182
        %v2225 = vadd.f32 %v2145, %v2184
        %v2226 = vadd.f32 %v2146, %v2186
        %v2227 = vadd.f32 %v2147, %v2188
        %v2228 = vadd.f32 %v2148, %v2190
        %v2229 = vadd.f32 %v2149, %v2192
        %v2230 = vadd.f32 %v2150, %v2194
        %v2231 = vadd.f32 %v2151, %v2196
        %v2232 = vadd.f32 %v2152, %v2198
        %v2233 = vadd.f32 %v2153, %v2200
        %v2234 = vadd.f32 %v2154, %v2202
        %vm2235 = vcmask 261248
        %2236 = vst.msk [vmem:[#allocation4] sm:$0xff] %vm2235, %v2219
        %2237 = vst.msk [vmem:[#allocation4 + $0x8] sm:$0xff] %vm2235, %v2220
        %2238 = vst.msk [vmem:[#allocation4 + $0x10] sm:$0xff] %vm2235, %v2221
        %2239 = vst.msk [vmem:[#allocation4 + $0x18] sm:$0xff] %vm2235, %v2222
        %2240 = vst.msk [vmem:[#allocation4 + $0x20] sm:$0xff] %vm2235, %v2223
        %2241 = vst.msk [vmem:[#allocation4 + $0x28] sm:$0xff] %vm2235, %v2224
        %2242 = vst.msk [vmem:[#allocation4 + $0x30] sm:$0xff] %vm2235, %v2225
        %2243 = vst.msk [vmem:[#allocation4 + $0x38] sm:$0xff] %vm2235, %v2226
        %2244 = vst.msk [vmem:[#allocation4 + $0x40] sm:$0xff] %vm2235, %v2227
        %2245 = vst.msk [vmem:[#allocation4 + $0x48] sm:$0xff] %vm2235, %v2228
        %2246 = vst.msk [vmem:[#allocation4 + $0x50] sm:$0xff] %vm2235, %v2229
        %2247 = vst.msk [vmem:[#allocation4 + $0x58] sm:$0xff] %vm2235, %v2230
        %2248 = vst.msk [vmem:[#allocation4 + $0x60] sm:$0xff] %vm2235, %v2231
        %2249 = vst.msk [vmem:[#allocation4 + $0x68] sm:$0xff] %vm2235, %v2232
        %2250 = vst.msk [vmem:[#allocation4 + $0x70] sm:$0xff] %vm2235, %v2233
        %2251 = vst.msk [vmem:[#allocation4 + $0x78] sm:$0xff] %vm2235, %v2234
        %2252 = vst.msk [vmem:[#allocation2] sm:$0xff] %vm1841, %v1569
        %2253 = vst.msk [vmem:[#allocation2 + $0x8] sm:$0xff] %vm1841, %v1570
        %2254 = vst.msk [vmem:[#allocation2 + $0x10] sm:$0xff] %vm1841, %v1571
        %2255 = vst.msk [vmem:[#allocation2 + $0x18] sm:$0xff] %vm1841, %v1572
        %2256 = vst.msk [vmem:[#allocation2 + $0x20] sm:$0xff] %vm1841, %v1573
        %2257 = vst.msk [vmem:[#allocation2 + $0x28] sm:$0xff] %vm1841, %v1574
        %2258 = vst.msk [vmem:[#allocation2 + $0x30] sm:$0xff] %vm1841, %v1575
        %2259 = vst.msk [vmem:[#allocation2 + $0x38] sm:$0xff] %vm1841, %v1576
        %2260 = vst.msk [vmem:[#allocation2 + $0x40] sm:$0xff] %vm1841, %v1577
        %2261 = vst.msk [vmem:[#allocation2 + $0x48] sm:$0xff] %vm1841, %v1578
        %2262 = vst.msk [vmem:[#allocation2 + $0x50] sm:$0xff] %vm1841, %v1579
        %2263 = vst.msk [vmem:[#allocation2 + $0x58] sm:$0xff] %vm1841, %v1580
        %2264 = vst.msk [vmem:[#allocation2 + $0x60] sm:$0xff] %vm1841, %v1581
        %2265 = vst.msk [vmem:[#allocation2 + $0x68] sm:$0xff] %vm1841, %v1582
        %2266 = vst.msk [vmem:[#allocation2 + $0x70] sm:$0xff] %vm1841, %v1583
        %2267 = vst.msk [vmem:[#allocation2 + $0x78] sm:$0xff] %vm1841, %v1584
        %v2268 = vld [vmem:[%s393] sm:$0xff]
        %v2269 = vld [vmem:[%s393 + $0x8] sm:$0xff]
        %v2270 = vld [vmem:[%s393 + $0x10] sm:$0xff]
        %v2271 = vld [vmem:[%s393 + $0x18] sm:$0xff]
        %v2272 = vld [vmem:[%s393 + $0x20] sm:$0xff]
        %v2273 = vld [vmem:[%s393 + $0x28] sm:$0xff]
        %v2274 = vld [vmem:[%s393 + $0x30] sm:$0xff]
        %v2275 = vld [vmem:[%s393 + $0x38] sm:$0xff]
        %v2276 = vld [vmem:[%s393 + $0x40] sm:$0xff]
        %v2277 = vld [vmem:[%s393 + $0x48] sm:$0xff]
        %v2278 = vld [vmem:[%s393 + $0x50] sm:$0xff]
        %v2279 = vld [vmem:[%s393 + $0x58] sm:$0xff]
        %v2280 = vld [vmem:[%s393 + $0x60] sm:$0xff]
        %v2281 = vld [vmem:[%s393 + $0x68] sm:$0xff]
        %v2282 = vld [vmem:[%s393 + $0x70] sm:$0xff]
        %v2283 = vld [vmem:[%s393 + $0x78] sm:$0xff]
        %v2284 = vld [vmem:[%s398 + $0x2] sm:$0x1]
        %2286 = vset.pattern.permute.xlu0 2
        %2287 = vperm.xlu0 %2286, %v2268
        %v2288 = vpop.permute.xlu0 %2287
        %2291 = vset.pattern.permute.xlu0 2
        %2292 = vperm.xlu0 %2291, %v2269
        %v2293 = vpop.permute.xlu0 %2292
        %2296 = vset.pattern.permute.xlu0 2
        %2297 = vperm.xlu0 %2296, %v2270
        %v2298 = vpop.permute.xlu0 %2297
        %2301 = vset.pattern.permute.xlu0 2
        %2302 = vperm.xlu0 %2301, %v2271
        %v2303 = vpop.permute.xlu0 %2302
        %2306 = vset.pattern.permute.xlu0 2
        %2307 = vperm.xlu0 %2306, %v2272
        %v2308 = vpop.permute.xlu0 %2307
        %2311 = vset.pattern.permute.xlu0 2
        %2312 = vperm.xlu0 %2311, %v2273
        %v2313 = vpop.permute.xlu0 %2312
        %2316 = vset.pattern.permute.xlu0 2
        %2317 = vperm.xlu0 %2316, %v2274
        %v2318 = vpop.permute.xlu0 %2317
        %2321 = vset.pattern.permute.xlu0 2
        %2322 = vperm.xlu0 %2321, %v2275
        %v2323 = vpop.permute.xlu0 %2322
        %2326 = vset.pattern.permute.xlu0 2
        %2327 = vperm.xlu0 %2326, %v2276
        %v2328 = vpop.permute.xlu0 %2327
        %2331 = vset.pattern.permute.xlu0 2
        %2332 = vperm.xlu0 %2331, %v2277
        %v2333 = vpop.permute.xlu0 %2332
        %2336 = vset.pattern.permute.xlu0 2
        %2337 = vperm.xlu0 %2336, %v2278
        %v2338 = vpop.permute.xlu0 %2337
        %2341 = vset.pattern.permute.xlu0 2
        %2342 = vperm.xlu0 %2341, %v2279
        %v2343 = vpop.permute.xlu0 %2342
        %2346 = vset.pattern.permute.xlu0 2
        %2347 = vperm.xlu0 %2346, %v2280
        %v2348 = vpop.permute.xlu0 %2347
        %2351 = vset.pattern.permute.xlu0 2
        %2352 = vperm.xlu0 %2351, %v2281
        %v2353 = vpop.permute.xlu0 %2352
        %2356 = vset.pattern.permute.xlu0 2
        %2357 = vperm.xlu0 %2356, %v2282
        %v2358 = vpop.permute.xlu0 %2357
        %2361 = vset.pattern.permute.xlu0 2
        %2362 = vperm.xlu0 %2361, %v2283
        %v2363 = vpop.permute.xlu0 %2362
        %v2365 = vlaneseq
        %v2366 = vshrl.u32 %v2365, 7
        %v2367 = vsub.s32 0, %v2366
        %v2368 = vrot.slane %v2284, %v2367
        %v2369 = vadd.f32 %v2288, %v2368
        %v2370 = vadd.f32 %v2293, %v2368
        %v2371 = vadd.f32 %v2298, %v2368
        %v2372 = vadd.f32 %v2303, %v2368
        %v2373 = vadd.f32 %v2308, %v2368
        %v2374 = vadd.f32 %v2313, %v2368
        %v2375 = vadd.f32 %v2318, %v2368
        %v2376 = vadd.f32 %v2323, %v2368
        %v2377 = vadd.f32 %v2328, %v2368
        %v2378 = vadd.f32 %v2333, %v2368
        %v2379 = vadd.f32 %v2338, %v2368
        %v2380 = vadd.f32 %v2343, %v2368
        %v2381 = vadd.f32 %v2348, %v2368
        %v2382 = vadd.f32 %v2353, %v2368
        %v2383 = vadd.f32 %v2358, %v2368
        %v2384 = vadd.f32 %v2363, %v2368
        %vm2385 = vcmp.gt.f32.partialorder %v2369, 0.0
        %vm2386 = vcmp.gt.f32.partialorder %v2370, 0.0
        %vm2387 = vcmp.gt.f32.partialorder %v2371, 0.0
        %vm2388 = vcmp.gt.f32.partialorder %v2372, 0.0
        %vm2389 = vcmp.gt.f32.partialorder %v2373, 0.0
        %vm2390 = vcmp.gt.f32.partialorder %v2374, 0.0
        %vm2391 = vcmp.gt.f32.partialorder %v2375, 0.0
        %vm2392 = vcmp.gt.f32.partialorder %v2376, 0.0
        %vm2393 = vcmp.gt.f32.partialorder %v2377, 0.0
        %vm2394 = vcmp.gt.f32.partialorder %v2378, 0.0
        %vm2395 = vcmp.gt.f32.partialorder %v2379, 0.0
        %vm2396 = vcmp.gt.f32.partialorder %v2380, 0.0
        %vm2397 = vcmp.gt.f32.partialorder %v2381, 0.0
        %vm2398 = vcmp.gt.f32.partialorder %v2382, 0.0
        %vm2399 = vcmp.gt.f32.partialorder %v2383, 0.0
        %vm2400 = vcmp.gt.f32.partialorder %v2384, 0.0
        %v2401 = vmul.f32 %v2369, 0.2
        %v2402 = vmul.f32 %v2370, 0.2
        %v2403 = vmul.f32 %v2371, 0.2
        %v2404 = vmul.f32 %v2372, 0.2
        %v2405 = vmul.f32 %v2373, 0.2
        %v2406 = vmul.f32 %v2374, 0.2
        %v2407 = vmul.f32 %v2375, 0.2
        %v2408 = vmul.f32 %v2376, 0.2
        %v2409 = vmul.f32 %v2377, 0.2
        %v2410 = vmul.f32 %v2378, 0.2
        %v2411 = vmul.f32 %v2379, 0.2
        %v2412 = vmul.f32 %v2380, 0.2
        %v2413 = vmul.f32 %v2381, 0.2
        %v2414 = vmul.f32 %v2382, 0.2
        %v2415 = vmul.f32 %v2383, 0.2
        %v2416 = vmul.f32 %v2384, 0.2
        %v2417 = vsel %vm2385, %v2369, %v2401
        %v2418 = vsel %vm2386, %v2370, %v2402
        %v2419 = vsel %vm2387, %v2371, %v2403
        %v2420 = vsel %vm2388, %v2372, %v2404
        %v2421 = vsel %vm2389, %v2373, %v2405
        %v2422 = vsel %vm2390, %v2374, %v2406
        %v2423 = vsel %vm2391, %v2375, %v2407
        %v2424 = vsel %vm2392, %v2376, %v2408
        %v2425 = vsel %vm2393, %v2377, %v2409
        %v2426 = vsel %vm2394, %v2378, %v2410
        %v2427 = vsel %vm2395, %v2379, %v2411
        %v2428 = vsel %vm2396, %v2380, %v2412
        %v2429 = vsel %vm2397, %v2381, %v2413
        %v2430 = vsel %vm2398, %v2382, %v2414
        %v2431 = vsel %vm2399, %v2383, %v2415
        %v2432 = vsel %vm2400, %v2384, %v2416
        %v2433 = vadd.f32 %v2417, %v476
        %v2434 = vadd.f32 %v2418, %v477
        %v2435 = vadd.f32 %v2419, %v478
        %v2436 = vadd.f32 %v2420, %v479
        %v2437 = vadd.f32 %v2421, %v480
        %v2438 = vadd.f32 %v2422, %v481
        %v2439 = vadd.f32 %v2423, %v482
        %v2440 = vadd.f32 %v2424, %v483
        %v2441 = vadd.f32 %v2425, %v484
        %v2442 = vadd.f32 %v2426, %v485
        %v2443 = vadd.f32 %v2427, %v486
        %v2444 = vadd.f32 %v2428, %v487
        %v2445 = vadd.f32 %v2429, %v488
        %v2446 = vadd.f32 %v2430, %v489
        %v2447 = vadd.f32 %v2431, %v490
        %v2448 = vadd.f32 %v2432, %v491
        %v2449 = vld [vmem:[#allocation2] sm:$0xff]
        %v2450 = vld [vmem:[#allocation2 + $0x8] sm:$0xff]
        %v2451 = vld [vmem:[#allocation2 + $0x10] sm:$0xff]
        %v2452 = vld [vmem:[#allocation2 + $0x18] sm:$0xff]
        %v2453 = vld [vmem:[#allocation2 + $0x20] sm:$0xff]
        %v2454 = vld [vmem:[#allocation2 + $0x28] sm:$0xff]
        %v2455 = vld [vmem:[#allocation2 + $0x30] sm:$0xff]
        %v2456 = vld [vmem:[#allocation2 + $0x38] sm:$0xff]
        %v2457 = vld [vmem:[#allocation2 + $0x40] sm:$0xff]
        %v2458 = vld [vmem:[#allocation2 + $0x48] sm:$0xff]
        %v2459 = vld [vmem:[#allocation2 + $0x50] sm:$0xff]
        %v2460 = vld [vmem:[#allocation2 + $0x58] sm:$0xff]
        %v2461 = vld [vmem:[#allocation2 + $0x60] sm:$0xff]
        %v2462 = vld [vmem:[#allocation2 + $0x68] sm:$0xff]
        %v2463 = vld [vmem:[#allocation2 + $0x70] sm:$0xff]
        %v2464 = vld [vmem:[#allocation2 + $0x78] sm:$0xff]
        %2465 = vmax.xlane.f32.xlu0 %v2433
        %v2466 = vpop.xlane.xlu0 %2465
        %2467 = vmax.xlane.f32.xlu0 %v2434
        %v2468 = vpop.xlane.xlu0 %2467
        %2469 = vmax.xlane.f32.xlu0 %v2435
        %v2470 = vpop.xlane.xlu0 %2469
        %2471 = vmax.xlane.f32.xlu0 %v2436
        %v2472 = vpop.xlane.xlu0 %2471
        %2473 = vmax.xlane.f32.xlu0 %v2437
        %v2474 = vpop.xlane.xlu0 %2473
        %2475 = vmax.xlane.f32.xlu0 %v2438
        %v2476 = vpop.xlane.xlu0 %2475
        %2477 = vmax.xlane.f32.xlu0 %v2439
        %v2478 = vpop.xlane.xlu0 %2477
        %2479 = vmax.xlane.f32.xlu0 %v2440
        %v2480 = vpop.xlane.xlu0 %2479
        %2481 = vmax.xlane.f32.xlu0 %v2441
        %v2482 = vpop.xlane.xlu0 %2481
        %2483 = vmax.xlane.f32.xlu0 %v2442
        %v2484 = vpop.xlane.xlu0 %2483
        %2485 = vmax.xlane.f32.xlu0 %v2443
        %v2486 = vpop.xlane.xlu0 %2485
        %2487 = vmax.xlane.f32.xlu0 %v2444
        %v2488 = vpop.xlane.xlu0 %2487
        %2489 = vmax.xlane.f32.xlu0 %v2445
        %v2490 = vpop.xlane.xlu0 %2489
        %2491 = vmax.xlane.f32.xlu0 %v2446
        %v2492 = vpop.xlane.xlu0 %2491
        %2493 = vmax.xlane.f32.xlu0 %v2447
        %v2494 = vpop.xlane.xlu0 %2493
        %2495 = vmax.xlane.f32.xlu0 %v2448
        %v2496 = vpop.xlane.xlu0 %2495
        %v2497 = vmax.f32 %v2449, %v2466
        %v2498 = vmax.f32 %v2450, %v2468
        %v2499 = vmax.f32 %v2451, %v2470
        %v2500 = vmax.f32 %v2452, %v2472
        %v2501 = vmax.f32 %v2453, %v2474
        %v2502 = vmax.f32 %v2454, %v2476
        %v2503 = vmax.f32 %v2455, %v2478
        %v2504 = vmax.f32 %v2456, %v2480
        %v2505 = vmax.f32 %v2457, %v2482
        %v2506 = vmax.f32 %v2458, %v2484
        %v2507 = vmax.f32 %v2459, %v2486
        %v2508 = vmax.f32 %v2460, %v2488
        %v2509 = vmax.f32 %v2461, %v2490
        %v2510 = vmax.f32 %v2462, %v2492
        %v2511 = vmax.f32 %v2463, %v2494
        %v2512 = vmax.f32 %v2464, %v2496
        %v2513 = vsub.f32 %v2449, %v2497
        %v2514 = vsub.f32 %v2450, %v2498
        %v2515 = vsub.f32 %v2451, %v2499
        %v2516 = vsub.f32 %v2452, %v2500
        %v2517 = vsub.f32 %v2453, %v2501
        %v2518 = vsub.f32 %v2454, %v2502
        %v2519 = vsub.f32 %v2455, %v2503
        %v2520 = vsub.f32 %v2456, %v2504
        %v2521 = vsub.f32 %v2457, %v2505
        %v2522 = vsub.f32 %v2458, %v2506
        %v2523 = vsub.f32 %v2459, %v2507
        %v2524 = vsub.f32 %v2460, %v2508
        %v2525 = vsub.f32 %v2461, %v2509
        %v2526 = vsub.f32 %v2462, %v2510
        %v2527 = vsub.f32 %v2463, %v2511
        %v2528 = vsub.f32 %v2464, %v2512
        %v2529 = vmul.f32 %v2513, 1.442695
        %v2530 = vpow.pop %v2529
        %v2531 = vmul.f32 %v2514, 1.442695
        %v2532 = vpow.pop %v2531
        %v2533 = vmul.f32 %v2515, 1.442695
        %v2534 = vpow.pop %v2533
        %v2535 = vmul.f32 %v2516, 1.442695
        %v2536 = vpow.pop %v2535
        %v2537 = vmul.f32 %v2517, 1.442695
        %v2538 = vpow.pop %v2537
        %v2539 = vmul.f32 %v2518, 1.442695
        %v2540 = vpow.pop %v2539
        %v2541 = vmul.f32 %v2519, 1.442695
        %v2542 = vpow.pop %v2541
        %v2543 = vmul.f32 %v2520, 1.442695
        %v2544 = vpow.pop %v2543
        %v2545 = vmul.f32 %v2521, 1.442695
        %v2546 = vpow.pop %v2545
        %v2547 = vmul.f32 %v2522, 1.442695
        %v2548 = vpow.pop %v2547
        %v2549 = vmul.f32 %v2523, 1.442695
        %v2550 = vpow.pop %v2549
        %v2551 = vmul.f32 %v2524, 1.442695
        %v2552 = vpow.pop %v2551
        %v2553 = vmul.f32 %v2525, 1.442695
        %v2554 = vpow.pop %v2553
        %v2555 = vmul.f32 %v2526, 1.442695
        %v2556 = vpow.pop %v2555
        %v2557 = vmul.f32 %v2527, 1.442695
        %v2558 = vpow.pop %v2557
        %v2559 = vmul.f32 %v2528, 1.442695
        %v2560 = vpow.pop %v2559
        %2562 = vset.pattern.permute.xlu0 2
        %2563 = vperm.xlu0 %2562, %v2497
        %v2564 = vpop.permute.xlu0 %2563
        %2567 = vset.pattern.permute.xlu0 2
        %2568 = vperm.xlu0 %2567, %v2498
        %v2569 = vpop.permute.xlu0 %2568
        %2572 = vset.pattern.permute.xlu0 2
        %2573 = vperm.xlu0 %2572, %v2499
        %v2574 = vpop.permute.xlu0 %2573
        %2577 = vset.pattern.permute.xlu0 2
        %2578 = vperm.xlu0 %2577, %v2500
        %v2579 = vpop.permute.xlu0 %2578
        %2582 = vset.pattern.permute.xlu0 2
        %2583 = vperm.xlu0 %2582, %v2501
        %v2584 = vpop.permute.xlu0 %2583
        %2587 = vset.pattern.permute.xlu0 2
        %2588 = vperm.xlu0 %2587, %v2502
        %v2589 = vpop.permute.xlu0 %2588
        %2592 = vset.pattern.permute.xlu0 2
        %2593 = vperm.xlu0 %2592, %v2503
        %v2594 = vpop.permute.xlu0 %2593
        %2597 = vset.pattern.permute.xlu0 2
        %2598 = vperm.xlu0 %2597, %v2504
        %v2599 = vpop.permute.xlu0 %2598
        %2602 = vset.pattern.permute.xlu0 2
        %2603 = vperm.xlu0 %2602, %v2505
        %v2604 = vpop.permute.xlu0 %2603
        %2607 = vset.pattern.permute.xlu0 2
        %2608 = vperm.xlu0 %2607, %v2506
        %v2609 = vpop.permute.xlu0 %2608
        %2612 = vset.pattern.permute.xlu0 2
        %2613 = vperm.xlu0 %2612, %v2507
        %v2614 = vpop.permute.xlu0 %2613
        %2617 = vset.pattern.permute.xlu0 2
        %2618 = vperm.xlu0 %2617, %v2508
        %v2619 = vpop.permute.xlu0 %2618
        %2622 = vset.pattern.permute.xlu0 2
        %2623 = vperm.xlu0 %2622, %v2509
        %v2624 = vpop.permute.xlu0 %2623
        %2627 = vset.pattern.permute.xlu0 2
        %2628 = vperm.xlu0 %2627, %v2510
        %v2629 = vpop.permute.xlu0 %2628
        %2632 = vset.pattern.permute.xlu0 2
        %2633 = vperm.xlu0 %2632, %v2511
        %v2634 = vpop.permute.xlu0 %2633
        %2637 = vset.pattern.permute.xlu0 2
        %2638 = vperm.xlu0 %2637, %v2512
        %v2639 = vpop.permute.xlu0 %2638
        %v2641 = vsub.f32 %v2433, %v2564
        %v2642 = vsub.f32 %v2434, %v2569
        %v2643 = vsub.f32 %v2435, %v2574
        %v2644 = vsub.f32 %v2436, %v2579
        %v2645 = vsub.f32 %v2437, %v2584
        %v2646 = vsub.f32 %v2438, %v2589
        %v2647 = vsub.f32 %v2439, %v2594
        %v2648 = vsub.f32 %v2440, %v2599
        %v2649 = vsub.f32 %v2441, %v2604
        %v2650 = vsub.f32 %v2442, %v2609
        %v2651 = vsub.f32 %v2443, %v2614
        %v2652 = vsub.f32 %v2444, %v2619
        %v2653 = vsub.f32 %v2445, %v2624
        %v2654 = vsub.f32 %v2446, %v2629
        %v2655 = vsub.f32 %v2447, %v2634
        %v2656 = vsub.f32 %v2448, %v2639
        %v2657 = vmul.f32 %v2641, 1.442695
        %v2658 = vpow.pop %v2657
        %v2659 = vmul.f32 %v2642, 1.442695
        %v2660 = vpow.pop %v2659
        %v2661 = vmul.f32 %v2643, 1.442695
        %v2662 = vpow.pop %v2661
        %v2663 = vmul.f32 %v2644, 1.442695
        %v2664 = vpow.pop %v2663
        %v2665 = vmul.f32 %v2645, 1.442695
        %v2666 = vpow.pop %v2665
        %v2667 = vmul.f32 %v2646, 1.442695
        %v2668 = vpow.pop %v2667
        %v2669 = vmul.f32 %v2647, 1.442695
        %v2670 = vpow.pop %v2669
        %v2671 = vmul.f32 %v2648, 1.442695
        %v2672 = vpow.pop %v2671
        %v2673 = vmul.f32 %v2649, 1.442695
        %v2674 = vpow.pop %v2673
        %v2675 = vmul.f32 %v2650, 1.442695
        %v2676 = vpow.pop %v2675
        %v2677 = vmul.f32 %v2651, 1.442695
        %v2678 = vpow.pop %v2677
        %v2679 = vmul.f32 %v2652, 1.442695
        %v2680 = vpow.pop %v2679
        %v2681 = vmul.f32 %v2653, 1.442695
        %v2682 = vpow.pop %v2681
        %v2683 = vmul.f32 %v2654, 1.442695
        %v2684 = vpow.pop %v2683
        %v2685 = vmul.f32 %v2655, 1.442695
        %v2686 = vpow.pop %v2685
        %v2687 = vmul.f32 %v2656, 1.442695
        %v2688 = vpow.pop %v2687
        %v2689 = vld [vmem:[#allocation3] sm:$0xff]
        %v2690 = vld [vmem:[#allocation3 + $0x8] sm:$0xff]
        %v2691 = vld [vmem:[#allocation3 + $0x10] sm:$0xff]
        %v2692 = vld [vmem:[#allocation3 + $0x18] sm:$0xff]
        %v2693 = vld [vmem:[#allocation3 + $0x20] sm:$0xff]
        %v2694 = vld [vmem:[#allocation3 + $0x28] sm:$0xff]
        %v2695 = vld [vmem:[#allocation3 + $0x30] sm:$0xff]
        %v2696 = vld [vmem:[#allocation3 + $0x38] sm:$0xff]
        %v2697 = vld [vmem:[#allocation3 + $0x40] sm:$0xff]
        %v2698 = vld [vmem:[#allocation3 + $0x48] sm:$0xff]
        %v2699 = vld [vmem:[#allocation3 + $0x50] sm:$0xff]
        %v2700 = vld [vmem:[#allocation3 + $0x58] sm:$0xff]
        %v2701 = vld [vmem:[#allocation3 + $0x60] sm:$0xff]
        %v2702 = vld [vmem:[#allocation3 + $0x68] sm:$0xff]
        %v2703 = vld [vmem:[#allocation3 + $0x70] sm:$0xff]
        %v2704 = vld [vmem:[#allocation3 + $0x78] sm:$0xff]
        %v2705 = vmul.f32 %v2530, %v2689
        %v2706 = vmul.f32 %v2532, %v2690
        %v2707 = vmul.f32 %v2534, %v2691
        %v2708 = vmul.f32 %v2536, %v2692
        %v2709 = vmul.f32 %v2538, %v2693
        %v2710 = vmul.f32 %v2540, %v2694
        %v2711 = vmul.f32 %v2542, %v2695
        %v2712 = vmul.f32 %v2544, %v2696
        %v2713 = vmul.f32 %v2546, %v2697
        %v2714 = vmul.f32 %v2548, %v2698
        %v2715 = vmul.f32 %v2550, %v2699
        %v2716 = vmul.f32 %v2552, %v2700
        %v2717 = vmul.f32 %v2554, %v2701
        %v2718 = vmul.f32 %v2556, %v2702
        %v2719 = vmul.f32 %v2558, %v2703
        %v2720 = vmul.f32 %v2560, %v2704
        %2721 = vadd.xlane.f32.xlu0 %v2658
        %v2722 = vpop.xlane.xlu0 %2721
        %2723 = vadd.xlane.f32.xlu0 %v2660
        %v2724 = vpop.xlane.xlu0 %2723
        %2725 = vadd.xlane.f32.xlu0 %v2662
        %v2726 = vpop.xlane.xlu0 %2725
        %2727 = vadd.xlane.f32.xlu0 %v2664
        %v2728 = vpop.xlane.xlu0 %2727
        %2729 = vadd.xlane.f32.xlu0 %v2666
        %v2730 = vpop.xlane.xlu0 %2729
        %2731 = vadd.xlane.f32.xlu0 %v2668
        %v2732 = vpop.xlane.xlu0 %2731
        %2733 = vadd.xlane.f32.xlu0 %v2670
        %v2734 = vpop.xlane.xlu0 %2733
        %2735 = vadd.xlane.f32.xlu0 %v2672
        %v2736 = vpop.xlane.xlu0 %2735
        %2737 = vadd.xlane.f32.xlu0 %v2674
        %v2738 = vpop.xlane.xlu0 %2737
        %2739 = vadd.xlane.f32.xlu0 %v2676
        %v2740 = vpop.xlane.xlu0 %2739
        %2741 = vadd.xlane.f32.xlu0 %v2678
        %v2742 = vpop.xlane.xlu0 %2741
        %2743 = vadd.xlane.f32.xlu0 %v2680
        %v2744 = vpop.xlane.xlu0 %2743
        %2745 = vadd.xlane.f32.xlu0 %v2682
        %v2746 = vpop.xlane.xlu0 %2745
        %2747 = vadd.xlane.f32.xlu0 %v2684
        %v2748 = vpop.xlane.xlu0 %2747
        %2749 = vadd.xlane.f32.xlu0 %v2686
        %v2750 = vpop.xlane.xlu0 %2749
        %2751 = vadd.xlane.f32.xlu0 %v2688
        %v2752 = vpop.xlane.xlu0 %2751
        %v2753 = vadd.f32 %v2705, %v2722
        %v2754 = vadd.f32 %v2706, %v2724
        %v2755 = vadd.f32 %v2707, %v2726
        %v2756 = vadd.f32 %v2708, %v2728
        %v2757 = vadd.f32 %v2709, %v2730
        %v2758 = vadd.f32 %v2710, %v2732
        %v2759 = vadd.f32 %v2711, %v2734
        %v2760 = vadd.f32 %v2712, %v2736
        %v2761 = vadd.f32 %v2713, %v2738
        %v2762 = vadd.f32 %v2714, %v2740
        %v2763 = vadd.f32 %v2715, %v2742
        %v2764 = vadd.f32 %v2716, %v2744
        %v2765 = vadd.f32 %v2717, %v2746
        %v2766 = vadd.f32 %v2718, %v2748
        %v2767 = vadd.f32 %v2719, %v2750
        %v2768 = vadd.f32 %v2720, %v2752
        %vm2769 = vcmask 23568
        %2770 = vst.msk [vmem:[#allocation3] sm:$0xff] %vm2769, %v2753
        %2771 = vst.msk [vmem:[#allocation3 + $0x8] sm:$0xff] %vm2769, %v2754
        %2772 = vst.msk [vmem:[#allocation3 + $0x10] sm:$0xff] %vm2769, %v2755
        %2773 = vst.msk [vmem:[#allocation3 + $0x18] sm:$0xff] %vm2769, %v2756
        %2774 = vst.msk [vmem:[#allocation3 + $0x20] sm:$0xff] %vm2769, %v2757
        %2775 = vst.msk [vmem:[#allocation3 + $0x28] sm:$0xff] %vm2769, %v2758
        %2776 = vst.msk [vmem:[#allocation3 + $0x30] sm:$0xff] %vm2769, %v2759
        %2777 = vst.msk [vmem:[#allocation3 + $0x38] sm:$0xff] %vm2769, %v2760
        %2778 = vst.msk [vmem:[#allocation3 + $0x40] sm:$0xff] %vm2769, %v2761
        %2779 = vst.msk [vmem:[#allocation3 + $0x48] sm:$0xff] %vm2769, %v2762
        %2780 = vst.msk [vmem:[#allocation3 + $0x50] sm:$0xff] %vm2769, %v2763
        %2781 = vst.msk [vmem:[#allocation3 + $0x58] sm:$0xff] %vm2769, %v2764
        %2782 = vst.msk [vmem:[#allocation3 + $0x60] sm:$0xff] %vm2769, %v2765
        %2783 = vst.msk [vmem:[#allocation3 + $0x68] sm:$0xff] %vm2769, %v2766
        %2784 = vst.msk [vmem:[#allocation3 + $0x70] sm:$0xff] %vm2769, %v2767
        %2785 = vst.msk [vmem:[#allocation3 + $0x78] sm:$0xff] %vm2769, %v2768
        %v2786 = vpack.c.bf16 %v2660, %v2658
        %v2787 = vpack.c.bf16 %v2664, %v2662
        %v2788 = vpack.c.bf16 %v2668, %v2666
        %v2789 = vpack.c.bf16 %v2672, %v2670
        %v2790 = vpack.c.bf16 %v2676, %v2674
        %v2791 = vpack.c.bf16 %v2680, %v2678
        %v2792 = vpack.c.bf16 %v2684, %v2682
        %v2793 = vpack.c.bf16 %v2688, %v2686
        %v2794 = vld [vmem:[%s387] sm:$0xf]
        %v2795 = vld [vmem:[%s387 + $0x4] sm:$0xf]
        %v2796 = vld [vmem:[%s387 + $0x8] sm:$0xf]
        %v2797 = vld [vmem:[%s387 + $0xc] sm:$0xf]
        %v2798 = vld [vmem:[%s387 + $0x10] sm:$0xf]
        %v2799 = vld [vmem:[%s387 + $0x14] sm:$0xf]
        %v2800 = vld [vmem:[%s387 + $0x18] sm:$0xf]
        %v2801 = vld [vmem:[%s387 + $0x1c] sm:$0xf]
        %v2802 = vld [vmem:[%s387 + $0x20] sm:$0xf]
        %v2803 = vld [vmem:[%s387 + $0x24] sm:$0xf]
        %v2804 = vld [vmem:[%s387 + $0x28] sm:$0xf]
        %v2805 = vld [vmem:[%s387 + $0x2c] sm:$0xf]
        %v2806 = vld [vmem:[%s387 + $0x30] sm:$0xf]
        %v2807 = vld [vmem:[%s387 + $0x34] sm:$0xf]
        %v2808 = vld [vmem:[%s387 + $0x38] sm:$0xf]
        %v2809 = vld [vmem:[%s387 + $0x3c] sm:$0xf]
        %v2826 = vunpack.c.l.b16 %v2794
        %v2827 = vunpack.c.l.b16 %v2795
        %v2828 = vunpack.c.l.b16 %v2796
        %v2829 = vunpack.c.l.b16 %v2797
        %v2830 = vunpack.c.l.b16 %v2798
        %v2831 = vunpack.c.l.b16 %v2799
        %v2832 = vunpack.c.l.b16 %v2800
        %v2833 = vunpack.c.l.b16 %v2801
        %v2834 = vunpack.c.l.b16 %v2802
        %v2835 = vunpack.c.l.b16 %v2803
        %v2836 = vunpack.c.l.b16 %v2804
        %v2837 = vunpack.c.l.b16 %v2805
        %v2838 = vunpack.c.l.b16 %v2806
        %v2839 = vunpack.c.l.b16 %v2807
        %v2840 = vunpack.c.l.b16 %v2808
        %v2841 = vunpack.c.l.b16 %v2809
        %v2842 = vpack.c.b16 %v2827, %v2826
        %v2843 = vpack.c.b16 %v2829, %v2828
        %v2844 = vpack.c.b16 %v2831, %v2830
        %v2845 = vpack.c.b16 %v2833, %v2832
        %v2846 = vpack.c.b16 %v2835, %v2834
        %v2847 = vpack.c.b16 %v2837, %v2836
        %v2848 = vpack.c.b16 %v2839, %v2838
        %v2849 = vpack.c.b16 %v2841, %v2840
        %2850 = vrot.lane.b32.xlu0 %v2842, 96
        %v2851 = vpop.permute.xlu0 %2850
        %2852 = vrot.lane.b32.xlu0 %v2843, 96
        %v2853 = vpop.permute.xlu0 %2852
        %2854 = vrot.lane.b32.xlu0 %v2844, 96
        %v2855 = vpop.permute.xlu0 %2854
        %2856 = vrot.lane.b32.xlu0 %v2845, 96
        %v2857 = vpop.permute.xlu0 %2856
        %2858 = vrot.lane.b32.xlu0 %v2846, 96
        %v2859 = vpop.permute.xlu0 %2858
        %2860 = vrot.lane.b32.xlu0 %v2847, 96
        %v2861 = vpop.permute.xlu0 %2860
        %2862 = vrot.lane.b32.xlu0 %v2848, 96
        %v2863 = vpop.permute.xlu0 %2862
        %2864 = vrot.lane.b32.xlu0 %v2849, 96
        %v2865 = vpop.permute.xlu0 %2864
        %2874 = vmatprep.subr.bf16.mxu0 0
        %2875 = vmatpush1.bf16.msra.mxu0 %v2851
        %2876 = vmatprep.subr.bf16.mxu0 0
        %2877 = vmatpush1.bf16.msra.mxu0 %v2853
        %2878 = vmatprep.subr.bf16.mxu0 0
        %2879 = vmatpush1.bf16.msra.mxu0 %v2855
        %2880 = vmatprep.subr.bf16.mxu0 0
        %2881 = vmatpush1.bf16.msra.mxu0 %v2857
        %2882 = vmatprep.subr.bf16.mxu0 0
        %2883 = vmatpush1.bf16.msra.mxu0 %v2859
        %2884 = vmatprep.subr.bf16.mxu0 0
        %2885 = vmatpush1.bf16.msra.mxu0 %v2861
        %2886 = vmatprep.subr.bf16.mxu0 0
        %2887 = vmatpush1.bf16.msra.mxu0 %v2863
        %2888 = vmatprep.subr.bf16.mxu0 0
        %2889 = vmatpush1.bf16.msra.mxu0 %v2865
        %2890 = vmatprep.subr.bf16.mxu0 0
        %2891 = vmatpush1.bf16.msra.mxu0 0
        %2892 = vmatprep.subr.bf16.mxu0 0
        %2893 = vmatpush1.bf16.msra.mxu0 0
        %2894 = vmatprep.subr.bf16.mxu0 0
        %2895 = vmatpush1.bf16.msra.mxu0 0
        %2896 = vmatprep.subr.bf16.mxu0 0
        %2897 = vmatpush1.bf16.msra.mxu0 0
        %2898 = vmatprep.subr.bf16.mxu0 0
        %2899 = vmatpush1.bf16.msra.mxu0 0
        %2900 = vmatprep.subr.bf16.mxu0 0
        %2901 = vmatpush1.bf16.msra.mxu0 0
        %2902 = vmatprep.subr.bf16.mxu0 0
        %2903 = vmatpush1.bf16.msra.mxu0 0
        %2904 = vmatprep.subr.bf16.mxu0 0
        %2905 = vmatpush1.bf16.msra.mxu0 0
        %2906 = vmatprep.mubr.bf16.mxu0 0
        %2907 = vmatmul.mubr.bf16.gmra.mrb[0].mxu0 %v2786
        %v2908 = vpop.f32.mrb[0].mxu0
        %v2909 = vadd.f32 0.0, %v2908
        %v2910 = vpop.f32.mrb[0].mxu0
        %v2911 = vpop.f32.mrb[0].mxu0
        %v2912 = vadd.f32 0.0, %v2911
        %v2913 = vpop.f32.mrb[0].mxu0
        %2914 = vmatprep.mubr.bf16.mxu0 0
        %2915 = vmatmul.mubr.bf16.gmra.mrb[0].mxu0 %v2787
        %v2916 = vpop.f32.mrb[0].mxu0
        %v2917 = vadd.f32 0.0, %v2916
        %v2918 = vpop.f32.mrb[0].mxu0
        %v2919 = vpop.f32.mrb[0].mxu0
        %v2920 = vadd.f32 0.0, %v2919
        %v2921 = vpop.f32.mrb[0].mxu0
        %2922 = vmatprep.mubr.bf16.mxu0 0
        %2923 = vmatmul.mubr.bf16.gmra.mrb[0].mxu0 %v2788
        %v2924 = vpop.f32.mrb[0].mxu0
        %v2925 = vadd.f32 0.0, %v2924
        %v2926 = vpop.f32.mrb[0].mxu0
        %v2927 = vpop.f32.mrb[0].mxu0
        %v2928 = vadd.f32 0.0, %v2927
        %v2929 = vpop.f32.mrb[0].mxu0
        %2930 = vmatprep.mubr.bf16.mxu0 0
        %2931 = vmatmul.mubr.bf16.gmra.mrb[0].mxu0 %v2789
        %v2932 = vpop.f32.mrb[0].mxu0
        %v2933 = vadd.f32 0.0, %v2932
        %v2934 = vpop.f32.mrb[0].mxu0
        %v2935 = vpop.f32.mrb[0].mxu0
        %v2936 = vadd.f32 0.0, %v2935
        %v2937 = vpop.f32.mrb[0].mxu0
        %2938 = vmatprep.mubr.bf16.mxu0 0
        %2939 = vmatmul.mubr.bf16.gmra.mrb[0].mxu0 %v2790
        %v2940 = vpop.f32.mrb[0].mxu0
        %v2941 = vadd.f32 0.0, %v2940
        %v2942 = vpop.f32.mrb[0].mxu0
        %v2943 = vpop.f32.mrb[0].mxu0
        %v2944 = vadd.f32 0.0, %v2943
        %v2945 = vpop.f32.mrb[0].mxu0
        %2946 = vmatprep.mubr.bf16.mxu0 0
        %2947 = vmatmul.mubr.bf16.gmra.mrb[0].mxu0 %v2791
        %v2948 = vpop.f32.mrb[0].mxu0
        %v2949 = vadd.f32 0.0, %v2948
        %v2950 = vpop.f32.mrb[0].mxu0
        %v2951 = vpop.f32.mrb[0].mxu0
        %v2952 = vadd.f32 0.0, %v2951
        %v2953 = vpop.f32.mrb[0].mxu0
        %2954 = vmatprep.mubr.bf16.mxu0 0
        %2955 = vmatmul.mubr.bf16.gmra.mrb[0].mxu0 %v2792
        %v2956 = vpop.f32.mrb[0].mxu0
        %v2957 = vadd.f32 0.0, %v2956
        %v2958 = vpop.f32.mrb[0].mxu0
        %v2959 = vpop.f32.mrb[0].mxu0
        %v2960 = vadd.f32 0.0, %v2959
        %v2961 = vpop.f32.mrb[0].mxu0
        %2962 = vmatprep.mubr.bf16.mxu0 0
        %2963 = vmatmul.mubr.bf16.gmra.mrb[0].mxu0 %v2793
        %v2964 = vpop.f32.mrb[0].mxu0
        %v2965 = vadd.f32 0.0, %v2964
        %v2966 = vpop.f32.mrb[0].mxu0
        %v2967 = vpop.f32.mrb[0].mxu0
        %v2968 = vadd.f32 0.0, %v2967
        %v2969 = vpop.f32.mrb[0].mxu0
        %2970 = vdwg.mxu0
        %v2971 = vld [vmem:[#allocation4] sm:$0xff]
        %v2972 = vld [vmem:[#allocation4 + $0x8] sm:$0xff]
        %v2973 = vld [vmem:[#allocation4 + $0x10] sm:$0xff]
        %v2974 = vld [vmem:[#allocation4 + $0x18] sm:$0xff]
        %v2975 = vld [vmem:[#allocation4 + $0x20] sm:$0xff]
        %v2976 = vld [vmem:[#allocation4 + $0x28] sm:$0xff]
        %v2977 = vld [vmem:[#allocation4 + $0x30] sm:$0xff]
        %v2978 = vld [vmem:[#allocation4 + $0x38] sm:$0xff]
        %v2979 = vld [vmem:[#allocation4 + $0x40] sm:$0xff]
        %v2980 = vld [vmem:[#allocation4 + $0x48] sm:$0xff]
        %v2981 = vld [vmem:[#allocation4 + $0x50] sm:$0xff]
        %v2982 = vld [vmem:[#allocation4 + $0x58] sm:$0xff]
        %v2983 = vld [vmem:[#allocation4 + $0x60] sm:$0xff]
        %v2984 = vld [vmem:[#allocation4 + $0x68] sm:$0xff]
        %v2985 = vld [vmem:[#allocation4 + $0x70] sm:$0xff]
        %v2986 = vld [vmem:[#allocation4 + $0x78] sm:$0xff]
        %2988 = vset.pattern.permute.xlu0 2
        %2989 = vperm.xlu0 %2988, %v2530
        %v2990 = vpop.permute.xlu0 %2989
        %2993 = vset.pattern.permute.xlu0 2
        %2994 = vperm.xlu0 %2993, %v2532
        %v2995 = vpop.permute.xlu0 %2994
        %2998 = vset.pattern.permute.xlu0 2
        %2999 = vperm.xlu0 %2998, %v2534
        %v3000 = vpop.permute.xlu0 %2999
        %3003 = vset.pattern.permute.xlu0 2
        %3004 = vperm.xlu0 %3003, %v2536
        %v3005 = vpop.permute.xlu0 %3004
        %3008 = vset.pattern.permute.xlu0 2
        %3009 = vperm.xlu0 %3008, %v2538
        %v3010 = vpop.permute.xlu0 %3009
        %3013 = vset.pattern.permute.xlu0 2
        %3014 = vperm.xlu0 %3013, %v2540
        %v3015 = vpop.permute.xlu0 %3014
        %3018 = vset.pattern.permute.xlu0 2
        %3019 = vperm.xlu0 %3018, %v2542
        %v3020 = vpop.permute.xlu0 %3019
        %3023 = vset.pattern.permute.xlu0 2
        %3024 = vperm.xlu0 %3023, %v2544
        %v3025 = vpop.permute.xlu0 %3024
        %3028 = vset.pattern.permute.xlu0 2
        %3029 = vperm.xlu0 %3028, %v2546
        %v3030 = vpop.permute.xlu0 %3029
        %3033 = vset.pattern.permute.xlu0 2
        %3034 = vperm.xlu0 %3033, %v2548
        %v3035 = vpop.permute.xlu0 %3034
        %3038 = vset.pattern.permute.xlu0 2
        %3039 = vperm.xlu0 %3038, %v2550
        %v3040 = vpop.permute.xlu0 %3039
        %3043 = vset.pattern.permute.xlu0 2
        %3044 = vperm.xlu0 %3043, %v2552
        %v3045 = vpop.permute.xlu0 %3044
        %3048 = vset.pattern.permute.xlu0 2
        %3049 = vperm.xlu0 %3048, %v2554
        %v3050 = vpop.permute.xlu0 %3049
        %3053 = vset.pattern.permute.xlu0 2
        %3054 = vperm.xlu0 %3053, %v2556
        %v3055 = vpop.permute.xlu0 %3054
        %3058 = vset.pattern.permute.xlu0 2
        %3059 = vperm.xlu0 %3058, %v2558
        %v3060 = vpop.permute.xlu0 %3059
        %3063 = vset.pattern.permute.xlu0 2
        %3064 = vperm.xlu0 %3063, %v2560
        %v3065 = vpop.permute.xlu0 %3064
        %v3067 = vmul.f32 %v2990, %v2971
        %v3068 = vmul.f32 %v2995, %v2972
        %v3069 = vmul.f32 %v3000, %v2973
        %v3070 = vmul.f32 %v3005, %v2974
        %v3071 = vmul.f32 %v3010, %v2975
        %v3072 = vmul.f32 %v3015, %v2976
        %v3073 = vmul.f32 %v3020, %v2977
        %v3074 = vmul.f32 %v3025, %v2978
        %v3075 = vmul.f32 %v3030, %v2979
        %v3076 = vmul.f32 %v3035, %v2980
        %v3077 = vmul.f32 %v3040, %v2981
        %v3078 = vmul.f32 %v3045, %v2982
        %v3079 = vmul.f32 %v3050, %v2983
        %v3080 = vmul.f32 %v3055, %v2984
        %v3081 = vmul.f32 %v3060, %v2985
        %v3082 = vmul.f32 %v3065, %v2986
        %3099 = vrot.lane.b32.xlu0 %v2909, 32
        %v3100 = vpop.permute.xlu0 %3099
        %3101 = vrot.lane.b32.xlu0 %v2912, 32
        %v3102 = vpop.permute.xlu0 %3101
        %3103 = vrot.lane.b32.xlu0 %v2917, 32
        %v3104 = vpop.permute.xlu0 %3103
        %3105 = vrot.lane.b32.xlu0 %v2920, 32
        %v3106 = vpop.permute.xlu0 %3105
        %3107 = vrot.lane.b32.xlu0 %v2925, 32
        %v3108 = vpop.permute.xlu0 %3107
        %3109 = vrot.lane.b32.xlu0 %v2928, 32
        %v3110 = vpop.permute.xlu0 %3109
        %3111 = vrot.lane.b32.xlu0 %v2933, 32
        %v3112 = vpop.permute.xlu0 %3111
        %3113 = vrot.lane.b32.xlu0 %v2936, 32
        %v3114 = vpop.permute.xlu0 %3113
        %3115 = vrot.lane.b32.xlu0 %v2941, 32
        %v3116 = vpop.permute.xlu0 %3115
        %3117 = vrot.lane.b32.xlu0 %v2944, 32
        %v3118 = vpop.permute.xlu0 %3117
        %3119 = vrot.lane.b32.xlu0 %v2949, 32
        %v3120 = vpop.permute.xlu0 %3119
        %3121 = vrot.lane.b32.xlu0 %v2952, 32
        %v3122 = vpop.permute.xlu0 %3121
        %3123 = vrot.lane.b32.xlu0 %v2957, 32
        %v3124 = vpop.permute.xlu0 %3123
        %3125 = vrot.lane.b32.xlu0 %v2960, 32
        %v3126 = vpop.permute.xlu0 %3125
        %3127 = vrot.lane.b32.xlu0 %v2965, 32
        %v3128 = vpop.permute.xlu0 %3127
        %3129 = vrot.lane.b32.xlu0 %v2968, 32
        %v3130 = vpop.permute.xlu0 %3129
        %v3147 = vadd.f32 %v3067, %v3100
        %v3148 = vadd.f32 %v3068, %v3102
        %v3149 = vadd.f32 %v3069, %v3104
        %v3150 = vadd.f32 %v3070, %v3106
        %v3151 = vadd.f32 %v3071, %v3108
        %v3152 = vadd.f32 %v3072, %v3110
        %v3153 = vadd.f32 %v3073, %v3112
        %v3154 = vadd.f32 %v3074, %v3114
        %v3155 = vadd.f32 %v3075, %v3116
        %v3156 = vadd.f32 %v3076, %v3118
        %v3157 = vadd.f32 %v3077, %v3120
        %v3158 = vadd.f32 %v3078, %v3122
        %v3159 = vadd.f32 %v3079, %v3124
        %v3160 = vadd.f32 %v3080, %v3126
        %v3161 = vadd.f32 %v3081, %v3128
        %v3162 = vadd.f32 %v3082, %v3130
        %vm3163 = vcmask 392448
        %3164 = vst.msk [vmem:[#allocation4] sm:$0xff] %vm3163, %v3147
        %3165 = vst.msk [vmem:[#allocation4 + $0x8] sm:$0xff] %vm3163, %v3148
        %3166 = vst.msk [vmem:[#allocation4 + $0x10] sm:$0xff] %vm3163, %v3149
        %3167 = vst.msk [vmem:[#allocation4 + $0x18] sm:$0xff] %vm3163, %v3150
        %3168 = vst.msk [vmem:[#allocation4 + $0x20] sm:$0xff] %vm3163, %v3151
        %3169 = vst.msk [vmem:[#allocation4 + $0x28] sm:$0xff] %vm3163, %v3152
        %3170 = vst.msk [vmem:[#allocation4 + $0x30] sm:$0xff] %vm3163, %v3153
        %3171 = vst.msk [vmem:[#allocation4 + $0x38] sm:$0xff] %vm3163, %v3154
        %3172 = vst.msk [vmem:[#allocation4 + $0x40] sm:$0xff] %vm3163, %v3155
        %3173 = vst.msk [vmem:[#allocation4 + $0x48] sm:$0xff] %vm3163, %v3156
        %3174 = vst.msk [vmem:[#allocation4 + $0x50] sm:$0xff] %vm3163, %v3157
        %3175 = vst.msk [vmem:[#allocation4 + $0x58] sm:$0xff] %vm3163, %v3158
        %3176 = vst.msk [vmem:[#allocation4 + $0x60] sm:$0xff] %vm3163, %v3159
        %3177 = vst.msk [vmem:[#allocation4 + $0x68] sm:$0xff] %vm3163, %v3160
        %3178 = vst.msk [vmem:[#allocation4 + $0x70] sm:$0xff] %vm3163, %v3161
        %3179 = vst.msk [vmem:[#allocation4 + $0x78] sm:$0xff] %vm3163, %v3162
        %3180 = vst.msk [vmem:[#allocation2] sm:$0xff] %vm2769, %v2497
        %3181 = vst.msk [vmem:[#allocation2 + $0x8] sm:$0xff] %vm2769, %v2498
        %3182 = vst.msk [vmem:[#allocation2 + $0x10] sm:$0xff] %vm2769, %v2499
        %3183 = vst.msk [vmem:[#allocation2 + $0x18] sm:$0xff] %vm2769, %v2500
        %3184 = vst.msk [vmem:[#allocation2 + $0x20] sm:$0xff] %vm2769, %v2501
        %3185 = vst.msk [vmem:[#allocation2 + $0x28] sm:$0xff] %vm2769, %v2502
        %3186 = vst.msk [vmem:[#allocation2 + $0x30] sm:$0xff] %vm2769, %v2503
        %3187 = vst.msk [vmem:[#allocation2 + $0x38] sm:$0xff] %vm2769, %v2504
        %3188 = vst.msk [vmem:[#allocation2 + $0x40] sm:$0xff] %vm2769, %v2505
        %3189 = vst.msk [vmem:[#allocation2 + $0x48] sm:$0xff] %vm2769, %v2506
        %3190 = vst.msk [vmem:[#allocation2 + $0x50] sm:$0xff] %vm2769, %v2507
        %3191 = vst.msk [vmem:[#allocation2 + $0x58] sm:$0xff] %vm2769, %v2508
        %3192 = vst.msk [vmem:[#allocation2 + $0x60] sm:$0xff] %vm2769, %v2509
        %3193 = vst.msk [vmem:[#allocation2 + $0x68] sm:$0xff] %vm2769, %v2510
        %3194 = vst.msk [vmem:[#allocation2 + $0x70] sm:$0xff] %vm2769, %v2511
        %3195 = vst.msk [vmem:[#allocation2 + $0x78] sm:$0xff] %vm2769, %v2512
        %v3196 = vld [vmem:[%s393] sm:$0xff]
        %v3197 = vld [vmem:[%s393 + $0x8] sm:$0xff]
        %v3198 = vld [vmem:[%s393 + $0x10] sm:$0xff]
        %v3199 = vld [vmem:[%s393 + $0x18] sm:$0xff]
        %v3200 = vld [vmem:[%s393 + $0x20] sm:$0xff]
        %v3201 = vld [vmem:[%s393 + $0x28] sm:$0xff]
        %v3202 = vld [vmem:[%s393 + $0x30] sm:$0xff]
        %v3203 = vld [vmem:[%s393 + $0x38] sm:$0xff]
        %v3204 = vld [vmem:[%s393 + $0x40] sm:$0xff]
        %v3205 = vld [vmem:[%s393 + $0x48] sm:$0xff]
        %v3206 = vld [vmem:[%s393 + $0x50] sm:$0xff]
        %v3207 = vld [vmem:[%s393 + $0x58] sm:$0xff]
        %v3208 = vld [vmem:[%s393 + $0x60] sm:$0xff]
        %v3209 = vld [vmem:[%s393 + $0x68] sm:$0xff]
        %v3210 = vld [vmem:[%s393 + $0x70] sm:$0xff]
        %v3211 = vld [vmem:[%s393 + $0x78] sm:$0xff]
        %v3212 = vld [vmem:[%s398 + $0x3] sm:$0x1]
        %3214 = vset.pattern.permute.xlu0 3
        %3215 = vperm.xlu0 %3214, %v3196
        %v3216 = vpop.permute.xlu0 %3215
        %3219 = vset.pattern.permute.xlu0 3
        %3220 = vperm.xlu0 %3219, %v3197
        %v3221 = vpop.permute.xlu0 %3220
        %3224 = vset.pattern.permute.xlu0 3
        %3225 = vperm.xlu0 %3224, %v3198
        %v3226 = vpop.permute.xlu0 %3225
        %3229 = vset.pattern.permute.xlu0 3
        %3230 = vperm.xlu0 %3229, %v3199
        %v3231 = vpop.permute.xlu0 %3230
        %3234 = vset.pattern.permute.xlu0 3
        %3235 = vperm.xlu0 %3234, %v3200
        %v3236 = vpop.permute.xlu0 %3235
        %3239 = vset.pattern.permute.xlu0 3
        %3240 = vperm.xlu0 %3239, %v3201
        %v3241 = vpop.permute.xlu0 %3240
        %3244 = vset.pattern.permute.xlu0 3
        %3245 = vperm.xlu0 %3244, %v3202
        %v3246 = vpop.permute.xlu0 %3245
        %3249 = vset.pattern.permute.xlu0 3
        %3250 = vperm.xlu0 %3249, %v3203
        %v3251 = vpop.permute.xlu0 %3250
        %3254 = vset.pattern.permute.xlu0 3
        %3255 = vperm.xlu0 %3254, %v3204
        %v3256 = vpop.permute.xlu0 %3255
        %3259 = vset.pattern.permute.xlu0 3
        %3260 = vperm.xlu0 %3259, %v3205
        %v3261 = vpop.permute.xlu0 %3260
        %3264 = vset.pattern.permute.xlu0 3
        %3265 = vperm.xlu0 %3264, %v3206
        %v3266 = vpop.permute.xlu0 %3265
        %3269 = vset.pattern.permute.xlu0 3
        %3270 = vperm.xlu0 %3269, %v3207
        %v3271 = vpop.permute.xlu0 %3270
        %3274 = vset.pattern.permute.xlu0 3
        %3275 = vperm.xlu0 %3274, %v3208
        %v3276 = vpop.permute.xlu0 %3275
        %3279 = vset.pattern.permute.xlu0 3
        %3280 = vperm.xlu0 %3279, %v3209
        %v3281 = vpop.permute.xlu0 %3280
        %3284 = vset.pattern.permute.xlu0 3
        %3285 = vperm.xlu0 %3284, %v3210
        %v3286 = vpop.permute.xlu0 %3285
        %3289 = vset.pattern.permute.xlu0 3
        %3290 = vperm.xlu0 %3289, %v3211
        %v3291 = vpop.permute.xlu0 %3290
        %v3293 = vlaneseq
        %v3294 = vshrl.u32 %v3293, 7
        %v3295 = vsub.s32 0, %v3294
        %v3296 = vrot.slane %v3212, %v3295
        %v3297 = vadd.f32 %v3216, %v3296
        %v3298 = vadd.f32 %v3221, %v3296
        %v3299 = vadd.f32 %v3226, %v3296
        %v3300 = vadd.f32 %v3231, %v3296
        %v3301 = vadd.f32 %v3236, %v3296
        %v3302 = vadd.f32 %v3241, %v3296
        %v3303 = vadd.f32 %v3246, %v3296
        %v3304 = vadd.f32 %v3251, %v3296
        %v3305 = vadd.f32 %v3256, %v3296
        %v3306 = vadd.f32 %v3261, %v3296
        %v3307 = vadd.f32 %v3266, %v3296
        %v3308 = vadd.f32 %v3271, %v3296
        %v3309 = vadd.f32 %v3276, %v3296
        %v3310 = vadd.f32 %v3281, %v3296
        %v3311 = vadd.f32 %v3286, %v3296
        %v3312 = vadd.f32 %v3291, %v3296
        %vm3313 = vcmp.gt.f32.partialorder %v3297, 0.0
        %vm3314 = vcmp.gt.f32.partialorder %v3298, 0.0
        %vm3315 = vcmp.gt.f32.partialorder %v3299, 0.0
        %vm3316 = vcmp.gt.f32.partialorder %v3300, 0.0
        %vm3317 = vcmp.gt.f32.partialorder %v3301, 0.0
        %vm3318 = vcmp.gt.f32.partialorder %v3302, 0.0
        %vm3319 = vcmp.gt.f32.partialorder %v3303, 0.0
        %vm3320 = vcmp.gt.f32.partialorder %v3304, 0.0
        %vm3321 = vcmp.gt.f32.partialorder %v3305, 0.0
        %vm3322 = vcmp.gt.f32.partialorder %v3306, 0.0
        %vm3323 = vcmp.gt.f32.partialorder %v3307, 0.0
        %vm3324 = vcmp.gt.f32.partialorder %v3308, 0.0
        %vm3325 = vcmp.gt.f32.partialorder %v3309, 0.0
        %vm3326 = vcmp.gt.f32.partialorder %v3310, 0.0
        %vm3327 = vcmp.gt.f32.partialorder %v3311, 0.0
        %vm3328 = vcmp.gt.f32.partialorder %v3312, 0.0
        %v3329 = vmul.f32 %v3297, 0.2
        %v3330 = vmul.f32 %v3298, 0.2
        %v3331 = vmul.f32 %v3299, 0.2
        %v3332 = vmul.f32 %v3300, 0.2
        %v3333 = vmul.f32 %v3301, 0.2
        %v3334 = vmul.f32 %v3302, 0.2
        %v3335 = vmul.f32 %v3303, 0.2
        %v3336 = vmul.f32 %v3304, 0.2
        %v3337 = vmul.f32 %v3305, 0.2
        %v3338 = vmul.f32 %v3306, 0.2
        %v3339 = vmul.f32 %v3307, 0.2
        %v3340 = vmul.f32 %v3308, 0.2
        %v3341 = vmul.f32 %v3309, 0.2
        %v3342 = vmul.f32 %v3310, 0.2
        %v3343 = vmul.f32 %v3311, 0.2
        %v3344 = vmul.f32 %v3312, 0.2
        %v3345 = vsel %vm3313, %v3297, %v3329
        %v3346 = vsel %vm3314, %v3298, %v3330
        %v3347 = vsel %vm3315, %v3299, %v3331
        %v3348 = vsel %vm3316, %v3300, %v3332
        %v3349 = vsel %vm3317, %v3301, %v3333
        %v3350 = vsel %vm3318, %v3302, %v3334
        %v3351 = vsel %vm3319, %v3303, %v3335
        %v3352 = vsel %vm3320, %v3304, %v3336
        %v3353 = vsel %vm3321, %v3305, %v3337
        %v3354 = vsel %vm3322, %v3306, %v3338
        %v3355 = vsel %vm3323, %v3307, %v3339
        %v3356 = vsel %vm3324, %v3308, %v3340
        %v3357 = vsel %vm3325, %v3309, %v3341
        %v3358 = vsel %vm3326, %v3310, %v3342
        %v3359 = vsel %vm3327, %v3311, %v3343
        %v3360 = vsel %vm3328, %v3312, %v3344
        %v3361 = vadd.f32 %v3345, %v476
        %v3362 = vadd.f32 %v3346, %v477
        %v3363 = vadd.f32 %v3347, %v478
        %v3364 = vadd.f32 %v3348, %v479
        %v3365 = vadd.f32 %v3349, %v480
        %v3366 = vadd.f32 %v3350, %v481
        %v3367 = vadd.f32 %v3351, %v482
        %v3368 = vadd.f32 %v3352, %v483
        %v3369 = vadd.f32 %v3353, %v484
        %v3370 = vadd.f32 %v3354, %v485
        %v3371 = vadd.f32 %v3355, %v486
        %v3372 = vadd.f32 %v3356, %v487
        %v3373 = vadd.f32 %v3357, %v488
        %v3374 = vadd.f32 %v3358, %v489
        %v3375 = vadd.f32 %v3359, %v490
        %v3376 = vadd.f32 %v3360, %v491
        %v3377 = vld [vmem:[#allocation2] sm:$0xff]
        %v3378 = vld [vmem:[#allocation2 + $0x8] sm:$0xff]
        %v3379 = vld [vmem:[#allocation2 + $0x10] sm:$0xff]
        %v3380 = vld [vmem:[#allocation2 + $0x18] sm:$0xff]
        %v3381 = vld [vmem:[#allocation2 + $0x20] sm:$0xff]
        %v3382 = vld [vmem:[#allocation2 + $0x28] sm:$0xff]
        %v3383 = vld [vmem:[#allocation2 + $0x30] sm:$0xff]
        %v3384 = vld [vmem:[#allocation2 + $0x38] sm:$0xff]
        %v3385 = vld [vmem:[#allocation2 + $0x40] sm:$0xff]
        %v3386 = vld [vmem:[#allocation2 + $0x48] sm:$0xff]
        %v3387 = vld [vmem:[#allocation2 + $0x50] sm:$0xff]
        %v3388 = vld [vmem:[#allocation2 + $0x58] sm:$0xff]
        %v3389 = vld [vmem:[#allocation2 + $0x60] sm:$0xff]
        %v3390 = vld [vmem:[#allocation2 + $0x68] sm:$0xff]
        %v3391 = vld [vmem:[#allocation2 + $0x70] sm:$0xff]
        %v3392 = vld [vmem:[#allocation2 + $0x78] sm:$0xff]
        %3393 = vmax.xlane.f32.xlu0 %v3361
        %v3394 = vpop.xlane.xlu0 %3393
        %3395 = vmax.xlane.f32.xlu0 %v3362
        %v3396 = vpop.xlane.xlu0 %3395
        %3397 = vmax.xlane.f32.xlu0 %v3363
        %v3398 = vpop.xlane.xlu0 %3397
        %3399 = vmax.xlane.f32.xlu0 %v3364
        %v3400 = vpop.xlane.xlu0 %3399
        %3401 = vmax.xlane.f32.xlu0 %v3365
        %v3402 = vpop.xlane.xlu0 %3401
        %3403 = vmax.xlane.f32.xlu0 %v3366
        %v3404 = vpop.xlane.xlu0 %3403
        %3405 = vmax.xlane.f32.xlu0 %v3367
        %v3406 = vpop.xlane.xlu0 %3405
        %3407 = vmax.xlane.f32.xlu0 %v3368
        %v3408 = vpop.xlane.xlu0 %3407
        %3409 = vmax.xlane.f32.xlu0 %v3369
        %v3410 = vpop.xlane.xlu0 %3409
        %3411 = vmax.xlane.f32.xlu0 %v3370
        %v3412 = vpop.xlane.xlu0 %3411
        %3413 = vmax.xlane.f32.xlu0 %v3371
        %v3414 = vpop.xlane.xlu0 %3413
        %3415 = vmax.xlane.f32.xlu0 %v3372
        %v3416 = vpop.xlane.xlu0 %3415
        %3417 = vmax.xlane.f32.xlu0 %v3373
        %v3418 = vpop.xlane.xlu0 %3417
        %3419 = vmax.xlane.f32.xlu0 %v3374
        %v3420 = vpop.xlane.xlu0 %3419
        %3421 = vmax.xlane.f32.xlu0 %v3375
        %v3422 = vpop.xlane.xlu0 %3421
        %3423 = vmax.xlane.f32.xlu0 %v3376
        %v3424 = vpop.xlane.xlu0 %3423
        %v3425 = vmax.f32 %v3377, %v3394
        %v3426 = vmax.f32 %v3378, %v3396
        %v3427 = vmax.f32 %v3379, %v3398
        %v3428 = vmax.f32 %v3380, %v3400
        %v3429 = vmax.f32 %v3381, %v3402
        %v3430 = vmax.f32 %v3382, %v3404
        %v3431 = vmax.f32 %v3383, %v3406
        %v3432 = vmax.f32 %v3384, %v3408
        %v3433 = vmax.f32 %v3385, %v3410
        %v3434 = vmax.f32 %v3386, %v3412
        %v3435 = vmax.f32 %v3387, %v3414
        %v3436 = vmax.f32 %v3388, %v3416
        %v3437 = vmax.f32 %v3389, %v3418
        %v3438 = vmax.f32 %v3390, %v3420
        %v3439 = vmax.f32 %v3391, %v3422
        %v3440 = vmax.f32 %v3392, %v3424
        %v3441 = vsub.f32 %v3377, %v3425
        %v3442 = vsub.f32 %v3378, %v3426
        %v3443 = vsub.f32 %v3379, %v3427
        %v3444 = vsub.f32 %v3380, %v3428
        %v3445 = vsub.f32 %v3381, %v3429
        %v3446 = vsub.f32 %v3382, %v3430
        %v3447 = vsub.f32 %v3383, %v3431
        %v3448 = vsub.f32 %v3384, %v3432
        %v3449 = vsub.f32 %v3385, %v3433
        %v3450 = vsub.f32 %v3386, %v3434
        %v3451 = vsub.f32 %v3387, %v3435
        %v3452 = vsub.f32 %v3388, %v3436
        %v3453 = vsub.f32 %v3389, %v3437
        %v3454 = vsub.f32 %v3390, %v3438
        %v3455 = vsub.f32 %v3391, %v3439
        %v3456 = vsub.f32 %v3392, %v3440
        %v3457 = vmul.f32 %v3441, 1.442695
        %v3458 = vpow.pop %v3457
        %v3459 = vmul.f32 %v3442, 1.442695
        %v3460 = vpow.pop %v3459
        %v3461 = vmul.f32 %v3443, 1.442695
        %v3462 = vpow.pop %v3461
        %v3463 = vmul.f32 %v3444, 1.442695
        %v3464 = vpow.pop %v3463
        %v3465 = vmul.f32 %v3445, 1.442695
        %v3466 = vpow.pop %v3465
        %v3467 = vmul.f32 %v3446, 1.442695
        %v3468 = vpow.pop %v3467
        %v3469 = vmul.f32 %v3447, 1.442695
        %v3470 = vpow.pop %v3469
        %v3471 = vmul.f32 %v3448, 1.442695
        %v3472 = vpow.pop %v3471
        %v3473 = vmul.f32 %v3449, 1.442695
        %v3474 = vpow.pop %v3473
        %v3475 = vmul.f32 %v3450, 1.442695
        %v3476 = vpow.pop %v3475
        %v3477 = vmul.f32 %v3451, 1.442695
        %v3478 = vpow.pop %v3477
        %v3479 = vmul.f32 %v3452, 1.442695
        %v3480 = vpow.pop %v3479
        %v3481 = vmul.f32 %v3453, 1.442695
        %v3482 = vpow.pop %v3481
        %v3483 = vmul.f32 %v3454, 1.442695
        %v3484 = vpow.pop %v3483
        %v3485 = vmul.f32 %v3455, 1.442695
        %v3486 = vpow.pop %v3485
        %v3487 = vmul.f32 %v3456, 1.442695
        %v3488 = vpow.pop %v3487
        %3490 = vset.pattern.permute.xlu0 3
        %3491 = vperm.xlu0 %3490, %v3425
        %v3492 = vpop.permute.xlu0 %3491
        %3495 = vset.pattern.permute.xlu0 3
        %3496 = vperm.xlu0 %3495, %v3426
        %v3497 = vpop.permute.xlu0 %3496
        %3500 = vset.pattern.permute.xlu0 3
        %3501 = vperm.xlu0 %3500, %v3427
        %v3502 = vpop.permute.xlu0 %3501
        %3505 = vset.pattern.permute.xlu0 3
        %3506 = vperm.xlu0 %3505, %v3428
        %v3507 = vpop.permute.xlu0 %3506
        %3510 = vset.pattern.permute.xlu0 3
        %3511 = vperm.xlu0 %3510, %v3429
        %v3512 = vpop.permute.xlu0 %3511
        %3515 = vset.pattern.permute.xlu0 3
        %3516 = vperm.xlu0 %3515, %v3430
        %v3517 = vpop.permute.xlu0 %3516
        %3520 = vset.pattern.permute.xlu0 3
        %3521 = vperm.xlu0 %3520, %v3431
        %v3522 = vpop.permute.xlu0 %3521
        %3525 = vset.pattern.permute.xlu0 3
        %3526 = vperm.xlu0 %3525, %v3432
        %v3527 = vpop.permute.xlu0 %3526
        %3530 = vset.pattern.permute.xlu0 3
        %3531 = vperm.xlu0 %3530, %v3433
        %v3532 = vpop.permute.xlu0 %3531
        %3535 = vset.pattern.permute.xlu0 3
        %3536 = vperm.xlu0 %3535, %v3434
        %v3537 = vpop.permute.xlu0 %3536
        %3540 = vset.pattern.permute.xlu0 3
        %3541 = vperm.xlu0 %3540, %v3435
        %v3542 = vpop.permute.xlu0 %3541
        %3545 = vset.pattern.permute.xlu0 3
        %3546 = vperm.xlu0 %3545, %v3436
        %v3547 = vpop.permute.xlu0 %3546
        %3550 = vset.pattern.permute.xlu0 3
        %3551 = vperm.xlu0 %3550, %v3437
        %v3552 = vpop.permute.xlu0 %3551
        %3555 = vset.pattern.permute.xlu0 3
        %3556 = vperm.xlu0 %3555, %v3438
        %v3557 = vpop.permute.xlu0 %3556
        %3560 = vset.pattern.permute.xlu0 3
        %3561 = vperm.xlu0 %3560, %v3439
        %v3562 = vpop.permute.xlu0 %3561
        %3565 = vset.pattern.permute.xlu0 3
        %3566 = vperm.xlu0 %3565, %v3440
        %v3567 = vpop.permute.xlu0 %3566
        %v3569 = vsub.f32 %v3361, %v3492
        %v3570 = vsub.f32 %v3362, %v3497
        %v3571 = vsub.f32 %v3363, %v3502
        %v3572 = vsub.f32 %v3364, %v3507
        %v3573 = vsub.f32 %v3365, %v3512
        %v3574 = vsub.f32 %v3366, %v3517
        %v3575 = vsub.f32 %v3367, %v3522
        %v3576 = vsub.f32 %v3368, %v3527
        %v3577 = vsub.f32 %v3369, %v3532
        %v3578 = vsub.f32 %v3370, %v3537
        %v3579 = vsub.f32 %v3371, %v3542
        %v3580 = vsub.f32 %v3372, %v3547
        %v3581 = vsub.f32 %v3373, %v3552
        %v3582 = vsub.f32 %v3374, %v3557
        %v3583 = vsub.f32 %v3375, %v3562
        %v3584 = vsub.f32 %v3376, %v3567
        %v3585 = vmul.f32 %v3569, 1.442695
        %v3586 = vpow.pop %v3585
        %v3587 = vmul.f32 %v3570, 1.442695
        %v3588 = vpow.pop %v3587
        %v3589 = vmul.f32 %v3571, 1.442695
        %v3590 = vpow.pop %v3589
        %v3591 = vmul.f32 %v3572, 1.442695
        %v3592 = vpow.pop %v3591
        %v3593 = vmul.f32 %v3573, 1.442695
        %v3594 = vpow.pop %v3593
        %v3595 = vmul.f32 %v3574, 1.442695
        %v3596 = vpow.pop %v3595
        %v3597 = vmul.f32 %v3575, 1.442695
        %v3598 = vpow.pop %v3597
        %v3599 = vmul.f32 %v3576, 1.442695
        %v3600 = vpow.pop %v3599
        %v3601 = vmul.f32 %v3577, 1.442695
        %v3602 = vpow.pop %v3601
        %v3603 = vmul.f32 %v3578, 1.442695
        %v3604 = vpow.pop %v3603
        %v3605 = vmul.f32 %v3579, 1.442695
        %v3606 = vpow.pop %v3605
        %v3607 = vmul.f32 %v3580, 1.442695
        %v3608 = vpow.pop %v3607
        %v3609 = vmul.f32 %v3581, 1.442695
        %v3610 = vpow.pop %v3609
        %v3611 = vmul.f32 %v3582, 1.442695
        %v3612 = vpow.pop %v3611
        %v3613 = vmul.f32 %v3583, 1.442695
        %v3614 = vpow.pop %v3613
        %v3615 = vmul.f32 %v3584, 1.442695
        %v3616 = vpow.pop %v3615
        %v3617 = vld [vmem:[#allocation3] sm:$0xff]
        %v3618 = vld [vmem:[#allocation3 + $0x8] sm:$0xff]
        %v3619 = vld [vmem:[#allocation3 + $0x10] sm:$0xff]
        %v3620 = vld [vmem:[#allocation3 + $0x18] sm:$0xff]
        %v3621 = vld [vmem:[#allocation3 + $0x20] sm:$0xff]
        %v3622 = vld [vmem:[#allocation3 + $0x28] sm:$0xff]
        %v3623 = vld [vmem:[#allocation3 + $0x30] sm:$0xff]
        %v3624 = vld [vmem:[#allocation3 + $0x38] sm:$0xff]
        %v3625 = vld [vmem:[#allocation3 + $0x40] sm:$0xff]
        %v3626 = vld [vmem:[#allocation3 + $0x48] sm:$0xff]
        %v3627 = vld [vmem:[#allocation3 + $0x50] sm:$0xff]
        %v3628 = vld [vmem:[#allocation3 + $0x58] sm:$0xff]
        %v3629 = vld [vmem:[#allocation3 + $0x60] sm:$0xff]
        %v3630 = vld [vmem:[#allocation3 + $0x68] sm:$0xff]
        %v3631 = vld [vmem:[#allocation3 + $0x70] sm:$0xff]
        %v3632 = vld [vmem:[#allocation3 + $0x78] sm:$0xff]
        %v3633 = vmul.f32 %v3458, %v3617
        %v3634 = vmul.f32 %v3460, %v3618
        %v3635 = vmul.f32 %v3462, %v3619
        %v3636 = vmul.f32 %v3464, %v3620
        %v3637 = vmul.f32 %v3466, %v3621
        %v3638 = vmul.f32 %v3468, %v3622
        %v3639 = vmul.f32 %v3470, %v3623
        %v3640 = vmul.f32 %v3472, %v3624
        %v3641 = vmul.f32 %v3474, %v3625
        %v3642 = vmul.f32 %v3476, %v3626
        %v3643 = vmul.f32 %v3478, %v3627
        %v3644 = vmul.f32 %v3480, %v3628
        %v3645 = vmul.f32 %v3482, %v3629
        %v3646 = vmul.f32 %v3484, %v3630
        %v3647 = vmul.f32 %v3486, %v3631
        %v3648 = vmul.f32 %v3488, %v3632
        %3649 = vadd.xlane.f32.xlu0 %v3586
        %v3650 = vpop.xlane.xlu0 %3649
        %3651 = vadd.xlane.f32.xlu0 %v3588
        %v3652 = vpop.xlane.xlu0 %3651
        %3653 = vadd.xlane.f32.xlu0 %v3590
        %v3654 = vpop.xlane.xlu0 %3653
        %3655 = vadd.xlane.f32.xlu0 %v3592
        %v3656 = vpop.xlane.xlu0 %3655
        %3657 = vadd.xlane.f32.xlu0 %v3594
        %v3658 = vpop.xlane.xlu0 %3657
        %3659 = vadd.xlane.f32.xlu0 %v3596
        %v3660 = vpop.xlane.xlu0 %3659
        %3661 = vadd.xlane.f32.xlu0 %v3598
        %v3662 = vpop.xlane.xlu0 %3661
        %3663 = vadd.xlane.f32.xlu0 %v3600
        %v3664 = vpop.xlane.xlu0 %3663
        %3665 = vadd.xlane.f32.xlu0 %v3602
        %v3666 = vpop.xlane.xlu0 %3665
        %3667 = vadd.xlane.f32.xlu0 %v3604
        %v3668 = vpop.xlane.xlu0 %3667
        %3669 = vadd.xlane.f32.xlu0 %v3606
        %v3670 = vpop.xlane.xlu0 %3669
        %3671 = vadd.xlane.f32.xlu0 %v3608
        %v3672 = vpop.xlane.xlu0 %3671
        %3673 = vadd.xlane.f32.xlu0 %v3610
        %v3674 = vpop.xlane.xlu0 %3673
        %3675 = vadd.xlane.f32.xlu0 %v3612
        %v3676 = vpop.xlane.xlu0 %3675
        %3677 = vadd.xlane.f32.xlu0 %v3614
        %v3678 = vpop.xlane.xlu0 %3677
        %3679 = vadd.xlane.f32.xlu0 %v3616
        %v3680 = vpop.xlane.xlu0 %3679
        %v3681 = vadd.f32 %v3633, %v3650
        %v3682 = vadd.f32 %v3634, %v3652
        %v3683 = vadd.f32 %v3635, %v3654
        %v3684 = vadd.f32 %v3636, %v3656
        %v3685 = vadd.f32 %v3637, %v3658
        %v3686 = vadd.f32 %v3638, %v3660
        %v3687 = vadd.f32 %v3639, %v3662
        %v3688 = vadd.f32 %v3640, %v3664
        %v3689 = vadd.f32 %v3641, %v3666
        %v3690 = vadd.f32 %v3642, %v3668
        %v3691 = vadd.f32 %v3643, %v3670
        %v3692 = vadd.f32 %v3644, %v3672
        %v3693 = vadd.f32 %v3645, %v3674
        %v3694 = vadd.f32 %v3646, %v3676
        %v3695 = vadd.f32 %v3647, %v3678
        %v3696 = vadd.f32 %v3648, %v3680
        %vm3697 = vcmask 31768
        %3698 = vst.msk [vmem:[#allocation3] sm:$0xff] %vm3697, %v3681
        %3699 = vst.msk [vmem:[#allocation3 + $0x8] sm:$0xff] %vm3697, %v3682
        %3700 = vst.msk [vmem:[#allocation3 + $0x10] sm:$0xff] %vm3697, %v3683
        %3701 = vst.msk [vmem:[#allocation3 + $0x18] sm:$0xff] %vm3697, %v3684
        %3702 = vst.msk [vmem:[#allocation3 + $0x20] sm:$0xff] %vm3697, %v3685
        %3703 = vst.msk [vmem:[#allocation3 + $0x28] sm:$0xff] %vm3697, %v3686
        %3704 = vst.msk [vmem:[#allocation3 + $0x30] sm:$0xff] %vm3697, %v3687
        %3705 = vst.msk [vmem:[#allocation3 + $0x38] sm:$0xff] %vm3697, %v3688
        %3706 = vst.msk [vmem:[#allocation3 + $0x40] sm:$0xff] %vm3697, %v3689
        %3707 = vst.msk [vmem:[#allocation3 + $0x48] sm:$0xff] %vm3697, %v3690
        %3708 = vst.msk [vmem:[#allocation3 + $0x50] sm:$0xff] %vm3697, %v3691
        %3709 = vst.msk [vmem:[#allocation3 + $0x58] sm:$0xff] %vm3697, %v3692
        %3710 = vst.msk [vmem:[#allocation3 + $0x60] sm:$0xff] %vm3697, %v3693
        %3711 = vst.msk [vmem:[#allocation3 + $0x68] sm:$0xff] %vm3697, %v3694
        %3712 = vst.msk [vmem:[#allocation3 + $0x70] sm:$0xff] %vm3697, %v3695
        %3713 = vst.msk [vmem:[#allocation3 + $0x78] sm:$0xff] %vm3697, %v3696
        %v3714 = vpack.c.bf16 %v3588, %v3586
        %v3715 = vpack.c.bf16 %v3592, %v3590
        %v3716 = vpack.c.bf16 %v3596, %v3594
        %v3717 = vpack.c.bf16 %v3600, %v3598
        %v3718 = vpack.c.bf16 %v3604, %v3602
        %v3719 = vpack.c.bf16 %v3608, %v3606
        %v3720 = vpack.c.bf16 %v3612, %v3610
        %v3721 = vpack.c.bf16 %v3616, %v3614
        %v3722 = vld [vmem:[%s387] sm:$0xf]
        %v3723 = vld [vmem:[%s387 + $0x4] sm:$0xf]
        %v3724 = vld [vmem:[%s387 + $0x8] sm:$0xf]
        %v3725 = vld [vmem:[%s387 + $0xc] sm:$0xf]
        %v3726 = vld [vmem:[%s387 + $0x10] sm:$0xf]
        %v3727 = vld [vmem:[%s387 + $0x14] sm:$0xf]
        %v3728 = vld [vmem:[%s387 + $0x18] sm:$0xf]
        %v3729 = vld [vmem:[%s387 + $0x1c] sm:$0xf]
        %v3730 = vld [vmem:[%s387 + $0x20] sm:$0xf]
        %v3731 = vld [vmem:[%s387 + $0x24] sm:$0xf]
        %v3732 = vld [vmem:[%s387 + $0x28] sm:$0xf]
        %v3733 = vld [vmem:[%s387 + $0x2c] sm:$0xf]
        %v3734 = vld [vmem:[%s387 + $0x30] sm:$0xf]
        %v3735 = vld [vmem:[%s387 + $0x34] sm:$0xf]
        %v3736 = vld [vmem:[%s387 + $0x38] sm:$0xf]
        %v3737 = vld [vmem:[%s387 + $0x3c] sm:$0xf]
        %v3754 = vunpack.c.l.b16 %v3722
        %v3755 = vunpack.c.l.b16 %v3723
        %v3756 = vunpack.c.l.b16 %v3724
        %v3757 = vunpack.c.l.b16 %v3725
        %v3758 = vunpack.c.l.b16 %v3726
        %v3759 = vunpack.c.l.b16 %v3727
        %v3760 = vunpack.c.l.b16 %v3728
        %v3761 = vunpack.c.l.b16 %v3729
        %v3762 = vunpack.c.l.b16 %v3730
        %v3763 = vunpack.c.l.b16 %v3731
        %v3764 = vunpack.c.l.b16 %v3732
        %v3765 = vunpack.c.l.b16 %v3733
        %v3766 = vunpack.c.l.b16 %v3734
        %v3767 = vunpack.c.l.b16 %v3735
        %v3768 = vunpack.c.l.b16 %v3736
        %v3769 = vunpack.c.l.b16 %v3737
        %v3770 = vpack.c.b16 %v3755, %v3754
        %v3771 = vpack.c.b16 %v3757, %v3756
        %v3772 = vpack.c.b16 %v3759, %v3758
        %v3773 = vpack.c.b16 %v3761, %v3760
        %v3774 = vpack.c.b16 %v3763, %v3762
        %v3775 = vpack.c.b16 %v3765, %v3764
        %v3776 = vpack.c.b16 %v3767, %v3766
        %v3777 = vpack.c.b16 %v3769, %v3768
        %3778 = vrot.lane.b32.xlu0 %v3770, 80
        %v3779 = vpop.permute.xlu0 %3778
        %3780 = vrot.lane.b32.xlu0 %v3771, 80
        %v3781 = vpop.permute.xlu0 %3780
        %3782 = vrot.lane.b32.xlu0 %v3772, 80
        %v3783 = vpop.permute.xlu0 %3782
        %3784 = vrot.lane.b32.xlu0 %v3773, 80
        %v3785 = vpop.permute.xlu0 %3784
        %3786 = vrot.lane.b32.xlu0 %v3774, 80
        %v3787 = vpop.permute.xlu0 %3786
        %3788 = vrot.lane.b32.xlu0 %v3775, 80
        %v3789 = vpop.permute.xlu0 %3788
        %3790 = vrot.lane.b32.xlu0 %v3776, 80
        %v3791 = vpop.permute.xlu0 %3790
        %3792 = vrot.lane.b32.xlu0 %v3777, 80
        %v3793 = vpop.permute.xlu0 %3792
        %3802 = vmatprep.subr.bf16.mxu0 0
        %3803 = vmatpush1.bf16.msra.mxu0 %v3779
        %3804 = vmatprep.subr.bf16.mxu0 0
        %3805 = vmatpush1.bf16.msra.mxu0 %v3781
        %3806 = vmatprep.subr.bf16.mxu0 0
        %3807 = vmatpush1.bf16.msra.mxu0 %v3783
        %3808 = vmatprep.subr.bf16.mxu0 0
        %3809 = vmatpush1.bf16.msra.mxu0 %v3785
        %3810 = vmatprep.subr.bf16.mxu0 0
        %3811 = vmatpush1.bf16.msra.mxu0 %v3787
        %3812 = vmatprep.subr.bf16.mxu0 0
        %3813 = vmatpush1.bf16.msra.mxu0 %v3789
        %3814 = vmatprep.subr.bf16.mxu0 0
        %3815 = vmatpush1.bf16.msra.mxu0 %v3791
        %3816 = vmatprep.subr.bf16.mxu0 0
        %3817 = vmatpush1.bf16.msra.mxu0 %v3793
        %3818 = vmatprep.subr.bf16.mxu0 0
        %3819 = vmatpush1.bf16.msra.mxu0 0
        %3820 = vmatprep.subr.bf16.mxu0 0
        %3821 = vmatpush1.bf16.msra.mxu0 0
        %3822 = vmatprep.subr.bf16.mxu0 0
        %3823 = vmatpush1.bf16.msra.mxu0 0
        %3824 = vmatprep.subr.bf16.mxu0 0
        %3825 = vmatpush1.bf16.msra.mxu0 0
        %3826 = vmatprep.subr.bf16.mxu0 0
        %3827 = vmatpush1.bf16.msra.mxu0 0
        %3828 = vmatprep.subr.bf16.mxu0 0
        %3829 = vmatpush1.bf16.msra.mxu0 0
        %3830 = vmatprep.subr.bf16.mxu0 0
        %3831 = vmatpush1.bf16.msra.mxu0 0
        %3832 = vmatprep.subr.bf16.mxu0 0
        %3833 = vmatpush1.bf16.msra.mxu0 0
        %3834 = vmatprep.mubr.bf16.mxu0 0
        %3835 = vmatmul.mubr.bf16.gmra.mrb[0].mxu0 %v3714
        %v3836 = vpop.f32.mrb[0].mxu0
        %v3837 = vadd.f32 0.0, %v3836
        %v3838 = vpop.f32.mrb[0].mxu0
        %v3839 = vpop.f32.mrb[0].mxu0
        %v3840 = vadd.f32 0.0, %v3839
        %v3841 = vpop.f32.mrb[0].mxu0
        %3842 = vmatprep.mubr.bf16.mxu0 0
        %3843 = vmatmul.mubr.bf16.gmra.mrb[0].mxu0 %v3715
        %v3844 = vpop.f32.mrb[0].mxu0
        %v3845 = vadd.f32 0.0, %v3844
        %v3846 = vpop.f32.mrb[0].mxu0
        %v3847 = vpop.f32.mrb[0].mxu0
        %v3848 = vadd.f32 0.0, %v3847
        %v3849 = vpop.f32.mrb[0].mxu0
        %3850 = vmatprep.mubr.bf16.mxu0 0
        %3851 = vmatmul.mubr.bf16.gmra.mrb[0].mxu0 %v3716
        %v3852 = vpop.f32.mrb[0].mxu0
        %v3853 = vadd.f32 0.0, %v3852
        %v3854 = vpop.f32.mrb[0].mxu0
        %v3855 = vpop.f32.mrb[0].mxu0
        %v3856 = vadd.f32 0.0, %v3855
        %v3857 = vpop.f32.mrb[0].mxu0
        %3858 = vmatprep.mubr.bf16.mxu0 0
        %3859 = vmatmul.mubr.bf16.gmra.mrb[0].mxu0 %v3717
        %v3860 = vpop.f32.mrb[0].mxu0
        %v3861 = vadd.f32 0.0, %v3860
        %v3862 = vpop.f32.mrb[0].mxu0
        %v3863 = vpop.f32.mrb[0].mxu0
        %v3864 = vadd.f32 0.0, %v3863
        %v3865 = vpop.f32.mrb[0].mxu0
        %3866 = vmatprep.mubr.bf16.mxu0 0
        %3867 = vmatmul.mubr.bf16.gmra.mrb[0].mxu0 %v3718
        %v3868 = vpop.f32.mrb[0].mxu0
        %v3869 = vadd.f32 0.0, %v3868
        %v3870 = vpop.f32.mrb[0].mxu0
        %v3871 = vpop.f32.mrb[0].mxu0
        %v3872 = vadd.f32 0.0, %v3871
        %v3873 = vpop.f32.mrb[0].mxu0
        %3874 = vmatprep.mubr.bf16.mxu0 0
        %3875 = vmatmul.mubr.bf16.gmra.mrb[0].mxu0 %v3719
        %v3876 = vpop.f32.mrb[0].mxu0
        %v3877 = vadd.f32 0.0, %v3876
        %v3878 = vpop.f32.mrb[0].mxu0
        %v3879 = vpop.f32.mrb[0].mxu0
        %v3880 = vadd.f32 0.0, %v3879
        %v3881 = vpop.f32.mrb[0].mxu0
        %3882 = vmatprep.mubr.bf16.mxu0 0
        %3883 = vmatmul.mubr.bf16.gmra.mrb[0].mxu0 %v3720
        %v3884 = vpop.f32.mrb[0].mxu0
        %v3885 = vadd.f32 0.0, %v3884
        %v3886 = vpop.f32.mrb[0].mxu0
        %v3887 = vpop.f32.mrb[0].mxu0
        %v3888 = vadd.f32 0.0, %v3887
        %v3889 = vpop.f32.mrb[0].mxu0
        %3890 = vmatprep.mubr.bf16.mxu0 0
        %3891 = vmatmul.mubr.bf16.gmra.mrb[0].mxu0 %v3721
        %v3892 = vpop.f32.mrb[0].mxu0
        %v3893 = vadd.f32 0.0, %v3892
        %v3894 = vpop.f32.mrb[0].mxu0
        %v3895 = vpop.f32.mrb[0].mxu0
        %v3896 = vadd.f32 0.0, %v3895
        %v3897 = vpop.f32.mrb[0].mxu0
        %3898 = vdwg.mxu0
        %v3899 = vld [vmem:[#allocation4] sm:$0xff]
        %v3900 = vld [vmem:[#allocation4 + $0x8] sm:$0xff]
        %v3901 = vld [vmem:[#allocation4 + $0x10] sm:$0xff]
        %v3902 = vld [vmem:[#allocation4 + $0x18] sm:$0xff]
        %v3903 = vld [vmem:[#allocation4 + $0x20] sm:$0xff]
        %v3904 = vld [vmem:[#allocation4 + $0x28] sm:$0xff]
        %v3905 = vld [vmem:[#allocation4 + $0x30] sm:$0xff]
        %v3906 = vld [vmem:[#allocation4 + $0x38] sm:$0xff]
        %v3907 = vld [vmem:[#allocation4 + $0x40] sm:$0xff]
        %v3908 = vld [vmem:[#allocation4 + $0x48] sm:$0xff]
        %v3909 = vld [vmem:[#allocation4 + $0x50] sm:$0xff]
        %v3910 = vld [vmem:[#allocation4 + $0x58] sm:$0xff]
        %v3911 = vld [vmem:[#allocation4 + $0x60] sm:$0xff]
        %v3912 = vld [vmem:[#allocation4 + $0x68] sm:$0xff]
        %v3913 = vld [vmem:[#allocation4 + $0x70] sm:$0xff]
        %v3914 = vld [vmem:[#allocation4 + $0x78] sm:$0xff]
        %3916 = vset.pattern.permute.xlu0 3
        %3917 = vperm.xlu0 %3916, %v3458
        %v3918 = vpop.permute.xlu0 %3917
        %3921 = vset.pattern.permute.xlu0 3
        %3922 = vperm.xlu0 %3921, %v3460
        %v3923 = vpop.permute.xlu0 %3922
        %3926 = vset.pattern.permute.xlu0 3
        %3927 = vperm.xlu0 %3926, %v3462
        %v3928 = vpop.permute.xlu0 %3927
        %3931 = vset.pattern.permute.xlu0 3
        %3932 = vperm.xlu0 %3931, %v3464
        %v3933 = vpop.permute.xlu0 %3932
        %3936 = vset.pattern.permute.xlu0 3
        %3937 = vperm.xlu0 %3936, %v3466
        %v3938 = vpop.permute.xlu0 %3937
        %3941 = vset.pattern.permute.xlu0 3
        %3942 = vperm.xlu0 %3941, %v3468
        %v3943 = vpop.permute.xlu0 %3942
        %3946 = vset.pattern.permute.xlu0 3
        %3947 = vperm.xlu0 %3946, %v3470
        %v3948 = vpop.permute.xlu0 %3947
        %3951 = vset.pattern.permute.xlu0 3
        %3952 = vperm.xlu0 %3951, %v3472
        %v3953 = vpop.permute.xlu0 %3952
        %3956 = vset.pattern.permute.xlu0 3
        %3957 = vperm.xlu0 %3956, %v3474
        %v3958 = vpop.permute.xlu0 %3957
        %3961 = vset.pattern.permute.xlu0 3
        %3962 = vperm.xlu0 %3961, %v3476
        %v3963 = vpop.permute.xlu0 %3962
        %3966 = vset.pattern.permute.xlu0 3
        %3967 = vperm.xlu0 %3966, %v3478
        %v3968 = vpop.permute.xlu0 %3967
        %3971 = vset.pattern.permute.xlu0 3
        %3972 = vperm.xlu0 %3971, %v3480
        %v3973 = vpop.permute.xlu0 %3972
        %3976 = vset.pattern.permute.xlu0 3
        %3977 = vperm.xlu0 %3976, %v3482
        %v3978 = vpop.permute.xlu0 %3977
        %3981 = vset.pattern.permute.xlu0 3
        %3982 = vperm.xlu0 %3981, %v3484
        %v3983 = vpop.permute.xlu0 %3982
        %3986 = vset.pattern.permute.xlu0 3
        %3987 = vperm.xlu0 %3986, %v3486
        %v3988 = vpop.permute.xlu0 %3987
        %3991 = vset.pattern.permute.xlu0 3
        %3992 = vperm.xlu0 %3991, %v3488
        %v3993 = vpop.permute.xlu0 %3992
        %v3995 = vmul.f32 %v3918, %v3899
        %v3996 = vmul.f32 %v3923, %v3900
        %v3997 = vmul.f32 %v3928, %v3901
        %v3998 = vmul.f32 %v3933, %v3902
        %v3999 = vmul.f32 %v3938, %v3903
        %v4000 = vmul.f32 %v3943, %v3904
        %v4001 = vmul.f32 %v3948, %v3905
        %v4002 = vmul.f32 %v3953, %v3906
        %v4003 = vmul.f32 %v3958, %v3907
        %v4004 = vmul.f32 %v3963, %v3908
        %v4005 = vmul.f32 %v3968, %v3909
        %v4006 = vmul.f32 %v3973, %v3910
        %v4007 = vmul.f32 %v3978, %v3911
        %v4008 = vmul.f32 %v3983, %v3912
        %v4009 = vmul.f32 %v3988, %v3913
        %v4010 = vmul.f32 %v3993, %v3914
        %4027 = vrot.lane.b32.xlu0 %v3837, 48
        %v4028 = vpop.permute.xlu0 %4027
        %4029 = vrot.lane.b32.xlu0 %v3840, 48
        %v4030 = vpop.permute.xlu0 %4029
        %4031 = vrot.lane.b32.xlu0 %v3845, 48
        %v4032 = vpop.permute.xlu0 %4031
        %4033 = vrot.lane.b32.xlu0 %v3848, 48
        %v4034 = vpop.permute.xlu0 %4033
        %4035 = vrot.lane.b32.xlu0 %v3853, 48
        %v4036 = vpop.permute.xlu0 %4035
        %4037 = vrot.lane.b32.xlu0 %v3856, 48
        %v4038 = vpop.permute.xlu0 %4037
        %4039 = vrot.lane.b32.xlu0 %v3861, 48
        %v4040 = vpop.permute.xlu0 %4039
        %4041 = vrot.lane.b32.xlu0 %v3864, 48
        %v4042 = vpop.permute.xlu0 %4041
        %4043 = vrot.lane.b32.xlu0 %v3869, 48
        %v4044 = vpop.permute.xlu0 %4043
        %4045 = vrot.lane.b32.xlu0 %v3872, 48
        %v4046 = vpop.permute.xlu0 %4045
        %4047 = vrot.lane.b32.xlu0 %v3877, 48
        %v4048 = vpop.permute.xlu0 %4047
        %4049 = vrot.lane.b32.xlu0 %v3880, 48
        %v4050 = vpop.permute.xlu0 %4049
        %4051 = vrot.lane.b32.xlu0 %v3885, 48
        %v4052 = vpop.permute.xlu0 %4051
        %4053 = vrot.lane.b32.xlu0 %v3888, 48
        %v4054 = vpop.permute.xlu0 %4053
        %4055 = vrot.lane.b32.xlu0 %v3893, 48
        %v4056 = vpop.permute.xlu0 %4055
        %4057 = vrot.lane.b32.xlu0 %v3896, 48
        %v4058 = vpop.permute.xlu0 %4057
        %v4075 = vadd.f32 %v3995, %v4028
        %v4076 = vadd.f32 %v3996, %v4030
        %v4077 = vadd.f32 %v3997, %v4032
        %v4078 = vadd.f32 %v3998, %v4034
        %v4079 = vadd.f32 %v3999, %v4036
        %v4080 = vadd.f32 %v4000, %v4038
        %v4081 = vadd.f32 %v4001, %v4040
        %v4082 = vadd.f32 %v4002, %v4042
        %v4083 = vadd.f32 %v4003, %v4044
        %v4084 = vadd.f32 %v4004, %v4046
        %v4085 = vadd.f32 %v4005, %v4048
        %v4086 = vadd.f32 %v4006, %v4050
        %v4087 = vadd.f32 %v4007, %v4052
        %v4088 = vadd.f32 %v4008, %v4054
        %v4089 = vadd.f32 %v4009, %v4056
        %v4090 = vadd.f32 %v4010, %v4058
        %vm4091 = vcmask 523648
        %4092 = vst.msk [vmem:[#allocation4] sm:$0xff] %vm4091, %v4075
        %4093 = vst.msk [vmem:[#allocation4 + $0x8] sm:$0xff] %vm4091, %v4076
        %4094 = vst.msk [vmem:[#allocation4 + $0x10] sm:$0xff] %vm4091, %v4077
        %4095 = vst.msk [vmem:[#allocation4 + $0x18] sm:$0xff] %vm4091, %v4078
        %4096 = vst.msk [vmem:[#allocation4 + $0x20] sm:$0xff] %vm4091, %v4079
        %4097 = vst.msk [vmem:[#allocation4 + $0x28] sm:$0xff] %vm4091, %v4080
        %4098 = vst.msk [vmem:[#allocation4 + $0x30] sm:$0xff] %vm4091, %v4081
        %4099 = vst.msk [vmem:[#allocation4 + $0x38] sm:$0xff] %vm4091, %v4082
        %4100 = vst.msk [vmem:[#allocation4 + $0x40] sm:$0xff] %vm4091, %v4083
        %4101 = vst.msk [vmem:[#allocation4 + $0x48] sm:$0xff] %vm4091, %v4084
        %4102 = vst.msk [vmem:[#allocation4 + $0x50] sm:$0xff] %vm4091, %v4085
        %4103 = vst.msk [vmem:[#allocation4 + $0x58] sm:$0xff] %vm4091, %v4086
        %4104 = vst.msk [vmem:[#allocation4 + $0x60] sm:$0xff] %vm4091, %v4087
        %4105 = vst.msk [vmem:[#allocation4 + $0x68] sm:$0xff] %vm4091, %v4088
        %4106 = vst.msk [vmem:[#allocation4 + $0x70] sm:$0xff] %vm4091, %v4089
        %4107 = vst.msk [vmem:[#allocation4 + $0x78] sm:$0xff] %vm4091, %v4090
        %4108 = vst.msk [vmem:[#allocation2] sm:$0xff] %vm3697, %v3425
        %4109 = vst.msk [vmem:[#allocation2 + $0x8] sm:$0xff] %vm3697, %v3426
        %4110 = vst.msk [vmem:[#allocation2 + $0x10] sm:$0xff] %vm3697, %v3427
        %4111 = vst.msk [vmem:[#allocation2 + $0x18] sm:$0xff] %vm3697, %v3428
        %4112 = vst.msk [vmem:[#allocation2 + $0x20] sm:$0xff] %vm3697, %v3429
        %4113 = vst.msk [vmem:[#allocation2 + $0x28] sm:$0xff] %vm3697, %v3430
        %4114 = vst.msk [vmem:[#allocation2 + $0x30] sm:$0xff] %vm3697, %v3431
        %4115 = vst.msk [vmem:[#allocation2 + $0x38] sm:$0xff] %vm3697, %v3432
        %4116 = vst.msk [vmem:[#allocation2 + $0x40] sm:$0xff] %vm3697, %v3433
        %4117 = vst.msk [vmem:[#allocation2 + $0x48] sm:$0xff] %vm3697, %v3434
        %4118 = vst.msk [vmem:[#allocation2 + $0x50] sm:$0xff] %vm3697, %v3435
        %4119 = vst.msk [vmem:[#allocation2 + $0x58] sm:$0xff] %vm3697, %v3436
        %4120 = vst.msk [vmem:[#allocation2 + $0x60] sm:$0xff] %vm3697, %v3437
        %4121 = vst.msk [vmem:[#allocation2 + $0x68] sm:$0xff] %vm3697, %v3438
        %4122 = vst.msk [vmem:[#allocation2 + $0x70] sm:$0xff] %vm3697, %v3439
        %4123 = vst.msk [vmem:[#allocation2 + $0x78] sm:$0xff] %vm3697, %v3440
        %p4124 = scmp.eq.s32.totalorder %s21, 1
        // Predicated region
        $region86: #{gat_gcn_forward.5} parent=76 // pred_check
          %p4125 = pneg %p4124
        $region87: #{gat_gcn_forward.5} parent=76 // pred_check_branch
          %4127 = sbr.rel (%p4125) target = $region89
        $region88: #{gat_gcn_forward.5} parent=76 // pred_region
          %v4128 = vld [vmem:[#allocation3] sm:$0xff]
          %v4129 = vld [vmem:[#allocation3 + $0x8] sm:$0xff]
          %v4130 = vld [vmem:[#allocation3 + $0x10] sm:$0xff]
          %v4131 = vld [vmem:[#allocation3 + $0x18] sm:$0xff]
          %v4132 = vld [vmem:[#allocation3 + $0x20] sm:$0xff]
          %v4133 = vld [vmem:[#allocation3 + $0x28] sm:$0xff]
          %v4134 = vld [vmem:[#allocation3 + $0x30] sm:$0xff]
          %v4135 = vld [vmem:[#allocation3 + $0x38] sm:$0xff]
          %v4136 = vld [vmem:[#allocation3 + $0x40] sm:$0xff]
          %v4137 = vld [vmem:[#allocation3 + $0x48] sm:$0xff]
          %v4138 = vld [vmem:[#allocation3 + $0x50] sm:$0xff]
          %v4139 = vld [vmem:[#allocation3 + $0x58] sm:$0xff]
          %v4140 = vld [vmem:[#allocation3 + $0x60] sm:$0xff]
          %v4141 = vld [vmem:[#allocation3 + $0x68] sm:$0xff]
          %v4142 = vld [vmem:[#allocation3 + $0x70] sm:$0xff]
          %v4143 = vld [vmem:[#allocation3 + $0x78] sm:$0xff]
          %v4144 = vmax.f32 %v4128, 1e-20
          %v4145 = vmax.f32 %v4129, 1e-20
          %v4146 = vmax.f32 %v4130, 1e-20
          %v4147 = vmax.f32 %v4131, 1e-20
          %v4148 = vmax.f32 %v4132, 1e-20
          %v4149 = vmax.f32 %v4133, 1e-20
          %v4150 = vmax.f32 %v4134, 1e-20
          %v4151 = vmax.f32 %v4135, 1e-20
          %v4152 = vmax.f32 %v4136, 1e-20
          %v4153 = vmax.f32 %v4137, 1e-20
          %v4154 = vmax.f32 %v4138, 1e-20
          %v4155 = vmax.f32 %v4139, 1e-20
          %v4156 = vmax.f32 %v4140, 1e-20
          %v4157 = vmax.f32 %v4141, 1e-20
          %v4158 = vmax.f32 %v4142, 1e-20
          %v4159 = vmax.f32 %v4143, 1e-20
          %v4160 = vrcp.pop %v4144
          %v4161 = vrcp.pop %v4145
          %v4162 = vrcp.pop %v4146
          %v4163 = vrcp.pop %v4147
          %v4164 = vrcp.pop %v4148
          %v4165 = vrcp.pop %v4149
          %v4166 = vrcp.pop %v4150
          %v4167 = vrcp.pop %v4151
          %v4168 = vrcp.pop %v4152
          %v4169 = vrcp.pop %v4153
          %v4170 = vrcp.pop %v4154
          %v4171 = vrcp.pop %v4155
          %v4172 = vrcp.pop %v4156
          %v4173 = vrcp.pop %v4157
          %v4174 = vrcp.pop %v4158
          %v4175 = vrcp.pop %v4159
          %v4176 = vld [vmem:[#allocation4] sm:$0xff]
          %v4177 = vld [vmem:[#allocation4 + $0x8] sm:$0xff]
          %v4178 = vld [vmem:[#allocation4 + $0x10] sm:$0xff]
          %v4179 = vld [vmem:[#allocation4 + $0x18] sm:$0xff]
          %v4180 = vld [vmem:[#allocation4 + $0x20] sm:$0xff]
          %v4181 = vld [vmem:[#allocation4 + $0x28] sm:$0xff]
          %v4182 = vld [vmem:[#allocation4 + $0x30] sm:$0xff]
          %v4183 = vld [vmem:[#allocation4 + $0x38] sm:$0xff]
          %v4184 = vld [vmem:[#allocation4 + $0x40] sm:$0xff]
          %v4185 = vld [vmem:[#allocation4 + $0x48] sm:$0xff]
          %v4186 = vld [vmem:[#allocation4 + $0x50] sm:$0xff]
          %v4187 = vld [vmem:[#allocation4 + $0x58] sm:$0xff]
          %v4188 = vld [vmem:[#allocation4 + $0x60] sm:$0xff]
          %v4189 = vld [vmem:[#allocation4 + $0x68] sm:$0xff]
          %v4190 = vld [vmem:[#allocation4 + $0x70] sm:$0xff]
          %v4191 = vld [vmem:[#allocation4 + $0x78] sm:$0xff]
          %4193 = vset.pattern.permute.xlu0 0
          %4194 = vperm.xlu0 %4193, %v4160
          %v4195 = vpop.permute.xlu0 %4194
          %4198 = vset.pattern.permute.xlu0 0
          %4199 = vperm.xlu0 %4198, %v4161
          %v4200 = vpop.permute.xlu0 %4199
          %4203 = vset.pattern.permute.xlu0 0
          %4204 = vperm.xlu0 %4203, %v4162
          %v4205 = vpop.permute.xlu0 %4204
          %4208 = vset.pattern.permute.xlu0 0
          %4209 = vperm.xlu0 %4208, %v4163
          %v4210 = vpop.permute.xlu0 %4209
          %4213 = vset.pattern.permute.xlu0 0
          %4214 = vperm.xlu0 %4213, %v4164
          %v4215 = vpop.permute.xlu0 %4214
          %4218 = vset.pattern.permute.xlu0 0
          %4219 = vperm.xlu0 %4218, %v4165
          %v4220 = vpop.permute.xlu0 %4219
          %4223 = vset.pattern.permute.xlu0 0
          %4224 = vperm.xlu0 %4223, %v4166
          %v4225 = vpop.permute.xlu0 %4224
          %4228 = vset.pattern.permute.xlu0 0
          %4229 = vperm.xlu0 %4228, %v4167
          %v4230 = vpop.permute.xlu0 %4229
          %4233 = vset.pattern.permute.xlu0 0
          %4234 = vperm.xlu0 %4233, %v4168
          %v4235 = vpop.permute.xlu0 %4234
          %4238 = vset.pattern.permute.xlu0 0
          %4239 = vperm.xlu0 %4238, %v4169
          %v4240 = vpop.permute.xlu0 %4239
          %4243 = vset.pattern.permute.xlu0 0
          %4244 = vperm.xlu0 %4243, %v4170
          %v4245 = vpop.permute.xlu0 %4244
          %4248 = vset.pattern.permute.xlu0 0
          %4249 = vperm.xlu0 %4248, %v4171
          %v4250 = vpop.permute.xlu0 %4249
          %4253 = vset.pattern.permute.xlu0 0
          %4254 = vperm.xlu0 %4253, %v4172
          %v4255 = vpop.permute.xlu0 %4254
          %4258 = vset.pattern.permute.xlu0 0
          %4259 = vperm.xlu0 %4258, %v4173
          %v4260 = vpop.permute.xlu0 %4259
          %4263 = vset.pattern.permute.xlu0 0
          %4264 = vperm.xlu0 %4263, %v4174
          %v4265 = vpop.permute.xlu0 %4264
          %4268 = vset.pattern.permute.xlu0 0
          %4269 = vperm.xlu0 %4268, %v4175
          %v4270 = vpop.permute.xlu0 %4269
          %v4272 = vmul.f32 %v4176, %v4195
          %v4273 = vmul.f32 %v4177, %v4200
          %v4274 = vmul.f32 %v4178, %v4205
          %v4275 = vmul.f32 %v4179, %v4210
          %v4276 = vmul.f32 %v4180, %v4215
          %v4277 = vmul.f32 %v4181, %v4220
          %v4278 = vmul.f32 %v4182, %v4225
          %v4279 = vmul.f32 %v4183, %v4230
          %v4280 = vmul.f32 %v4184, %v4235
          %v4281 = vmul.f32 %v4185, %v4240
          %v4282 = vmul.f32 %v4186, %v4245
          %v4283 = vmul.f32 %v4187, %v4250
          %v4284 = vmul.f32 %v4188, %v4255
          %v4285 = vmul.f32 %v4189, %v4260
          %v4286 = vmul.f32 %v4190, %v4265
          %v4287 = vmul.f32 %v4191, %v4270
          %4288 = vset.pattern.permute.xlu0 1
          %4289 = vperm.xlu0 %4288, %v4160
          %v4290 = vpop.permute.xlu0 %4289
          %4292 = vset.pattern.permute.xlu0 1
          %4293 = vperm.xlu0 %4292, %v4161
          %v4294 = vpop.permute.xlu0 %4293
          %4296 = vset.pattern.permute.xlu0 1
          %4297 = vperm.xlu0 %4296, %v4162
          %v4298 = vpop.permute.xlu0 %4297
          %4300 = vset.pattern.permute.xlu0 1
          %4301 = vperm.xlu0 %4300, %v4163
          %v4302 = vpop.permute.xlu0 %4301
          %4304 = vset.pattern.permute.xlu0 1
          %4305 = vperm.xlu0 %4304, %v4164
          %v4306 = vpop.permute.xlu0 %4305
          %4308 = vset.pattern.permute.xlu0 1
          %4309 = vperm.xlu0 %4308, %v4165
          %v4310 = vpop.permute.xlu0 %4309
          %4312 = vset.pattern.permute.xlu0 1
          %4313 = vperm.xlu0 %4312, %v4166
          %v4314 = vpop.permute.xlu0 %4313
          %4316 = vset.pattern.permute.xlu0 1
          %4317 = vperm.xlu0 %4316, %v4167
          %v4318 = vpop.permute.xlu0 %4317
          %4320 = vset.pattern.permute.xlu0 1
          %4321 = vperm.xlu0 %4320, %v4168
          %v4322 = vpop.permute.xlu0 %4321
          %4324 = vset.pattern.permute.xlu0 1
          %4325 = vperm.xlu0 %4324, %v4169
          %v4326 = vpop.permute.xlu0 %4325
          %4328 = vset.pattern.permute.xlu0 1
          %4329 = vperm.xlu0 %4328, %v4170
          %v4330 = vpop.permute.xlu0 %4329
          %4332 = vset.pattern.permute.xlu0 1
          %4333 = vperm.xlu0 %4332, %v4171
          %v4334 = vpop.permute.xlu0 %4333
          %4336 = vset.pattern.permute.xlu0 1
          %4337 = vperm.xlu0 %4336, %v4172
          %v4338 = vpop.permute.xlu0 %4337
          %4340 = vset.pattern.permute.xlu0 1
          %4341 = vperm.xlu0 %4340, %v4173
          %v4342 = vpop.permute.xlu0 %4341
          %4344 = vset.pattern.permute.xlu0 1
          %4345 = vperm.xlu0 %4344, %v4174
          %v4346 = vpop.permute.xlu0 %4345
          %4348 = vset.pattern.permute.xlu0 1
          %4349 = vperm.xlu0 %4348, %v4175
          %v4350 = vpop.permute.xlu0 %4349
          %v4352 = vmul.f32 %v4176, %v4290
          %v4353 = vmul.f32 %v4177, %v4294
          %v4354 = vmul.f32 %v4178, %v4298
          %v4355 = vmul.f32 %v4179, %v4302
          %v4356 = vmul.f32 %v4180, %v4306
          %v4357 = vmul.f32 %v4181, %v4310
          %v4358 = vmul.f32 %v4182, %v4314
          %v4359 = vmul.f32 %v4183, %v4318
          %v4360 = vmul.f32 %v4184, %v4322
          %v4361 = vmul.f32 %v4185, %v4326
          %v4362 = vmul.f32 %v4186, %v4330
          %v4363 = vmul.f32 %v4187, %v4334
          %v4364 = vmul.f32 %v4188, %v4338
          %v4365 = vmul.f32 %v4189, %v4342
          %v4366 = vmul.f32 %v4190, %v4346
          %v4367 = vmul.f32 %v4191, %v4350
          %4368 = vset.pattern.permute.xlu0 2
          %4369 = vperm.xlu0 %4368, %v4160
          %v4370 = vpop.permute.xlu0 %4369
          %4372 = vset.pattern.permute.xlu0 2
          %4373 = vperm.xlu0 %4372, %v4161
          %v4374 = vpop.permute.xlu0 %4373
          %4376 = vset.pattern.permute.xlu0 2
          %4377 = vperm.xlu0 %4376, %v4162
          %v4378 = vpop.permute.xlu0 %4377
          %4380 = vset.pattern.permute.xlu0 2
          %4381 = vperm.xlu0 %4380, %v4163
          %v4382 = vpop.permute.xlu0 %4381
          %4384 = vset.pattern.permute.xlu0 2
          %4385 = vperm.xlu0 %4384, %v4164
          %v4386 = vpop.permute.xlu0 %4385
          %4388 = vset.pattern.permute.xlu0 2
          %4389 = vperm.xlu0 %4388, %v4165
          %v4390 = vpop.permute.xlu0 %4389
          %4392 = vset.pattern.permute.xlu0 2
          %4393 = vperm.xlu0 %4392, %v4166
          %v4394 = vpop.permute.xlu0 %4393
          %4396 = vset.pattern.permute.xlu0 2
          %4397 = vperm.xlu0 %4396, %v4167
          %v4398 = vpop.permute.xlu0 %4397
          %4400 = vset.pattern.permute.xlu0 2
          %4401 = vperm.xlu0 %4400, %v4168
          %v4402 = vpop.permute.xlu0 %4401
          %4404 = vset.pattern.permute.xlu0 2
          %4405 = vperm.xlu0 %4404, %v4169
          %v4406 = vpop.permute.xlu0 %4405
          %4408 = vset.pattern.permute.xlu0 2
          %4409 = vperm.xlu0 %4408, %v4170
          %v4410 = vpop.permute.xlu0 %4409
          %4412 = vset.pattern.permute.xlu0 2
          %4413 = vperm.xlu0 %4412, %v4171
          %v4414 = vpop.permute.xlu0 %4413
          %4416 = vset.pattern.permute.xlu0 2
          %4417 = vperm.xlu0 %4416, %v4172
          %v4418 = vpop.permute.xlu0 %4417
          %4420 = vset.pattern.permute.xlu0 2
          %4421 = vperm.xlu0 %4420, %v4173
          %v4422 = vpop.permute.xlu0 %4421
          %4424 = vset.pattern.permute.xlu0 2
          %4425 = vperm.xlu0 %4424, %v4174
          %v4426 = vpop.permute.xlu0 %4425
          %4428 = vset.pattern.permute.xlu0 2
          %4429 = vperm.xlu0 %4428, %v4175
          %v4430 = vpop.permute.xlu0 %4429
          %v4432 = vmul.f32 %v4176, %v4370
          %v4433 = vmul.f32 %v4177, %v4374
          %v4434 = vmul.f32 %v4178, %v4378
          %v4435 = vmul.f32 %v4179, %v4382
          %v4436 = vmul.f32 %v4180, %v4386
          %v4437 = vmul.f32 %v4181, %v4390
          %v4438 = vmul.f32 %v4182, %v4394
          %v4439 = vmul.f32 %v4183, %v4398
          %v4440 = vmul.f32 %v4184, %v4402
          %v4441 = vmul.f32 %v4185, %v4406
          %v4442 = vmul.f32 %v4186, %v4410
          %v4443 = vmul.f32 %v4187, %v4414
          %v4444 = vmul.f32 %v4188, %v4418
          %v4445 = vmul.f32 %v4189, %v4422
          %v4446 = vmul.f32 %v4190, %v4426
          %v4447 = vmul.f32 %v4191, %v4430
          %4448 = vset.pattern.permute.xlu0 3
          %4449 = vperm.xlu0 %4448, %v4160
          %v4450 = vpop.permute.xlu0 %4449
          %4452 = vset.pattern.permute.xlu0 3
          %4453 = vperm.xlu0 %4452, %v4161
          %v4454 = vpop.permute.xlu0 %4453
          %4456 = vset.pattern.permute.xlu0 3
          %4457 = vperm.xlu0 %4456, %v4162
          %v4458 = vpop.permute.xlu0 %4457
          %4460 = vset.pattern.permute.xlu0 3
          %4461 = vperm.xlu0 %4460, %v4163
          %v4462 = vpop.permute.xlu0 %4461
          %4464 = vset.pattern.permute.xlu0 3
          %4465 = vperm.xlu0 %4464, %v4164
          %v4466 = vpop.permute.xlu0 %4465
          %4468 = vset.pattern.permute.xlu0 3
          %4469 = vperm.xlu0 %4468, %v4165
          %v4470 = vpop.permute.xlu0 %4469
          %4472 = vset.pattern.permute.xlu0 3
          %4473 = vperm.xlu0 %4472, %v4166
          %v4474 = vpop.permute.xlu0 %4473
          %4476 = vset.pattern.permute.xlu0 3
          %4477 = vperm.xlu0 %4476, %v4167
          %v4478 = vpop.permute.xlu0 %4477
          %4480 = vset.pattern.permute.xlu0 3
          %4481 = vperm.xlu0 %4480, %v4168
          %v4482 = vpop.permute.xlu0 %4481
          %4484 = vset.pattern.permute.xlu0 3
          %4485 = vperm.xlu0 %4484, %v4169
          %v4486 = vpop.permute.xlu0 %4485
          %4488 = vset.pattern.permute.xlu0 3
          %4489 = vperm.xlu0 %4488, %v4170
          %v4490 = vpop.permute.xlu0 %4489
          %4492 = vset.pattern.permute.xlu0 3
          %4493 = vperm.xlu0 %4492, %v4171
          %v4494 = vpop.permute.xlu0 %4493
          %4496 = vset.pattern.permute.xlu0 3
          %4497 = vperm.xlu0 %4496, %v4172
          %v4498 = vpop.permute.xlu0 %4497
          %4500 = vset.pattern.permute.xlu0 3
          %4501 = vperm.xlu0 %4500, %v4173
          %v4502 = vpop.permute.xlu0 %4501
          %4504 = vset.pattern.permute.xlu0 3
          %4505 = vperm.xlu0 %4504, %v4174
          %v4506 = vpop.permute.xlu0 %4505
          %4508 = vset.pattern.permute.xlu0 3
          %4509 = vperm.xlu0 %4508, %v4175
          %v4510 = vpop.permute.xlu0 %4509
          %v4512 = vmul.f32 %v4176, %v4450
          %v4513 = vmul.f32 %v4177, %v4454
          %v4514 = vmul.f32 %v4178, %v4458
          %v4515 = vmul.f32 %v4179, %v4462
          %v4516 = vmul.f32 %v4180, %v4466
          %v4517 = vmul.f32 %v4181, %v4470
          %v4518 = vmul.f32 %v4182, %v4474
          %v4519 = vmul.f32 %v4183, %v4478
          %v4520 = vmul.f32 %v4184, %v4482
          %v4521 = vmul.f32 %v4185, %v4486
          %v4522 = vmul.f32 %v4186, %v4490
          %v4523 = vmul.f32 %v4187, %v4494
          %v4524 = vmul.f32 %v4188, %v4498
          %v4525 = vmul.f32 %v4189, %v4502
          %v4526 = vmul.f32 %v4190, %v4506
          %v4527 = vmul.f32 %v4191, %v4510
          %v4528 = vsel %vm1307, %v4272, %v4352
          %v4529 = vsel %vm1307, %v4273, %v4353
          %v4530 = vsel %vm1307, %v4274, %v4354
          %v4531 = vsel %vm1307, %v4275, %v4355
          %v4532 = vsel %vm1307, %v4276, %v4356
          %v4533 = vsel %vm1307, %v4277, %v4357
          %v4534 = vsel %vm1307, %v4278, %v4358
          %v4535 = vsel %vm1307, %v4279, %v4359
          %v4536 = vsel %vm1307, %v4280, %v4360
          %v4537 = vsel %vm1307, %v4281, %v4361
          %v4538 = vsel %vm1307, %v4282, %v4362
          %v4539 = vsel %vm1307, %v4283, %v4363
          %v4540 = vsel %vm1307, %v4284, %v4364
          %v4541 = vsel %vm1307, %v4285, %v4365
          %v4542 = vsel %vm1307, %v4286, %v4366
          %v4543 = vsel %vm1307, %v4287, %v4367
          %vm4544 = vcmask 261120
          %v4545 = vsel %vm4544, %v4528, %v4432
          %v4546 = vsel %vm4544, %v4529, %v4433
          %v4547 = vsel %vm4544, %v4530, %v4434
          %v4548 = vsel %vm4544, %v4531, %v4435
          %v4549 = vsel %vm4544, %v4532, %v4436
          %v4550 = vsel %vm4544, %v4533, %v4437
          %v4551 = vsel %vm4544, %v4534, %v4438
          %v4552 = vsel %vm4544, %v4535, %v4439
          %v4553 = vsel %vm4544, %v4536, %v4440
          %v4554 = vsel %vm4544, %v4537, %v4441
          %v4555 = vsel %vm4544, %v4538, %v4442
          %v4556 = vsel %vm4544, %v4539, %v4443
          %v4557 = vsel %vm4544, %v4540, %v4444
          %v4558 = vsel %vm4544, %v4541, %v4445
          %v4559 = vsel %vm4544, %v4542, %v4446
          %v4560 = vsel %vm4544, %v4543, %v4447
          %vm4561 = vcmask 392192
          %v4562 = vsel %vm4561, %v4545, %v4512
          %v4563 = vsel %vm4561, %v4546, %v4513
          %v4564 = vsel %vm4561, %v4547, %v4514
          %v4565 = vsel %vm4561, %v4548, %v4515
          %v4566 = vsel %vm4561, %v4549, %v4516
          %v4567 = vsel %vm4561, %v4550, %v4517
          %v4568 = vsel %vm4561, %v4551, %v4518
          %v4569 = vsel %vm4561, %v4552, %v4519
          %v4570 = vsel %vm4561, %v4553, %v4520
          %v4571 = vsel %vm4561, %v4554, %v4521
          %v4572 = vsel %vm4561, %v4555, %v4522
          %v4573 = vsel %vm4561, %v4556, %v4523
          %v4574 = vsel %vm4561, %v4557, %v4524
          %v4575 = vsel %vm4561, %v4558, %v4525
          %v4576 = vsel %vm4561, %v4559, %v4526
          %v4577 = vsel %vm4561, %v4560, %v4527
          %vm4578 = vcmask 523264
          %v4579 = vsel %vm4578, %v4562, 0.0
          %v4580 = vsel %vm4578, %v4563, 0.0
          %v4581 = vsel %vm4578, %v4564, 0.0
          %v4582 = vsel %vm4578, %v4565, 0.0
          %v4583 = vsel %vm4578, %v4566, 0.0
          %v4584 = vsel %vm4578, %v4567, 0.0
          %v4585 = vsel %vm4578, %v4568, 0.0
          %v4586 = vsel %vm4578, %v4569, 0.0
          %v4587 = vsel %vm4578, %v4570, 0.0
          %v4588 = vsel %vm4578, %v4571, 0.0
          %v4589 = vsel %vm4578, %v4572, 0.0
          %v4590 = vsel %vm4578, %v4573, 0.0
          %v4591 = vsel %vm4578, %v4574, 0.0
          %v4592 = vsel %vm4578, %v4575, 0.0
          %v4593 = vsel %vm4578, %v4576, 0.0
          %v4594 = vsel %vm4578, %v4577, 0.0
          %v4595 = vld [vmem:[%s4] sm:$0x1]
          %v4597 = vlaneseq
          %v4598 = vshrl.u32 %v4597, 7
          %v4599 = vsub.s32 0, %v4598
          %v4600 = vrot.slane %v4595, %v4599
          %v4602 = vadd.f32 %v4579, %v4600
          %v4603 = vadd.f32 %v4580, %v4600
          %v4604 = vadd.f32 %v4581, %v4600
          %v4605 = vadd.f32 %v4582, %v4600
          %v4606 = vadd.f32 %v4583, %v4600
          %v4607 = vadd.f32 %v4584, %v4600
          %v4608 = vadd.f32 %v4585, %v4600
          %v4609 = vadd.f32 %v4586, %v4600
          %v4610 = vadd.f32 %v4587, %v4600
          %v4611 = vadd.f32 %v4588, %v4600
          %v4612 = vadd.f32 %v4589, %v4600
          %v4613 = vadd.f32 %v4590, %v4600
          %v4614 = vadd.f32 %v4591, %v4600
          %v4615 = vadd.f32 %v4592, %v4600
          %v4616 = vadd.f32 %v4593, %v4600
          %v4617 = vadd.f32 %v4594, %v4600
          %vm4618 = vcmp.gt.f32.partialorder %v4602, 0.0
          %vm4619 = vcmp.gt.f32.partialorder %v4603, 0.0
          %vm4620 = vcmp.gt.f32.partialorder %v4604, 0.0
          %vm4621 = vcmp.gt.f32.partialorder %v4605, 0.0
          %vm4622 = vcmp.gt.f32.partialorder %v4606, 0.0
          %vm4623 = vcmp.gt.f32.partialorder %v4607, 0.0
          %vm4624 = vcmp.gt.f32.partialorder %v4608, 0.0
          %vm4625 = vcmp.gt.f32.partialorder %v4609, 0.0
          %vm4626 = vcmp.gt.f32.partialorder %v4610, 0.0
          %vm4627 = vcmp.gt.f32.partialorder %v4611, 0.0
          %vm4628 = vcmp.gt.f32.partialorder %v4612, 0.0
          %vm4629 = vcmp.gt.f32.partialorder %v4613, 0.0
          %vm4630 = vcmp.gt.f32.partialorder %v4614, 0.0
          %vm4631 = vcmp.gt.f32.partialorder %v4615, 0.0
          %vm4632 = vcmp.gt.f32.partialorder %v4616, 0.0
          %vm4633 = vcmp.gt.f32.partialorder %v4617, 0.0
          %v4634 = vmul.f32 %v4602, 1.442695
          %v4635 = vpow.pop %v4634
          %v4636 = vmul.f32 %v4603, 1.442695
          %v4637 = vpow.pop %v4636
          %v4638 = vmul.f32 %v4604, 1.442695
          %v4639 = vpow.pop %v4638
          %v4640 = vmul.f32 %v4605, 1.442695
          %v4641 = vpow.pop %v4640
          %v4642 = vmul.f32 %v4606, 1.442695
          %v4643 = vpow.pop %v4642
          %v4644 = vmul.f32 %v4607, 1.442695
          %v4645 = vpow.pop %v4644
          %v4646 = vmul.f32 %v4608, 1.442695
          %v4647 = vpow.pop %v4646
          %v4648 = vmul.f32 %v4609, 1.442695
          %v4649 = vpow.pop %v4648
          %v4650 = vmul.f32 %v4610, 1.442695
          %v4651 = vpow.pop %v4650
          %v4652 = vmul.f32 %v4611, 1.442695
          %v4653 = vpow.pop %v4652
          %v4654 = vmul.f32 %v4612, 1.442695
          %v4655 = vpow.pop %v4654
          %v4656 = vmul.f32 %v4613, 1.442695
          %v4657 = vpow.pop %v4656
          %v4658 = vmul.f32 %v4614, 1.442695
          %v4659 = vpow.pop %v4658
          %v4660 = vmul.f32 %v4615, 1.442695
          %v4661 = vpow.pop %v4660
          %v4662 = vmul.f32 %v4616, 1.442695
          %v4663 = vpow.pop %v4662
          %v4664 = vmul.f32 %v4617, 1.442695
          %v4665 = vpow.pop %v4664
          %v4666 = vsub.f32 %v4635, 1.0
          %v4667 = vsub.f32 %v4637, 1.0
          %v4668 = vsub.f32 %v4639, 1.0
          %v4669 = vsub.f32 %v4641, 1.0
          %v4670 = vsub.f32 %v4643, 1.0
          %v4671 = vsub.f32 %v4645, 1.0
          %v4672 = vsub.f32 %v4647, 1.0
          %v4673 = vsub.f32 %v4649, 1.0
          %v4674 = vsub.f32 %v4651, 1.0
          %v4675 = vsub.f32 %v4653, 1.0
          %v4676 = vsub.f32 %v4655, 1.0
          %v4677 = vsub.f32 %v4657, 1.0
          %v4678 = vsub.f32 %v4659, 1.0
          %v4679 = vsub.f32 %v4661, 1.0
          %v4680 = vsub.f32 %v4663, 1.0
          %v4681 = vsub.f32 %v4665, 1.0
          %v4682 = vsel %vm4618, %v4602, %v4666
          %v4683 = vsel %vm4619, %v4603, %v4667
          %v4684 = vsel %vm4620, %v4604, %v4668
          %v4685 = vsel %vm4621, %v4605, %v4669
          %v4686 = vsel %vm4622, %v4606, %v4670
          %v4687 = vsel %vm4623, %v4607, %v4671
          %v4688 = vsel %vm4624, %v4608, %v4672
          %v4689 = vsel %vm4625, %v4609, %v4673
          %v4690 = vsel %vm4626, %v4610, %v4674
          %v4691 = vsel %vm4627, %v4611, %v4675
          %v4692 = vsel %vm4628, %v4612, %v4676
          %v4693 = vsel %vm4629, %v4613, %v4677
          %v4694 = vsel %vm4630, %v4614, %v4678
          %v4695 = vsel %vm4631, %v4615, %v4679
          %v4696 = vsel %vm4632, %v4616, %v4680
          %v4697 = vsel %vm4633, %v4617, %v4681
          %4698 = vst [vmem:[%s404] sm:$0xff] %v4682
          %4699 = vst [vmem:[%s404 + $0x8] sm:$0xff] %v4683
          %4700 = vst [vmem:[%s404 + $0x10] sm:$0xff] %v4684
          %4701 = vst [vmem:[%s404 + $0x18] sm:$0xff] %v4685
          %4702 = vst [vmem:[%s404 + $0x20] sm:$0xff] %v4686
          %4703 = vst [vmem:[%s404 + $0x28] sm:$0xff] %v4687
          %4704 = vst [vmem:[%s404 + $0x30] sm:$0xff] %v4688
          %4705 = vst [vmem:[%s404 + $0x38] sm:$0xff] %v4689
          %4706 = vst [vmem:[%s404 + $0x40] sm:$0xff] %v4690
          %4707 = vst [vmem:[%s404 + $0x48] sm:$0xff] %v4691
          %4708 = vst [vmem:[%s404 + $0x50] sm:$0xff] %v4692
          %4709 = vst [vmem:[%s404 + $0x58] sm:$0xff] %v4693
          %4710 = vst [vmem:[%s404 + $0x60] sm:$0xff] %v4694
          %4711 = vst [vmem:[%s404 + $0x68] sm:$0xff] %v4695
          %4712 = vst [vmem:[%s404 + $0x70] sm:$0xff] %v4696
          %4713 = vst [vmem:[%s404 + $0x78] sm:$0xff] %v4697
        $region89: #{gat_gcn_forward.5} parent=76 // pred_fallthru
          _
        %s4714 = smul.u32 16, %s20
        %p4715 = scmp.lt.s32.totalorder %s4714, 31
        %s4716 = scalar_select %p4715, %s4714, 31
        %s4717 = smul.addr %s4716, 8
        %s4718 = scalar_lea.vmem %s5, %s4717
        // Predicated region
        $region90: #{gat_gcn_forward.5} parent=76 // pred_check
          %p4719 = pneg %p173
        $region91: #{gat_gcn_forward.5} parent=76 // pred_check_branch
          %4721 = sbr.rel (%p4719) target = $region93
        $region92: #{gat_gcn_forward.5} parent=76 // pred_region
          %s4722 = smul.u32 16, %s20
        $region93: #{gat_gcn_forward.5} parent=76 // pred_fallthru
          _
      $region77: #{gat_gcn_forward.5} parent=5 // pred_fallthru
        _
      %p4723 = scmp.le.s32.totalorder 2, %s11
      // Predicated region
      $region94: #{gat_gcn_forward.5} parent=5 // pred_check
        %p4724 = pneg %p4723
      $region95: #{gat_gcn_forward.5} parent=5 // pred_check_branch
        %4726 = sbr.rel (%p4724) target = $region97
      $region96: #{gat_gcn_forward.5} parent=5 // pred_region
        %s4727 = ssub.s32 %s11, 2
        // Predicated region
        $region98: #{gat_gcn_forward.5} parent=96 // pred_check
          %p4728 = pneg %p179
        $region99: #{gat_gcn_forward.5} parent=96 // pred_check_branch
          %4730 = sbr.rel (%p4728) target = $region101
        $region100: #{gat_gcn_forward.5} parent=96 // pred_region
          %s4731 = smul.u32 16, %s22
          %p4732 = scmp.lt.s32.totalorder %s4731, 31
          %s4733 = scalar_select %p4732, %s4731, 31
          %s4734 = smul.addr %s4733, 8
          %s4735 = scalar_lea.vmem %s5, %s4734
        $region101: #{gat_gcn_forward.5} parent=96 // pred_fallthru
          _
      $region97: #{gat_gcn_forward.5} parent=5 // pred_fallthru
        _
    $region6: #{gat_gcn_forward.5} parent=1 // loop_footer
      %s15 = sadd.s32 1, %s11
    $region7: #{gat_gcn_forward.5} parent=1 // loop_footer_branch
      %10 = sbr.rel target = $region3
    $region8: #{gat_gcn_forward.5} parent=1 // loop_exit
      _

</llo_original>
